<compile_context>
chip_gen: v7x
topology: tpu7x:2x2x1
jax: 0.10.0
libtpu: 0.0.40
codegen_flags: <defaults>
</compile_context>

<pallas_src>
import jax
import jax.numpy as jnp
from jax import lax
from jax.experimental import pallas as pl
from jax.experimental.pallas import tpu as pltpu

EPS = 1e-5  # PyTorch BatchNorm2d default eps


def _round_up(x, m):
    return ((x + m - 1) // m) * m


# ----------------------------- Pallas kernels ------------------------------ #

def _conv0_kernel(a_ref, w_ref, shift_ref, o_ref):
    """conv0 (BN scale pre-folded into w) + shift + ReLU:  o = max(w@a + shift, 0)."""
    y = jnp.dot(w_ref[...], a_ref[...], preferred_element_type=jnp.float32)
    o_ref[...] = jnp.maximum(y + shift_ref[...], 0.0)


def _head_kernel(x_ref, s_ref, b_ref, pool_ref, w_ref, bias_ref, o_ref):
    """norm5 + ReLU + 7x7 global avg-pool (masked pooling matmul) + Linear."""
    a = jnp.maximum(x_ref[...] * s_ref[...] + b_ref[...], 0.0)        # (C, N*Mim)
    feat = jnp.dot(a, pool_ref[...], preferred_element_type=jnp.float32)   # (C, N)
    o_ref[...] = jnp.dot(w_ref[...], feat,
                         preferred_element_type=jnp.float32) + bias_ref[...]


def _make_block_kernel(C0, g, Cmid, L, Wp, Mim, has_transition):
    """One dense block (optionally + transition 1x1 conv) as a single kernel.

    Feature maps use a per-image "padded flat" layout of width Mim:
    column m = h*Wp + w over the (Hp, Wp) zero-padded image (plus dead lane
    padding up to Mim); the 1-pixel border / dead columns are kept at 0 so the
    3x3 conv's zero padding is exact.  The 3x3 conv is 9 tap matmuls over
    static lane-shifted slices of a zero-flanked VMEM scratch.
    """
    P = Wp + 1  # flank width of the shift buffer

    def kernel(*refs):
        mask_ref, x_ref = refs[0], refs[1]
        layer_refs = refs[2:2 + 6 * L]
        p = 2 + 6 * L
        if has_transition:
            ts_ref, tb_ref, tw_ref = refs[p:p + 3]
            p += 3
        out_ref = refs[p]
        p += 1
        if has_transition:
            feat_ref = refs[p]          # VMEM scratch holds the feature map
            p += 1
        else:
            feat_ref = out_ref          # output doubles as the working feature map
        a2buf_ref = refs[p]

        mask = mask_ref[...]                          # (1, Mim) interior mask
        a2buf_ref[...] = jnp.zeros_like(a2buf_ref)    # zero flanks = zero padding
        feat_ref[0:C0, :] = x_ref[...]                # "concat" seed: input features

        C = C0
        for li in range(L):
            s1, b1, w1, s2, b2, w2 = layer_refs[6 * li:6 * li + 6]
            # norm1 + relu1 on the (un-expanded) running feature map
            a1 = jnp.maximum(feat_ref[0:C, :] * s1[...] + b1[...], 0.0)
            # conv1 (1x1) with norm2 + relu2 fused as its epilogue
            z = jnp.dot(w1[...], a1.astype(jnp.bfloat16),
                        preferred_element_type=jnp.float32)
            a2 = jnp.maximum(z * s2[...] + b2[...], 0.0) * mask
            # conv2 (3x3, pad=1): 9 tap matmuls over lane-shifted slices
            a2buf_ref[:, P:P + Mim] = a2.astype(jnp.bfloat16)
            acc = None
            for t in range(9):
                d = (t // 3 - 1) * Wp + (t % 3 - 1)
                a2s = a2buf_ref[:, P + d:P + d + Mim]
                y = jnp.dot(w2[t], a2s, preferred_element_type=jnp.float32)
                acc = y if acc is None else acc + y
            feat_ref[C:C + g, :] = acc * mask   # torch.cat == in-place slice write
            C += g

        if has_transition:
            # transition: norm + relu + 1x1 conv fused as the block epilogue
            at = jnp.maximum(feat_ref[0:C, :] * ts_ref[...] + tb_ref[...], 0.0)
            out_ref[...] = jnp.dot(tw_ref[...], at.astype(jnp.bfloat16),
                                   preferred_element_type=jnp.float32)

    return kernel


# --------------------------- wrapper / glue helpers ------------------------- #

def _bn_scale_shift(bn):
    scale = bn['gamma'] * lax.rsqrt(bn['var'] + EPS)
    shift = bn['beta'] - bn['mean'] * scale
    return scale, shift


def _w_t(w):
    """PyTorch conv weight (Cout, Cin, kh, kw) -> (Cout, kh*kw*Cin), tap-major K."""
    Cout, Cin, kh, kw = w.shape
    return jnp.transpose(w, (0, 2, 3, 1)).reshape(Cout, kh * kw * Cin)


def _im2col_t(x, kh, kw, stride, pad):
    """x: (C, N, H, W) -> (kh*kw*C, N*Ho*Wo) zero-padded patches."""
    C, N, H, W = x.shape
    Ho = (H + 2 * pad - kh) // stride + 1
    Wo = (W + 2 * pad - kw) // stride + 1
    xp = jnp.pad(x, ((0, 0), (0, 0), (pad, pad), (pad, pad))) if pad > 0 else x
    cols = []
    for i in range(kh):
        for j in range(kw):
            cols.append(xp[:, :, i:i + stride * Ho:stride,
                           j:j + stride * Wo:stride])
    patches = jnp.stack(cols, axis=0)                 # (kh*kw, C, N, Ho, Wo)
    return patches.reshape(kh * kw * C, N * Ho * Wo), Ho, Wo


def conv0_bn_relu(x, w, bn):
    """conv0(7x7,s2,p3) + norm0 + relu0; grid over 128-aligned M tiles (v7x)."""
    C, N, H, W = x.shape
    Cout = w.shape[0]
    scale, shift = _bn_scale_shift(bn)
    w2d = (_w_t(w) * scale[:, None]).astype(jnp.bfloat16)   # fold BN scale into w
    # TODO(synk): conv0's im2col (and pool0) still built in XLA; an in-kernel
    # stride-2 tap loop would avoid the (49*C, M) HBM expansion.
    a, Ho, Wo = _im2col_t(x.astype(jnp.bfloat16), 7, 7, 2, 3)
    K = a.shape[0]
    M = N * Ho * Wo
    TM = min(896, _round_up(M, 128))     # 128-multiple tiles, masked tail block
    out = pl.pallas_call(
        _conv0_kernel,
        out_shape=jax.ShapeDtypeStruct((Cout, M), jnp.float32),
        grid_spec=pltpu.PrefetchScalarGridSpec(
            num_scalar_prefetch=0,
            grid=(pl.cdiv(M, TM),),
            in_specs=[pl.BlockSpec((K, TM), lambda j: (0, j)),
                      pl.BlockSpec((Cout, K), lambda j: (0, 0)),
                      pl.BlockSpec((Cout, 1), lambda j: (0, 0))],
            out_specs=pl.BlockSpec((Cout, TM), lambda j: (0, j))),
        compiler_params=pltpu.CompilerParams(
            dimension_semantics=("parallel",)),
    )(a, w2d, shift.reshape(Cout, 1))
    return out.reshape(Cout, N, Ho, Wo)


def maxpool_3x3_s2_p1(x):
    # nn.MaxPool2d(kernel_size=3, stride=2, padding=1): pad with -inf
    return lax.reduce_window(x, -jnp.inf, lax.max,
                             window_dimensions=(1, 1, 3, 3),
                             window_strides=(1, 1, 2, 2),
                             padding=((0, 0), (0, 0), (1, 1), (1, 1)))


def _interior_mask(Hp, Wp, Mim):
    col = jnp.arange(Mim)
    h = col // Wp
    w = col % Wp
    valid = ((col < Hp * Wp) & (h >= 1) & (h <= Hp - 2)
             & (w >= 1) & (w <= Wp - 2))
    return valid.astype(jnp.float32).reshape(1, Mim)


def _to_padded_flat(x):
    """(C, N, H, W) -> (C, N*Mim) padded-flat layout (zero border, 128-aligned)."""
    C, N, H, W = x.shape
    Hp, Wp = H + 2, W + 2
    Mim = _round_up(Hp * Wp, 128)
    xp = jnp.pad(x, ((0, 0), (0, 0), (1, 1), (1, 1))).reshape(C, N, Hp * Wp)
    if Mim > Hp * Wp:
        xp = jnp.pad(xp, ((0, 0), (0, 0), (0, Mim - Hp * Wp)))
    return xp.reshape(C, N * Mim), Hp, Wp, Mim


def _prep_layer(lp):
    g, Cmid = lp['conv2'].shape[0], lp['conv2'].shape[1]
    s1, b1 = _bn_scale_shift(lp['norm1'])
    s2, b2 = _bn_scale_shift(lp['norm2'])
    w1 = lp['conv1'][:, :, 0, 0].astype(jnp.bfloat16)                  # (Cmid, Cin)
    w2 = jnp.transpose(lp['conv2'], (2, 3, 0, 1)).reshape(9, g, Cmid)  # tap-major
    return [s1.reshape(-1, 1), b1.reshape(-1, 1), w1,
            s2.reshape(-1, 1), b2.reshape(-1, 1), w2.astype(jnp.bfloat16)]


def dense_block(x_flat, mask, layer_params, trans_params, *,
                C0, g, Cmid, N, Wp, Mim):
    """One dense block (+ optional fused transition conv) as one pallas_call,
    gridded over the batch (per-image blocks, parallel for v7x megacore)."""
    L = len(layer_params)
    C_total = C0 + L * g
    has_transition = trans_params is not None
    P = Wp + 1
    kernel = _make_block_kernel(C0, g, Cmid, L, Wp, Mim, has_transition)

    def _const_spec(arr):
        zero = (0,) * arr.ndim
        return pl.BlockSpec(arr.shape, lambda n, z=zero: z)

    inputs = [mask, x_flat]
    in_specs = [_const_spec(mask),
                pl.BlockSpec((C0, Mim), lambda n: (0, n))]
    for lp in layer_params:
        for arr in lp:
            inputs.append(arr)
            in_specs.append(_const_spec(arr))
    scratch = []
    if has_transition:
        for arr in trans_params:
            inputs.append(arr)
            in_specs.append(_const_spec(arr))
        Cout = trans_params[2].shape[0]
        out_shape = jax.ShapeDtypeStruct((Cout, N * Mim), jnp.float32)
        out_specs = pl.BlockSpec((Cout, Mim), lambda n: (0, n))
        scratch.append(pltpu.VMEM((C_total, Mim), jnp.float32))   # feature map
    else:
        out_shape = jax.ShapeDtypeStruct((C_total, N * Mim), jnp.float32)
        out_specs = pl.BlockSpec((C_total, Mim), lambda n: (0, n))
    scratch.append(pltpu.VMEM((Cmid, Mim + 2 * P), jnp.bfloat16))  # shift buffer

    return pl.pallas_call(
        kernel,
        out_shape=out_shape,
        grid_spec=pltpu.PrefetchScalarGridSpec(
            num_scalar_prefetch=0,
            grid=(N,),
            in_specs=in_specs,
            out_specs=out_specs,
            scratch_shapes=scratch),
        compiler_params=pltpu.CompilerParams(
            dimension_semantics=("parallel",)),
    )(*inputs)


# ----------------------------- parameter init ------------------------------ #

def _bn_params(C):
    # init_model: BN weight=1, bias=0; fresh buffers: running_mean=0, running_var=1
    return dict(gamma=jnp.ones((C,), jnp.float32),
                beta=jnp.zeros((C,), jnp.float32),
                mean=jnp.zeros((C,), jnp.float32),
                var=jnp.ones((C,), jnp.float32))


def _conv_w(key, cout, cin, kh, kw):
    # nn.init.kaiming_normal_ (fan_in, gain=sqrt(2))
    fan_in = cin * kh * kw
    std = (2.0 / fan_in) ** 0.5
    return std * jax.random.normal(key, (cout, cin, kh, kw), jnp.float32)


def init_densenet_params(key, growth_rate=8, block_config=(2, 2),
                         num_init_features=16, bn_size=2, num_classes=10):
    keys = iter(jax.random.split(key, 64))
    params = {}
    params['conv0'] = _conv_w(next(keys), num_init_features, 3, 7, 7)
    params['norm0'] = _bn_params(num_init_features)
    blocks = []
    nf = num_init_features
    for bi, num_layers in enumerate(block_config):
        layers = []
        for li in range(num_layers):
            cin = nf + li * growth_rate
            layers.append(dict(
                norm1=_bn_params(cin),
                conv1=_conv_w(next(keys), bn_size * growth_rate, cin, 1, 1),
                norm2=_bn_params(bn_size * growth_rate),
                conv2=_conv_w(next(keys), growth_rate,
                              bn_size * growth_rate, 3, 3)))
        nf = nf + num_layers * growth_rate
        block = dict(layers=layers)
        if bi != len(block_config) - 1:
            block['transition'] = dict(norm=_bn_params(nf),
                                       conv=_conv_w(next(keys), nf // 2, nf, 1, 1))
            nf = nf // 2
        blocks.append(block)
    params['blocks'] = blocks
    params['norm5'] = _bn_params(nf)
    # nn.Linear default weight init (uniform +-1/sqrt(fan_in)); bias=0 from init_model
    bound = 1.0 / (nf ** 0.5)
    params['fc_w'] = jax.random.uniform(next(keys), (num_classes, nf),
                                        jnp.float32, -bound, bound)
    params['fc_b'] = jnp.zeros((num_classes,), jnp.float32)
    return params


# -------------------------------- forward ---------------------------------- #

def densenet_forward(params, x_nchw):
    # NCHW -> channels-major (C, N, H, W): conv outputs become lane-dense (Cout, M)
    x = jnp.transpose(x_nchw, (1, 0, 2, 3)).astype(jnp.float32)
    N = x.shape[1]

    # features: conv0 + norm0 + relu0 (one fused kernel) -> pool0
    x = conv0_bn_relu(x, params['conv0'], params['norm0'])
    # TODO(synk): pool0 kept as an XLA reduce_window; fusing the stride-2 max
    # window into conv0's epilogue needs strided in-register slicing.
    x = maxpool_3x3_s2_p1(x)

    final_flat = None
    final_geom = None
    for block in params['blocks']:
        C0, _, H, W = x.shape
        x_flat, Hp, Wp, Mim = _to_padded_flat(x)
        mask = _interior_mask(Hp, Wp, Mim)
        layer_params = [_prep_layer(lp) for lp in block['layers']]
        g, Cmid = block['layers'][0]['conv2'].shape[:2]
        trans_params = None
        if 'transition' in block:
            t = block['transition']
            ts, tb = _bn_scale_shift(t['norm'])
            trans_params = (ts.reshape(-1, 1), tb.reshape(-1, 1),
                            t['conv'][:, :, 0, 0].astype(jnp.bfloat16))

        out = dense_block(x_flat, mask, layer_params, trans_params,
                          C0=C0, g=g, Cmid=Cmid, N=N, Wp=Wp, Mim=Mim)

        if trans_params is not None:
            # transition BN+ReLU+1x1 conv already done in-kernel; 2x2 avg-pool here.
            Ct = trans_params[2].shape[0]
            t4 = out.reshape(Ct, N, Mim)[:, :, :Hp * Wp].reshape(Ct, N, Hp, Wp)
            t4 = t4[:, :, 1:1 + H, 1:1 + W]
            # TODO(synk): AvgPool2d(2,2) kept in XLA (stride-2 spatial access).
            x = t4.reshape(Ct, N, H // 2, 2, W // 2, 2).mean(axis=(3, 5))
        else:
            final_flat = out
            final_geom = (Hp, Wp, Mim, H, W)

    # head: norm5 + forward()'s F.relu + 7x7 avg-pool + classifier, one tiny kernel
    Hp, Wp, Mim, H, W = final_geom
    s5, b5 = _bn_scale_shift(params['norm5'])
    base = _interior_mask(Hp, Wp, Mim).reshape(Mim, 1) / float(H * W)
    pool = jnp.kron(jnp.eye(N, dtype=jnp.float32), base)          # (N*Mim, N)
    num_classes = params['fc_w'].shape[0]
    logits = pl.pallas_call(
        _head_kernel,
        out_shape=jax.ShapeDtypeStruct((num_classes, N), jnp.float32),
    )(final_flat, s5.reshape(-1, 1), b5.reshape(-1, 1), pool,
      params['fc_w'], params['fc_b'].reshape(-1, 1))
    # TODO(synk): F.dropout omitted -- drop_rate=0 makes it an identity here.
    return logits.T                                               # (N, num_classes)


if __name__ == "__main__":
    key = jax.random.PRNGKey(0)
    pkey, xkey = jax.random.split(key)
    params = init_densenet_params(pkey)
    x = jax.random.normal(xkey, (2, 3, 56, 56), jnp.float32)   # NCHW, like PyTorch
    fwd = jax.jit(densenet_forward)
    out = fwd(params, x)
    jax.block_until_ready(out)
    assert out.shape == (2, 10) and out.dtype == jnp.float32
    print("KERNEL_OK")
</pallas_src>

<mosaic_0001>
module attributes {stable_mosaic.version = 11 : i64} {
  func.func @_conv0_kernel(%arg0: i32, %arg1: memref<147x896xbf16, #tpu.memory_space<vmem>>, %arg2: memref<16x147xbf16, #tpu.memory_space<vmem>>, %arg3: memref<16x1xf32, #tpu.memory_space<vmem>>, %arg4: memref<16x896xf32, #tpu.memory_space<vmem>>) attributes {dimension_semantics = [#tpu.dimension_semantics<parallel>], iteration_bounds = array<i64: 2>, scalar_prefetch = 0 : i64, scratch_operands = 0 : i64, tpu.core_type = #tpu.core_type<tc>, window_params = [{transform_indices = @transform_0, window_bounds = array<i64: 147, 896>}, {pipeline_mode = #tpu.pipeline_mode<synchronous>, transform_indices = @transform_1, window_bounds = array<i64: 16, 147>}, {pipeline_mode = #tpu.pipeline_mode<synchronous>, transform_indices = @transform_2, window_bounds = array<i64: 16, 1>}, {transform_indices = @transform_3, window_bounds = array<i64: 16, 896>}]} {
    %c0 = arith.constant 0 : index
    %c0_0 = arith.constant 0 : index
    %0 = vector.load %arg2[%c0, %c0_0] : memref<16x147xbf16, #tpu.memory_space<vmem>>, vector<16x147xbf16>
    %c0_1 = arith.constant 0 : index
    %c0_2 = arith.constant 0 : index
    %1 = vector.load %arg1[%c0_1, %c0_2] : memref<147x896xbf16, #tpu.memory_space<vmem>>, vector<147x896xbf16>
    %cst = arith.constant dense<0.000000e+00> : vector<16x896xf32>
    %2 = tpu.matmul %0, %1, %cst {dimension_numbers = #tpu.dot_dimension_numbers<[1], [0], [0], [1], [0, 0, 1, 1], [], []>} : vector<16x147xbf16>, vector<147x896xbf16>, vector<16x896xf32> -> vector<16x896xf32>
    %c0_3 = arith.constant 0 : index
    %c0_4 = arith.constant 0 : index
    %3 = vector.load %arg3[%c0_3, %c0_4] : memref<16x1xf32, #tpu.memory_space<vmem>>, vector<16x1xf32>
    %4 = vector.broadcast %3 : vector<16x1xf32> to vector<16x896xf32>
    %5 = arith.addf %2, %4 : vector<16x896xf32>
    %cst_5 = arith.constant 0.000000e+00 : f32
    %6 = vector.broadcast %cst_5 : f32 to vector<16x896xf32>
    %7 = arith.maximumf %5, %6 : vector<16x896xf32>
    %c0_6 = arith.constant 0 : index
    %c0_7 = arith.constant 0 : index
    %8 = vector.load %arg4[%c0_6, %c0_7] : memref<16x896xf32, #tpu.memory_space<vmem>>, vector<16x896xf32>
    tpu.vector_store %arg4[%c0_6, %c0_7], %7 {strides = array<i32>} : memref<16x896xf32, #tpu.memory_space<vmem>>, vector<16x896xf32>,
    return
  }
  func.func @transform_0(%arg0: i32) -> (i32, i32) {
    %c0_i32 = arith.constant 0 : i32
    %c0_i32_0 = arith.constant 0 : i32
    return %c0_i32, %arg0 : i32, i32
  }
  func.func @transform_1(%arg0: i32) -> (i32, i32) {
    %c0_i32 = arith.constant 0 : i32
    %c0_i32_0 = arith.constant 0 : i32
    %c0_i32_1 = arith.constant 0 : i32
    return %c0_i32, %c0_i32_0 : i32, i32
  }
  func.func @transform_2(%arg0: i32) -> (i32, i32) {
    %c0_i32 = arith.constant 0 : i32
    %c0_i32_0 = arith.constant 0 : i32
    %c0_i32_1 = arith.constant 0 : i32
    return %c0_i32, %c0_i32_0 : i32, i32
  }
  func.func @transform_3(%arg0: i32) -> (i32, i32) {
    %c0_i32 = arith.constant 0 : i32
    %c0_i32_0 = arith.constant 0 : i32
    return %c0_i32, %arg0 : i32, i32
  }
}

module attributes {stable_mosaic.version = 11 : i64} {
  func.func @kernel(%arg0: i32, %arg1: memref<1x256xf32, #tpu.memory_space<vmem>>, %arg2: memref<16x256xf32, #tpu.memory_space<vmem>>, %arg3: memref<16x1xf32, #tpu.memory_space<vmem>>, %arg4: memref<16x1xf32, #tpu.memory_space<vmem>>, %arg5: memref<16x16xbf16, #tpu.memory_space<vmem>>, %arg6: memref<16x1xf32, #tpu.memory_space<vmem>>, %arg7: memref<16x1xf32, #tpu.memory_space<vmem>>, %arg8: memref<9x8x16xbf16, #tpu.memory_space<vmem>>, %arg9: memref<24x1xf32, #tpu.memory_space<vmem>>, %arg10: memref<24x1xf32, #tpu.memory_space<vmem>>, %arg11: memref<16x24xbf16, #tpu.memory_space<vmem>>, %arg12: memref<16x1xf32, #tpu.memory_space<vmem>>, %arg13: memref<16x1xf32, #tpu.memory_space<vmem>>, %arg14: memref<9x8x16xbf16, #tpu.memory_space<vmem>>, %arg15: memref<32x1xf32, #tpu.memory_space<vmem>>, %arg16: memref<32x1xf32, #tpu.memory_space<vmem>>, %arg17: memref<16x32xbf16, #tpu.memory_space<vmem>>, %arg18: memref<16x256xf32, #tpu.memory_space<vmem>>, %arg19: memref<32x256xf32, #tpu.memory_space<vmem>>, %arg20: memref<16x290xbf16, #tpu.memory_space<vmem>>) attributes {dimension_semantics = [#tpu.dimension_semantics<parallel>], iteration_bounds = array<i64: 2>, scalar_prefetch = 0 : i64, scratch_operands = 2 : i64, tpu.core_type = #tpu.core_type<tc>, window_params = [{pipeline_mode = #tpu.pipeline_mode<synchronous>, transform_indices = @transform_0, window_bounds = array<i64: 1, 256>}, {transform_indices = @transform_1, window_bounds = array<i64: 16, 256>}, {pipeline_mode = #tpu.pipeline_mode<synchronous>, transform_indices = @transform_2, window_bounds = array<i64: 16, 1>}, {pipeline_mode = #tpu.pipeline_mode<synchronous>, transform_indices = @transform_3, window_bounds = array<i64: 16, 1>}, {pipeline_mode = #tpu.pipeline_mode<synchronous>, transform_indices = @transform_4, window_bounds = array<i64: 16, 16>}, {pipeline_mode = #tpu.pipeline_mode<synchronous>, transform_indices = @transform_5, window_bounds = array<i64: 16, 1>}, {pipeline_mode = #tpu.pipeline_mode<synchronous>, transform_indices = @transform_6, window_bounds = array<i64: 16, 1>}, {pipeline_mode = #tpu.pipeline_mode<synchronous>, transform_indices = @transform_7, window_bounds = array<i64: 9, 8, 16>}, {pipeline_mode = #tpu.pipeline_mode<synchronous>, transform_indices = @transform_8, window_bounds = array<i64: 24, 1>}, {pipeline_mode = #tpu.pipeline_mode<synchronous>, transform_indices = @transform_9, window_bounds = array<i64: 24, 1>}, {pipeline_mode = #tpu.pipeline_mode<synchronous>, transform_indices = @transform_10, window_bounds = array<i64: 16, 24>}, {pipeline_mode = #tpu.pipeline_mode<synchronous>, transform_indices = @transform_11, window_bounds = array<i64: 16, 1>}, {pipeline_mode = #tpu.pipeline_mode<synchronous>, transform_indices = @transform_12, window_bounds = array<i64: 16, 1>}, {pipeline_mode = #tpu.pipeline_mode<synchronous>, transform_indices = @transform_13, window_bounds = array<i64: 9, 8, 16>}, {pipeline_mode = #tpu.pipeline_mode<synchronous>, transform_indices = @transform_14, window_bounds = array<i64: 32, 1>}, {pipeline_mode = #tpu.pipeline_mode<synchronous>, transform_indices = @transform_15, window_bounds = array<i64: 32, 1>}, {pipeline_mode = #tpu.pipeline_mode<synchronous>, transform_indices = @transform_16, window_bounds = array<i64: 16, 32>}, {transform_indices = @transform_17, window_bounds = array<i64: 16, 256>}]} {
    %c0 = arith.constant 0 : index
    %c0_0 = arith.constant 0 : index
    %0 = vector.load %arg1[%c0, %c0_0] : memref<1x256xf32, #tpu.memory_space<vmem>>, vector<1x256xf32>
    %cst = arith.constant 0.000000e+00 : bf16
    %1 = vector.broadcast %cst : bf16 to vector<16x290xbf16>
    %c0_1 = arith.constant 0 : index
    %c0_2 = arith.constant 0 : index
    %2 = vector.load %arg20[%c0_1, %c0_2] : memref<16x290xbf16, #tpu.memory_space<vmem>>, vector<16x290xbf16>
    tpu.vector_store %arg20[%c0_1, %c0_2], %1 {strides = array<i32>} : memref<16x290xbf16, #tpu.memory_space<vmem>>, vector<16x290xbf16>,
    %c0_3 = arith.constant 0 : index
    %c0_4 = arith.constant 0 : index
    %3 = vector.load %arg2[%c0_3, %c0_4] : memref<16x256xf32, #tpu.memory_space<vmem>>, vector<16x256xf32>
    %c0_5 = arith.constant 0 : index
    %c0_6 = arith.constant 0 : index
    %4 = vector.load %arg19[%c0_5, %c0_6] : memref<32x256xf32, #tpu.memory_space<vmem>>, vector<16x256xf32>
    tpu.vector_store %arg19[%c0_5, %c0_6], %3 {strides = array<i32>} : memref<32x256xf32, #tpu.memory_space<vmem>>, vector<16x256xf32>,
    %c0_7 = arith.constant 0 : index
    %c0_8 = arith.constant 0 : index
    %5 = vector.load %arg19[%c0_7, %c0_8] : memref<32x256xf32, #tpu.memory_space<vmem>>, vector<16x256xf32>
    %c0_9 = arith.constant 0 : index
    %c0_10 = arith.constant 0 : index
    %6 = vector.load %arg3[%c0_9, %c0_10] : memref<16x1xf32, #tpu.memory_space<vmem>>, vector<16x1xf32>
    %7 = vector.broadcast %6 : vector<16x1xf32> to vector<16x256xf32>
    %8 = arith.mulf %5, %7 : vector<16x256xf32>
    %c0_11 = arith.constant 0 : index
    %c0_12 = arith.constant 0 : index
    %9 = vector.load %arg4[%c0_11, %c0_12] : memref<16x1xf32, #tpu.memory_space<vmem>>, vector<16x1xf32>
    %10 = vector.broadcast %9 : vector<16x1xf32> to vector<16x256xf32>
    %11 = arith.addf %8, %10 : vector<16x256xf32>
    %cst_13 = arith.constant 0.000000e+00 : f32
    %12 = vector.broadcast %cst_13 : f32 to vector<16x256xf32>
    %13 = arith.maximumf %11, %12 : vector<16x256xf32>
    %c0_14 = arith.constant 0 : index
    %c0_15 = arith.constant 0 : index
    %14 = vector.load %arg5[%c0_14, %c0_15] : memref<16x16xbf16, #tpu.memory_space<vmem>>, vector<16x16xbf16>
    %15 = arith.truncf %13 : vector<16x256xf32> to vector<16x256xbf16>
    %cst_16 = arith.constant dense<0.000000e+00> : vector<16x256xf32>
    %16 = tpu.matmul %14, %15, %cst_16 {dimension_numbers = #tpu.dot_dimension_numbers<[1], [0], [0], [1], [0, 0, 1, 1], [], []>} : vector<16x16xbf16>, vector<16x256xbf16>, vector<16x256xf32> -> vector<16x256xf32>
    %c0_17 = arith.constant 0 : index
    %c0_18 = arith.constant 0 : index
    %17 = vector.load %arg6[%c0_17, %c0_18] : memref<16x1xf32, #tpu.memory_space<vmem>>, vector<16x1xf32>
    %18 = vector.broadcast %17 : vector<16x1xf32> to vector<16x256xf32>
    %19 = arith.mulf %16, %18 : vector<16x256xf32>
    %c0_19 = arith.constant 0 : index
    %c0_20 = arith.constant 0 : index
    %20 = vector.load %arg7[%c0_19, %c0_20] : memref<16x1xf32, #tpu.memory_space<vmem>>, vector<16x1xf32>
    %21 = vector.broadcast %20 : vector<16x1xf32> to vector<16x256xf32>
    %22 = arith.addf %19, %21 : vector<16x256xf32>
    %cst_21 = arith.constant 0.000000e+00 : f32
    %23 = vector.broadcast %cst_21 : f32 to vector<16x256xf32>
    %24 = arith.maximumf %22, %23 : vector<16x256xf32>
    %25 = vector.broadcast %0 : vector<1x256xf32> to vector<16x256xf32>
    %26 = arith.mulf %24, %25 : vector<16x256xf32>
    %27 = arith.truncf %26 : vector<16x256xf32> to vector<16x256xbf16>
    %c0_22 = arith.constant 0 : index
    %c17 = arith.constant 17 : index
    %28 = vector.load %arg20[%c0_22, %c17] : memref<16x290xbf16, #tpu.memory_space<vmem>>, vector<16x256xbf16>
    tpu.vector_store %arg20[%c0_22, %c17], %27 {strides = array<i32>} : memref<16x290xbf16, #tpu.memory_space<vmem>>, vector<16x256xbf16>,
    %c0_23 = arith.constant 0 : index
    %c0_24 = arith.constant 0 : index
    %29 = vector.load %arg20[%c0_23, %c0_24] : memref<16x290xbf16, #tpu.memory_space<vmem>>, vector<16x256xbf16>
    %c0_25 = arith.constant 0 : index
    %c0_26 = arith.constant 0 : index
    %c0_27 = arith.constant 0 : index
    %30 = vector.load %arg8[%c0_25, %c0_26, %c0_27] : memref<9x8x16xbf16, #tpu.memory_space<vmem>>, vector<1x8x16xbf16>
    %31 = vector.shape_cast %30 : vector<1x8x16xbf16> to vector<8x16xbf16>
    %cst_28 = arith.constant dense<0.000000e+00> : vector<8x256xf32>
    %32 = tpu.matmul %31, %29, %cst_28 {dimension_numbers = #tpu.dot_dimension_numbers<[1], [0], [0], [1], [0, 0, 1, 1], [], []>} : vector<8x16xbf16>, vector<16x256xbf16>, vector<8x256xf32> -> vector<8x256xf32>
    %c0_29 = arith.constant 0 : index
    %c1 = arith.constant 1 : index
    %33 = vector.load %arg20[%c0_29, %c1] : memref<16x290xbf16, #tpu.memory_space<vmem>>, vector<16x256xbf16>
    %c1_30 = arith.constant 1 : index
    %c0_31 = arith.constant 0 : index
    %c0_32 = arith.constant 0 : index
    %34 = vector.load %arg8[%c1_30, %c0_31, %c0_32] : memref<9x8x16xbf16, #tpu.memory_space<vmem>>, vector<1x8x16xbf16>
    %35 = vector.shape_cast %34 : vector<1x8x16xbf16> to vector<8x16xbf16>
    %cst_33 = arith.constant dense<0.000000e+00> : vector<8x256xf32>
    %36 = tpu.matmul %35, %33, %cst_33 {dimension_numbers = #tpu.dot_dimension_numbers<[1], [0], [0], [1], [0, 0, 1, 1], [], []>} : vector<8x16xbf16>, vector<16x256xbf16>, vector<8x256xf32> -> vector<8x256xf32>
    %37 = arith.addf %32, %36 : vector<8x256xf32>
    %c0_34 = arith.constant 0 : index
    %c2 = arith.constant 2 : index
    %38 = vector.load %arg20[%c0_34, %c2] : memref<16x290xbf16, #tpu.memory_space<vmem>>, vector<16x256xbf16>
    %c2_35 = arith.constant 2 : index
    %c0_36 = arith.constant 0 : index
    %c0_37 = arith.constant 0 : index
    %39 = vector.load %arg8[%c2_35, %c0_36, %c0_37] : memref<9x8x16xbf16, #tpu.memory_space<vmem>>, vector<1x8x16xbf16>
    %40 = vector.shape_cast %39 : vector<1x8x16xbf16> to vector<8x16xbf16>
    %cst_38 = arith.constant dense<0.000000e+00> : vector<8x256xf32>
    %41 = tpu.matmul %40, %38, %cst_38 {dimension_numbers = #tpu.dot_dimension_numbers<[1], [0], [0], [1], [0, 0, 1, 1], [], []>} : vector<8x16xbf16>, vector<16x256xbf16>, vector<8x256xf32> -> vector<8x256xf32>
    %42 = arith.addf %37, %41 : vector<8x256xf32>
    %c0_39 = arith.constant 0 : index
    %c16 = arith.constant 16 : index
    %43 = vector.load %arg20[%c0_39, %c16] : memref<16x290xbf16, #tpu.memory_space<vmem>>, vector<16x256xbf16>
    %c3 = arith.constant 3 : index
    %c0_40 = arith.constant 0 : index
    %c0_41 = arith.constant 0 : index
    %44 = vector.load %arg8[%c3, %c0_40, %c0_41] : memref<9x8x16xbf16, #tpu.memory_space<vmem>>, vector<1x8x16xbf16>
    %45 = vector.shape_cast %44 : vector<1x8x16xbf16> to vector<8x16xbf16>
    %cst_42 = arith.constant dense<0.000000e+00> : vector<8x256xf32>
    %46 = tpu.matmul %45, %43, %cst_42 {dimension_numbers = #tpu.dot_dimension_numbers<[1], [0], [0], [1], [0, 0, 1, 1], [], []>} : vector<8x16xbf16>, vector<16x256xbf16>, vector<8x256xf32> -> vector<8x256xf32>
    %47 = arith.addf %42, %46 : vector<8x256xf32>
    %c0_43 = arith.constant 0 : index
    %c17_44 = arith.constant 17 : index
    %48 = vector.load %arg20[%c0_43, %c17_44] : memref<16x290xbf16, #tpu.memory_space<vmem>>, vector<16x256xbf16>
    %c4 = arith.constant 4 : index
    %c0_45 = arith.constant 0 : index
    %c0_46 = arith.constant 0 : index
    %49 = vector.load %arg8[%c4, %c0_45, %c0_46] : memref<9x8x16xbf16, #tpu.memory_space<vmem>>, vector<1x8x16xbf16>
    %50 = vector.shape_cast %49 : vector<1x8x16xbf16> to vector<8x16xbf16>
    %cst_47 = arith.constant dense<0.000000e+00> : vector<8x256xf32>
    %51 = tpu.matmul %50, %48, %cst_47 {dimension_numbers = #tpu.dot_dimension_numbers<[1], [0], [0], [1], [0, 0, 1, 1], [], []>} : vector<8x16xbf16>, vector<16x256xbf16>, vector<8x256xf32> -> vector<8x256xf32>
    %52 = arith.addf %47, %51 : vector<8x256xf32>
    %c0_48 = arith.constant 0 : index
    %c18 = arith.constant 18 : index
    %53 = vector.load %arg20[%c0_48, %c18] : memref<16x290xbf16, #tpu.memory_space<vmem>>, vector<16x256xbf16>
    %c5 = arith.constant 5 : index
    %c0_49 = arith.constant 0 : index
    %c0_50 = arith.constant 0 : index
    %54 = vector.load %arg8[%c5, %c0_49, %c0_50] : memref<9x8x16xbf16, #tpu.memory_space<vmem>>, vector<1x8x16xbf16>
    %55 = vector.shape_cast %54 : vector<1x8x16xbf16> to vector<8x16xbf16>
    %cst_51 = arith.constant dense<0.000000e+00> : vector<8x256xf32>
    %56 = tpu.matmul %55, %53, %cst_51 {dimension_numbers = #tpu.dot_dimension_numbers<[1], [0], [0], [1], [0, 0, 1, 1], [], []>} : vector<8x16xbf16>, vector<16x256xbf16>, vector<8x256xf32> -> vector<8x256xf32>
    %57 = arith.addf %52, %56 : vector<8x256xf32>
    %c0_52 = arith.constant 0 : index
    %c32 = arith.constant 32 : index
    %58 = vector.load %arg20[%c0_52, %c32] : memref<16x290xbf16, #tpu.memory_space<vmem>>, vector<16x256xbf16>
    %c6 = arith.constant 6 : index
    %c0_53 = arith.constant 0 : index
    %c0_54 = arith.constant 0 : index
    %59 = vector.load %arg8[%c6, %c0_53, %c0_54] : memref<9x8x16xbf16, #tpu.memory_space<vmem>>, vector<1x8x16xbf16>
    %60 = vector.shape_cast %59 : vector<1x8x16xbf16> to vector<8x16xbf16>
    %cst_55 = arith.constant dense<0.000000e+00> : vector<8x256xf32>
    %61 = tpu.matmul %60, %58, %cst_55 {dimension_numbers = #tpu.dot_dimension_numbers<[1], [0], [0], [1], [0, 0, 1, 1], [], []>} : vector<8x16xbf16>, vector<16x256xbf16>, vector<8x256xf32> -> vector<8x256xf32>
    %62 = arith.addf %57, %61 : vector<8x256xf32>
    %c0_56 = arith.constant 0 : index
    %c33 = arith.constant 33 : index
    %63 = vector.load %arg20[%c0_56, %c33] : memref<16x290xbf16, #tpu.memory_space<vmem>>, vector<16x256xbf16>
    %c7 = arith.constant 7 : index
    %c0_57 = arith.constant 0 : index
    %c0_58 = arith.constant 0 : index
    %64 = vector.load %arg8[%c7, %c0_57, %c0_58] : memref<9x8x16xbf16, #tpu.memory_space<vmem>>, vector<1x8x16xbf16>
    %65 = vector.shape_cast %64 : vector<1x8x16xbf16> to vector<8x16xbf16>
    %cst_59 = arith.constant dense<0.000000e+00> : vector<8x256xf32>
    %66 = tpu.matmul %65, %63, %cst_59 {dimension_numbers = #tpu.dot_dimension_numbers<[1], [0], [0], [1], [0, 0, 1, 1], [], []>} : vector<8x16xbf16>, vector<16x256xbf16>, vector<8x256xf32> -> vector<8x256xf32>
    %67 = arith.addf %62, %66 : vector<8x256xf32>
    %c0_60 = arith.constant 0 : index
    %c34 = arith.constant 34 : index
    %68 = vector.load %arg20[%c0_60, %c34] : memref<16x290xbf16, #tpu.memory_space<vmem>>, vector<16x256xbf16>
    %c8 = arith.constant 8 : index
    %c0_61 = arith.constant 0 : index
    %c0_62 = arith.constant 0 : index
    %69 = vector.load %arg8[%c8, %c0_61, %c0_62] : memref<9x8x16xbf16, #tpu.memory_space<vmem>>, vector<1x8x16xbf16>
    %70 = vector.shape_cast %69 : vector<1x8x16xbf16> to vector<8x16xbf16>
    %cst_63 = arith.constant dense<0.000000e+00> : vector<8x256xf32>
    %71 = tpu.matmul %70, %68, %cst_63 {dimension_numbers = #tpu.dot_dimension_numbers<[1], [0], [0], [1], [0, 0, 1, 1], [], []>} : vector<8x16xbf16>, vector<16x256xbf16>, vector<8x256xf32> -> vector<8x256xf32>
    %72 = arith.addf %67, %71 : vector<8x256xf32>
    %73 = vector.broadcast %0 : vector<1x256xf32> to vector<8x256xf32>
    %74 = arith.mulf %72, %73 : vector<8x256xf32>
    %c16_64 = arith.constant 16 : index
    %c0_65 = arith.constant 0 : index
    %75 = vector.load %arg19[%c16_64, %c0_65] : memref<32x256xf32, #tpu.memory_space<vmem>>, vector<8x256xf32>
    tpu.vector_store %arg19[%c16_64, %c0_65], %74 {strides = array<i32>} : memref<32x256xf32, #tpu.memory_space<vmem>>, vector<8x256xf32>,
    %c0_66 = arith.constant 0 : index
    %c0_67 = arith.constant 0 : index
    %76 = vector.load %arg19[%c0_66, %c0_67] : memref<32x256xf32, #tpu.memory_space<vmem>>, vector<24x256xf32>
    %c0_68 = arith.constant 0 : index
    %c0_69 = arith.constant 0 : index
    %77 = vector.load %arg9[%c0_68, %c0_69] : memref<24x1xf32, #tpu.memory_space<vmem>>, vector<24x1xf32>
    %78 = vector.broadcast %77 : vector<24x1xf32> to vector<24x256xf32>
    %79 = arith.mulf %76, %78 : vector<24x256xf32>
    %c0_70 = arith.constant 0 : index
    %c0_71 = arith.constant 0 : index
    %80 = vector.load %arg10[%c0_70, %c0_71] : memref<24x1xf32, #tpu.memory_space<vmem>>, vector<24x1xf32>
    %81 = vector.broadcast %80 : vector<24x1xf32> to vector<24x256xf32>
    %82 = arith.addf %79, %81 : vector<24x256xf32>
    %cst_72 = arith.constant 0.000000e+00 : f32
    %83 = vector.broadcast %cst_72 : f32 to vector<24x256xf32>
    %84 = arith.maximumf %82, %83 : vector<24x256xf32>
    %c0_73 = arith.constant 0 : index
    %c0_74 = arith.constant 0 : index
    %85 = vector.load %arg11[%c0_73, %c0_74] : memref<16x24xbf16, #tpu.memory_space<vmem>>, vector<16x24xbf16>
    %86 = arith.truncf %84 : vector<24x256xf32> to vector<24x256xbf16>
    %cst_75 = arith.constant dense<0.000000e+00> : vector<16x256xf32>
    %87 = tpu.matmul %85, %86, %cst_75 {dimension_numbers = #tpu.dot_dimension_numbers<[1], [0], [0], [1], [0, 0, 1, 1], [], []>} : vector<16x24xbf16>, vector<24x256xbf16>, vector<16x256xf32> -> vector<16x256xf32>
    %c0_76 = arith.constant 0 : index
    %c0_77 = arith.constant 0 : index
    %88 = vector.load %arg12[%c0_76, %c0_77] : memref<16x1xf32, #tpu.memory_space<vmem>>, vector<16x1xf32>
    %89 = vector.broadcast %88 : vector<16x1xf32> to vector<16x256xf32>
    %90 = arith.mulf %87, %89 : vector<16x256xf32>
    %c0_78 = arith.constant 0 : index
    %c0_79 = arith.constant 0 : index
    %91 = vector.load %arg13[%c0_78, %c0_79] : memref<16x1xf32, #tpu.memory_space<vmem>>, vector<16x1xf32>
    %92 = vector.broadcast %91 : vector<16x1xf32> to vector<16x256xf32>
    %93 = arith.addf %90, %92 : vector<16x256xf32>
    %cst_80 = arith.constant 0.000000e+00 : f32
    %94 = vector.broadcast %cst_80 : f32 to vector<16x256xf32>
    %95 = arith.maximumf %93, %94 : vector<16x256xf32>
    %96 = vector.broadcast %0 : vector<1x256xf32> to vector<16x256xf32>
    %97 = arith.mulf %95, %96 : vector<16x256xf32>
    %98 = arith.truncf %97 : vector<16x256xf32> to vector<16x256xbf16>
    %c0_81 = arith.constant 0 : index
    %c17_82 = arith.constant 17 : index
    %99 = vector.load %arg20[%c0_81, %c17_82] : memref<16x290xbf16, #tpu.memory_space<vmem>>, vector<16x256xbf16>
    tpu.vector_store %arg20[%c0_81, %c17_82], %98 {strides = array<i32>} : memref<16x290xbf16, #tpu.memory_space<vmem>>, vector<16x256xbf16>,
    %c0_83 = arith.constant 0 : index
    %c0_84 = arith.constant 0 : index
    %100 = vector.load %arg20[%c0_83, %c0_84] : memref<16x290xbf16, #tpu.memory_space<vmem>>, vector<16x256xbf16>
    %c0_85 = arith.constant 0 : index
    %c0_86 = arith.constant 0 : index
    %c0_87 = arith.constant 0 : index
    %101 = vector.load %arg14[%c0_85, %c0_86, %c0_87] : memref<9x8x16xbf16, #tpu.memory_space<vmem>>, vector<1x8x16xbf16>
    %102 = vector.shape_cast %101 : vector<1x8x16xbf16> to vector<8x16xbf16>
    %cst_88 = arith.constant dense<0.000000e+00> : vector<8x256xf32>
    %103 = tpu.matmul %102, %100, %cst_88 {dimension_numbers = #tpu.dot_dimension_numbers<[1], [0], [0], [1], [0, 0, 1, 1], [], []>} : vector<8x16xbf16>, vector<16x256xbf16>, vector<8x256xf32> -> vector<8x256xf32>
    %c0_89 = arith.constant 0 : index
    %c1_90 = arith.constant 1 : index
    %104 = vector.load %arg20[%c0_89, %c1_90] : memref<16x290xbf16, #tpu.memory_space<vmem>>, vector<16x256xbf16>
    %c1_91 = arith.constant 1 : index
    %c0_92 = arith.constant 0 : index
    %c0_93 = arith.constant 0 : index
    %105 = vector.load %arg14[%c1_91, %c0_92, %c0_93] : memref<9x8x16xbf16, #tpu.memory_space<vmem>>, vector<1x8x16xbf16>
    %106 = vector.shape_cast %105 : vector<1x8x16xbf16> to vector<8x16xbf16>
    %cst_94 = arith.constant dense<0.000000e+00> : vector<8x256xf32>
    %107 = tpu.matmul %106, %104, %cst_94 {dimension_numbers = #tpu.dot_dimension_numbers<[1], [0], [0], [1], [0, 0, 1, 1], [], []>} : vector<8x16xbf16>, vector<16x256xbf16>, vector<8x256xf32> -> vector<8x256xf32>
    %108 = arith.addf %103, %107 : vector<8x256xf32>
    %c0_95 = arith.constant 0 : index
    %c2_96 = arith.constant 2 : index
    %109 = vector.load %arg20[%c0_95, %c2_96] : memref<16x290xbf16, #tpu.memory_space<vmem>>, vector<16x256xbf16>
    %c2_97 = arith.constant 2 : index
    %c0_98 = arith.constant 0 : index
    %c0_99 = arith.constant 0 : index
    %110 = vector.load %arg14[%c2_97, %c0_98, %c0_99] : memref<9x8x16xbf16, #tpu.memory_space<vmem>>, vector<1x8x16xbf16>
    %111 = vector.shape_cast %110 : vector<1x8x16xbf16> to vector<8x16xbf16>
    %cst_100 = arith.constant dense<0.000000e+00> : vector<8x256xf32>
    %112 = tpu.matmul %111, %109, %cst_100 {dimension_numbers = #tpu.dot_dimension_numbers<[1], [0], [0], [1], [0, 0, 1, 1], [], []>} : vector<8x16xbf16>, vector<16x256xbf16>, vector<8x256xf32> -> vector<8x256xf32>
    %113 = arith.addf %108, %112 : vector<8x256xf32>
    %c0_101 = arith.constant 0 : index
    %c16_102 = arith.constant 16 : index
    %114 = vector.load %arg20[%c0_101, %c16_102] : memref<16x290xbf16, #tpu.memory_space<vmem>>, vector<16x256xbf16>
    %c3_103 = arith.constant 3 : index
    %c0_104 = arith.constant 0 : index
    %c0_105 = arith.constant 0 : index
    %115 = vector.load %arg14[%c3_103, %c0_104, %c0_105] : memref<9x8x16xbf16, #tpu.memory_space<vmem>>, vector<1x8x16xbf16>
    %116 = vector.shape_cast %115 : vector<1x8x16xbf16> to vector<8x16xbf16>
    %cst_106 = arith.constant dense<0.000000e+00> : vector<8x256xf32>
    %117 = tpu.matmul %116, %114, %cst_106 {dimension_numbers = #tpu.dot_dimension_numbers<[1], [0], [0], [1], [0, 0, 1, 1], [], []>} : vector<8x16xbf16>, vector<16x256xbf16>, vector<8x256xf32> -> vector<8x256xf32>
    %118 = arith.addf %113, %117 : vector<8x256xf32>
    %c0_107 = arith.constant 0 : index
    %c17_108 = arith.constant 17 : index
    %119 = vector.load %arg20[%c0_107, %c17_108] : memref<16x290xbf16, #tpu.memory_space<vmem>>, vector<16x256xbf16>
    %c4_109 = arith.constant 4 : index
    %c0_110 = arith.constant 0 : index
    %c0_111 = arith.constant 0 : index
    %120 = vector.load %arg14[%c4_109, %c0_110, %c0_111] : memref<9x8x16xbf16, #tpu.memory_space<vmem>>, vector<1x8x16xbf16>
    %121 = vector.shape_cast %120 : vector<1x8x16xbf16> to vector<8x16xbf16>
    %cst_112 = arith.constant dense<0.000000e+00> : vector<8x256xf32>
    %122 = tpu.matmul %121, %119, %cst_112 {dimension_numbers = #tpu.dot_dimension_numbers<[1], [0], [0], [1], [0, 0, 1, 1], [], []>} : vector<8x16xbf16>, vector<16x256xbf16>, vector<8x256xf32> -> vector<8x256xf32>
    %123 = arith.addf %118, %122 : vector<8x256xf32>
    %c0_113 = arith.constant 0 : index
    %c18_114 = arith.constant 18 : index
    %124 = vector.load %arg20[%c0_113, %c18_114] : memref<16x290xbf16, #tpu.memory_space<vmem>>, vector<16x256xbf16>
    %c5_115 = arith.constant 5 : index
    %c0_116 = arith.constant 0 : index
    %c0_117 = arith.constant 0 : index
    %125 = vector.load %arg14[%c5_115, %c0_116, %c0_117] : memref<9x8x16xbf16, #tpu.memory_space<vmem>>, vector<1x8x16xbf16>
    %126 = vector.shape_cast %125 : vector<1x8x16xbf16> to vector<8x16xbf16>
    %cst_118 = arith.constant dense<0.000000e+00> : vector<8x256xf32>
    %127 = tpu.matmul %126, %124, %cst_118 {dimension_numbers = #tpu.dot_dimension_numbers<[1], [0], [0], [1], [0, 0, 1, 1], [], []>} : vector<8x16xbf16>, vector<16x256xbf16>, vector<8x256xf32> -> vector<8x256xf32>
    %128 = arith.addf %123, %127 : vector<8x256xf32>
    %c0_119 = arith.constant 0 : index
    %c32_120 = arith.constant 32 : index
    %129 = vector.load %arg20[%c0_119, %c32_120] : memref<16x290xbf16, #tpu.memory_space<vmem>>, vector<16x256xbf16>
    %c6_121 = arith.constant 6 : index
    %c0_122 = arith.constant 0 : index
    %c0_123 = arith.constant 0 : index
    %130 = vector.load %arg14[%c6_121, %c0_122, %c0_123] : memref<9x8x16xbf16, #tpu.memory_space<vmem>>, vector<1x8x16xbf16>
    %131 = vector.shape_cast %130 : vector<1x8x16xbf16> to vector<8x16xbf16>
    %cst_124 = arith.constant dense<0.000000e+00> : vector<8x256xf32>
    %132 = tpu.matmul %131, %129, %cst_124 {dimension_numbers = #tpu.dot_dimension_numbers<[1], [0], [0], [1], [0, 0, 1, 1], [], []>} : vector<8x16xbf16>, vector<16x256xbf16>, vector<8x256xf32> -> vector<8x256xf32>
    %133 = arith.addf %128, %132 : vector<8x256xf32>
    %c0_125 = arith.constant 0 : index
    %c33_126 = arith.constant 33 : index
    %134 = vector.load %arg20[%c0_125, %c33_126] : memref<16x290xbf16, #tpu.memory_space<vmem>>, vector<16x256xbf16>
    %c7_127 = arith.constant 7 : index
    %c0_128 = arith.constant 0 : index
    %c0_129 = arith.constant 0 : index
    %135 = vector.load %arg14[%c7_127, %c0_128, %c0_129] : memref<9x8x16xbf16, #tpu.memory_space<vmem>>, vector<1x8x16xbf16>
    %136 = vector.shape_cast %135 : vector<1x8x16xbf16> to vector<8x16xbf16>
    %cst_130 = arith.constant dense<0.000000e+00> : vector<8x256xf32>
    %137 = tpu.matmul %136, %134, %cst_130 {dimension_numbers = #tpu.dot_dimension_numbers<[1], [0], [0], [1], [0, 0, 1, 1], [], []>} : vector<8x16xbf16>, vector<16x256xbf16>, vector<8x256xf32> -> vector<8x256xf32>
    %138 = arith.addf %133, %137 : vector<8x256xf32>
    %c0_131 = arith.constant 0 : index
    %c34_132 = arith.constant 34 : index
    %139 = vector.load %arg20[%c0_131, %c34_132] : memref<16x290xbf16, #tpu.memory_space<vmem>>, vector<16x256xbf16>
    %c8_133 = arith.constant 8 : index
    %c0_134 = arith.constant 0 : index
    %c0_135 = arith.constant 0 : index
    %140 = vector.load %arg14[%c8_133, %c0_134, %c0_135] : memref<9x8x16xbf16, #tpu.memory_space<vmem>>, vector<1x8x16xbf16>
    %141 = vector.shape_cast %140 : vector<1x8x16xbf16> to vector<8x16xbf16>
    %cst_136 = arith.constant dense<0.000000e+00> : vector<8x256xf32>
    %142 = tpu.matmul %141, %139, %cst_136 {dimension_numbers = #tpu.dot_dimension_numbers<[1], [0], [0], [1], [0, 0, 1, 1], [], []>} : vector<8x16xbf16>, vector<16x256xbf16>, vector<8x256xf32> -> vector<8x256xf32>
    %143 = arith.addf %138, %142 : vector<8x256xf32>
    %144 = vector.broadcast %0 : vector<1x256xf32> to vector<8x256xf32>
    %145 = arith.mulf %143, %144 : vector<8x256xf32>
    %c24 = arith.constant 24 : index
    %c0_137 = arith.constant 0 : index
    %146 = vector.load %arg19[%c24, %c0_137] : memref<32x256xf32, #tpu.memory_space<vmem>>, vector<8x256xf32>
    tpu.vector_store %arg19[%c24, %c0_137], %145 {strides = array<i32>} : memref<32x256xf32, #tpu.memory_space<vmem>>, vector<8x256xf32>,
    %c0_138 = arith.constant 0 : index
    %c0_139 = arith.constant 0 : index
    %147 = vector.load %arg19[%c0_138, %c0_139] : memref<32x256xf32, #tpu.memory_space<vmem>>, vector<32x256xf32>
    %c0_140 = arith.constant 0 : index
    %c0_141 = arith.constant 0 : index
    %148 = vector.load %arg15[%c0_140, %c0_141] : memref<32x1xf32, #tpu.memory_space<vmem>>, vector<32x1xf32>
    %149 = vector.broadcast %148 : vector<32x1xf32> to vector<32x256xf32>
    %150 = arith.mulf %147, %149 : vector<32x256xf32>
    %c0_142 = arith.constant 0 : index
    %c0_143 = arith.constant 0 : index
    %151 = vector.load %arg16[%c0_142, %c0_143] : memref<32x1xf32, #tpu.memory_space<vmem>>, vector<32x1xf32>
    %152 = vector.broadcast %151 : vector<32x1xf32> to vector<32x256xf32>
    %153 = arith.addf %150, %152 : vector<32x256xf32>
    %cst_144 = arith.constant 0.000000e+00 : f32
    %154 = vector.broadcast %cst_144 : f32 to vector<32x256xf32>
    %155 = arith.maximumf %153, %154 : vector<32x256xf32>
    %c0_145 = arith.constant 0 : index
    %c0_146 = arith.constant 0 : index
    %156 = vector.load %arg17[%c0_145, %c0_146] : memref<16x32xbf16, #tpu.memory_space<vmem>>, vector<16x32xbf16>
    %157 = arith.truncf %155 : vector<32x256xf32> to vector<32x256xbf16>
    %cst_147 = arith.constant dense<0.000000e+00> : vector<16x256xf32>
    %158 = tpu.matmul %156, %157, %cst_147 {dimension_numbers = #tpu.dot_dimension_numbers<[1], [0], [0], [1], [0, 0, 1, 1], [], []>} : vector<16x32xbf16>, vector<32x256xbf16>, vector<16x256xf32> -> vector<16x256xf32>
    %c0_148 = arith.constant 0 : index
    %c0_149 = arith.constant 0 : index
    %159 = vector.load %arg18[%c0_148, %c0_149] : memref<16x256xf32, #tpu.memory_space<vmem>>, vector<16x256xf32>
    tpu.vector_store %arg18[%c0_148, %c0_149], %158 {strides = array<i32>} : memref<16x256xf32, #tpu.memory_space<vmem>>, vector<16x256xf32>,
    return
  }
  func.func @transform_0(%arg0: i32) -> (i32, i32) {
    %c0_i32 = arith.constant 0 : i32
    %c0_i32_0 = arith.constant 0 : i32
    %c0_i32_1 = arith.constant 0 : i32
    return %c0_i32, %c0_i32_0 : i32, i32
  }
  func.func @transform_1(%arg0: i32) -> (i32, i32) {
    %c0_i32 = arith.constant 0 : i32
    %c0_i32_0 = arith.constant 0 : i32
    return %c0_i32, %arg0 : i32, i32
  }
  func.func @transform_2(%arg0: i32) -> (i32, i32) {
    %c0_i32 = arith.constant 0 : i32
    %c0_i32_0 = arith.constant 0 : i32
    %c0_i32_1 = arith.constant 0 : i32
    return %c0_i32, %c0_i32_0 : i32, i32
  }
  func.func @transform_3(%arg0: i32) -> (i32, i32) {
    %c0_i32 = arith.constant 0 : i32
    %c0_i32_0 = arith.constant 0 : i32
    %c0_i32_1 = arith.constant 0 : i32
    return %c0_i32, %c0_i32_0 : i32, i32
  }
  func.func @transform_4(%arg0: i32) -> (i32, i32) {
    %c0_i32 = arith.constant 0 : i32
    %c0_i32_0 = arith.constant 0 : i32
    %c0_i32_1 = arith.constant 0 : i32
    return %c0_i32, %c0_i32_0 : i32, i32
  }
  func.func @transform_5(%arg0: i32) -> (i32, i32) {
    %c0_i32 = arith.constant 0 : i32
    %c0_i32_0 = arith.constant 0 : i32
    %c0_i32_1 = arith.constant 0 : i32
    return %c0_i32, %c0_i32_0 : i32, i32
  }
  func.func @transform_6(%arg0: i32) -> (i32, i32) {
    %c0_i32 = arith.constant 0 : i32
    %c0_i32_0 = arith.constant 0 : i32
    %c0_i32_1 = arith.constant 0 : i32
    return %c0_i32, %c0_i32_0 : i32, i32
  }
  func.func @transform_7(%arg0: i32) -> (i32, i32, i32) {
    %c0_i32 = arith.constant 0 : i32
    %c0_i32_0 = arith.constant 0 : i32
    %c0_i32_1 = arith.constant 0 : i32
    %c0_i32_2 = arith.constant 0 : i32
    return %c0_i32, %c0_i32_0, %c0_i32_1 : i32, i32, i32
  }
  func.func @transform_8(%arg0: i32) -> (i32, i32) {
    %c0_i32 = arith.constant 0 : i32
    %c0_i32_0 = arith.constant 0 : i32
    %c0_i32_1 = arith.constant 0 : i32
    return %c0_i32, %c0_i32_0 : i32, i32
  }
  func.func @transform_9(%arg0: i32) -> (i32, i32) {
    %c0_i32 = arith.constant 0 : i32
    %c0_i32_0 = arith.constant 0 : i32
    %c0_i32_1 = arith.constant 0 : i32
    return %c0_i32, %c0_i32_0 : i32, i32
  }
  func.func @transform_10(%arg0: i32) -> (i32, i32) {
    %c0_i32 = arith.constant 0 : i32
    %c0_i32_0 = arith.constant 0 : i32
    %c0_i32_1 = arith.constant 0 : i32
    return %c0_i32, %c0_i32_0 : i32, i32
  }
  func.func @transform_11(%arg0: i32) -> (i32, i32) {
    %c0_i32 = arith.constant 0 : i32
    %c0_i32_0 = arith.constant 0 : i32
    %c0_i32_1 = arith.constant 0 : i32
    return %c0_i32, %c0_i32_0 : i32, i32
  }
  func.func @transform_12(%arg0: i32) -> (i32, i32) {
    %c0_i32 = arith.constant 0 : i32
    %c0_i32_0 = arith.constant 0 : i32
    %c0_i32_1 = arith.constant 0 : i32
    return %c0_i32, %c0_i32_0 : i32, i32
  }
  func.func @transform_13(%arg0: i32) -> (i32, i32, i32) {
    %c0_i32 = arith.constant 0 : i32
    %c0_i32_0 = arith.constant 0 : i32
    %c0_i32_1 = arith.constant 0 : i32
    %c0_i32_2 = arith.constant 0 : i32
    return %c0_i32, %c0_i32_0, %c0_i32_1 : i32, i32, i32
  }
  func.func @transform_14(%arg0: i32) -> (i32, i32) {
    %c0_i32 = arith.constant 0 : i32
    %c0_i32_0 = arith.constant 0 : i32
    %c0_i32_1 = arith.constant 0 : i32
    return %c0_i32, %c0_i32_0 : i32, i32
  }
  func.func @transform_15(%arg0: i32) -> (i32, i32) {
    %c0_i32 = arith.constant 0 : i32
    %c0_i32_0 = arith.constant 0 : i32
    %c0_i32_1 = arith.constant 0 : i32
    return %c0_i32, %c0_i32_0 : i32, i32
  }
  func.func @transform_16(%arg0: i32) -> (i32, i32) {
    %c0_i32 = arith.constant 0 : i32
    %c0_i32_0 = arith.constant 0 : i32
    %c0_i32_1 = arith.constant 0 : i32
    return %c0_i32, %c0_i32_0 : i32, i32
  }
  func.func @transform_17(%arg0: i32) -> (i32, i32) {
    %c0_i32 = arith.constant 0 : i32
    %c0_i32_0 = arith.constant 0 : i32
    return %c0_i32, %arg0 : i32, i32
  }
}

module attributes {stable_mosaic.version = 11 : i64} {
  func.func @kernel(%arg0: i32, %arg1: memref<1x128xf32, #tpu.memory_space<vmem>>, %arg2: memref<16x128xf32, #tpu.memory_space<vmem>>, %arg3: memref<16x1xf32, #tpu.memory_space<vmem>>, %arg4: memref<16x1xf32, #tpu.memory_space<vmem>>, %arg5: memref<16x16xbf16, #tpu.memory_space<vmem>>, %arg6: memref<16x1xf32, #tpu.memory_space<vmem>>, %arg7: memref<16x1xf32, #tpu.memory_space<vmem>>, %arg8: memref<9x8x16xbf16, #tpu.memory_space<vmem>>, %arg9: memref<24x1xf32, #tpu.memory_space<vmem>>, %arg10: memref<24x1xf32, #tpu.memory_space<vmem>>, %arg11: memref<16x24xbf16, #tpu.memory_space<vmem>>, %arg12: memref<16x1xf32, #tpu.memory_space<vmem>>, %arg13: memref<16x1xf32, #tpu.memory_space<vmem>>, %arg14: memref<9x8x16xbf16, #tpu.memory_space<vmem>>, %arg15: memref<32x128xf32, #tpu.memory_space<vmem>>, %arg16: memref<16x148xbf16, #tpu.memory_space<vmem>>) attributes {dimension_semantics = [#tpu.dimension_semantics<parallel>], iteration_bounds = array<i64: 2>, scalar_prefetch = 0 : i64, scratch_operands = 1 : i64, tpu.core_type = #tpu.core_type<tc>, window_params = [{pipeline_mode = #tpu.pipeline_mode<synchronous>, transform_indices = @transform_0, window_bounds = array<i64: 1, 128>}, {transform_indices = @transform_1, window_bounds = array<i64: 16, 128>}, {pipeline_mode = #tpu.pipeline_mode<synchronous>, transform_indices = @transform_2, window_bounds = array<i64: 16, 1>}, {pipeline_mode = #tpu.pipeline_mode<synchronous>, transform_indices = @transform_3, window_bounds = array<i64: 16, 1>}, {pipeline_mode = #tpu.pipeline_mode<synchronous>, transform_indices = @transform_4, window_bounds = array<i64: 16, 16>}, {pipeline_mode = #tpu.pipeline_mode<synchronous>, transform_indices = @transform_5, window_bounds = array<i64: 16, 1>}, {pipeline_mode = #tpu.pipeline_mode<synchronous>, transform_indices = @transform_6, window_bounds = array<i64: 16, 1>}, {pipeline_mode = #tpu.pipeline_mode<synchronous>, transform_indices = @transform_7, window_bounds = array<i64: 9, 8, 16>}, {pipeline_mode = #tpu.pipeline_mode<synchronous>, transform_indices = @transform_8, window_bounds = array<i64: 24, 1>}, {pipeline_mode = #tpu.pipeline_mode<synchronous>, transform_indices = @transform_9, window_bounds = array<i64: 24, 1>}, {pipeline_mode = #tpu.pipeline_mode<synchronous>, transform_indices = @transform_10, window_bounds = array<i64: 16, 24>}, {pipeline_mode = #tpu.pipeline_mode<synchronous>, transform_indices = @transform_11, window_bounds = array<i64: 16, 1>}, {pipeline_mode = #tpu.pipeline_mode<synchronous>, transform_indices = @transform_12, window_bounds = array<i64: 16, 1>}, {pipeline_mode = #tpu.pipeline_mode<synchronous>, transform_indices = @transform_13, window_bounds = array<i64: 9, 8, 16>}, {transform_indices = @transform_14, window_bounds = array<i64: 32, 128>}]} {
    %c0 = arith.constant 0 : index
    %c0_0 = arith.constant 0 : index
    %0 = vector.load %arg1[%c0, %c0_0] : memref<1x128xf32, #tpu.memory_space<vmem>>, vector<1x128xf32>
    %cst = arith.constant 0.000000e+00 : bf16
    %1 = vector.broadcast %cst : bf16 to vector<16x148xbf16>
    %c0_1 = arith.constant 0 : index
    %c0_2 = arith.constant 0 : index
    %2 = vector.load %arg16[%c0_1, %c0_2] : memref<16x148xbf16, #tpu.memory_space<vmem>>, vector<16x148xbf16>
    tpu.vector_store %arg16[%c0_1, %c0_2], %1 {strides = array<i32>} : memref<16x148xbf16, #tpu.memory_space<vmem>>, vector<16x148xbf16>,
    %c0_3 = arith.constant 0 : index
    %c0_4 = arith.constant 0 : index
    %3 = vector.load %arg2[%c0_3, %c0_4] : memref<16x128xf32, #tpu.memory_space<vmem>>, vector<16x128xf32>
    %c0_5 = arith.constant 0 : index
    %c0_6 = arith.constant 0 : index
    %4 = vector.load %arg15[%c0_5, %c0_6] : memref<32x128xf32, #tpu.memory_space<vmem>>, vector<16x128xf32>
    tpu.vector_store %arg15[%c0_5, %c0_6], %3 {strides = array<i32>} : memref<32x128xf32, #tpu.memory_space<vmem>>, vector<16x128xf32>,
    %c0_7 = arith.constant 0 : index
    %c0_8 = arith.constant 0 : index
    %5 = vector.load %arg15[%c0_7, %c0_8] : memref<32x128xf32, #tpu.memory_space<vmem>>, vector<16x128xf32>
    %c0_9 = arith.constant 0 : index
    %c0_10 = arith.constant 0 : index
    %6 = vector.load %arg3[%c0_9, %c0_10] : memref<16x1xf32, #tpu.memory_space<vmem>>, vector<16x1xf32>
    %7 = vector.broadcast %6 : vector<16x1xf32> to vector<16x128xf32>
    %8 = arith.mulf %5, %7 : vector<16x128xf32>
    %c0_11 = arith.constant 0 : index
    %c0_12 = arith.constant 0 : index
    %9 = vector.load %arg4[%c0_11, %c0_12] : memref<16x1xf32, #tpu.memory_space<vmem>>, vector<16x1xf32>
    %10 = vector.broadcast %9 : vector<16x1xf32> to vector<16x128xf32>
    %11 = arith.addf %8, %10 : vector<16x128xf32>
    %cst_13 = arith.constant 0.000000e+00 : f32
    %12 = vector.broadcast %cst_13 : f32 to vector<16x128xf32>
    %13 = arith.maximumf %11, %12 : vector<16x128xf32>
    %c0_14 = arith.constant 0 : index
    %c0_15 = arith.constant 0 : index
    %14 = vector.load %arg5[%c0_14, %c0_15] : memref<16x16xbf16, #tpu.memory_space<vmem>>, vector<16x16xbf16>
    %15 = arith.truncf %13 : vector<16x128xf32> to vector<16x128xbf16>
    %cst_16 = arith.constant dense<0.000000e+00> : vector<16x128xf32>
    %16 = tpu.matmul %14, %15, %cst_16 {dimension_numbers = #tpu.dot_dimension_numbers<[1], [0], [0], [1], [0, 0, 1, 1], [], []>} : vector<16x16xbf16>, vector<16x128xbf16>, vector<16x128xf32> -> vector<16x128xf32>
    %c0_17 = arith.constant 0 : index
    %c0_18 = arith.constant 0 : index
    %17 = vector.load %arg6[%c0_17, %c0_18] : memref<16x1xf32, #tpu.memory_space<vmem>>, vector<16x1xf32>
    %18 = vector.broadcast %17 : vector<16x1xf32> to vector<16x128xf32>
    %19 = arith.mulf %16, %18 : vector<16x128xf32>
    %c0_19 = arith.constant 0 : index
    %c0_20 = arith.constant 0 : index
    %20 = vector.load %arg7[%c0_19, %c0_20] : memref<16x1xf32, #tpu.memory_space<vmem>>, vector<16x1xf32>
    %21 = vector.broadcast %20 : vector<16x1xf32> to vector<16x128xf32>
    %22 = arith.addf %19, %21 : vector<16x128xf32>
    %cst_21 = arith.constant 0.000000e+00 : f32
    %23 = vector.broadcast %cst_21 : f32 to vector<16x128xf32>
    %24 = arith.maximumf %22, %23 : vector<16x128xf32>
    %25 = vector.broadcast %0 : vector<1x128xf32> to vector<16x128xf32>
    %26 = arith.mulf %24, %25 : vector<16x128xf32>
    %27 = arith.truncf %26 : vector<16x128xf32> to vector<16x128xbf16>
    %c0_22 = arith.constant 0 : index
    %c10 = arith.constant 10 : index
    %28 = vector.load %arg16[%c0_22, %c10] : memref<16x148xbf16, #tpu.memory_space<vmem>>, vector<16x128xbf16>
    tpu.vector_store %arg16[%c0_22, %c10], %27 {strides = array<i32>} : memref<16x148xbf16, #tpu.memory_space<vmem>>, vector<16x128xbf16>,
    %c0_23 = arith.constant 0 : index
    %c0_24 = arith.constant 0 : index
    %29 = vector.load %arg16[%c0_23, %c0_24] : memref<16x148xbf16, #tpu.memory_space<vmem>>, vector<16x128xbf16>
    %c0_25 = arith.constant 0 : index
    %c0_26 = arith.constant 0 : index
    %c0_27 = arith.constant 0 : index
    %30 = vector.load %arg8[%c0_25, %c0_26, %c0_27] : memref<9x8x16xbf16, #tpu.memory_space<vmem>>, vector<1x8x16xbf16>
    %31 = vector.shape_cast %30 : vector<1x8x16xbf16> to vector<8x16xbf16>
    %cst_28 = arith.constant dense<0.000000e+00> : vector<8x128xf32>
    %32 = tpu.matmul %31, %29, %cst_28 {dimension_numbers = #tpu.dot_dimension_numbers<[1], [0], [0], [1], [0, 0, 1, 1], [], []>} : vector<8x16xbf16>, vector<16x128xbf16>, vector<8x128xf32> -> vector<8x128xf32>
    %c0_29 = arith.constant 0 : index
    %c1 = arith.constant 1 : index
    %33 = vector.load %arg16[%c0_29, %c1] : memref<16x148xbf16, #tpu.memory_space<vmem>>, vector<16x128xbf16>
    %c1_30 = arith.constant 1 : index
    %c0_31 = arith.constant 0 : index
    %c0_32 = arith.constant 0 : index
    %34 = vector.load %arg8[%c1_30, %c0_31, %c0_32] : memref<9x8x16xbf16, #tpu.memory_space<vmem>>, vector<1x8x16xbf16>
    %35 = vector.shape_cast %34 : vector<1x8x16xbf16> to vector<8x16xbf16>
    %cst_33 = arith.constant dense<0.000000e+00> : vector<8x128xf32>
    %36 = tpu.matmul %35, %33, %cst_33 {dimension_numbers = #tpu.dot_dimension_numbers<[1], [0], [0], [1], [0, 0, 1, 1], [], []>} : vector<8x16xbf16>, vector<16x128xbf16>, vector<8x128xf32> -> vector<8x128xf32>
    %37 = arith.addf %32, %36 : vector<8x128xf32>
    %c0_34 = arith.constant 0 : index
    %c2 = arith.constant 2 : index
    %38 = vector.load %arg16[%c0_34, %c2] : memref<16x148xbf16, #tpu.memory_space<vmem>>, vector<16x128xbf16>
    %c2_35 = arith.constant 2 : index
    %c0_36 = arith.constant 0 : index
    %c0_37 = arith.constant 0 : index
    %39 = vector.load %arg8[%c2_35, %c0_36, %c0_37] : memref<9x8x16xbf16, #tpu.memory_space<vmem>>, vector<1x8x16xbf16>
    %40 = vector.shape_cast %39 : vector<1x8x16xbf16> to vector<8x16xbf16>
    %cst_38 = arith.constant dense<0.000000e+00> : vector<8x128xf32>
    %41 = tpu.matmul %40, %38, %cst_38 {dimension_numbers = #tpu.dot_dimension_numbers<[1], [0], [0], [1], [0, 0, 1, 1], [], []>} : vector<8x16xbf16>, vector<16x128xbf16>, vector<8x128xf32> -> vector<8x128xf32>
    %42 = arith.addf %37, %41 : vector<8x128xf32>
    %c0_39 = arith.constant 0 : index
    %c9 = arith.constant 9 : index
    %43 = vector.load %arg16[%c0_39, %c9] : memref<16x148xbf16, #tpu.memory_space<vmem>>, vector<16x128xbf16>
    %c3 = arith.constant 3 : index
    %c0_40 = arith.constant 0 : index
    %c0_41 = arith.constant 0 : index
    %44 = vector.load %arg8[%c3, %c0_40, %c0_41] : memref<9x8x16xbf16, #tpu.memory_space<vmem>>, vector<1x8x16xbf16>
    %45 = vector.shape_cast %44 : vector<1x8x16xbf16> to vector<8x16xbf16>
    %cst_42 = arith.constant dense<0.000000e+00> : vector<8x128xf32>
    %46 = tpu.matmul %45, %43, %cst_42 {dimension_numbers = #tpu.dot_dimension_numbers<[1], [0], [0], [1], [0, 0, 1, 1], [], []>} : vector<8x16xbf16>, vector<16x128xbf16>, vector<8x128xf32> -> vector<8x128xf32>
    %47 = arith.addf %42, %46 : vector<8x128xf32>
    %c0_43 = arith.constant 0 : index
    %c10_44 = arith.constant 10 : index
    %48 = vector.load %arg16[%c0_43, %c10_44] : memref<16x148xbf16, #tpu.memory_space<vmem>>, vector<16x128xbf16>
    %c4 = arith.constant 4 : index
    %c0_45 = arith.constant 0 : index
    %c0_46 = arith.constant 0 : index
    %49 = vector.load %arg8[%c4, %c0_45, %c0_46] : memref<9x8x16xbf16, #tpu.memory_space<vmem>>, vector<1x8x16xbf16>
    %50 = vector.shape_cast %49 : vector<1x8x16xbf16> to vector<8x16xbf16>
    %cst_47 = arith.constant dense<0.000000e+00> : vector<8x128xf32>
    %51 = tpu.matmul %50, %48, %cst_47 {dimension_numbers = #tpu.dot_dimension_numbers<[1], [0], [0], [1], [0, 0, 1, 1], [], []>} : vector<8x16xbf16>, vector<16x128xbf16>, vector<8x128xf32> -> vector<8x128xf32>
    %52 = arith.addf %47, %51 : vector<8x128xf32>
    %c0_48 = arith.constant 0 : index
    %c11 = arith.constant 11 : index
    %53 = vector.load %arg16[%c0_48, %c11] : memref<16x148xbf16, #tpu.memory_space<vmem>>, vector<16x128xbf16>
    %c5 = arith.constant 5 : index
    %c0_49 = arith.constant 0 : index
    %c0_50 = arith.constant 0 : index
    %54 = vector.load %arg8[%c5, %c0_49, %c0_50] : memref<9x8x16xbf16, #tpu.memory_space<vmem>>, vector<1x8x16xbf16>
    %55 = vector.shape_cast %54 : vector<1x8x16xbf16> to vector<8x16xbf16>
    %cst_51 = arith.constant dense<0.000000e+00> : vector<8x128xf32>
    %56 = tpu.matmul %55, %53, %cst_51 {dimension_numbers = #tpu.dot_dimension_numbers<[1], [0], [0], [1], [0, 0, 1, 1], [], []>} : vector<8x16xbf16>, vector<16x128xbf16>, vector<8x128xf32> -> vector<8x128xf32>
    %57 = arith.addf %52, %56 : vector<8x128xf32>
    %c0_52 = arith.constant 0 : index
    %c18 = arith.constant 18 : index
    %58 = vector.load %arg16[%c0_52, %c18] : memref<16x148xbf16, #tpu.memory_space<vmem>>, vector<16x128xbf16>
    %c6 = arith.constant 6 : index
    %c0_53 = arith.constant 0 : index
    %c0_54 = arith.constant 0 : index
    %59 = vector.load %arg8[%c6, %c0_53, %c0_54] : memref<9x8x16xbf16, #tpu.memory_space<vmem>>, vector<1x8x16xbf16>
    %60 = vector.shape_cast %59 : vector<1x8x16xbf16> to vector<8x16xbf16>
    %cst_55 = arith.constant dense<0.000000e+00> : vector<8x128xf32>
    %61 = tpu.matmul %60, %58, %cst_55 {dimension_numbers = #tpu.dot_dimension_numbers<[1], [0], [0], [1], [0, 0, 1, 1], [], []>} : vector<8x16xbf16>, vector<16x128xbf16>, vector<8x128xf32> -> vector<8x128xf32>
    %62 = arith.addf %57, %61 : vector<8x128xf32>
    %c0_56 = arith.constant 0 : index
    %c19 = arith.constant 19 : index
    %63 = vector.load %arg16[%c0_56, %c19] : memref<16x148xbf16, #tpu.memory_space<vmem>>, vector<16x128xbf16>
    %c7 = arith.constant 7 : index
    %c0_57 = arith.constant 0 : index
    %c0_58 = arith.constant 0 : index
    %64 = vector.load %arg8[%c7, %c0_57, %c0_58] : memref<9x8x16xbf16, #tpu.memory_space<vmem>>, vector<1x8x16xbf16>
    %65 = vector.shape_cast %64 : vector<1x8x16xbf16> to vector<8x16xbf16>
    %cst_59 = arith.constant dense<0.000000e+00> : vector<8x128xf32>
    %66 = tpu.matmul %65, %63, %cst_59 {dimension_numbers = #tpu.dot_dimension_numbers<[1], [0], [0], [1], [0, 0, 1, 1], [], []>} : vector<8x16xbf16>, vector<16x128xbf16>, vector<8x128xf32> -> vector<8x128xf32>
    %67 = arith.addf %62, %66 : vector<8x128xf32>
    %c0_60 = arith.constant 0 : index
    %c20 = arith.constant 20 : index
    %68 = vector.load %arg16[%c0_60, %c20] : memref<16x148xbf16, #tpu.memory_space<vmem>>, vector<16x128xbf16>
    %c8 = arith.constant 8 : index
    %c0_61 = arith.constant 0 : index
    %c0_62 = arith.constant 0 : index
    %69 = vector.load %arg8[%c8, %c0_61, %c0_62] : memref<9x8x16xbf16, #tpu.memory_space<vmem>>, vector<1x8x16xbf16>
    %70 = vector.shape_cast %69 : vector<1x8x16xbf16> to vector<8x16xbf16>
    %cst_63 = arith.constant dense<0.000000e+00> : vector<8x128xf32>
    %71 = tpu.matmul %70, %68, %cst_63 {dimension_numbers = #tpu.dot_dimension_numbers<[1], [0], [0], [1], [0, 0, 1, 1], [], []>} : vector<8x16xbf16>, vector<16x128xbf16>, vector<8x128xf32> -> vector<8x128xf32>
    %72 = arith.addf %67, %71 : vector<8x128xf32>
    %73 = vector.broadcast %0 : vector<1x128xf32> to vector<8x128xf32>
    %74 = arith.mulf %72, %73 : vector<8x128xf32>
    %c16 = arith.constant 16 : index
    %c0_64 = arith.constant 0 : index
    %75 = vector.load %arg15[%c16, %c0_64] : memref<32x128xf32, #tpu.memory_space<vmem>>, vector<8x128xf32>
    tpu.vector_store %arg15[%c16, %c0_64], %74 {strides = array<i32>} : memref<32x128xf32, #tpu.memory_space<vmem>>, vector<8x128xf32>,
    %c0_65 = arith.constant 0 : index
    %c0_66 = arith.constant 0 : index
    %76 = vector.load %arg15[%c0_65, %c0_66] : memref<32x128xf32, #tpu.memory_space<vmem>>, vector<24x128xf32>
    %c0_67 = arith.constant 0 : index
    %c0_68 = arith.constant 0 : index
    %77 = vector.load %arg9[%c0_67, %c0_68] : memref<24x1xf32, #tpu.memory_space<vmem>>, vector<24x1xf32>
    %78 = vector.broadcast %77 : vector<24x1xf32> to vector<24x128xf32>
    %79 = arith.mulf %76, %78 : vector<24x128xf32>
    %c0_69 = arith.constant 0 : index
    %c0_70 = arith.constant 0 : index
    %80 = vector.load %arg10[%c0_69, %c0_70] : memref<24x1xf32, #tpu.memory_space<vmem>>, vector<24x1xf32>
    %81 = vector.broadcast %80 : vector<24x1xf32> to vector<24x128xf32>
    %82 = arith.addf %79, %81 : vector<24x128xf32>
    %cst_71 = arith.constant 0.000000e+00 : f32
    %83 = vector.broadcast %cst_71 : f32 to vector<24x128xf32>
    %84 = arith.maximumf %82, %83 : vector<24x128xf32>
    %c0_72 = arith.constant 0 : index
    %c0_73 = arith.constant 0 : index
    %85 = vector.load %arg11[%c0_72, %c0_73] : memref<16x24xbf16, #tpu.memory_space<vmem>>, vector<16x24xbf16>
    %86 = arith.truncf %84 : vector<24x128xf32> to vector<24x128xbf16>
    %cst_74 = arith.constant dense<0.000000e+00> : vector<16x128xf32>
    %87 = tpu.matmul %85, %86, %cst_74 {dimension_numbers = #tpu.dot_dimension_numbers<[1], [0], [0], [1], [0, 0, 1, 1], [], []>} : vector<16x24xbf16>, vector<24x128xbf16>, vector<16x128xf32> -> vector<16x128xf32>
    %c0_75 = arith.constant 0 : index
    %c0_76 = arith.constant 0 : index
    %88 = vector.load %arg12[%c0_75, %c0_76] : memref<16x1xf32, #tpu.memory_space<vmem>>, vector<16x1xf32>
    %89 = vector.broadcast %88 : vector<16x1xf32> to vector<16x128xf32>
    %90 = arith.mulf %87, %89 : vector<16x128xf32>
    %c0_77 = arith.constant 0 : index
    %c0_78 = arith.constant 0 : index
    %91 = vector.load %arg13[%c0_77, %c0_78] : memref<16x1xf32, #tpu.memory_space<vmem>>, vector<16x1xf32>
    %92 = vector.broadcast %91 : vector<16x1xf32> to vector<16x128xf32>
    %93 = arith.addf %90, %92 : vector<16x128xf32>
    %cst_79 = arith.constant 0.000000e+00 : f32
    %94 = vector.broadcast %cst_79 : f32 to vector<16x128xf32>
    %95 = arith.maximumf %93, %94 : vector<16x128xf32>
    %96 = vector.broadcast %0 : vector<1x128xf32> to vector<16x128xf32>
    %97 = arith.mulf %95, %96 : vector<16x128xf32>
    %98 = arith.truncf %97 : vector<16x128xf32> to vector<16x128xbf16>
    %c0_80 = arith.constant 0 : index
    %c10_81 = arith.constant 10 : index
    %99 = vector.load %arg16[%c0_80, %c10_81] : memref<16x148xbf16, #tpu.memory_space<vmem>>, vector<16x128xbf16>
    tpu.vector_store %arg16[%c0_80, %c10_81], %98 {strides = array<i32>} : memref<16x148xbf16, #tpu.memory_space<vmem>>, vector<16x128xbf16>,
    %c0_82 = arith.constant 0 : index
    %c0_83 = arith.constant 0 : index
    %100 = vector.load %arg16[%c0_82, %c0_83] : memref<16x148xbf16, #tpu.memory_space<vmem>>, vector<16x128xbf16>
    %c0_84 = arith.constant 0 : index
    %c0_85 = arith.constant 0 : index
    %c0_86 = arith.constant 0 : index
    %101 = vector.load %arg14[%c0_84, %c0_85, %c0_86] : memref<9x8x16xbf16, #tpu.memory_space<vmem>>, vector<1x8x16xbf16>
    %102 = vector.shape_cast %101 : vector<1x8x16xbf16> to vector<8x16xbf16>
    %cst_87 = arith.constant dense<0.000000e+00> : vector<8x128xf32>
    %103 = tpu.matmul %102, %100, %cst_87 {dimension_numbers = #tpu.dot_dimension_numbers<[1], [0], [0], [1], [0, 0, 1, 1], [], []>} : vector<8x16xbf16>, vector<16x128xbf16>, vector<8x128xf32> -> vector<8x128xf32>
    %c0_88 = arith.constant 0 : index
    %c1_89 = arith.constant 1 : index
    %104 = vector.load %arg16[%c0_88, %c1_89] : memref<16x148xbf16, #tpu.memory_space<vmem>>, vector<16x128xbf16>
    %c1_90 = arith.constant 1 : index
    %c0_91 = arith.constant 0 : index
    %c0_92 = arith.constant 0 : index
    %105 = vector.load %arg14[%c1_90, %c0_91, %c0_92] : memref<9x8x16xbf16, #tpu.memory_space<vmem>>, vector<1x8x16xbf16>
    %106 = vector.shape_cast %105 : vector<1x8x16xbf16> to vector<8x16xbf16>
    %cst_93 = arith.constant dense<0.000000e+00> : vector<8x128xf32>
    %107 = tpu.matmul %106, %104, %cst_93 {dimension_numbers = #tpu.dot_dimension_numbers<[1], [0], [0], [1], [0, 0, 1, 1], [], []>} : vector<8x16xbf16>, vector<16x128xbf16>, vector<8x128xf32> -> vector<8x128xf32>
    %108 = arith.addf %103, %107 : vector<8x128xf32>
    %c0_94 = arith.constant 0 : index
    %c2_95 = arith.constant 2 : index
    %109 = vector.load %arg16[%c0_94, %c2_95] : memref<16x148xbf16, #tpu.memory_space<vmem>>, vector<16x128xbf16>
    %c2_96 = arith.constant 2 : index
    %c0_97 = arith.constant 0 : index
    %c0_98 = arith.constant 0 : index
    %110 = vector.load %arg14[%c2_96, %c0_97, %c0_98] : memref<9x8x16xbf16, #tpu.memory_space<vmem>>, vector<1x8x16xbf16>
    %111 = vector.shape_cast %110 : vector<1x8x16xbf16> to vector<8x16xbf16>
    %cst_99 = arith.constant dense<0.000000e+00> : vector<8x128xf32>
    %112 = tpu.matmul %111, %109, %cst_99 {dimension_numbers = #tpu.dot_dimension_numbers<[1], [0], [0], [1], [0, 0, 1, 1], [], []>} : vector<8x16xbf16>, vector<16x128xbf16>, vector<8x128xf32> -> vector<8x128xf32>
    %113 = arith.addf %108, %112 : vector<8x128xf32>
    %c0_100 = arith.constant 0 : index
    %c9_101 = arith.constant 9 : index
    %114 = vector.load %arg16[%c0_100, %c9_101] : memref<16x148xbf16, #tpu.memory_space<vmem>>, vector<16x128xbf16>
    %c3_102 = arith.constant 3 : index
    %c0_103 = arith.constant 0 : index
    %c0_104 = arith.constant 0 : index
    %115 = vector.load %arg14[%c3_102, %c0_103, %c0_104] : memref<9x8x16xbf16, #tpu.memory_space<vmem>>, vector<1x8x16xbf16>
    %116 = vector.shape_cast %115 : vector<1x8x16xbf16> to vector<8x16xbf16>
    %cst_105 = arith.constant dense<0.000000e+00> : vector<8x128xf32>
    %117 = tpu.matmul %116, %114, %cst_105 {dimension_numbers = #tpu.dot_dimension_numbers<[1], [0], [0], [1], [0, 0, 1, 1], [], []>} : vector<8x16xbf16>, vector<16x128xbf16>, vector<8x128xf32> -> vector<8x128xf32>
    %118 = arith.addf %113, %117 : vector<8x128xf32>
    %c0_106 = arith.constant 0 : index
    %c10_107 = arith.constant 10 : index
    %119 = vector.load %arg16[%c0_106, %c10_107] : memref<16x148xbf16, #tpu.memory_space<vmem>>, vector<16x128xbf16>
    %c4_108 = arith.constant 4 : index
    %c0_109 = arith.constant 0 : index
    %c0_110 = arith.constant 0 : index
    %120 = vector.load %arg14[%c4_108, %c0_109, %c0_110] : memref<9x8x16xbf16, #tpu.memory_space<vmem>>, vector<1x8x16xbf16>
    %121 = vector.shape_cast %120 : vector<1x8x16xbf16> to vector<8x16xbf16>
    %cst_111 = arith.constant dense<0.000000e+00> : vector<8x128xf32>
    %122 = tpu.matmul %121, %119, %cst_111 {dimension_numbers = #tpu.dot_dimension_numbers<[1], [0], [0], [1], [0, 0, 1, 1], [], []>} : vector<8x16xbf16>, vector<16x128xbf16>, vector<8x128xf32> -> vector<8x128xf32>
    %123 = arith.addf %118, %122 : vector<8x128xf32>
    %c0_112 = arith.constant 0 : index
    %c11_113 = arith.constant 11 : index
    %124 = vector.load %arg16[%c0_112, %c11_113] : memref<16x148xbf16, #tpu.memory_space<vmem>>, vector<16x128xbf16>
    %c5_114 = arith.constant 5 : index
    %c0_115 = arith.constant 0 : index
    %c0_116 = arith.constant 0 : index
    %125 = vector.load %arg14[%c5_114, %c0_115, %c0_116] : memref<9x8x16xbf16, #tpu.memory_space<vmem>>, vector<1x8x16xbf16>
    %126 = vector.shape_cast %125 : vector<1x8x16xbf16> to vector<8x16xbf16>
    %cst_117 = arith.constant dense<0.000000e+00> : vector<8x128xf32>
    %127 = tpu.matmul %126, %124, %cst_117 {dimension_numbers = #tpu.dot_dimension_numbers<[1], [0], [0], [1], [0, 0, 1, 1], [], []>} : vector<8x16xbf16>, vector<16x128xbf16>, vector<8x128xf32> -> vector<8x128xf32>
    %128 = arith.addf %123, %127 : vector<8x128xf32>
    %c0_118 = arith.constant 0 : index
    %c18_119 = arith.constant 18 : index
    %129 = vector.load %arg16[%c0_118, %c18_119] : memref<16x148xbf16, #tpu.memory_space<vmem>>, vector<16x128xbf16>
    %c6_120 = arith.constant 6 : index
    %c0_121 = arith.constant 0 : index
    %c0_122 = arith.constant 0 : index
    %130 = vector.load %arg14[%c6_120, %c0_121, %c0_122] : memref<9x8x16xbf16, #tpu.memory_space<vmem>>, vector<1x8x16xbf16>
    %131 = vector.shape_cast %130 : vector<1x8x16xbf16> to vector<8x16xbf16>
    %cst_123 = arith.constant dense<0.000000e+00> : vector<8x128xf32>
    %132 = tpu.matmul %131, %129, %cst_123 {dimension_numbers = #tpu.dot_dimension_numbers<[1], [0], [0], [1], [0, 0, 1, 1], [], []>} : vector<8x16xbf16>, vector<16x128xbf16>, vector<8x128xf32> -> vector<8x128xf32>
    %133 = arith.addf %128, %132 : vector<8x128xf32>
    %c0_124 = arith.constant 0 : index
    %c19_125 = arith.constant 19 : index
    %134 = vector.load %arg16[%c0_124, %c19_125] : memref<16x148xbf16, #tpu.memory_space<vmem>>, vector<16x128xbf16>
    %c7_126 = arith.constant 7 : index
    %c0_127 = arith.constant 0 : index
    %c0_128 = arith.constant 0 : index
    %135 = vector.load %arg14[%c7_126, %c0_127, %c0_128] : memref<9x8x16xbf16, #tpu.memory_space<vmem>>, vector<1x8x16xbf16>
    %136 = vector.shape_cast %135 : vector<1x8x16xbf16> to vector<8x16xbf16>
    %cst_129 = arith.constant dense<0.000000e+00> : vector<8x128xf32>
    %137 = tpu.matmul %136, %134, %cst_129 {dimension_numbers = #tpu.dot_dimension_numbers<[1], [0], [0], [1], [0, 0, 1, 1], [], []>} : vector<8x16xbf16>, vector<16x128xbf16>, vector<8x128xf32> -> vector<8x128xf32>
    %138 = arith.addf %133, %137 : vector<8x128xf32>
    %c0_130 = arith.constant 0 : index
    %c20_131 = arith.constant 20 : index
    %139 = vector.load %arg16[%c0_130, %c20_131] : memref<16x148xbf16, #tpu.memory_space<vmem>>, vector<16x128xbf16>
    %c8_132 = arith.constant 8 : index
    %c0_133 = arith.constant 0 : index
    %c0_134 = arith.constant 0 : index
    %140 = vector.load %arg14[%c8_132, %c0_133, %c0_134] : memref<9x8x16xbf16, #tpu.memory_space<vmem>>, vector<1x8x16xbf16>
    %141 = vector.shape_cast %140 : vector<1x8x16xbf16> to vector<8x16xbf16>
    %cst_135 = arith.constant dense<0.000000e+00> : vector<8x128xf32>
    %142 = tpu.matmul %141, %139, %cst_135 {dimension_numbers = #tpu.dot_dimension_numbers<[1], [0], [0], [1], [0, 0, 1, 1], [], []>} : vector<8x16xbf16>, vector<16x128xbf16>, vector<8x128xf32> -> vector<8x128xf32>
    %143 = arith.addf %138, %142 : vector<8x128xf32>
    %144 = vector.broadcast %0 : vector<1x128xf32> to vector<8x128xf32>
    %145 = arith.mulf %143, %144 : vector<8x128xf32>
    %c24 = arith.constant 24 : index
    %c0_136 = arith.constant 0 : index
    %146 = vector.load %arg15[%c24, %c0_136] : memref<32x128xf32, #tpu.memory_space<vmem>>, vector<8x128xf32>
    tpu.vector_store %arg15[%c24, %c0_136], %145 {strides = array<i32>} : memref<32x128xf32, #tpu.memory_space<vmem>>, vector<8x128xf32>,
    return
  }
  func.func @transform_0(%arg0: i32) -> (i32, i32) {
    %c0_i32 = arith.constant 0 : i32
    %c0_i32_0 = arith.constant 0 : i32
    %c0_i32_1 = arith.constant 0 : i32
    return %c0_i32, %c0_i32_0 : i32, i32
  }
  func.func @transform_1(%arg0: i32) -> (i32, i32) {
    %c0_i32 = arith.constant 0 : i32
    %c0_i32_0 = arith.constant 0 : i32
    return %c0_i32, %arg0 : i32, i32
  }
  func.func @transform_2(%arg0: i32) -> (i32, i32) {
    %c0_i32 = arith.constant 0 : i32
    %c0_i32_0 = arith.constant 0 : i32
    %c0_i32_1 = arith.constant 0 : i32
    return %c0_i32, %c0_i32_0 : i32, i32
  }
  func.func @transform_3(%arg0: i32) -> (i32, i32) {
    %c0_i32 = arith.constant 0 : i32
    %c0_i32_0 = arith.constant 0 : i32
    %c0_i32_1 = arith.constant 0 : i32
    return %c0_i32, %c0_i32_0 : i32, i32
  }
  func.func @transform_4(%arg0: i32) -> (i32, i32) {
    %c0_i32 = arith.constant 0 : i32
    %c0_i32_0 = arith.constant 0 : i32
    %c0_i32_1 = arith.constant 0 : i32
    return %c0_i32, %c0_i32_0 : i32, i32
  }
  func.func @transform_5(%arg0: i32) -> (i32, i32) {
    %c0_i32 = arith.constant 0 : i32
    %c0_i32_0 = arith.constant 0 : i32
    %c0_i32_1 = arith.constant 0 : i32
    return %c0_i32, %c0_i32_0 : i32, i32
  }
  func.func @transform_6(%arg0: i32) -> (i32, i32) {
    %c0_i32 = arith.constant 0 : i32
    %c0_i32_0 = arith.constant 0 : i32
    %c0_i32_1 = arith.constant 0 : i32
    return %c0_i32, %c0_i32_0 : i32, i32
  }
  func.func @transform_7(%arg0: i32) -> (i32, i32, i32) {
    %c0_i32 = arith.constant 0 : i32
    %c0_i32_0 = arith.constant 0 : i32
    %c0_i32_1 = arith.constant 0 : i32
    %c0_i32_2 = arith.constant 0 : i32
    return %c0_i32, %c0_i32_0, %c0_i32_1 : i32, i32, i32
  }
  func.func @transform_8(%arg0: i32) -> (i32, i32) {
    %c0_i32 = arith.constant 0 : i32
    %c0_i32_0 = arith.constant 0 : i32
    %c0_i32_1 = arith.constant 0 : i32
    return %c0_i32, %c0_i32_0 : i32, i32
  }
  func.func @transform_9(%arg0: i32) -> (i32, i32) {
    %c0_i32 = arith.constant 0 : i32
    %c0_i32_0 = arith.constant 0 : i32
    %c0_i32_1 = arith.constant 0 : i32
    return %c0_i32, %c0_i32_0 : i32, i32
  }
  func.func @transform_10(%arg0: i32) -> (i32, i32) {
    %c0_i32 = arith.constant 0 : i32
    %c0_i32_0 = arith.constant 0 : i32
    %c0_i32_1 = arith.constant 0 : i32
    return %c0_i32, %c0_i32_0 : i32, i32
  }
  func.func @transform_11(%arg0: i32) -> (i32, i32) {
    %c0_i32 = arith.constant 0 : i32
    %c0_i32_0 = arith.constant 0 : i32
    %c0_i32_1 = arith.constant 0 : i32
    return %c0_i32, %c0_i32_0 : i32, i32
  }
  func.func @transform_12(%arg0: i32) -> (i32, i32) {
    %c0_i32 = arith.constant 0 : i32
    %c0_i32_0 = arith.constant 0 : i32
    %c0_i32_1 = arith.constant 0 : i32
    return %c0_i32, %c0_i32_0 : i32, i32
  }
  func.func @transform_13(%arg0: i32) -> (i32, i32, i32) {
    %c0_i32 = arith.constant 0 : i32
    %c0_i32_0 = arith.constant 0 : i32
    %c0_i32_1 = arith.constant 0 : i32
    %c0_i32_2 = arith.constant 0 : i32
    return %c0_i32, %c0_i32_0, %c0_i32_1 : i32, i32, i32
  }
  func.func @transform_14(%arg0: i32) -> (i32, i32) {
    %c0_i32 = arith.constant 0 : i32
    %c0_i32_0 = arith.constant 0 : i32
    return %c0_i32, %arg0 : i32, i32
  }
}

module attributes {stable_mosaic.version = 11 : i64} {
  func.func @_head_kernel(%arg0: memref<32x256xf32, #tpu.memory_space<vmem>>, %arg1: memref<32x1xf32, #tpu.memory_space<vmem>>, %arg2: memref<32x1xf32, #tpu.memory_space<vmem>>, %arg3: memref<256x2xf32, #tpu.memory_space<vmem>>, %arg4: memref<10x32xf32, #tpu.memory_space<vmem>>, %arg5: memref<10x1xf32, #tpu.memory_space<vmem>>, %arg6: memref<10x2xf32, #tpu.memory_space<vmem>>) attributes {dimension_semantics = [], scalar_prefetch = 0 : i64, scratch_operands = 0 : i64, tpu.core_type = #tpu.core_type<tc>} {
    %c0 = arith.constant 0 : index
    %c0_0 = arith.constant 0 : index
    %0 = vector.load %arg0[%c0, %c0_0] : memref<32x256xf32, #tpu.memory_space<vmem>>, vector<32x256xf32>
    %c0_1 = arith.constant 0 : index
    %c0_2 = arith.constant 0 : index
    %1 = vector.load %arg1[%c0_1, %c0_2] : memref<32x1xf32, #tpu.memory_space<vmem>>, vector<32x1xf32>
    %2 = vector.broadcast %1 : vector<32x1xf32> to vector<32x256xf32>
    %3 = arith.mulf %0, %2 : vector<32x256xf32>
    %c0_3 = arith.constant 0 : index
    %c0_4 = arith.constant 0 : index
    %4 = vector.load %arg2[%c0_3, %c0_4] : memref<32x1xf32, #tpu.memory_space<vmem>>, vector<32x1xf32>
    %5 = vector.broadcast %4 : vector<32x1xf32> to vector<32x256xf32>
    %6 = arith.addf %3, %5 : vector<32x256xf32>
    %cst = arith.constant 0.000000e+00 : f32
    %7 = vector.broadcast %cst : f32 to vector<32x256xf32>
    %8 = arith.maximumf %6, %7 : vector<32x256xf32>
    %c0_5 = arith.constant 0 : index
    %c0_6 = arith.constant 0 : index
    %9 = vector.load %arg3[%c0_5, %c0_6] : memref<256x2xf32, #tpu.memory_space<vmem>>, vector<256x2xf32>
    %cst_7 = arith.constant dense<0.000000e+00> : vector<32x2xf32>
    %10 = tpu.matmul %8, %9, %cst_7 {dimension_numbers = #tpu.dot_dimension_numbers<[1], [0], [0], [1], [0, 0, 1, 1], [], []>} : vector<32x256xf32>, vector<256x2xf32>, vector<32x2xf32> -> vector<32x2xf32>
    %c0_8 = arith.constant 0 : index
    %c0_9 = arith.constant 0 : index
    %11 = vector.load %arg4[%c0_8, %c0_9] : memref<10x32xf32, #tpu.memory_space<vmem>>, vector<10x32xf32>
    %cst_10 = arith.constant dense<0.000000e+00> : vector<10x2xf32>
    %12 = tpu.matmul %11, %10, %cst_10 {dimension_numbers = #tpu.dot_dimension_numbers<[1], [0], [0], [1], [0, 0, 1, 1], [], []>} : vector<10x32xf32>, vector<32x2xf32>, vector<10x2xf32> -> vector<10x2xf32>
    %c0_11 = arith.constant 0 : index
    %c0_12 = arith.constant 0 : index
    %13 = vector.load %arg5[%c0_11, %c0_12] : memref<10x1xf32, #tpu.memory_space<vmem>>, vector<10x1xf32>
    %14 = vector.broadcast %13 : vector<10x1xf32> to vector<10x2xf32>
    %15 = arith.addf %12, %14 : vector<10x2xf32>
    %c0_13 = arith.constant 0 : index
    %c0_14 = arith.constant 0 : index
    %16 = vector.load %arg6[%c0_13, %c0_14] : memref<10x2xf32, #tpu.memory_space<vmem>>, vector<10x2xf32>
    tpu.vector_store %arg6[%c0_13, %c0_14], %15 {strides = array<i32>} : memref<10x2xf32, #tpu.memory_space<vmem>>, vector<10x2xf32>,
    return
  }
}

</mosaic_0001>

<llo_original>
// kernel: densenet_forward.4
$region0: #{densenet_forward.4}
  #allocation0 [shape = 'u32[]', space=smem, size = 0x4, offset = 0x4, fixed_abs, tag = 'smem constant byte address 0x4 - core index']
  #allocation1 [shape = 'u32[144,128]{1,0:T(1,128)}', space=vmem, size = 0x12000, scoped, tag = 'internal scratch']
  %s0 = inlined_call_operand.vmem [shape: bf16[147,1568], index: 0, kind: input, shape index: {}]
  %s1 = inlined_call_operand.vmem [shape: bf16[16,147], index: 1, kind: input, shape index: {}]
  %s2 = inlined_call_operand.vmem [shape: f32[16,1], index: 2, kind: input, shape index: {}]
  %s3 = inlined_call_operand.vmem [shape: f32[16,1568], index: 3, kind: output, shape index: {}]
  %s4 = sld [smem:[#allocation0]]
  $region173: #{densenet_forward.4} parent=0
    _
  %s6 = ssub.s32 1, %s4
  %s7 = scalar_select 0, %s6, %s4
  $region1: #{densenet_forward.4} parent=0
    #allocation2 [shape = 'u8[544768]{0}', space=vmem, size = 0x85000, scoped, tag = 'input window, operand 0']
    #allocation3 [shape = 'u8[114688]{0}', space=vmem, size = 0x1c000, scoped, tag = 'output window, operand 0']
    loop: start=0, step=1, limit=4
    $region2: #{densenet_forward.4} parent=1 // loop_pre_header
      _
    $region3: #{densenet_forward.4} parent=1 // loop_header
      %s9 = sphi 0, %s13
      %p10 = scmp.ge.s32.totalorder %s9, 4
      %s19 = sphi 0, %s21
      %s22 = sphi 0, %s19
      %s23 = sphi 0, %s22
      %s39 = sphi 0, %s23
      %s43 = sphi 0, %s43
      %s45 = sphi 0, %s43
      %s46 = sphi 0, %s45
      %s60 = sphi 0, %s46
      %s64 = sphi 0, %s64
      %s66 = sphi 0, %s64
      %s67 = sphi 0, %s66
      %s81 = sphi 0, %s67
      %s87 = sphi 0, %s89
      %s90 = sphi 0, %s87
      %s91 = sphi 0, %s90
      %s107 = sphi 0, %s91
    $region4: #{densenet_forward.4} parent=1 // loop_header_branch
      %12 = sbr.rel (%p10) target = $region8
    $region5: #{densenet_forward.4} parent=1 // loop_body
      %s14 = ssub.s32 %s9, 1
      %s15 = ssub.s32 %s9, 2
      %s16 = sadd.s32 %s9, 1
      %s17 = ssub.s32 %s9, %s16
      %p18 = scmp.eq.s32.totalorder %s17, 0
      %s20 = sadd.s32 %s19, 1
      %s21 = scalar_select %p18, %s19, %s20
      %p24 = pneg %p18
      %p25 = scmp.eq.s32.totalorder %s9, 1
      %p26 = por %p24, %p25
      %p27 = scmp.ne.s32.totalorder %s19, %s22
      %p28 = scmp.eq.s32.totalorder %s9, 0
      %p29 = por %p27, %p28
      %p30 = scmp.ne.s32.totalorder %s19, %s22
      %p31 = scmp.eq.s32.totalorder %s14, 1
      %p32 = por %p30, %p31
      %p33 = scmp.ne.s32.totalorder %s22, %s23
      %p34 = scmp.eq.s32.totalorder %s14, 0
      %p35 = por %p33, %p34
      %p36 = scmp.ne.s32.totalorder %s22, %s23
      %p37 = scmp.eq.s32.totalorder %s15, 1
      %p38 = por %p36, %p37
      %p40 = scmp.ne.s32.totalorder %s23, %s39
      %p41 = scmp.eq.s32.totalorder %s15, 0
      %p42 = por %p40, %p41
      %s44 = sadd.s32 %s43, 1
      %p47 = scmp.eq.s32.totalorder %s9, 1
      %p48 = scmp.ne.s32.totalorder %s43, %s45
      %p49 = scmp.eq.s32.totalorder %s9, 0
      %p50 = por %p48, %p49
      %p51 = scmp.ne.s32.totalorder %s43, %s45
      %p52 = scmp.eq.s32.totalorder %s14, 1
      %p53 = por %p51, %p52
      %p54 = scmp.ne.s32.totalorder %s45, %s46
      %p55 = scmp.eq.s32.totalorder %s14, 0
      %p56 = por %p54, %p55
      %p57 = scmp.ne.s32.totalorder %s45, %s46
      %p58 = scmp.eq.s32.totalorder %s15, 1
      %p59 = por %p57, %p58
      %p61 = scmp.ne.s32.totalorder %s46, %s60
      %p62 = scmp.eq.s32.totalorder %s15, 0
      %p63 = por %p61, %p62
      %s65 = sadd.s32 %s64, 1
      %p68 = scmp.eq.s32.totalorder %s9, 1
      %p69 = scmp.ne.s32.totalorder %s64, %s66
      %p70 = scmp.eq.s32.totalorder %s9, 0
      %p71 = por %p69, %p70
      %p72 = scmp.ne.s32.totalorder %s64, %s66
      %p73 = scmp.eq.s32.totalorder %s14, 1
      %p74 = por %p72, %p73
      %p75 = scmp.ne.s32.totalorder %s66, %s67
      %p76 = scmp.eq.s32.totalorder %s14, 0
      %p77 = por %p75, %p76
      %p78 = scmp.ne.s32.totalorder %s66, %s67
      %p79 = scmp.eq.s32.totalorder %s15, 1
      %p80 = por %p78, %p79
      %p82 = scmp.ne.s32.totalorder %s67, %s81
      %p83 = scmp.eq.s32.totalorder %s15, 0
      %p84 = por %p82, %p83
      %s85 = ssub.s32 %s9, %s16
      %p86 = scmp.eq.s32.totalorder %s85, 0
      %s88 = sadd.s32 %s87, 1
      %s89 = scalar_select %p86, %s87, %s88
      %p92 = pneg %p86
      %p93 = scmp.eq.s32.totalorder %s9, 1
      %p94 = por %p92, %p93
      %p95 = scmp.ne.s32.totalorder %s87, %s90
      %p96 = scmp.eq.s32.totalorder %s9, 0
      %p97 = por %p95, %p96
      %p98 = scmp.ne.s32.totalorder %s87, %s90
      %p99 = scmp.eq.s32.totalorder %s14, 1
      %p100 = por %p98, %p99
      %p101 = scmp.ne.s32.totalorder %s90, %s91
      %p102 = scmp.eq.s32.totalorder %s14, 0
      %p103 = por %p101, %p102
      %p104 = scmp.ne.s32.totalorder %s90, %s91
      %p105 = scmp.eq.s32.totalorder %s15, 1
      %p106 = por %p104, %p105
      %p108 = scmp.ne.s32.totalorder %s91, %s107
      %p109 = scmp.eq.s32.totalorder %s15, 0
      %p110 = por %p108, %p109
      %p111 = scmp.le.s32.totalorder 1, %s9
      %p112 = scmp.lt.s32.totalorder %s9, 3
      %p113 = pnand %p111, %p112
      %p114 = pneg %p113
      // Predicated region
      $region9: #{densenet_forward.4} parent=5 // pred_check
        _
      $region10: #{densenet_forward.4} parent=5 // pred_check_branch
        %116 = sbr.rel (%p113) target = $region12
      $region11: #{densenet_forward.4} parent=5 // pred_region
        %s117 = ssub.s32 %s9, 1
        // Predicated region
        $region13: #{densenet_forward.4} parent=11 // pred_check
          %p118 = pneg %p56
        $region14: #{densenet_forward.4} parent=11 // pred_check_branch
          %120 = sbr.rel (%p118) target = $region16
        $region15: #{densenet_forward.4} parent=11 // pred_region
          _
        $region16: #{densenet_forward.4} parent=11 // pred_fallthru
          _
        // Predicated region
        $region17: #{densenet_forward.4} parent=11 // pred_check
          %p121 = pneg %p77
        $region18: #{densenet_forward.4} parent=11 // pred_check_branch
          %123 = sbr.rel (%p121) target = $region20
        $region19: #{densenet_forward.4} parent=11 // pred_region
          _
        $region20: #{densenet_forward.4} parent=11 // pred_fallthru
          _
      $region12: #{densenet_forward.4} parent=5 // pred_fallthru
        _
      %p124 = scmp.lt.s32.totalorder %s9, 2
      // Predicated region
      $region21: #{densenet_forward.4} parent=5 // pred_check
        %p125 = pneg %p124
      $region22: #{densenet_forward.4} parent=5 // pred_check_branch
        %127 = sbr.rel (%p125) target = $region24
      $region23: #{densenet_forward.4} parent=5 // pred_region
        // Predicated region
        $region25: #{densenet_forward.4} parent=23 // pred_check
          %p128 = pneg %p29
        $region26: #{densenet_forward.4} parent=23 // pred_check_branch
          %130 = sbr.rel (%p128) target = $region28
        $region27: #{densenet_forward.4} parent=23 // pred_region
          %s131 = sand.u32 %s19, 1
          %s132 = sand.u32 %s19, 1
          %s133 = smul.addr %s132, 532
          %s134 = scalar_lea.vmem [#allocation2], %s133
          %s135 = smul.u32 7, %s9
          %s136 = ssub.s32 13, %s135
          %p137 = scmp.lt.s32.totalorder %s136, 7
          %s138 = scalar_select %p137, %s136, 7
          %s139 = smul.u32 1216, %s138
          %p140 = scmp.ne.s32.totalorder 0, %s139
          %s141 = smul.addr %s135, 4
          %s142 = scalar_lea.vmem %s0, %s141
          %s143 = smul.u32 %s138, 4
          // Predicated region
          $region29: #{densenet_forward.4} parent=27 // pred_check
            %p144 = pneg %p140
          $region30: #{densenet_forward.4} parent=27 // pred_check_branch
            %146 = sbr.rel (%p144) target = $region32
          $region31: #{densenet_forward.4} parent=27 // pred_region
            %p147 = scmp.lt.u32.totalorder %s143, 8
            %p148 = pneg %p147
            // Predicated region
            $region33: #{densenet_forward.4} parent=31 // pred_check
              _
            $region34: #{densenet_forward.4} parent=31 // pred_check_branch
              %150 = sbr.rel (%p147) target = $region36
            $region35: #{densenet_forward.4} parent=31 // pred_region
              %s201 = sand.u32 %s143, 7
              %p202 = scmp.eq.s32.totalorder %s201, 0
              // Predicated region
              $region48: #{densenet_forward.4} parent=35 // pred_check
                %p203 = pneg %p202
              $region49: #{densenet_forward.4} parent=35 // pred_check_branch
                %205 = sbr.rel (%p203) target = $region51
              $region50: #{densenet_forward.4} parent=35 // pred_region
                %s206 = sshrl.u32 %s143, 3
                %s207 = sshrl.u32 %s206, 2
                // While loop
                $region52: #{densenet_forward.4} parent=50 // loop_pre_header
                  _
                $region53: #{densenet_forward.4} parent=50 // loop_header
                  %s211 = sphi 0, %s213
                  %p212 = scmp.ge.s32.totalorder %s211, %s207
                  %s216 = sphi 0, %s373
                  %s217 = sphi %s142, %s376
                  %s218 = sphi %s134, %s377
                $region54: #{densenet_forward.4} parent=50 // loop_header_branch
                  %215 = sbr.rel (%p212) target = $region58
                $region55: #{densenet_forward.4} parent=50 // loop_body
                  %v219 = vld [vmem:[%s217] sm:$0xff]
                  %220 = vst [vmem:[%s218] sm:$0xff] %v219
                  %v221 = vld [vmem:[%s217 + $0x8] sm:$0xff]
                  %222 = vst [vmem:[%s218 + $0x8] sm:$0xff] %v221
                  %v223 = vld [vmem:[%s217 + $0x10] sm:$0xff]
                  %224 = vst [vmem:[%s218 + $0x10] sm:$0xff] %v223
                  %v225 = vld [vmem:[%s217 + $0x18] sm:$0xff]
                  %226 = vst [vmem:[%s218 + $0x18] sm:$0xff] %v225
                  %v227 = vld [vmem:[%s217 + $0x34] sm:$0xff]
                  %228 = vst [vmem:[%s218 + $0x1c] sm:$0xff] %v227
                  %v229 = vld [vmem:[%s217 + $0x3c] sm:$0xff]
                  %230 = vst [vmem:[%s218 + $0x24] sm:$0xff] %v229
                  %v231 = vld [vmem:[%s217 + $0x44] sm:$0xff]
                  %232 = vst [vmem:[%s218 + $0x2c] sm:$0xff] %v231
                  %v233 = vld [vmem:[%s217 + $0x4c] sm:$0xff]
                  %234 = vst [vmem:[%s218 + $0x34] sm:$0xff] %v233
                  %v235 = vld [vmem:[%s217 + $0x68] sm:$0xff]
                  %236 = vst [vmem:[%s218 + $0x38] sm:$0xff] %v235
                  %v237 = vld [vmem:[%s217 + $0x70] sm:$0xff]
                  %238 = vst [vmem:[%s218 + $0x40] sm:$0xff] %v237
                  %v239 = vld [vmem:[%s217 + $0x78] sm:$0xff]
                  %240 = vst [vmem:[%s218 + $0x48] sm:$0xff] %v239
                  %v241 = vld [vmem:[%s217 + $0x80] sm:$0xff]
                  %242 = vst [vmem:[%s218 + $0x50] sm:$0xff] %v241
                  %v243 = vld [vmem:[%s217 + $0x9c] sm:$0xff]
                  %244 = vst [vmem:[%s218 + $0x54] sm:$0xff] %v243
                  %v245 = vld [vmem:[%s217 + $0xa4] sm:$0xff]
                  %246 = vst [vmem:[%s218 + $0x5c] sm:$0xff] %v245
                  %v247 = vld [vmem:[%s217 + $0xac] sm:$0xff]
                  %248 = vst [vmem:[%s218 + $0x64] sm:$0xff] %v247
                  %v249 = vld [vmem:[%s217 + $0xb4] sm:$0xff]
                  %250 = vst [vmem:[%s218 + $0x6c] sm:$0xff] %v249
                  %v251 = vld [vmem:[%s217 + $0xd0] sm:$0xff]
                  %252 = vst [vmem:[%s218 + $0x70] sm:$0xff] %v251
                  %v253 = vld [vmem:[%s217 + $0xd8] sm:$0xff]
                  %254 = vst [vmem:[%s218 + $0x78] sm:$0xff] %v253
                  %v255 = vld [vmem:[%s217 + $0xe0] sm:$0xff]
                  %256 = vst [vmem:[%s218 + $0x80] sm:$0xff] %v255
                  %v257 = vld [vmem:[%s217 + $0xe8] sm:$0xff]
                  %258 = vst [vmem:[%s218 + $0x88] sm:$0xff] %v257
                  %v259 = vld [vmem:[%s217 + $0x104] sm:$0xff]
                  %260 = vst [vmem:[%s218 + $0x8c] sm:$0xff] %v259
                  %v261 = vld [vmem:[%s217 + $0x10c] sm:$0xff]
                  %262 = vst [vmem:[%s218 + $0x94] sm:$0xff] %v261
                  %v263 = vld [vmem:[%s217 + $0x114] sm:$0xff]
                  %264 = vst [vmem:[%s218 + $0x9c] sm:$0xff] %v263
                  %v265 = vld [vmem:[%s217 + $0x11c] sm:$0xff]
                  %266 = vst [vmem:[%s218 + $0xa4] sm:$0xff] %v265
                  %v267 = vld [vmem:[%s217 + $0x138] sm:$0xff]
                  %268 = vst [vmem:[%s218 + $0xa8] sm:$0xff] %v267
                  %v269 = vld [vmem:[%s217 + $0x140] sm:$0xff]
                  %270 = vst [vmem:[%s218 + $0xb0] sm:$0xff] %v269
                  %v271 = vld [vmem:[%s217 + $0x148] sm:$0xff]
                  %272 = vst [vmem:[%s218 + $0xb8] sm:$0xff] %v271
                  %v273 = vld [vmem:[%s217 + $0x150] sm:$0xff]
                  %274 = vst [vmem:[%s218 + $0xc0] sm:$0xff] %v273
                  %v275 = vld [vmem:[%s217 + $0x16c] sm:$0xff]
                  %276 = vst [vmem:[%s218 + $0xc4] sm:$0xff] %v275
                  %v277 = vld [vmem:[%s217 + $0x174] sm:$0xff]
                  %278 = vst [vmem:[%s218 + $0xcc] sm:$0xff] %v277
                  %v279 = vld [vmem:[%s217 + $0x17c] sm:$0xff]
                  %280 = vst [vmem:[%s218 + $0xd4] sm:$0xff] %v279
                  %v281 = vld [vmem:[%s217 + $0x184] sm:$0xff]
                  %282 = vst [vmem:[%s218 + $0xdc] sm:$0xff] %v281
                  %v283 = vld [vmem:[%s217 + $0x1a0] sm:$0xff]
                  %284 = vst [vmem:[%s218 + $0xe0] sm:$0xff] %v283
                  %v285 = vld [vmem:[%s217 + $0x1a8] sm:$0xff]
                  %286 = vst [vmem:[%s218 + $0xe8] sm:$0xff] %v285
                  %v287 = vld [vmem:[%s217 + $0x1b0] sm:$0xff]
                  %288 = vst [vmem:[%s218 + $0xf0] sm:$0xff] %v287
                  %v289 = vld [vmem:[%s217 + $0x1b8] sm:$0xff]
                  %290 = vst [vmem:[%s218 + $0xf8] sm:$0xff] %v289
                  %v291 = vld [vmem:[%s217 + $0x1d4] sm:$0xff]
                  %292 = vst [vmem:[%s218 + $0xfc] sm:$0xff] %v291
                  %v293 = vld [vmem:[%s217 + $0x1dc] sm:$0xff]
                  %294 = vst [vmem:[%s218 + $0x104] sm:$0xff] %v293
                  %v295 = vld [vmem:[%s217 + $0x1e4] sm:$0xff]
                  %296 = vst [vmem:[%s218 + $0x10c] sm:$0xff] %v295
                  %v297 = vld [vmem:[%s217 + $0x1ec] sm:$0xff]
                  %298 = vst [vmem:[%s218 + $0x114] sm:$0xff] %v297
                  %v299 = vld [vmem:[%s217 + $0x208] sm:$0xff]
                  %300 = vst [vmem:[%s218 + $0x118] sm:$0xff] %v299
                  %v301 = vld [vmem:[%s217 + $0x210] sm:$0xff]
                  %302 = vst [vmem:[%s218 + $0x120] sm:$0xff] %v301
                  %v303 = vld [vmem:[%s217 + $0x218] sm:$0xff]
                  %304 = vst [vmem:[%s218 + $0x128] sm:$0xff] %v303
                  %v305 = vld [vmem:[%s217 + $0x220] sm:$0xff]
                  %306 = vst [vmem:[%s218 + $0x130] sm:$0xff] %v305
                  %v307 = vld [vmem:[%s217 + $0x23c] sm:$0xff]
                  %308 = vst [vmem:[%s218 + $0x134] sm:$0xff] %v307
                  %v309 = vld [vmem:[%s217 + $0x244] sm:$0xff]
                  %310 = vst [vmem:[%s218 + $0x13c] sm:$0xff] %v309
                  %v311 = vld [vmem:[%s217 + $0x24c] sm:$0xff]
                  %312 = vst [vmem:[%s218 + $0x144] sm:$0xff] %v311
                  %v313 = vld [vmem:[%s217 + $0x254] sm:$0xff]
                  %314 = vst [vmem:[%s218 + $0x14c] sm:$0xff] %v313
                  %v315 = vld [vmem:[%s217 + $0x270] sm:$0xff]
                  %316 = vst [vmem:[%s218 + $0x150] sm:$0xff] %v315
                  %v317 = vld [vmem:[%s217 + $0x278] sm:$0xff]
                  %318 = vst [vmem:[%s218 + $0x158] sm:$0xff] %v317
                  %v319 = vld [vmem:[%s217 + $0x280] sm:$0xff]
                  %320 = vst [vmem:[%s218 + $0x160] sm:$0xff] %v319
                  %v321 = vld [vmem:[%s217 + $0x288] sm:$0xff]
                  %322 = vst [vmem:[%s218 + $0x168] sm:$0xff] %v321
                  %v323 = vld [vmem:[%s217 + $0x2a4] sm:$0xff]
                  %324 = vst [vmem:[%s218 + $0x16c] sm:$0xff] %v323
                  %v325 = vld [vmem:[%s217 + $0x2ac] sm:$0xff]
                  %326 = vst [vmem:[%s218 + $0x174] sm:$0xff] %v325
                  %v327 = vld [vmem:[%s217 + $0x2b4] sm:$0xff]
                  %328 = vst [vmem:[%s218 + $0x17c] sm:$0xff] %v327
                  %v329 = vld [vmem:[%s217 + $0x2bc] sm:$0xff]
                  %330 = vst [vmem:[%s218 + $0x184] sm:$0xff] %v329
                  %v331 = vld [vmem:[%s217 + $0x2d8] sm:$0xff]
                  %332 = vst [vmem:[%s218 + $0x188] sm:$0xff] %v331
                  %v333 = vld [vmem:[%s217 + $0x2e0] sm:$0xff]
                  %334 = vst [vmem:[%s218 + $0x190] sm:$0xff] %v333
                  %v335 = vld [vmem:[%s217 + $0x2e8] sm:$0xff]
                  %336 = vst [vmem:[%s218 + $0x198] sm:$0xff] %v335
                  %v337 = vld [vmem:[%s217 + $0x2f0] sm:$0xff]
                  %338 = vst [vmem:[%s218 + $0x1a0] sm:$0xff] %v337
                  %v339 = vld [vmem:[%s217 + $0x30c] sm:$0xff]
                  %340 = vst [vmem:[%s218 + $0x1a4] sm:$0xff] %v339
                  %v341 = vld [vmem:[%s217 + $0x314] sm:$0xff]
                  %342 = vst [vmem:[%s218 + $0x1ac] sm:$0xff] %v341
                  %v343 = vld [vmem:[%s217 + $0x31c] sm:$0xff]
                  %344 = vst [vmem:[%s218 + $0x1b4] sm:$0xff] %v343
                  %v345 = vld [vmem:[%s217 + $0x324] sm:$0xff]
                  %346 = vst [vmem:[%s218 + $0x1bc] sm:$0xff] %v345
                  %v347 = vld [vmem:[%s217 + $0x340] sm:$0xff]
                  %348 = vst [vmem:[%s218 + $0x1c0] sm:$0xff] %v347
                  %v349 = vld [vmem:[%s217 + $0x348] sm:$0xff]
                  %350 = vst [vmem:[%s218 + $0x1c8] sm:$0xff] %v349
                  %v351 = vld [vmem:[%s217 + $0x350] sm:$0xff]
                  %352 = vst [vmem:[%s218 + $0x1d0] sm:$0xff] %v351
                  %v353 = vld [vmem:[%s217 + $0x358] sm:$0xff]
                  %354 = vst [vmem:[%s218 + $0x1d8] sm:$0xff] %v353
                  %v355 = vld [vmem:[%s217 + $0x374] sm:$0xff]
                  %356 = vst [vmem:[%s218 + $0x1dc] sm:$0xff] %v355
                  %v357 = vld [vmem:[%s217 + $0x37c] sm:$0xff]
                  %358 = vst [vmem:[%s218 + $0x1e4] sm:$0xff] %v357
                  %v359 = vld [vmem:[%s217 + $0x384] sm:$0xff]
                  %360 = vst [vmem:[%s218 + $0x1ec] sm:$0xff] %v359
                  %v361 = vld [vmem:[%s217 + $0x38c] sm:$0xff]
                  %362 = vst [vmem:[%s218 + $0x1f4] sm:$0xff] %v361
                  %v363 = vld [vmem:[%s217 + $0x3a8] sm:$0xff]
                  %364 = vst [vmem:[%s218 + $0x1f8] sm:$0xff] %v363
                  %v365 = vld [vmem:[%s217 + $0x3b0] sm:$0xff]
                  %366 = vst [vmem:[%s218 + $0x200] sm:$0xff] %v365
                  %v367 = vld [vmem:[%s217 + $0x3b8] sm:$0xff]
                  %368 = vst [vmem:[%s218 + $0x208] sm:$0xff] %v367
                  %v369 = vld [vmem:[%s217 + $0x3c0] sm:$0xff]
                  %370 = vst [vmem:[%s218 + $0x210] sm:$0xff] %v369
                  %s371 = sadd.s32 1, %s216
                  %p372 = scmp.ge.s32.totalorder %s371, %s207
                  %s373 = scalar_select %p372, 0, %s371
                  %s374 = smul.u32 %s373, 32
                  %s375 = smul.u32 %s373, 32
                  %s376 = scalar_lea.vmem %s142, %s374
                  %s377 = scalar_lea.vmem %s134, %s375 [#allocation2]
                $region56: #{densenet_forward.4} parent=50 // loop_footer
                  %s213 = sadd.s32 %s211, 1
                $region57: #{densenet_forward.4} parent=50 // loop_footer_branch
                  %210 = sbr.rel target = $region53
                $region58: #{densenet_forward.4} parent=50 // loop_exit
                  _
                %s378 = sshrl.u32 %s206, 2
                %s379 = sand.u32 %s206, 3
                %s380 = smul.u32 %s378, 4
                %s381 = smul.u32 128, %s380
                %s382 = sshra.s32 %s381, 4
                %s383 = scalar_lea.vmem %s142, %s382
                %s384 = smul.u32 128, %s380
                %s385 = sshra.s32 %s384, 4
                %s386 = scalar_lea.vmem %s134, %s385 [#allocation2]
                // While loop
                $region59: #{densenet_forward.4} parent=50 // loop_pre_header
                  _
                $region60: #{densenet_forward.4} parent=50 // loop_header
                  %s390 = sphi 0, %s392
                  %p391 = scmp.ge.s32.totalorder %s390, %s379
                  %s395 = sphi 0, %s438
                  %s396 = sphi %s383, %s441
                  %s397 = sphi %s386, %s442
                $region61: #{densenet_forward.4} parent=50 // loop_header_branch
                  %394 = sbr.rel (%p391) target = $region65
                $region62: #{densenet_forward.4} parent=50 // loop_body
                  %v398 = vld [vmem:[%s396] sm:$0xff]
                  %399 = vst [vmem:[%s397] sm:$0xff] %v398
                  %v400 = vld [vmem:[%s396 + $0x34] sm:$0xff]
                  %401 = vst [vmem:[%s397 + $0x1c] sm:$0xff] %v400
                  %v402 = vld [vmem:[%s396 + $0x68] sm:$0xff]
                  %403 = vst [vmem:[%s397 + $0x38] sm:$0xff] %v402
                  %v404 = vld [vmem:[%s396 + $0x9c] sm:$0xff]
                  %405 = vst [vmem:[%s397 + $0x54] sm:$0xff] %v404
                  %v406 = vld [vmem:[%s396 + $0xd0] sm:$0xff]
                  %407 = vst [vmem:[%s397 + $0x70] sm:$0xff] %v406
                  %v408 = vld [vmem:[%s396 + $0x104] sm:$0xff]
                  %409 = vst [vmem:[%s397 + $0x8c] sm:$0xff] %v408
                  %v410 = vld [vmem:[%s396 + $0x138] sm:$0xff]
                  %411 = vst [vmem:[%s397 + $0xa8] sm:$0xff] %v410
                  %v412 = vld [vmem:[%s396 + $0x16c] sm:$0xff]
                  %413 = vst [vmem:[%s397 + $0xc4] sm:$0xff] %v412
                  %v414 = vld [vmem:[%s396 + $0x1a0] sm:$0xff]
                  %415 = vst [vmem:[%s397 + $0xe0] sm:$0xff] %v414
                  %v416 = vld [vmem:[%s396 + $0x1d4] sm:$0xff]
                  %417 = vst [vmem:[%s397 + $0xfc] sm:$0xff] %v416
                  %v418 = vld [vmem:[%s396 + $0x208] sm:$0xff]
                  %419 = vst [vmem:[%s397 + $0x118] sm:$0xff] %v418
                  %v420 = vld [vmem:[%s396 + $0x23c] sm:$0xff]
                  %421 = vst [vmem:[%s397 + $0x134] sm:$0xff] %v420
                  %v422 = vld [vmem:[%s396 + $0x270] sm:$0xff]
                  %423 = vst [vmem:[%s397 + $0x150] sm:$0xff] %v422
                  %v424 = vld [vmem:[%s396 + $0x2a4] sm:$0xff]
                  %425 = vst [vmem:[%s397 + $0x16c] sm:$0xff] %v424
                  %v426 = vld [vmem:[%s396 + $0x2d8] sm:$0xff]
                  %427 = vst [vmem:[%s397 + $0x188] sm:$0xff] %v426
                  %v428 = vld [vmem:[%s396 + $0x30c] sm:$0xff]
                  %429 = vst [vmem:[%s397 + $0x1a4] sm:$0xff] %v428
                  %v430 = vld [vmem:[%s396 + $0x340] sm:$0xff]
                  %431 = vst [vmem:[%s397 + $0x1c0] sm:$0xff] %v430
                  %v432 = vld [vmem:[%s396 + $0x374] sm:$0xff]
                  %433 = vst [vmem:[%s397 + $0x1dc] sm:$0xff] %v432
                  %v434 = vld [vmem:[%s396 + $0x3a8] sm:$0xff]
                  %435 = vst [vmem:[%s397 + $0x1f8] sm:$0xff] %v434
                  %s436 = sadd.s32 1, %s395
                  %p437 = scmp.ge.s32.totalorder %s436, %s379
                  %s438 = scalar_select %p437, 0, %s436
                  %s439 = smul.u32 %s438, 8
                  %s440 = smul.u32 %s438, 8
                  %s441 = scalar_lea.vmem %s383, %s439
                  %s442 = scalar_lea.vmem %s386, %s440 [#allocation2]
                $region63: #{densenet_forward.4} parent=50 // loop_footer
                  %s392 = sadd.s32 %s390, 1
                $region64: #{densenet_forward.4} parent=50 // loop_footer_branch
                  %389 = sbr.rel target = $region60
                $region65: #{densenet_forward.4} parent=50 // loop_exit
                  _
              $region51: #{densenet_forward.4} parent=35 // pred_fallthru
                _
              %p443 = pneg %p202
              // Predicated region
              $region66: #{densenet_forward.4} parent=35 // pred_check
                _
              $region67: #{densenet_forward.4} parent=35 // pred_check_branch
                %445 = sbr.rel (%p202) target = $region69
              $region68: #{densenet_forward.4} parent=35 // pred_region
                %s446 = sand.u32 %s143, 7
                %s447 = ssub.s32 %s143, %s446
                %s448 = scalar_lea.vmem %s142, %s447
                %s449 = ssub.s32 %s143, %s446
                %s450 = scalar_lea.vmem %s134, %s449 [#allocation2]
                %s451 = sshrl.u32 %s143, 3
                %s452 = sshrl.u32 %s451, 2
                // While loop
                $region70: #{densenet_forward.4} parent=68 // loop_pre_header
                  _
                $region71: #{densenet_forward.4} parent=68 // loop_header
                  %s456 = sphi 0, %s458
                  %p457 = scmp.ge.s32.totalorder %s456, %s452
                  %s461 = sphi 0, %s618
                  %s462 = sphi %s142, %s621
                  %s463 = sphi %s134, %s622
                $region72: #{densenet_forward.4} parent=68 // loop_header_branch
                  %460 = sbr.rel (%p457) target = $region76
                $region73: #{densenet_forward.4} parent=68 // loop_body
                  %v464 = vld [vmem:[%s462] sm:$0xff]
                  %465 = vst [vmem:[%s463] sm:$0xff] %v464
                  %v466 = vld [vmem:[%s462 + $0x8] sm:$0xff]
                  %467 = vst [vmem:[%s463 + $0x8] sm:$0xff] %v466
                  %v468 = vld [vmem:[%s462 + $0x10] sm:$0xff]
                  %469 = vst [vmem:[%s463 + $0x10] sm:$0xff] %v468
                  %v470 = vld [vmem:[%s462 + $0x18] sm:$0xff]
                  %471 = vst [vmem:[%s463 + $0x18] sm:$0xff] %v470
                  %v472 = vld [vmem:[%s462 + $0x34] sm:$0xff]
                  %473 = vst [vmem:[%s463 + $0x1c] sm:$0xff] %v472
                  %v474 = vld [vmem:[%s462 + $0x3c] sm:$0xff]
                  %475 = vst [vmem:[%s463 + $0x24] sm:$0xff] %v474
                  %v476 = vld [vmem:[%s462 + $0x44] sm:$0xff]
                  %477 = vst [vmem:[%s463 + $0x2c] sm:$0xff] %v476
                  %v478 = vld [vmem:[%s462 + $0x4c] sm:$0xff]
                  %479 = vst [vmem:[%s463 + $0x34] sm:$0xff] %v478
                  %v480 = vld [vmem:[%s462 + $0x68] sm:$0xff]
                  %481 = vst [vmem:[%s463 + $0x38] sm:$0xff] %v480
                  %v482 = vld [vmem:[%s462 + $0x70] sm:$0xff]
                  %483 = vst [vmem:[%s463 + $0x40] sm:$0xff] %v482
                  %v484 = vld [vmem:[%s462 + $0x78] sm:$0xff]
                  %485 = vst [vmem:[%s463 + $0x48] sm:$0xff] %v484
                  %v486 = vld [vmem:[%s462 + $0x80] sm:$0xff]
                  %487 = vst [vmem:[%s463 + $0x50] sm:$0xff] %v486
                  %v488 = vld [vmem:[%s462 + $0x9c] sm:$0xff]
                  %489 = vst [vmem:[%s463 + $0x54] sm:$0xff] %v488
                  %v490 = vld [vmem:[%s462 + $0xa4] sm:$0xff]
                  %491 = vst [vmem:[%s463 + $0x5c] sm:$0xff] %v490
                  %v492 = vld [vmem:[%s462 + $0xac] sm:$0xff]
                  %493 = vst [vmem:[%s463 + $0x64] sm:$0xff] %v492
                  %v494 = vld [vmem:[%s462 + $0xb4] sm:$0xff]
                  %495 = vst [vmem:[%s463 + $0x6c] sm:$0xff] %v494
                  %v496 = vld [vmem:[%s462 + $0xd0] sm:$0xff]
                  %497 = vst [vmem:[%s463 + $0x70] sm:$0xff] %v496
                  %v498 = vld [vmem:[%s462 + $0xd8] sm:$0xff]
                  %499 = vst [vmem:[%s463 + $0x78] sm:$0xff] %v498
                  %v500 = vld [vmem:[%s462 + $0xe0] sm:$0xff]
                  %501 = vst [vmem:[%s463 + $0x80] sm:$0xff] %v500
                  %v502 = vld [vmem:[%s462 + $0xe8] sm:$0xff]
                  %503 = vst [vmem:[%s463 + $0x88] sm:$0xff] %v502
                  %v504 = vld [vmem:[%s462 + $0x104] sm:$0xff]
                  %505 = vst [vmem:[%s463 + $0x8c] sm:$0xff] %v504
                  %v506 = vld [vmem:[%s462 + $0x10c] sm:$0xff]
                  %507 = vst [vmem:[%s463 + $0x94] sm:$0xff] %v506
                  %v508 = vld [vmem:[%s462 + $0x114] sm:$0xff]
                  %509 = vst [vmem:[%s463 + $0x9c] sm:$0xff] %v508
                  %v510 = vld [vmem:[%s462 + $0x11c] sm:$0xff]
                  %511 = vst [vmem:[%s463 + $0xa4] sm:$0xff] %v510
                  %v512 = vld [vmem:[%s462 + $0x138] sm:$0xff]
                  %513 = vst [vmem:[%s463 + $0xa8] sm:$0xff] %v512
                  %v514 = vld [vmem:[%s462 + $0x140] sm:$0xff]
                  %515 = vst [vmem:[%s463 + $0xb0] sm:$0xff] %v514
                  %v516 = vld [vmem:[%s462 + $0x148] sm:$0xff]
                  %517 = vst [vmem:[%s463 + $0xb8] sm:$0xff] %v516
                  %v518 = vld [vmem:[%s462 + $0x150] sm:$0xff]
                  %519 = vst [vmem:[%s463 + $0xc0] sm:$0xff] %v518
                  %v520 = vld [vmem:[%s462 + $0x16c] sm:$0xff]
                  %521 = vst [vmem:[%s463 + $0xc4] sm:$0xff] %v520
                  %v522 = vld [vmem:[%s462 + $0x174] sm:$0xff]
                  %523 = vst [vmem:[%s463 + $0xcc] sm:$0xff] %v522
                  %v524 = vld [vmem:[%s462 + $0x17c] sm:$0xff]
                  %525 = vst [vmem:[%s463 + $0xd4] sm:$0xff] %v524
                  %v526 = vld [vmem:[%s462 + $0x184] sm:$0xff]
                  %527 = vst [vmem:[%s463 + $0xdc] sm:$0xff] %v526
                  %v528 = vld [vmem:[%s462 + $0x1a0] sm:$0xff]
                  %529 = vst [vmem:[%s463 + $0xe0] sm:$0xff] %v528
                  %v530 = vld [vmem:[%s462 + $0x1a8] sm:$0xff]
                  %531 = vst [vmem:[%s463 + $0xe8] sm:$0xff] %v530
                  %v532 = vld [vmem:[%s462 + $0x1b0] sm:$0xff]
                  %533 = vst [vmem:[%s463 + $0xf0] sm:$0xff] %v532
                  %v534 = vld [vmem:[%s462 + $0x1b8] sm:$0xff]
                  %535 = vst [vmem:[%s463 + $0xf8] sm:$0xff] %v534
                  %v536 = vld [vmem:[%s462 + $0x1d4] sm:$0xff]
                  %537 = vst [vmem:[%s463 + $0xfc] sm:$0xff] %v536
                  %v538 = vld [vmem:[%s462 + $0x1dc] sm:$0xff]
                  %539 = vst [vmem:[%s463 + $0x104] sm:$0xff] %v538
                  %v540 = vld [vmem:[%s462 + $0x1e4] sm:$0xff]
                  %541 = vst [vmem:[%s463 + $0x10c] sm:$0xff] %v540
                  %v542 = vld [vmem:[%s462 + $0x1ec] sm:$0xff]
                  %543 = vst [vmem:[%s463 + $0x114] sm:$0xff] %v542
                  %v544 = vld [vmem:[%s462 + $0x208] sm:$0xff]
                  %545 = vst [vmem:[%s463 + $0x118] sm:$0xff] %v544
                  %v546 = vld [vmem:[%s462 + $0x210] sm:$0xff]
                  %547 = vst [vmem:[%s463 + $0x120] sm:$0xff] %v546
                  %v548 = vld [vmem:[%s462 + $0x218] sm:$0xff]
                  %549 = vst [vmem:[%s463 + $0x128] sm:$0xff] %v548
                  %v550 = vld [vmem:[%s462 + $0x220] sm:$0xff]
                  %551 = vst [vmem:[%s463 + $0x130] sm:$0xff] %v550
                  %v552 = vld [vmem:[%s462 + $0x23c] sm:$0xff]
                  %553 = vst [vmem:[%s463 + $0x134] sm:$0xff] %v552
                  %v554 = vld [vmem:[%s462 + $0x244] sm:$0xff]
                  %555 = vst [vmem:[%s463 + $0x13c] sm:$0xff] %v554
                  %v556 = vld [vmem:[%s462 + $0x24c] sm:$0xff]
                  %557 = vst [vmem:[%s463 + $0x144] sm:$0xff] %v556
                  %v558 = vld [vmem:[%s462 + $0x254] sm:$0xff]
                  %559 = vst [vmem:[%s463 + $0x14c] sm:$0xff] %v558
                  %v560 = vld [vmem:[%s462 + $0x270] sm:$0xff]
                  %561 = vst [vmem:[%s463 + $0x150] sm:$0xff] %v560
                  %v562 = vld [vmem:[%s462 + $0x278] sm:$0xff]
                  %563 = vst [vmem:[%s463 + $0x158] sm:$0xff] %v562
                  %v564 = vld [vmem:[%s462 + $0x280] sm:$0xff]
                  %565 = vst [vmem:[%s463 + $0x160] sm:$0xff] %v564
                  %v566 = vld [vmem:[%s462 + $0x288] sm:$0xff]
                  %567 = vst [vmem:[%s463 + $0x168] sm:$0xff] %v566
                  %v568 = vld [vmem:[%s462 + $0x2a4] sm:$0xff]
                  %569 = vst [vmem:[%s463 + $0x16c] sm:$0xff] %v568
                  %v570 = vld [vmem:[%s462 + $0x2ac] sm:$0xff]
                  %571 = vst [vmem:[%s463 + $0x174] sm:$0xff] %v570
                  %v572 = vld [vmem:[%s462 + $0x2b4] sm:$0xff]
                  %573 = vst [vmem:[%s463 + $0x17c] sm:$0xff] %v572
                  %v574 = vld [vmem:[%s462 + $0x2bc] sm:$0xff]
                  %575 = vst [vmem:[%s463 + $0x184] sm:$0xff] %v574
                  %v576 = vld [vmem:[%s462 + $0x2d8] sm:$0xff]
                  %577 = vst [vmem:[%s463 + $0x188] sm:$0xff] %v576
                  %v578 = vld [vmem:[%s462 + $0x2e0] sm:$0xff]
                  %579 = vst [vmem:[%s463 + $0x190] sm:$0xff] %v578
                  %v580 = vld [vmem:[%s462 + $0x2e8] sm:$0xff]
                  %581 = vst [vmem:[%s463 + $0x198] sm:$0xff] %v580
                  %v582 = vld [vmem:[%s462 + $0x2f0] sm:$0xff]
                  %583 = vst [vmem:[%s463 + $0x1a0] sm:$0xff] %v582
                  %v584 = vld [vmem:[%s462 + $0x30c] sm:$0xff]
                  %585 = vst [vmem:[%s463 + $0x1a4] sm:$0xff] %v584
                  %v586 = vld [vmem:[%s462 + $0x314] sm:$0xff]
                  %587 = vst [vmem:[%s463 + $0x1ac] sm:$0xff] %v586
                  %v588 = vld [vmem:[%s462 + $0x31c] sm:$0xff]
                  %589 = vst [vmem:[%s463 + $0x1b4] sm:$0xff] %v588
                  %v590 = vld [vmem:[%s462 + $0x324] sm:$0xff]
                  %591 = vst [vmem:[%s463 + $0x1bc] sm:$0xff] %v590
                  %v592 = vld [vmem:[%s462 + $0x340] sm:$0xff]
                  %593 = vst [vmem:[%s463 + $0x1c0] sm:$0xff] %v592
                  %v594 = vld [vmem:[%s462 + $0x348] sm:$0xff]
                  %595 = vst [vmem:[%s463 + $0x1c8] sm:$0xff] %v594
                  %v596 = vld [vmem:[%s462 + $0x350] sm:$0xff]
                  %597 = vst [vmem:[%s463 + $0x1d0] sm:$0xff] %v596
                  %v598 = vld [vmem:[%s462 + $0x358] sm:$0xff]
                  %599 = vst [vmem:[%s463 + $0x1d8] sm:$0xff] %v598
                  %v600 = vld [vmem:[%s462 + $0x374] sm:$0xff]
                  %601 = vst [vmem:[%s463 + $0x1dc] sm:$0xff] %v600
                  %v602 = vld [vmem:[%s462 + $0x37c] sm:$0xff]
                  %603 = vst [vmem:[%s463 + $0x1e4] sm:$0xff] %v602
                  %v604 = vld [vmem:[%s462 + $0x384] sm:$0xff]
                  %605 = vst [vmem:[%s463 + $0x1ec] sm:$0xff] %v604
                  %v606 = vld [vmem:[%s462 + $0x38c] sm:$0xff]
                  %607 = vst [vmem:[%s463 + $0x1f4] sm:$0xff] %v606
                  %v608 = vld [vmem:[%s462 + $0x3a8] sm:$0xff]
                  %609 = vst [vmem:[%s463 + $0x1f8] sm:$0xff] %v608
                  %v610 = vld [vmem:[%s462 + $0x3b0] sm:$0xff]
                  %611 = vst [vmem:[%s463 + $0x200] sm:$0xff] %v610
                  %v612 = vld [vmem:[%s462 + $0x3b8] sm:$0xff]
                  %613 = vst [vmem:[%s463 + $0x208] sm:$0xff] %v612
                  %v614 = vld [vmem:[%s462 + $0x3c0] sm:$0xff]
                  %615 = vst [vmem:[%s463 + $0x210] sm:$0xff] %v614
                  %s616 = sadd.s32 1, %s461
                  %p617 = scmp.ge.s32.totalorder %s616, %s452
                  %s618 = scalar_select %p617, 0, %s616
                  %s619 = smul.u32 %s618, 32
                  %s620 = smul.u32 %s618, 32
                  %s621 = scalar_lea.vmem %s142, %s619
                  %s622 = scalar_lea.vmem %s134, %s620 [#allocation2]
                $region74: #{densenet_forward.4} parent=68 // loop_footer
                  %s458 = sadd.s32 %s456, 1
                $region75: #{densenet_forward.4} parent=68 // loop_footer_branch
                  %455 = sbr.rel target = $region71
                $region76: #{densenet_forward.4} parent=68 // loop_exit
                  _
                %s623 = sshrl.u32 %s451, 2
                %s624 = sand.u32 %s451, 3
                %s625 = smul.u32 %s623, 4
                %s626 = smul.u32 128, %s625
                %s627 = sshra.s32 %s626, 4
                %s628 = scalar_lea.vmem %s142, %s627
                %s629 = smul.u32 128, %s625
                %s630 = sshra.s32 %s629, 4
                %s631 = scalar_lea.vmem %s134, %s630 [#allocation2]
                // While loop
                $region77: #{densenet_forward.4} parent=68 // loop_pre_header
                  _
                $region78: #{densenet_forward.4} parent=68 // loop_header
                  %s635 = sphi 0, %s637
                  %p636 = scmp.ge.s32.totalorder %s635, %s624
                  %s640 = sphi 0, %s683
                  %s641 = sphi %s628, %s686
                  %s642 = sphi %s631, %s687
                $region79: #{densenet_forward.4} parent=68 // loop_header_branch
                  %639 = sbr.rel (%p636) target = $region83
                $region80: #{densenet_forward.4} parent=68 // loop_body
                  %v643 = vld [vmem:[%s641] sm:$0xff]
                  %644 = vst [vmem:[%s642] sm:$0xff] %v643
                  %v645 = vld [vmem:[%s641 + $0x34] sm:$0xff]
                  %646 = vst [vmem:[%s642 + $0x1c] sm:$0xff] %v645
                  %v647 = vld [vmem:[%s641 + $0x68] sm:$0xff]
                  %648 = vst [vmem:[%s642 + $0x38] sm:$0xff] %v647
                  %v649 = vld [vmem:[%s641 + $0x9c] sm:$0xff]
                  %650 = vst [vmem:[%s642 + $0x54] sm:$0xff] %v649
                  %v651 = vld [vmem:[%s641 + $0xd0] sm:$0xff]
                  %652 = vst [vmem:[%s642 + $0x70] sm:$0xff] %v651
                  %v653 = vld [vmem:[%s641 + $0x104] sm:$0xff]
                  %654 = vst [vmem:[%s642 + $0x8c] sm:$0xff] %v653
                  %v655 = vld [vmem:[%s641 + $0x138] sm:$0xff]
                  %656 = vst [vmem:[%s642 + $0xa8] sm:$0xff] %v655
                  %v657 = vld [vmem:[%s641 + $0x16c] sm:$0xff]
                  %658 = vst [vmem:[%s642 + $0xc4] sm:$0xff] %v657
                  %v659 = vld [vmem:[%s641 + $0x1a0] sm:$0xff]
                  %660 = vst [vmem:[%s642 + $0xe0] sm:$0xff] %v659
                  %v661 = vld [vmem:[%s641 + $0x1d4] sm:$0xff]
                  %662 = vst [vmem:[%s642 + $0xfc] sm:$0xff] %v661
                  %v663 = vld [vmem:[%s641 + $0x208] sm:$0xff]
                  %664 = vst [vmem:[%s642 + $0x118] sm:$0xff] %v663
                  %v665 = vld [vmem:[%s641 + $0x23c] sm:$0xff]
                  %666 = vst [vmem:[%s642 + $0x134] sm:$0xff] %v665
                  %v667 = vld [vmem:[%s641 + $0x270] sm:$0xff]
                  %668 = vst [vmem:[%s642 + $0x150] sm:$0xff] %v667
                  %v669 = vld [vmem:[%s641 + $0x2a4] sm:$0xff]
                  %670 = vst [vmem:[%s642 + $0x16c] sm:$0xff] %v669
                  %v671 = vld [vmem:[%s641 + $0x2d8] sm:$0xff]
                  %672 = vst [vmem:[%s642 + $0x188] sm:$0xff] %v671
                  %v673 = vld [vmem:[%s641 + $0x30c] sm:$0xff]
                  %674 = vst [vmem:[%s642 + $0x1a4] sm:$0xff] %v673
                  %v675 = vld [vmem:[%s641 + $0x340] sm:$0xff]
                  %676 = vst [vmem:[%s642 + $0x1c0] sm:$0xff] %v675
                  %v677 = vld [vmem:[%s641 + $0x374] sm:$0xff]
                  %678 = vst [vmem:[%s642 + $0x1dc] sm:$0xff] %v677
                  %v679 = vld [vmem:[%s641 + $0x3a8] sm:$0xff]
                  %680 = vst [vmem:[%s642 + $0x1f8] sm:$0xff] %v679
                  %s681 = sadd.s32 1, %s640
                  %p682 = scmp.ge.s32.totalorder %s681, %s624
                  %s683 = scalar_select %p682, 0, %s681
                  %s684 = smul.u32 %s683, 8
                  %s685 = smul.u32 %s683, 8
                  %s686 = scalar_lea.vmem %s628, %s684
                  %s687 = scalar_lea.vmem %s631, %s685 [#allocation2]
                $region81: #{densenet_forward.4} parent=68 // loop_footer
                  %s637 = sadd.s32 %s635, 1
                $region82: #{densenet_forward.4} parent=68 // loop_footer_branch
                  %634 = sbr.rel target = $region78
                $region83: #{densenet_forward.4} parent=68 // loop_exit
                  _
                %s688 = sshllo.u32 0, %s446
                loop: start=0, step=1, limit=1
                $region84: #{densenet_forward.4} parent=68 // loop_pre_header
                  _
                $region85: #{densenet_forward.4} parent=68 // loop_header
                  %s690 = sphi 0, %s694
                  %p691 = scmp.ge.s32.totalorder %s690, 1
                  %s695 = sphi %s448, %s448
                  %s696 = sphi %s450, %s450
                $region86: #{densenet_forward.4} parent=68 // loop_header_branch
                  %693 = sbr.rel (%p691) target = $region90
                $region87: #{densenet_forward.4} parent=68 // loop_body
                  %v697 = vld [vmem:[%s695] sm:%s688]
                  %698 = vst [vmem:[%s696] sm:%s688] %v697
                  %v699 = vld [vmem:[%s695 + $0x34] sm:%s688]
                  %700 = vst [vmem:[%s696 + $0x1c] sm:%s688] %v699
                  %v701 = vld [vmem:[%s695 + $0x68] sm:%s688]
                  %702 = vst [vmem:[%s696 + $0x38] sm:%s688] %v701
                  %v703 = vld [vmem:[%s695 + $0x9c] sm:%s688]
                  %704 = vst [vmem:[%s696 + $0x54] sm:%s688] %v703
                  %v705 = vld [vmem:[%s695 + $0xd0] sm:%s688]
                  %706 = vst [vmem:[%s696 + $0x70] sm:%s688] %v705
                  %v707 = vld [vmem:[%s695 + $0x104] sm:%s688]
                  %708 = vst [vmem:[%s696 + $0x8c] sm:%s688] %v707
                  %v709 = vld [vmem:[%s695 + $0x138] sm:%s688]
                  %710 = vst [vmem:[%s696 + $0xa8] sm:%s688] %v709
                  %v711 = vld [vmem:[%s695 + $0x16c] sm:%s688]
                  %712 = vst [vmem:[%s696 + $0xc4] sm:%s688] %v711
                  %v713 = vld [vmem:[%s695 + $0x1a0] sm:%s688]
                  %714 = vst [vmem:[%s696 + $0xe0] sm:%s688] %v713
                  %v715 = vld [vmem:[%s695 + $0x1d4] sm:%s688]
                  %716 = vst [vmem:[%s696 + $0xfc] sm:%s688] %v715
                  %v717 = vld [vmem:[%s695 + $0x208] sm:%s688]
                  %718 = vst [vmem:[%s696 + $0x118] sm:%s688] %v717
                  %v719 = vld [vmem:[%s695 + $0x23c] sm:%s688]
                  %720 = vst [vmem:[%s696 + $0x134] sm:%s688] %v719
                  %v721 = vld [vmem:[%s695 + $0x270] sm:%s688]
                  %722 = vst [vmem:[%s696 + $0x150] sm:%s688] %v721
                  %v723 = vld [vmem:[%s695 + $0x2a4] sm:%s688]
                  %724 = vst [vmem:[%s696 + $0x16c] sm:%s688] %v723
                  %v725 = vld [vmem:[%s695 + $0x2d8] sm:%s688]
                  %726 = vst [vmem:[%s696 + $0x188] sm:%s688] %v725
                  %v727 = vld [vmem:[%s695 + $0x30c] sm:%s688]
                  %728 = vst [vmem:[%s696 + $0x1a4] sm:%s688] %v727
                  %v729 = vld [vmem:[%s695 + $0x340] sm:%s688]
                  %730 = vst [vmem:[%s696 + $0x1c0] sm:%s688] %v729
                  %v731 = vld [vmem:[%s695 + $0x374] sm:%s688]
                  %732 = vst [vmem:[%s696 + $0x1dc] sm:%s688] %v731
                  %v733 = vld [vmem:[%s695 + $0x3a8] sm:%s688]
                  %734 = vst [vmem:[%s696 + $0x1f8] sm:%s688] %v733
                $region88: #{densenet_forward.4} parent=68 // loop_footer
                  %s694 = sadd.s32 1, %s690
                $region89: #{densenet_forward.4} parent=68 // loop_footer_branch
                  %689 = sbr.rel target = $region85
                $region90: #{densenet_forward.4} parent=68 // loop_exit
                  _
              $region69: #{densenet_forward.4} parent=35 // pred_fallthru
                _
            $region36: #{densenet_forward.4} parent=31 // pred_fallthru
              _
            // Predicated region
            $region37: #{densenet_forward.4} parent=31 // pred_check
              %p151 = pneg %p147
            $region38: #{densenet_forward.4} parent=31 // pred_check_branch
              %153 = sbr.rel (%p151) target = $region40
            $region39: #{densenet_forward.4} parent=31 // pred_region
              %s154 = sshllo.u32 0, %s143
              loop: start=0, step=1, limit=1
              $region41: #{densenet_forward.4} parent=39 // loop_pre_header
                _
              $region42: #{densenet_forward.4} parent=39 // loop_header
                %s156 = sphi 0, %s160
                %p157 = scmp.ge.s32.totalorder %s156, 1
                %s161 = sphi %s142, %s142
                %s162 = sphi %s134, %s134
              $region43: #{densenet_forward.4} parent=39 // loop_header_branch
                %159 = sbr.rel (%p157) target = $region47
              $region44: #{densenet_forward.4} parent=39 // loop_body
                %v163 = vld [vmem:[%s161] sm:%s154]
                %164 = vst [vmem:[%s162] sm:%s154] %v163
                %v165 = vld [vmem:[%s161 + $0x34] sm:%s154]
                %166 = vst [vmem:[%s162 + $0x1c] sm:%s154] %v165
                %v167 = vld [vmem:[%s161 + $0x68] sm:%s154]
                %168 = vst [vmem:[%s162 + $0x38] sm:%s154] %v167
                %v169 = vld [vmem:[%s161 + $0x9c] sm:%s154]
                %170 = vst [vmem:[%s162 + $0x54] sm:%s154] %v169
                %v171 = vld [vmem:[%s161 + $0xd0] sm:%s154]
                %172 = vst [vmem:[%s162 + $0x70] sm:%s154] %v171
                %v173 = vld [vmem:[%s161 + $0x104] sm:%s154]
                %174 = vst [vmem:[%s162 + $0x8c] sm:%s154] %v173
                %v175 = vld [vmem:[%s161 + $0x138] sm:%s154]
                %176 = vst [vmem:[%s162 + $0xa8] sm:%s154] %v175
                %v177 = vld [vmem:[%s161 + $0x16c] sm:%s154]
                %178 = vst [vmem:[%s162 + $0xc4] sm:%s154] %v177
                %v179 = vld [vmem:[%s161 + $0x1a0] sm:%s154]
                %180 = vst [vmem:[%s162 + $0xe0] sm:%s154] %v179
                %v181 = vld [vmem:[%s161 + $0x1d4] sm:%s154]
                %182 = vst [vmem:[%s162 + $0xfc] sm:%s154] %v181
                %v183 = vld [vmem:[%s161 + $0x208] sm:%s154]
                %184 = vst [vmem:[%s162 + $0x118] sm:%s154] %v183
                %v185 = vld [vmem:[%s161 + $0x23c] sm:%s154]
                %186 = vst [vmem:[%s162 + $0x134] sm:%s154] %v185
                %v187 = vld [vmem:[%s161 + $0x270] sm:%s154]
                %188 = vst [vmem:[%s162 + $0x150] sm:%s154] %v187
                %v189 = vld [vmem:[%s161 + $0x2a4] sm:%s154]
                %190 = vst [vmem:[%s162 + $0x16c] sm:%s154] %v189
                %v191 = vld [vmem:[%s161 + $0x2d8] sm:%s154]
                %192 = vst [vmem:[%s162 + $0x188] sm:%s154] %v191
                %v193 = vld [vmem:[%s161 + $0x30c] sm:%s154]
                %194 = vst [vmem:[%s162 + $0x1a4] sm:%s154] %v193
                %v195 = vld [vmem:[%s161 + $0x340] sm:%s154]
                %196 = vst [vmem:[%s162 + $0x1c0] sm:%s154] %v195
                %v197 = vld [vmem:[%s161 + $0x374] sm:%s154]
                %198 = vst [vmem:[%s162 + $0x1dc] sm:%s154] %v197
                %v199 = vld [vmem:[%s161 + $0x3a8] sm:%s154]
                %200 = vst [vmem:[%s162 + $0x1f8] sm:%s154] %v199
              $region45: #{densenet_forward.4} parent=39 // loop_footer
                %s160 = sadd.s32 1, %s156
              $region46: #{densenet_forward.4} parent=39 // loop_footer_branch
                %155 = sbr.rel target = $region42
              $region47: #{densenet_forward.4} parent=39 // loop_exit
                _
            $region40: #{densenet_forward.4} parent=31 // pred_fallthru
              _
          $region32: #{densenet_forward.4} parent=27 // pred_fallthru
            _
          %735 = vnop
        $region28: #{densenet_forward.4} parent=23 // pred_fallthru
          _
      $region24: #{densenet_forward.4} parent=5 // pred_fallthru
        _
      %p736 = scmp.le.s32.totalorder 1, %s9
      %p737 = scmp.lt.s32.totalorder %s9, 3
      %p738 = pnand %p736, %p737
      %p739 = pneg %p738
      // Predicated region
      $region91: #{densenet_forward.4} parent=5 // pred_check
        _
      $region92: #{densenet_forward.4} parent=5 // pred_check_branch
        %741 = sbr.rel (%p738) target = $region94
      $region93: #{densenet_forward.4} parent=5 // pred_region
        %s742 = ssub.s32 %s9, 1
        %s743 = sand.u32 %s22, 1
        %s744 = sand.u32 %s22, 1
        %s745 = smul.addr %s744, 532
        %s746 = scalar_lea.vmem [#allocation2], %s745
        // Predicated region
        $region95: #{densenet_forward.4} parent=93 // pred_check
          %p747 = pneg %p35
        $region96: #{densenet_forward.4} parent=93 // pred_check_branch
          %749 = sbr.rel (%p747) target = $region98
        $region97: #{densenet_forward.4} parent=93 // pred_region
          _
        $region98: #{densenet_forward.4} parent=93 // pred_fallthru
          _
        %s750 = sand.u32 %s22, 1
        %s751 = sand.u32 %s22, 1
        %s752 = smul.addr %s751, 532
        %s753 = scalar_lea.vmem [#allocation2], %s752
        %p754 = pneg %p35
        %p755 = pneg %p32
        %p756 = pneg %p56
        %p757 = pneg %p53
        %p758 = pneg %p77
        %p759 = pneg %p74
        %p760 = pneg %p103
        %p761 = pneg %p100
        %s762 = sand.u32 %s90, 1
        %s763 = sand.u32 %s90, 1
        %s764 = smul.addr %s763, 112
        %s765 = scalar_lea.vmem [#allocation3], %s764
        %s766 = smul.u32 7, %s14
        %s767 = ssub.s32 13, %s766
        %p768 = scmp.lt.s32.totalorder %s767, 7
        %s769 = scalar_select %p768, %s767, 7
        %s770 = smul.u32 1216, %s769
        %s771 = smul.u32 7, %s14
        %s772 = ssub.s32 13, %s771
        %p773 = scmp.lt.s32.totalorder %s772, 7
        %s774 = scalar_select %p773, %s772, 7
        %s775 = smul.u32 256, %s774
        %v777 = vld [vmem:[%s1] sm:$0xff]
        %v778 = vld [vmem:[%s1 + $0x8] sm:$0xff]
        %v779 = vld [vmem:[%s746] sm:$0xff]
        %v780 = vld [vmem:[%s746 + $0x8] sm:$0xff]
        %v781 = vld [vmem:[%s746 + $0x10] sm:$0xff]
        %v782 = vld [vmem:[%s746 + $0x18] sm:$0xf]
        %v783 = vld [vmem:[%s746 + $0x1c] sm:$0xff]
        %v784 = vld [vmem:[%s746 + $0x24] sm:$0xff]
        %v785 = vld [vmem:[%s746 + $0x2c] sm:$0xff]
        %v786 = vld [vmem:[%s746 + $0x34] sm:$0xf]
        %v787 = vld [vmem:[%s746 + $0x38] sm:$0xff]
        %v788 = vld [vmem:[%s746 + $0x40] sm:$0xff]
        %v789 = vld [vmem:[%s746 + $0x48] sm:$0xff]
        %v790 = vld [vmem:[%s746 + $0x50] sm:$0xf]
        %v791 = vld [vmem:[%s746 + $0x54] sm:$0xff]
        %v792 = vld [vmem:[%s746 + $0x5c] sm:$0xff]
        %v793 = vld [vmem:[%s746 + $0x64] sm:$0xff]
        %v794 = vld [vmem:[%s746 + $0x6c] sm:$0xf]
        %v795 = vld [vmem:[%s746 + $0x70] sm:$0xff]
        %v796 = vld [vmem:[%s746 + $0x78] sm:$0xff]
        %v797 = vld [vmem:[%s746 + $0x80] sm:$0xff]
        %v798 = vld [vmem:[%s746 + $0x88] sm:$0xf]
        %v799 = vld [vmem:[%s746 + $0x8c] sm:$0xff]
        %v800 = vld [vmem:[%s746 + $0x94] sm:$0xff]
        %v801 = vld [vmem:[%s746 + $0x9c] sm:$0xff]
        %v802 = vld [vmem:[%s746 + $0xa4] sm:$0xf]
        %v803 = vld [vmem:[%s746 + $0xa8] sm:$0xff]
        %v804 = vld [vmem:[%s746 + $0xb0] sm:$0xff]
        %v805 = vld [vmem:[%s746 + $0xb8] sm:$0xff]
        %v806 = vld [vmem:[%s746 + $0xc0] sm:$0xf]
        %v807 = vld [vmem:[%s746 + $0xc4] sm:$0xff]
        %v808 = vld [vmem:[%s746 + $0xcc] sm:$0xff]
        %v809 = vld [vmem:[%s746 + $0xd4] sm:$0xff]
        %v810 = vld [vmem:[%s746 + $0xdc] sm:$0xf]
        %v811 = vld [vmem:[%s746 + $0xe0] sm:$0xff]
        %v812 = vld [vmem:[%s746 + $0xe8] sm:$0xff]
        %v813 = vld [vmem:[%s746 + $0xf0] sm:$0xff]
        %v814 = vld [vmem:[%s746 + $0xf8] sm:$0xf]
        %v815 = vld [vmem:[%s746 + $0xfc] sm:$0xff]
        %v816 = vld [vmem:[%s746 + $0x104] sm:$0xff]
        %v817 = vld [vmem:[%s746 + $0x10c] sm:$0xff]
        %v818 = vld [vmem:[%s746 + $0x114] sm:$0xf]
        %v819 = vld [vmem:[%s746 + $0x118] sm:$0xff]
        %v820 = vld [vmem:[%s746 + $0x120] sm:$0xff]
        %v821 = vld [vmem:[%s746 + $0x128] sm:$0xff]
        %v822 = vld [vmem:[%s746 + $0x130] sm:$0xf]
        %v823 = vld [vmem:[%s746 + $0x134] sm:$0xff]
        %v824 = vld [vmem:[%s746 + $0x13c] sm:$0xff]
        %v825 = vld [vmem:[%s746 + $0x144] sm:$0xff]
        %v826 = vld [vmem:[%s746 + $0x14c] sm:$0xf]
        %v827 = vld [vmem:[%s746 + $0x150] sm:$0xff]
        %v828 = vld [vmem:[%s746 + $0x158] sm:$0xff]
        %v829 = vld [vmem:[%s746 + $0x160] sm:$0xff]
        %v830 = vld [vmem:[%s746 + $0x168] sm:$0xf]
        %v831 = vld [vmem:[%s746 + $0x16c] sm:$0xff]
        %v832 = vld [vmem:[%s746 + $0x174] sm:$0xff]
        %v833 = vld [vmem:[%s746 + $0x17c] sm:$0xff]
        %v834 = vld [vmem:[%s746 + $0x184] sm:$0xf]
        %v835 = vld [vmem:[%s746 + $0x188] sm:$0xff]
        %v836 = vld [vmem:[%s746 + $0x190] sm:$0xff]
        %v837 = vld [vmem:[%s746 + $0x198] sm:$0xff]
        %v838 = vld [vmem:[%s746 + $0x1a0] sm:$0xf]
        %v839 = vld [vmem:[%s746 + $0x1a4] sm:$0xff]
        %v840 = vld [vmem:[%s746 + $0x1ac] sm:$0xff]
        %v841 = vld [vmem:[%s746 + $0x1b4] sm:$0xff]
        %v842 = vld [vmem:[%s746 + $0x1bc] sm:$0xf]
        %v843 = vld [vmem:[%s746 + $0x1c0] sm:$0xff]
        %v844 = vld [vmem:[%s746 + $0x1c8] sm:$0xff]
        %v845 = vld [vmem:[%s746 + $0x1d0] sm:$0xff]
        %v846 = vld [vmem:[%s746 + $0x1d8] sm:$0xf]
        %v847 = vld [vmem:[%s746 + $0x1dc] sm:$0xff]
        %v848 = vld [vmem:[%s746 + $0x1e4] sm:$0xff]
        %v849 = vld [vmem:[%s746 + $0x1ec] sm:$0xff]
        %v850 = vld [vmem:[%s746 + $0x1f4] sm:$0xf]
        %v851 = vld [vmem:[%s746 + $0x1f8] sm:$0x33]
        %v852 = vld [vmem:[%s746 + $0x200] sm:$0x33]
        %v853 = vld [vmem:[%s746 + $0x208] sm:$0x33]
        %v854 = vld [vmem:[%s746 + $0x210] sm:$0x3]
        %v855 = vld [vmem:[%s2] sm:$0xff]
        %v856 = vld [vmem:[%s2 + $0x8] sm:$0xff]
        %858 = vset.pattern.permute.xlu0 0
        %859 = vperm.xlu0 %858, %v855
        %v860 = vpop.permute.xlu0 %859
        %863 = vset.pattern.permute.xlu0 0
        %864 = vperm.xlu0 %863, %v856
        %v865 = vpop.permute.xlu0 %864
        %v869 = vunpack.c.l.b16 %v777
        %v870 = vunpack.c.h.b16 %v777
        %v871 = vunpack.c.l.b16 %v778
        %v872 = vunpack.c.h.b16 %v778
        %v873 = vpack.c.b16 %v871, %v869
        %v874 = vpack.c.b16 %v872, %v870
        %v952 = vunpack.c.l.b16 %v779
        %v953 = vunpack.c.h.b16 %v779
        %v954 = vunpack.c.l.b16 %v780
        %v955 = vunpack.c.h.b16 %v780
        %v956 = vunpack.c.l.b16 %v781
        %v957 = vunpack.c.h.b16 %v781
        %v958 = vunpack.c.l.b16 %v782
        %v959 = vunpack.c.l.b16 %v783
        %v960 = vunpack.c.h.b16 %v783
        %v961 = vunpack.c.l.b16 %v784
        %v962 = vunpack.c.h.b16 %v784
        %v963 = vunpack.c.l.b16 %v785
        %v964 = vunpack.c.h.b16 %v785
        %v965 = vunpack.c.l.b16 %v786
        %v966 = vunpack.c.l.b16 %v787
        %v967 = vunpack.c.h.b16 %v787
        %v968 = vunpack.c.l.b16 %v788
        %v969 = vunpack.c.h.b16 %v788
        %v970 = vunpack.c.l.b16 %v789
        %v971 = vunpack.c.h.b16 %v789
        %v972 = vunpack.c.l.b16 %v790
        %v973 = vunpack.c.l.b16 %v791
        %v974 = vunpack.c.h.b16 %v791
        %v975 = vunpack.c.l.b16 %v792
        %v976 = vunpack.c.h.b16 %v792
        %v977 = vunpack.c.l.b16 %v793
        %v978 = vunpack.c.h.b16 %v793
        %v979 = vunpack.c.l.b16 %v794
        %v980 = vunpack.c.l.b16 %v795
        %v981 = vunpack.c.h.b16 %v795
        %v982 = vunpack.c.l.b16 %v796
        %v983 = vunpack.c.h.b16 %v796
        %v984 = vunpack.c.l.b16 %v797
        %v985 = vunpack.c.h.b16 %v797
        %v986 = vunpack.c.l.b16 %v798
        %v987 = vunpack.c.l.b16 %v799
        %v988 = vunpack.c.h.b16 %v799
        %v989 = vunpack.c.l.b16 %v800
        %v990 = vunpack.c.h.b16 %v800
        %v991 = vunpack.c.l.b16 %v801
        %v992 = vunpack.c.h.b16 %v801
        %v993 = vunpack.c.l.b16 %v802
        %v994 = vunpack.c.l.b16 %v803
        %v995 = vunpack.c.h.b16 %v803
        %v996 = vunpack.c.l.b16 %v804
        %v997 = vunpack.c.h.b16 %v804
        %v998 = vunpack.c.l.b16 %v805
        %v999 = vunpack.c.h.b16 %v805
        %v1000 = vunpack.c.l.b16 %v806
        %v1001 = vunpack.c.l.b16 %v807
        %v1002 = vunpack.c.h.b16 %v807
        %v1003 = vunpack.c.l.b16 %v808
        %v1004 = vunpack.c.h.b16 %v808
        %v1005 = vunpack.c.l.b16 %v809
        %v1006 = vunpack.c.h.b16 %v809
        %v1007 = vunpack.c.l.b16 %v810
        %v1008 = vunpack.c.l.b16 %v811
        %v1009 = vunpack.c.h.b16 %v811
        %v1010 = vunpack.c.l.b16 %v812
        %v1011 = vunpack.c.h.b16 %v812
        %v1012 = vunpack.c.l.b16 %v813
        %v1013 = vunpack.c.h.b16 %v813
        %v1014 = vunpack.c.l.b16 %v814
        %v1015 = vunpack.c.l.b16 %v815
        %v1016 = vunpack.c.h.b16 %v815
        %v1017 = vunpack.c.l.b16 %v816
        %v1018 = vunpack.c.h.b16 %v816
        %v1019 = vunpack.c.l.b16 %v817
        %v1020 = vunpack.c.h.b16 %v817
        %v1021 = vunpack.c.l.b16 %v818
        %v1022 = vunpack.c.l.b16 %v819
        %v1023 = vunpack.c.h.b16 %v819
        %v1024 = vunpack.c.l.b16 %v820
        %v1025 = vunpack.c.h.b16 %v820
        %v1026 = vunpack.c.l.b16 %v821
        %v1027 = vunpack.c.h.b16 %v821
        %v1028 = vunpack.c.l.b16 %v822
        %v1029 = vunpack.c.l.b16 %v823
        %v1030 = vunpack.c.h.b16 %v823
        %v1031 = vunpack.c.l.b16 %v824
        %v1032 = vunpack.c.h.b16 %v824
        %v1033 = vunpack.c.l.b16 %v825
        %v1034 = vunpack.c.h.b16 %v825
        %v1035 = vunpack.c.l.b16 %v826
        %v1036 = vunpack.c.l.b16 %v827
        %v1037 = vunpack.c.h.b16 %v827
        %v1038 = vunpack.c.l.b16 %v828
        %v1039 = vunpack.c.h.b16 %v828
        %v1040 = vunpack.c.l.b16 %v829
        %v1041 = vunpack.c.h.b16 %v829
        %v1042 = vunpack.c.l.b16 %v830
        %v1043 = vunpack.c.l.b16 %v831
        %v1044 = vunpack.c.h.b16 %v831
        %v1045 = vunpack.c.l.b16 %v832
        %v1046 = vunpack.c.h.b16 %v832
        %v1047 = vunpack.c.l.b16 %v833
        %v1048 = vunpack.c.h.b16 %v833
        %v1049 = vunpack.c.l.b16 %v834
        %v1050 = vunpack.c.l.b16 %v835
        %v1051 = vunpack.c.h.b16 %v835
        %v1052 = vunpack.c.l.b16 %v836
        %v1053 = vunpack.c.h.b16 %v836
        %v1054 = vunpack.c.l.b16 %v837
        %v1055 = vunpack.c.h.b16 %v837
        %v1056 = vunpack.c.l.b16 %v838
        %v1057 = vunpack.c.l.b16 %v839
        %v1058 = vunpack.c.h.b16 %v839
        %v1059 = vunpack.c.l.b16 %v840
        %v1060 = vunpack.c.h.b16 %v840
        %v1061 = vunpack.c.l.b16 %v841
        %v1062 = vunpack.c.h.b16 %v841
        %v1063 = vunpack.c.l.b16 %v842
        %v1064 = vunpack.c.l.b16 %v843
        %v1065 = vunpack.c.h.b16 %v843
        %v1066 = vunpack.c.l.b16 %v844
        %v1067 = vunpack.c.h.b16 %v844
        %v1068 = vunpack.c.l.b16 %v845
        %v1069 = vunpack.c.h.b16 %v845
        %v1070 = vunpack.c.l.b16 %v846
        %v1071 = vunpack.c.l.b16 %v847
        %v1072 = vunpack.c.h.b16 %v847
        %v1073 = vunpack.c.l.b16 %v848
        %v1074 = vunpack.c.h.b16 %v848
        %v1075 = vunpack.c.l.b16 %v849
        %v1076 = vunpack.c.h.b16 %v849
        %v1077 = vunpack.c.l.b16 %v850
        %v1078 = vunpack.c.l.b16 %v851
        %v1079 = vunpack.c.h.b16 %v851
        %v1080 = vunpack.c.l.b16 %v852
        %v1081 = vunpack.c.h.b16 %v852
        %v1082 = vunpack.c.l.b16 %v853
        %v1083 = vunpack.c.h.b16 %v853
        %v1084 = vunpack.c.l.b16 %v854
        %v1085 = vpack.c.b16 %v959, %v952
        %v1086 = vpack.c.b16 %v960, %v953
        %v1087 = vpack.c.b16 %v961, %v954
        %v1088 = vpack.c.b16 %v962, %v955
        %v1089 = vpack.c.b16 %v963, %v956
        %v1090 = vpack.c.b16 %v964, %v957
        %v1091 = vpack.c.b16 %v965, %v958
        %v1092 = vpack.c.b16 %v973, %v966
        %v1093 = vpack.c.b16 %v974, %v967
        %v1094 = vpack.c.b16 %v975, %v968
        %v1095 = vpack.c.b16 %v976, %v969
        %v1096 = vpack.c.b16 %v977, %v970
        %v1097 = vpack.c.b16 %v978, %v971
        %v1098 = vpack.c.b16 %v979, %v972
        %v1099 = vpack.c.b16 %v987, %v980
        %v1100 = vpack.c.b16 %v988, %v981
        %v1101 = vpack.c.b16 %v989, %v982
        %v1102 = vpack.c.b16 %v990, %v983
        %v1103 = vpack.c.b16 %v991, %v984
        %v1104 = vpack.c.b16 %v992, %v985
        %v1105 = vpack.c.b16 %v993, %v986
        %v1106 = vpack.c.b16 %v1001, %v994
        %v1107 = vpack.c.b16 %v1002, %v995
        %v1108 = vpack.c.b16 %v1003, %v996
        %v1109 = vpack.c.b16 %v1004, %v997
        %v1110 = vpack.c.b16 %v1005, %v998
        %v1111 = vpack.c.b16 %v1006, %v999
        %v1112 = vpack.c.b16 %v1007, %v1000
        %v1113 = vpack.c.b16 %v1015, %v1008
        %v1114 = vpack.c.b16 %v1016, %v1009
        %v1115 = vpack.c.b16 %v1017, %v1010
        %v1116 = vpack.c.b16 %v1018, %v1011
        %v1117 = vpack.c.b16 %v1019, %v1012
        %v1118 = vpack.c.b16 %v1020, %v1013
        %v1119 = vpack.c.b16 %v1021, %v1014
        %v1120 = vpack.c.b16 %v1029, %v1022
        %v1121 = vpack.c.b16 %v1030, %v1023
        %v1122 = vpack.c.b16 %v1031, %v1024
        %v1123 = vpack.c.b16 %v1032, %v1025
        %v1124 = vpack.c.b16 %v1033, %v1026
        %v1125 = vpack.c.b16 %v1034, %v1027
        %v1126 = vpack.c.b16 %v1035, %v1028
        %v1127 = vpack.c.b16 %v1043, %v1036
        %v1128 = vpack.c.b16 %v1044, %v1037
        %v1129 = vpack.c.b16 %v1045, %v1038
        %v1130 = vpack.c.b16 %v1046, %v1039
        %v1131 = vpack.c.b16 %v1047, %v1040
        %v1132 = vpack.c.b16 %v1048, %v1041
        %v1133 = vpack.c.b16 %v1049, %v1042
        %v1134 = vpack.c.b16 %v1057, %v1050
        %v1135 = vpack.c.b16 %v1058, %v1051
        %v1136 = vpack.c.b16 %v1059, %v1052
        %v1137 = vpack.c.b16 %v1060, %v1053
        %v1138 = vpack.c.b16 %v1061, %v1054
        %v1139 = vpack.c.b16 %v1062, %v1055
        %v1140 = vpack.c.b16 %v1063, %v1056
        %v1141 = vpack.c.b16 %v1071, %v1064
        %v1142 = vpack.c.b16 %v1072, %v1065
        %v1143 = vpack.c.b16 %v1073, %v1066
        %v1144 = vpack.c.b16 %v1074, %v1067
        %v1145 = vpack.c.b16 %v1075, %v1068
        %v1146 = vpack.c.b16 %v1076, %v1069
        %v1147 = vpack.c.b16 %v1077, %v1070
        %v1148 = vpack.c.b16 %v1078, %v1078
        %v1149 = vpack.c.b16 %v1079, %v1079
        %v1150 = vpack.c.b16 %v1080, %v1080
        %v1151 = vpack.c.b16 %v1081, %v1081
        %v1152 = vpack.c.b16 %v1082, %v1082
        %v1153 = vpack.c.b16 %v1083, %v1083
        %v1154 = vpack.c.b16 %v1084, %v1084
        %vm1218 = vcmask 154624
        %v1220 = vsel %vm1218, %v874, 0
        %vm1222 = vcmask 1040384
        %vm1223 = vcmask 1041408
        %v1224 = vsel %vm1222, 4294967295, 65535
        %v1225 = vsel %vm1223, %v1224, 0
        %v1227 = vand.u32 %v1148, %v1225
        %v1230 = vand.u32 %v1149, %v1225
        %v1233 = vand.u32 %v1150, %v1225
        %v1236 = vand.u32 %v1151, %v1225
        %v1239 = vand.u32 %v1152, %v1225
        %v1242 = vand.u32 %v1153, %v1225
        %v1245 = vand.u32 %v1154, %v1225
        %1247 = vmatprep.subr.bf16.mxu0 %v1086
        %1248 = vmatpush1.bf16.msra.mxu0 %v1085
        %1249 = vmatprep.subr.bf16.mxu0 %v1093
        %1250 = vmatpush1.bf16.msra.mxu0 %v1092
        %1251 = vmatprep.subr.bf16.mxu0 %v1100
        %1252 = vmatpush1.bf16.msra.mxu0 %v1099
        %1253 = vmatprep.subr.bf16.mxu0 %v1107
        %1254 = vmatpush1.bf16.msra.mxu0 %v1106
        %1255 = vmatprep.subr.bf16.mxu0 %v1114
        %1256 = vmatpush1.bf16.msra.mxu0 %v1113
        %1257 = vmatprep.subr.bf16.mxu0 %v1121
        %1258 = vmatpush1.bf16.msra.mxu0 %v1120
        %1259 = vmatprep.subr.bf16.mxu0 %v1128
        %1260 = vmatpush1.bf16.msra.mxu0 %v1127
        %1261 = vmatprep.subr.bf16.mxu0 %v1135
        %1262 = vmatpush1.bf16.msra.mxu0 %v1134
        %1263 = vmatprep.subr.bf16.mxu0 %v1142
        %1264 = vmatpush1.bf16.msra.mxu0 %v1141
        %1265 = vmatprep.subr.bf16.mxu0 %v1230
        %1266 = vmatpush1.bf16.msra.mxu0 %v1227
        %1267 = vmatprep.subr.bf16.mxu0 0
        %1268 = vmatpush1.bf16.msra.mxu0 0
        %1269 = vmatprep.subr.bf16.mxu0 0
        %1270 = vmatpush1.bf16.msra.mxu0 0
        %1271 = vmatprep.subr.bf16.mxu0 0
        %1272 = vmatpush1.bf16.msra.mxu0 0
        %1273 = vmatprep.subr.bf16.mxu0 0
        %1274 = vmatpush1.bf16.msra.mxu0 0
        %1275 = vmatprep.subr.bf16.mxu0 0
        %1276 = vmatpush1.bf16.msra.mxu0 0
        %1277 = vmatprep.subr.bf16.mxu0 0
        %1278 = vmatpush1.bf16.msra.mxu0 0
        %1279 = vmatprep.mubr.bf16.mxu0 %v1220
        %1280 = vmatmul.mubr.bf16.gmra.mrb[0].mxu0 %v873
        %v1281 = vpop.f32.mrb[0].mxu0
        %v1282 = vadd.f32 %v860, %v1281
        %v1283 = vpop.f32.mrb[0].mxu0
        %v1284 = vadd.f32 %v860, %v1283
        %v1285 = vpop.f32.mrb[0].mxu0
        %v1286 = vadd.f32 %v865, %v1285
        %v1287 = vpop.f32.mrb[0].mxu0
        %v1288 = vadd.f32 %v865, %v1287
        %1289 = vdwg.mxu0
        %1290 = vmatprep.subr.bf16.mxu0 %v1088
        %1291 = vmatpush1.bf16.msra.mxu0 %v1087
        %1292 = vmatprep.subr.bf16.mxu0 %v1095
        %1293 = vmatpush1.bf16.msra.mxu0 %v1094
        %1294 = vmatprep.subr.bf16.mxu0 %v1102
        %1295 = vmatpush1.bf16.msra.mxu0 %v1101
        %1296 = vmatprep.subr.bf16.mxu0 %v1109
        %1297 = vmatpush1.bf16.msra.mxu0 %v1108
        %1298 = vmatprep.subr.bf16.mxu0 %v1116
        %1299 = vmatpush1.bf16.msra.mxu0 %v1115
        %1300 = vmatprep.subr.bf16.mxu0 %v1123
        %1301 = vmatpush1.bf16.msra.mxu0 %v1122
        %1302 = vmatprep.subr.bf16.mxu0 %v1130
        %1303 = vmatpush1.bf16.msra.mxu0 %v1129
        %1304 = vmatprep.subr.bf16.mxu0 %v1137
        %1305 = vmatpush1.bf16.msra.mxu0 %v1136
        %1306 = vmatprep.subr.bf16.mxu0 %v1144
        %1307 = vmatpush1.bf16.msra.mxu0 %v1143
        %1308 = vmatprep.subr.bf16.mxu0 %v1236
        %1309 = vmatpush1.bf16.msra.mxu0 %v1233
        %1310 = vmatprep.subr.bf16.mxu0 0
        %1311 = vmatpush1.bf16.msra.mxu0 0
        %1312 = vmatprep.subr.bf16.mxu0 0
        %1313 = vmatpush1.bf16.msra.mxu0 0
        %1314 = vmatprep.subr.bf16.mxu0 0
        %1315 = vmatpush1.bf16.msra.mxu0 0
        %1316 = vmatprep.subr.bf16.mxu0 0
        %1317 = vmatpush1.bf16.msra.mxu0 0
        %1318 = vmatprep.subr.bf16.mxu0 0
        %1319 = vmatpush1.bf16.msra.mxu0 0
        %1320 = vmatprep.subr.bf16.mxu0 0
        %1321 = vmatpush1.bf16.msra.mxu0 0
        %1322 = vmatprep.mubr.bf16.mxu0 %v1220
        %1323 = vmatmul.mubr.bf16.gmra.mrb[0].mxu0 %v873
        %v1324 = vpop.f32.mrb[0].mxu0
        %v1325 = vadd.f32 %v860, %v1324
        %v1326 = vpop.f32.mrb[0].mxu0
        %v1327 = vadd.f32 %v860, %v1326
        %v1328 = vpop.f32.mrb[0].mxu0
        %v1329 = vadd.f32 %v865, %v1328
        %v1330 = vpop.f32.mrb[0].mxu0
        %v1331 = vadd.f32 %v865, %v1330
        %1332 = vdwg.mxu0
        %1333 = vmatprep.subr.bf16.mxu0 %v1090
        %1334 = vmatpush1.bf16.msra.mxu0 %v1089
        %1335 = vmatprep.subr.bf16.mxu0 %v1097
        %1336 = vmatpush1.bf16.msra.mxu0 %v1096
        %1337 = vmatprep.subr.bf16.mxu0 %v1104
        %1338 = vmatpush1.bf16.msra.mxu0 %v1103
        %1339 = vmatprep.subr.bf16.mxu0 %v1111
        %1340 = vmatpush1.bf16.msra.mxu0 %v1110
        %1341 = vmatprep.subr.bf16.mxu0 %v1118
        %1342 = vmatpush1.bf16.msra.mxu0 %v1117
        %1343 = vmatprep.subr.bf16.mxu0 %v1125
        %1344 = vmatpush1.bf16.msra.mxu0 %v1124
        %1345 = vmatprep.subr.bf16.mxu0 %v1132
        %1346 = vmatpush1.bf16.msra.mxu0 %v1131
        %1347 = vmatprep.subr.bf16.mxu0 %v1139
        %1348 = vmatpush1.bf16.msra.mxu0 %v1138
        %1349 = vmatprep.subr.bf16.mxu0 %v1146
        %1350 = vmatpush1.bf16.msra.mxu0 %v1145
        %1351 = vmatprep.subr.bf16.mxu0 %v1242
        %1352 = vmatpush1.bf16.msra.mxu0 %v1239
        %1353 = vmatprep.subr.bf16.mxu0 0
        %1354 = vmatpush1.bf16.msra.mxu0 0
        %1355 = vmatprep.subr.bf16.mxu0 0
        %1356 = vmatpush1.bf16.msra.mxu0 0
        %1357 = vmatprep.subr.bf16.mxu0 0
        %1358 = vmatpush1.bf16.msra.mxu0 0
        %1359 = vmatprep.subr.bf16.mxu0 0
        %1360 = vmatpush1.bf16.msra.mxu0 0
        %1361 = vmatprep.subr.bf16.mxu0 0
        %1362 = vmatpush1.bf16.msra.mxu0 0
        %1363 = vmatprep.subr.bf16.mxu0 0
        %1364 = vmatpush1.bf16.msra.mxu0 0
        %1365 = vmatprep.mubr.bf16.mxu0 %v1220
        %1366 = vmatmul.mubr.bf16.gmra.mrb[0].mxu0 %v873
        %v1367 = vpop.f32.mrb[0].mxu0
        %v1368 = vadd.f32 %v860, %v1367
        %v1369 = vpop.f32.mrb[0].mxu0
        %v1370 = vadd.f32 %v860, %v1369
        %v1371 = vpop.f32.mrb[0].mxu0
        %v1372 = vadd.f32 %v865, %v1371
        %v1373 = vpop.f32.mrb[0].mxu0
        %v1374 = vadd.f32 %v865, %v1373
        %1375 = vdwg.mxu0
        %1376 = vmatprep.subr.bf16.mxu0 0
        %1377 = vmatpush1.bf16.msra.mxu0 %v1091
        %1378 = vmatprep.subr.bf16.mxu0 0
        %1379 = vmatpush1.bf16.msra.mxu0 %v1098
        %1380 = vmatprep.subr.bf16.mxu0 0
        %1381 = vmatpush1.bf16.msra.mxu0 %v1105
        %1382 = vmatprep.subr.bf16.mxu0 0
        %1383 = vmatpush1.bf16.msra.mxu0 %v1112
        %1384 = vmatprep.subr.bf16.mxu0 0
        %1385 = vmatpush1.bf16.msra.mxu0 %v1119
        %1386 = vmatprep.subr.bf16.mxu0 0
        %1387 = vmatpush1.bf16.msra.mxu0 %v1126
        %1388 = vmatprep.subr.bf16.mxu0 0
        %1389 = vmatpush1.bf16.msra.mxu0 %v1133
        %1390 = vmatprep.subr.bf16.mxu0 0
        %1391 = vmatpush1.bf16.msra.mxu0 %v1140
        %1392 = vmatprep.subr.bf16.mxu0 0
        %1393 = vmatpush1.bf16.msra.mxu0 %v1147
        %1394 = vmatprep.subr.bf16.mxu0 0
        %1395 = vmatpush1.bf16.msra.mxu0 %v1245
        %1396 = vmatprep.subr.bf16.mxu0 0
        %1397 = vmatpush1.bf16.msra.mxu0 0
        %1398 = vmatprep.subr.bf16.mxu0 0
        %1399 = vmatpush1.bf16.msra.mxu0 0
        %1400 = vmatprep.subr.bf16.mxu0 0
        %1401 = vmatpush1.bf16.msra.mxu0 0
        %1402 = vmatprep.subr.bf16.mxu0 0
        %1403 = vmatpush1.bf16.msra.mxu0 0
        %1404 = vmatprep.subr.bf16.mxu0 0
        %1405 = vmatpush1.bf16.msra.mxu0 0
        %1406 = vmatprep.subr.bf16.mxu0 0
        %1407 = vmatpush1.bf16.msra.mxu0 0
        %1408 = vmatprep.mubr.bf16.mxu0 %v1220
        %1409 = vmatmul.mubr.bf16.gmra.mrb[0].mxu0 %v873
        %v1410 = vpop.f32.mrb[0].mxu0
        %v1411 = vadd.f32 %v860, %v1410
        %v1412 = vpop.f32.mrb[0].mxu0
        %v1413 = vpop.f32.mrb[0].mxu0
        %v1414 = vadd.f32 %v865, %v1413
        %v1415 = vpop.f32.mrb[0].mxu0
        %1416 = vdwg.mxu0
        %v1417 = vmax.f32 %v1282, 0.0
        %v1418 = vmax.f32 %v1284, 0.0
        %v1419 = vmax.f32 %v1325, 0.0
        %v1420 = vmax.f32 %v1327, 0.0
        %v1421 = vmax.f32 %v1368, 0.0
        %v1422 = vmax.f32 %v1370, 0.0
        %v1423 = vmax.f32 %v1411, 0.0
        %v1424 = vmax.f32 %v1286, 0.0
        %v1425 = vmax.f32 %v1288, 0.0
        %v1426 = vmax.f32 %v1329, 0.0
        %v1427 = vmax.f32 %v1331, 0.0
        %v1428 = vmax.f32 %v1372, 0.0
        %v1429 = vmax.f32 %v1374, 0.0
        %v1430 = vmax.f32 %v1414, 0.0
        %1431 = vst [vmem:[%s765] sm:$0xff] %v1417
        %1432 = vst [vmem:[%s765 + $0x8] sm:$0xff] %v1418
        %1433 = vst [vmem:[%s765 + $0x10] sm:$0xff] %v1419
        %1434 = vst [vmem:[%s765 + $0x18] sm:$0xff] %v1420
        %1435 = vst [vmem:[%s765 + $0x20] sm:$0xff] %v1421
        %1436 = vst [vmem:[%s765 + $0x28] sm:$0xff] %v1422
        %1437 = vst [vmem:[%s765 + $0x30] sm:$0xff] %v1423
        %1438 = vst [vmem:[%s765 + $0x38] sm:$0xff] %v1424
        %1439 = vst [vmem:[%s765 + $0x40] sm:$0xff] %v1425
        %1440 = vst [vmem:[%s765 + $0x48] sm:$0xff] %v1426
        %1441 = vst [vmem:[%s765 + $0x50] sm:$0xff] %v1427
        %1442 = vst [vmem:[%s765 + $0x58] sm:$0xff] %v1428
        %1443 = vst [vmem:[%s765 + $0x60] sm:$0xff] %v1429
        %1444 = vst [vmem:[%s765 + $0x68] sm:$0xff] %v1430
        %s1445 = sand.u32 %s90, 1
        %s1446 = sand.u32 %s90, 1
        %s1447 = smul.addr %s1446, 112
        %s1448 = scalar_lea.vmem [#allocation3], %s1447
        // Predicated region
        $region99: #{densenet_forward.4} parent=93 // pred_check
          %p1449 = pneg %p100
        $region100: #{densenet_forward.4} parent=93 // pred_check_branch
          %1451 = sbr.rel (%p1449) target = $region102
        $region101: #{densenet_forward.4} parent=93 // pred_region
          %s1452 = smul.u32 7, %s14
          %s1453 = ssub.s32 13, %s1452
          %p1454 = scmp.lt.s32.totalorder %s1453, 7
          %s1455 = scalar_select %p1454, %s1453, 7
          %s1456 = smul.u32 256, %s1455
          %p1457 = scmp.ne.s32.totalorder 0, %s1456
          %s1458 = smul.addr %s1452, 8
          %s1459 = scalar_lea.vmem %s3, %s1458
          %s1460 = smul.u32 %s1455, 8
          // Predicated region
          $region103: #{densenet_forward.4} parent=101 // pred_check
            %p1461 = pneg %p1457
          $region104: #{densenet_forward.4} parent=101 // pred_check_branch
            %1463 = sbr.rel (%p1461) target = $region106
          $region105: #{densenet_forward.4} parent=101 // pred_region
            %p1464 = scmp.lt.u32.totalorder %s1460, 8
            %p1465 = pneg %p1464
            // Predicated region
            $region107: #{densenet_forward.4} parent=105 // pred_check
              _
            $region108: #{densenet_forward.4} parent=105 // pred_check_branch
              %1467 = sbr.rel (%p1464) target = $region110
            $region109: #{densenet_forward.4} parent=105 // pred_region
              %s1484 = sand.u32 %s1460, 7
              %p1485 = scmp.eq.s32.totalorder %s1484, 0
              // Predicated region
              $region122: #{densenet_forward.4} parent=109 // pred_check
                %p1486 = pneg %p1485
              $region123: #{densenet_forward.4} parent=109 // pred_check_branch
                %1488 = sbr.rel (%p1486) target = $region125
              $region124: #{densenet_forward.4} parent=109 // pred_region
                %s1489 = sshrl.u32 %s1460, 3
                %s1490 = sshrl.u32 %s1489, 5
                // While loop
                $region126: #{densenet_forward.4} parent=124 // loop_pre_header
                  _
                $region127: #{densenet_forward.4} parent=124 // loop_header
                  %s1494 = sphi 0, %s1496
                  %p1495 = scmp.ge.s32.totalorder %s1494, %s1490
                  %s1499 = sphi 0, %s1632
                  %s1500 = sphi %s1448, %s1635
                  %s1501 = sphi %s1459, %s1636
                $region128: #{densenet_forward.4} parent=124 // loop_header_branch
                  %1498 = sbr.rel (%p1495) target = $region132
                $region129: #{densenet_forward.4} parent=124 // loop_body
                  %v1502 = vld [vmem:[%s1500] sm:$0xff]
                  %1503 = vst [vmem:[%s1501] sm:$0xff] %v1502
                  %v1504 = vld [vmem:[%s1500 + $0x8] sm:$0xff]
                  %1505 = vst [vmem:[%s1501 + $0x8] sm:$0xff] %v1504
                  %v1506 = vld [vmem:[%s1500 + $0x10] sm:$0xff]
                  %1507 = vst [vmem:[%s1501 + $0x10] sm:$0xff] %v1506
                  %v1508 = vld [vmem:[%s1500 + $0x18] sm:$0xff]
                  %1509 = vst [vmem:[%s1501 + $0x18] sm:$0xff] %v1508
                  %v1510 = vld [vmem:[%s1500 + $0x20] sm:$0xff]
                  %1511 = vst [vmem:[%s1501 + $0x20] sm:$0xff] %v1510
                  %v1512 = vld [vmem:[%s1500 + $0x28] sm:$0xff]
                  %1513 = vst [vmem:[%s1501 + $0x28] sm:$0xff] %v1512
                  %v1514 = vld [vmem:[%s1500 + $0x30] sm:$0xff]
                  %1515 = vst [vmem:[%s1501 + $0x30] sm:$0xff] %v1514
                  %v1516 = vld [vmem:[%s1500 + $0x38] sm:$0xff]
                  %1517 = vst [vmem:[%s1501 + $0x38] sm:$0xff] %v1516
                  %v1518 = vld [vmem:[%s1500 + $0x40] sm:$0xff]
                  %1519 = vst [vmem:[%s1501 + $0x40] sm:$0xff] %v1518
                  %v1520 = vld [vmem:[%s1500 + $0x48] sm:$0xff]
                  %1521 = vst [vmem:[%s1501 + $0x48] sm:$0xff] %v1520
                  %v1522 = vld [vmem:[%s1500 + $0x50] sm:$0xff]
                  %1523 = vst [vmem:[%s1501 + $0x50] sm:$0xff] %v1522
                  %v1524 = vld [vmem:[%s1500 + $0x58] sm:$0xff]
                  %1525 = vst [vmem:[%s1501 + $0x58] sm:$0xff] %v1524
                  %v1526 = vld [vmem:[%s1500 + $0x60] sm:$0xff]
                  %1527 = vst [vmem:[%s1501 + $0x60] sm:$0xff] %v1526
                  %v1528 = vld [vmem:[%s1500 + $0x68] sm:$0xff]
                  %1529 = vst [vmem:[%s1501 + $0x68] sm:$0xff] %v1528
                  %v1530 = vld [vmem:[%s1500 + $0x70] sm:$0xff]
                  %1531 = vst [vmem:[%s1501 + $0x70] sm:$0xff] %v1530
                  %v1532 = vld [vmem:[%s1500 + $0x78] sm:$0xff]
                  %1533 = vst [vmem:[%s1501 + $0x78] sm:$0xff] %v1532
                  %v1534 = vld [vmem:[%s1500 + $0x80] sm:$0xff]
                  %1535 = vst [vmem:[%s1501 + $0x80] sm:$0xff] %v1534
                  %v1536 = vld [vmem:[%s1500 + $0x88] sm:$0xff]
                  %1537 = vst [vmem:[%s1501 + $0x88] sm:$0xff] %v1536
                  %v1538 = vld [vmem:[%s1500 + $0x90] sm:$0xff]
                  %1539 = vst [vmem:[%s1501 + $0x90] sm:$0xff] %v1538
                  %v1540 = vld [vmem:[%s1500 + $0x98] sm:$0xff]
                  %1541 = vst [vmem:[%s1501 + $0x98] sm:$0xff] %v1540
                  %v1542 = vld [vmem:[%s1500 + $0xa0] sm:$0xff]
                  %1543 = vst [vmem:[%s1501 + $0xa0] sm:$0xff] %v1542
                  %v1544 = vld [vmem:[%s1500 + $0xa8] sm:$0xff]
                  %1545 = vst [vmem:[%s1501 + $0xa8] sm:$0xff] %v1544
                  %v1546 = vld [vmem:[%s1500 + $0xb0] sm:$0xff]
                  %1547 = vst [vmem:[%s1501 + $0xb0] sm:$0xff] %v1546
                  %v1548 = vld [vmem:[%s1500 + $0xb8] sm:$0xff]
                  %1549 = vst [vmem:[%s1501 + $0xb8] sm:$0xff] %v1548
                  %v1550 = vld [vmem:[%s1500 + $0xc0] sm:$0xff]
                  %1551 = vst [vmem:[%s1501 + $0xc0] sm:$0xff] %v1550
                  %v1552 = vld [vmem:[%s1500 + $0xc8] sm:$0xff]
                  %1553 = vst [vmem:[%s1501 + $0xc8] sm:$0xff] %v1552
                  %v1554 = vld [vmem:[%s1500 + $0xd0] sm:$0xff]
                  %1555 = vst [vmem:[%s1501 + $0xd0] sm:$0xff] %v1554
                  %v1556 = vld [vmem:[%s1500 + $0xd8] sm:$0xff]
                  %1557 = vst [vmem:[%s1501 + $0xd8] sm:$0xff] %v1556
                  %v1558 = vld [vmem:[%s1500 + $0xe0] sm:$0xff]
                  %1559 = vst [vmem:[%s1501 + $0xe0] sm:$0xff] %v1558
                  %v1560 = vld [vmem:[%s1500 + $0xe8] sm:$0xff]
                  %1561 = vst [vmem:[%s1501 + $0xe8] sm:$0xff] %v1560
                  %v1562 = vld [vmem:[%s1500 + $0xf0] sm:$0xff]
                  %1563 = vst [vmem:[%s1501 + $0xf0] sm:$0xff] %v1562
                  %v1564 = vld [vmem:[%s1500 + $0xf8] sm:$0xff]
                  %1565 = vst [vmem:[%s1501 + $0xf8] sm:$0xff] %v1564
                  %v1566 = vld [vmem:[%s1500 + $0x38] sm:$0xff]
                  %1567 = vst [vmem:[%s1501 + $0x68] sm:$0xff] %v1566
                  %v1568 = vld [vmem:[%s1500 + $0x40] sm:$0xff]
                  %1569 = vst [vmem:[%s1501 + $0x70] sm:$0xff] %v1568
                  %v1570 = vld [vmem:[%s1500 + $0x48] sm:$0xff]
                  %1571 = vst [vmem:[%s1501 + $0x78] sm:$0xff] %v1570
                  %v1572 = vld [vmem:[%s1500 + $0x50] sm:$0xff]
                  %1573 = vst [vmem:[%s1501 + $0x80] sm:$0xff] %v1572
                  %v1574 = vld [vmem:[%s1500 + $0x58] sm:$0xff]
                  %1575 = vst [vmem:[%s1501 + $0x88] sm:$0xff] %v1574
                  %v1576 = vld [vmem:[%s1500 + $0x60] sm:$0xff]
                  %1577 = vst [vmem:[%s1501 + $0x90] sm:$0xff] %v1576
                  %v1578 = vld [vmem:[%s1500 + $0x68] sm:$0xff]
                  %1579 = vst [vmem:[%s1501 + $0x98] sm:$0xff] %v1578
                  %v1580 = vld [vmem:[%s1500 + $0x70] sm:$0xff]
                  %1581 = vst [vmem:[%s1501 + $0xa0] sm:$0xff] %v1580
                  %v1582 = vld [vmem:[%s1500 + $0x78] sm:$0xff]
                  %1583 = vst [vmem:[%s1501 + $0xa8] sm:$0xff] %v1582
                  %v1584 = vld [vmem:[%s1500 + $0x80] sm:$0xff]
                  %1585 = vst [vmem:[%s1501 + $0xb0] sm:$0xff] %v1584
                  %v1586 = vld [vmem:[%s1500 + $0x88] sm:$0xff]
                  %1587 = vst [vmem:[%s1501 + $0xb8] sm:$0xff] %v1586
                  %v1588 = vld [vmem:[%s1500 + $0x90] sm:$0xff]
                  %1589 = vst [vmem:[%s1501 + $0xc0] sm:$0xff] %v1588
                  %v1590 = vld [vmem:[%s1500 + $0x98] sm:$0xff]
                  %1591 = vst [vmem:[%s1501 + $0xc8] sm:$0xff] %v1590
                  %v1592 = vld [vmem:[%s1500 + $0xa0] sm:$0xff]
                  %1593 = vst [vmem:[%s1501 + $0xd0] sm:$0xff] %v1592
                  %v1594 = vld [vmem:[%s1500 + $0xa8] sm:$0xff]
                  %1595 = vst [vmem:[%s1501 + $0xd8] sm:$0xff] %v1594
                  %v1596 = vld [vmem:[%s1500 + $0xb0] sm:$0xff]
                  %1597 = vst [vmem:[%s1501 + $0xe0] sm:$0xff] %v1596
                  %v1598 = vld [vmem:[%s1500 + $0xb8] sm:$0xff]
                  %1599 = vst [vmem:[%s1501 + $0xe8] sm:$0xff] %v1598
                  %v1600 = vld [vmem:[%s1500 + $0xc0] sm:$0xff]
                  %1601 = vst [vmem:[%s1501 + $0xf0] sm:$0xff] %v1600
                  %v1602 = vld [vmem:[%s1500 + $0xc8] sm:$0xff]
                  %1603 = vst [vmem:[%s1501 + $0xf8] sm:$0xff] %v1602
                  %v1604 = vld [vmem:[%s1500 + $0xd0] sm:$0xff]
                  %1605 = vst [vmem:[%s1501 + $0x100] sm:$0xff] %v1604
                  %v1606 = vld [vmem:[%s1500 + $0xd8] sm:$0xff]
                  %1607 = vst [vmem:[%s1501 + $0x108] sm:$0xff] %v1606
                  %v1608 = vld [vmem:[%s1500 + $0xe0] sm:$0xff]
                  %1609 = vst [vmem:[%s1501 + $0x110] sm:$0xff] %v1608
                  %v1610 = vld [vmem:[%s1500 + $0xe8] sm:$0xff]
                  %1611 = vst [vmem:[%s1501 + $0x118] sm:$0xff] %v1610
                  %v1612 = vld [vmem:[%s1500 + $0xf0] sm:$0xff]
                  %1613 = vst [vmem:[%s1501 + $0x120] sm:$0xff] %v1612
                  %v1614 = vld [vmem:[%s1500 + $0xf8] sm:$0xff]
                  %1615 = vst [vmem:[%s1501 + $0x128] sm:$0xff] %v1614
                  %v1616 = vld [vmem:[%s1500 + $0x100] sm:$0xff]
                  %1617 = vst [vmem:[%s1501 + $0x130] sm:$0xff] %v1616
                  %v1618 = vld [vmem:[%s1500 + $0x108] sm:$0xff]
                  %1619 = vst [vmem:[%s1501 + $0x138] sm:$0xff] %v1618
                  %v1620 = vld [vmem:[%s1500 + $0x110] sm:$0xff]
                  %1621 = vst [vmem:[%s1501 + $0x140] sm:$0xff] %v1620
                  %v1622 = vld [vmem:[%s1500 + $0x118] sm:$0xff]
                  %1623 = vst [vmem:[%s1501 + $0x148] sm:$0xff] %v1622
                  %v1624 = vld [vmem:[%s1500 + $0x120] sm:$0xff]
                  %1625 = vst [vmem:[%s1501 + $0x150] sm:$0xff] %v1624
                  %v1626 = vld [vmem:[%s1500 + $0x128] sm:$0xff]
                  %1627 = vst [vmem:[%s1501 + $0x158] sm:$0xff] %v1626
                  %v1628 = vld [vmem:[%s1500 + $0x130] sm:$0xff]
                  %1629 = vst [vmem:[%s1501 + $0x160] sm:$0xff] %v1628
                  %s1630 = sadd.s32 1, %s1499
                  %p1631 = scmp.ge.s32.totalorder %s1630, %s1490
                  %s1632 = scalar_select %p1631, 0, %s1630
                  %s1633 = smul.u32 %s1632, 256
                  %s1634 = smul.u32 %s1632, 256
                  %s1635 = scalar_lea.vmem %s1448, %s1633 [#allocation3]
                  %s1636 = scalar_lea.vmem %s1459, %s1634
                $region130: #{densenet_forward.4} parent=124 // loop_footer
                  %s1496 = sadd.s32 %s1494, 1
                $region131: #{densenet_forward.4} parent=124 // loop_footer_branch
                  %1493 = sbr.rel target = $region127
                $region132: #{densenet_forward.4} parent=124 // loop_exit
                  _
                %s1637 = sshrl.u32 %s1489, 5
                %s1638 = sand.u32 %s1489, 31
                %s1639 = smul.u32 %s1637, 32
                %s1640 = smul.u32 128, %s1639
                %s1641 = sshra.s32 %s1640, 4
                %s1642 = scalar_lea.vmem %s1448, %s1641 [#allocation3]
                %s1643 = smul.u32 128, %s1639
                %s1644 = sshra.s32 %s1643, 4
                %s1645 = scalar_lea.vmem %s1459, %s1644
                // While loop
                $region133: #{densenet_forward.4} parent=124 // loop_pre_header
                  _
                $region134: #{densenet_forward.4} parent=124 // loop_header
                  %s1649 = sphi 0, %s1651
                  %p1650 = scmp.ge.s32.totalorder %s1649, %s1638
                  %s1654 = sphi 0, %s1663
                  %s1655 = sphi %s1642, %s1666
                  %s1656 = sphi %s1645, %s1667
                $region135: #{densenet_forward.4} parent=124 // loop_header_branch
                  %1653 = sbr.rel (%p1650) target = $region139
                $region136: #{densenet_forward.4} parent=124 // loop_body
                  %v1657 = vld [vmem:[%s1655] sm:$0xff]
                  %1658 = vst [vmem:[%s1656] sm:$0xff] %v1657
                  %v1659 = vld [vmem:[%s1655 + $0x38] sm:$0xff]
                  %1660 = vst [vmem:[%s1656 + $0x68] sm:$0xff] %v1659
                  %s1661 = sadd.s32 1, %s1654
                  %p1662 = scmp.ge.s32.totalorder %s1661, %s1638
                  %s1663 = scalar_select %p1662, 0, %s1661
                  %s1664 = smul.u32 %s1663, 8
                  %s1665 = smul.u32 %s1663, 8
                  %s1666 = scalar_lea.vmem %s1642, %s1664 [#allocation3]
                  %s1667 = scalar_lea.vmem %s1645, %s1665
                $region137: #{densenet_forward.4} parent=124 // loop_footer
                  %s1651 = sadd.s32 %s1649, 1
                $region138: #{densenet_forward.4} parent=124 // loop_footer_branch
                  %1648 = sbr.rel target = $region134
                $region139: #{densenet_forward.4} parent=124 // loop_exit
                  _
              $region125: #{densenet_forward.4} parent=109 // pred_fallthru
                _
              %p1668 = pneg %p1485
              // Predicated region
              $region140: #{densenet_forward.4} parent=109 // pred_check
                _
              $region141: #{densenet_forward.4} parent=109 // pred_check_branch
                %1670 = sbr.rel (%p1485) target = $region143
              $region142: #{densenet_forward.4} parent=109 // pred_region
                %s1671 = sand.u32 %s1460, 7
                %s1672 = ssub.s32 %s1460, %s1671
                %s1673 = scalar_lea.vmem %s1448, %s1672 [#allocation3]
                %s1674 = ssub.s32 %s1460, %s1671
                %s1675 = scalar_lea.vmem %s1459, %s1674
                %s1676 = sshrl.u32 %s1460, 3
                %s1677 = sshrl.u32 %s1676, 5
                // While loop
                $region144: #{densenet_forward.4} parent=142 // loop_pre_header
                  _
                $region145: #{densenet_forward.4} parent=142 // loop_header
                  %s1681 = sphi 0, %s1683
                  %p1682 = scmp.ge.s32.totalorder %s1681, %s1677
                  %s1686 = sphi 0, %s1819
                  %s1687 = sphi %s1448, %s1822
                  %s1688 = sphi %s1459, %s1823
                $region146: #{densenet_forward.4} parent=142 // loop_header_branch
                  %1685 = sbr.rel (%p1682) target = $region150
                $region147: #{densenet_forward.4} parent=142 // loop_body
                  %v1689 = vld [vmem:[%s1687] sm:$0xff]
                  %1690 = vst [vmem:[%s1688] sm:$0xff] %v1689
                  %v1691 = vld [vmem:[%s1687 + $0x8] sm:$0xff]
                  %1692 = vst [vmem:[%s1688 + $0x8] sm:$0xff] %v1691
                  %v1693 = vld [vmem:[%s1687 + $0x10] sm:$0xff]
                  %1694 = vst [vmem:[%s1688 + $0x10] sm:$0xff] %v1693
                  %v1695 = vld [vmem:[%s1687 + $0x18] sm:$0xff]
                  %1696 = vst [vmem:[%s1688 + $0x18] sm:$0xff] %v1695
                  %v1697 = vld [vmem:[%s1687 + $0x20] sm:$0xff]
                  %1698 = vst [vmem:[%s1688 + $0x20] sm:$0xff] %v1697
                  %v1699 = vld [vmem:[%s1687 + $0x28] sm:$0xff]
                  %1700 = vst [vmem:[%s1688 + $0x28] sm:$0xff] %v1699
                  %v1701 = vld [vmem:[%s1687 + $0x30] sm:$0xff]
                  %1702 = vst [vmem:[%s1688 + $0x30] sm:$0xff] %v1701
                  %v1703 = vld [vmem:[%s1687 + $0x38] sm:$0xff]
                  %1704 = vst [vmem:[%s1688 + $0x38] sm:$0xff] %v1703
                  %v1705 = vld [vmem:[%s1687 + $0x40] sm:$0xff]
                  %1706 = vst [vmem:[%s1688 + $0x40] sm:$0xff] %v1705
                  %v1707 = vld [vmem:[%s1687 + $0x48] sm:$0xff]
                  %1708 = vst [vmem:[%s1688 + $0x48] sm:$0xff] %v1707
                  %v1709 = vld [vmem:[%s1687 + $0x50] sm:$0xff]
                  %1710 = vst [vmem:[%s1688 + $0x50] sm:$0xff] %v1709
                  %v1711 = vld [vmem:[%s1687 + $0x58] sm:$0xff]
                  %1712 = vst [vmem:[%s1688 + $0x58] sm:$0xff] %v1711
                  %v1713 = vld [vmem:[%s1687 + $0x60] sm:$0xff]
                  %1714 = vst [vmem:[%s1688 + $0x60] sm:$0xff] %v1713
                  %v1715 = vld [vmem:[%s1687 + $0x68] sm:$0xff]
                  %1716 = vst [vmem:[%s1688 + $0x68] sm:$0xff] %v1715
                  %v1717 = vld [vmem:[%s1687 + $0x70] sm:$0xff]
                  %1718 = vst [vmem:[%s1688 + $0x70] sm:$0xff] %v1717
                  %v1719 = vld [vmem:[%s1687 + $0x78] sm:$0xff]
                  %1720 = vst [vmem:[%s1688 + $0x78] sm:$0xff] %v1719
                  %v1721 = vld [vmem:[%s1687 + $0x80] sm:$0xff]
                  %1722 = vst [vmem:[%s1688 + $0x80] sm:$0xff] %v1721
                  %v1723 = vld [vmem:[%s1687 + $0x88] sm:$0xff]
                  %1724 = vst [vmem:[%s1688 + $0x88] sm:$0xff] %v1723
                  %v1725 = vld [vmem:[%s1687 + $0x90] sm:$0xff]
                  %1726 = vst [vmem:[%s1688 + $0x90] sm:$0xff] %v1725
                  %v1727 = vld [vmem:[%s1687 + $0x98] sm:$0xff]
                  %1728 = vst [vmem:[%s1688 + $0x98] sm:$0xff] %v1727
                  %v1729 = vld [vmem:[%s1687 + $0xa0] sm:$0xff]
                  %1730 = vst [vmem:[%s1688 + $0xa0] sm:$0xff] %v1729
                  %v1731 = vld [vmem:[%s1687 + $0xa8] sm:$0xff]
                  %1732 = vst [vmem:[%s1688 + $0xa8] sm:$0xff] %v1731
                  %v1733 = vld [vmem:[%s1687 + $0xb0] sm:$0xff]
                  %1734 = vst [vmem:[%s1688 + $0xb0] sm:$0xff] %v1733
                  %v1735 = vld [vmem:[%s1687 + $0xb8] sm:$0xff]
                  %1736 = vst [vmem:[%s1688 + $0xb8] sm:$0xff] %v1735
                  %v1737 = vld [vmem:[%s1687 + $0xc0] sm:$0xff]
                  %1738 = vst [vmem:[%s1688 + $0xc0] sm:$0xff] %v1737
                  %v1739 = vld [vmem:[%s1687 + $0xc8] sm:$0xff]
                  %1740 = vst [vmem:[%s1688 + $0xc8] sm:$0xff] %v1739
                  %v1741 = vld [vmem:[%s1687 + $0xd0] sm:$0xff]
                  %1742 = vst [vmem:[%s1688 + $0xd0] sm:$0xff] %v1741
                  %v1743 = vld [vmem:[%s1687 + $0xd8] sm:$0xff]
                  %1744 = vst [vmem:[%s1688 + $0xd8] sm:$0xff] %v1743
                  %v1745 = vld [vmem:[%s1687 + $0xe0] sm:$0xff]
                  %1746 = vst [vmem:[%s1688 + $0xe0] sm:$0xff] %v1745
                  %v1747 = vld [vmem:[%s1687 + $0xe8] sm:$0xff]
                  %1748 = vst [vmem:[%s1688 + $0xe8] sm:$0xff] %v1747
                  %v1749 = vld [vmem:[%s1687 + $0xf0] sm:$0xff]
                  %1750 = vst [vmem:[%s1688 + $0xf0] sm:$0xff] %v1749
                  %v1751 = vld [vmem:[%s1687 + $0xf8] sm:$0xff]
                  %1752 = vst [vmem:[%s1688 + $0xf8] sm:$0xff] %v1751
                  %v1753 = vld [vmem:[%s1687 + $0x38] sm:$0xff]
                  %1754 = vst [vmem:[%s1688 + $0x68] sm:$0xff] %v1753
                  %v1755 = vld [vmem:[%s1687 + $0x40] sm:$0xff]
                  %1756 = vst [vmem:[%s1688 + $0x70] sm:$0xff] %v1755
                  %v1757 = vld [vmem:[%s1687 + $0x48] sm:$0xff]
                  %1758 = vst [vmem:[%s1688 + $0x78] sm:$0xff] %v1757
                  %v1759 = vld [vmem:[%s1687 + $0x50] sm:$0xff]
                  %1760 = vst [vmem:[%s1688 + $0x80] sm:$0xff] %v1759
                  %v1761 = vld [vmem:[%s1687 + $0x58] sm:$0xff]
                  %1762 = vst [vmem:[%s1688 + $0x88] sm:$0xff] %v1761
                  %v1763 = vld [vmem:[%s1687 + $0x60] sm:$0xff]
                  %1764 = vst [vmem:[%s1688 + $0x90] sm:$0xff] %v1763
                  %v1765 = vld [vmem:[%s1687 + $0x68] sm:$0xff]
                  %1766 = vst [vmem:[%s1688 + $0x98] sm:$0xff] %v1765
                  %v1767 = vld [vmem:[%s1687 + $0x70] sm:$0xff]
                  %1768 = vst [vmem:[%s1688 + $0xa0] sm:$0xff] %v1767
                  %v1769 = vld [vmem:[%s1687 + $0x78] sm:$0xff]
                  %1770 = vst [vmem:[%s1688 + $0xa8] sm:$0xff] %v1769
                  %v1771 = vld [vmem:[%s1687 + $0x80] sm:$0xff]
                  %1772 = vst [vmem:[%s1688 + $0xb0] sm:$0xff] %v1771
                  %v1773 = vld [vmem:[%s1687 + $0x88] sm:$0xff]
                  %1774 = vst [vmem:[%s1688 + $0xb8] sm:$0xff] %v1773
                  %v1775 = vld [vmem:[%s1687 + $0x90] sm:$0xff]
                  %1776 = vst [vmem:[%s1688 + $0xc0] sm:$0xff] %v1775
                  %v1777 = vld [vmem:[%s1687 + $0x98] sm:$0xff]
                  %1778 = vst [vmem:[%s1688 + $0xc8] sm:$0xff] %v1777
                  %v1779 = vld [vmem:[%s1687 + $0xa0] sm:$0xff]
                  %1780 = vst [vmem:[%s1688 + $0xd0] sm:$0xff] %v1779
                  %v1781 = vld [vmem:[%s1687 + $0xa8] sm:$0xff]
                  %1782 = vst [vmem:[%s1688 + $0xd8] sm:$0xff] %v1781
                  %v1783 = vld [vmem:[%s1687 + $0xb0] sm:$0xff]
                  %1784 = vst [vmem:[%s1688 + $0xe0] sm:$0xff] %v1783
                  %v1785 = vld [vmem:[%s1687 + $0xb8] sm:$0xff]
                  %1786 = vst [vmem:[%s1688 + $0xe8] sm:$0xff] %v1785
                  %v1787 = vld [vmem:[%s1687 + $0xc0] sm:$0xff]
                  %1788 = vst [vmem:[%s1688 + $0xf0] sm:$0xff] %v1787
                  %v1789 = vld [vmem:[%s1687 + $0xc8] sm:$0xff]
                  %1790 = vst [vmem:[%s1688 + $0xf8] sm:$0xff] %v1789
                  %v1791 = vld [vmem:[%s1687 + $0xd0] sm:$0xff]
                  %1792 = vst [vmem:[%s1688 + $0x100] sm:$0xff] %v1791
                  %v1793 = vld [vmem:[%s1687 + $0xd8] sm:$0xff]
                  %1794 = vst [vmem:[%s1688 + $0x108] sm:$0xff] %v1793
                  %v1795 = vld [vmem:[%s1687 + $0xe0] sm:$0xff]
                  %1796 = vst [vmem:[%s1688 + $0x110] sm:$0xff] %v1795
                  %v1797 = vld [vmem:[%s1687 + $0xe8] sm:$0xff]
                  %1798 = vst [vmem:[%s1688 + $0x118] sm:$0xff] %v1797
                  %v1799 = vld [vmem:[%s1687 + $0xf0] sm:$0xff]
                  %1800 = vst [vmem:[%s1688 + $0x120] sm:$0xff] %v1799
                  %v1801 = vld [vmem:[%s1687 + $0xf8] sm:$0xff]
                  %1802 = vst [vmem:[%s1688 + $0x128] sm:$0xff] %v1801
                  %v1803 = vld [vmem:[%s1687 + $0x100] sm:$0xff]
                  %1804 = vst [vmem:[%s1688 + $0x130] sm:$0xff] %v1803
                  %v1805 = vld [vmem:[%s1687 + $0x108] sm:$0xff]
                  %1806 = vst [vmem:[%s1688 + $0x138] sm:$0xff] %v1805
                  %v1807 = vld [vmem:[%s1687 + $0x110] sm:$0xff]
                  %1808 = vst [vmem:[%s1688 + $0x140] sm:$0xff] %v1807
                  %v1809 = vld [vmem:[%s1687 + $0x118] sm:$0xff]
                  %1810 = vst [vmem:[%s1688 + $0x148] sm:$0xff] %v1809
                  %v1811 = vld [vmem:[%s1687 + $0x120] sm:$0xff]
                  %1812 = vst [vmem:[%s1688 + $0x150] sm:$0xff] %v1811
                  %v1813 = vld [vmem:[%s1687 + $0x128] sm:$0xff]
                  %1814 = vst [vmem:[%s1688 + $0x158] sm:$0xff] %v1813
                  %v1815 = vld [vmem:[%s1687 + $0x130] sm:$0xff]
                  %1816 = vst [vmem:[%s1688 + $0x160] sm:$0xff] %v1815
                  %s1817 = sadd.s32 1, %s1686
                  %p1818 = scmp.ge.s32.totalorder %s1817, %s1677
                  %s1819 = scalar_select %p1818, 0, %s1817
                  %s1820 = smul.u32 %s1819, 256
                  %s1821 = smul.u32 %s1819, 256
                  %s1822 = scalar_lea.vmem %s1448, %s1820 [#allocation3]
                  %s1823 = scalar_lea.vmem %s1459, %s1821
                $region148: #{densenet_forward.4} parent=142 // loop_footer
                  %s1683 = sadd.s32 %s1681, 1
                $region149: #{densenet_forward.4} parent=142 // loop_footer_branch
                  %1680 = sbr.rel target = $region145
                $region150: #{densenet_forward.4} parent=142 // loop_exit
                  _
                %s1824 = sshrl.u32 %s1676, 5
                %s1825 = sand.u32 %s1676, 31
                %s1826 = smul.u32 %s1824, 32
                %s1827 = smul.u32 128, %s1826
                %s1828 = sshra.s32 %s1827, 4
                %s1829 = scalar_lea.vmem %s1448, %s1828 [#allocation3]
                %s1830 = smul.u32 128, %s1826
                %s1831 = sshra.s32 %s1830, 4
                %s1832 = scalar_lea.vmem %s1459, %s1831
                // While loop
                $region151: #{densenet_forward.4} parent=142 // loop_pre_header
                  _
                $region152: #{densenet_forward.4} parent=142 // loop_header
                  %s1836 = sphi 0, %s1838
                  %p1837 = scmp.ge.s32.totalorder %s1836, %s1825
                  %s1841 = sphi 0, %s1850
                  %s1842 = sphi %s1829, %s1853
                  %s1843 = sphi %s1832, %s1854
                $region153: #{densenet_forward.4} parent=142 // loop_header_branch
                  %1840 = sbr.rel (%p1837) target = $region157
                $region154: #{densenet_forward.4} parent=142 // loop_body
                  %v1844 = vld [vmem:[%s1842] sm:$0xff]
                  %1845 = vst [vmem:[%s1843] sm:$0xff] %v1844
                  %v1846 = vld [vmem:[%s1842 + $0x38] sm:$0xff]
                  %1847 = vst [vmem:[%s1843 + $0x68] sm:$0xff] %v1846
                  %s1848 = sadd.s32 1, %s1841
                  %p1849 = scmp.ge.s32.totalorder %s1848, %s1825
                  %s1850 = scalar_select %p1849, 0, %s1848
                  %s1851 = smul.u32 %s1850, 8
                  %s1852 = smul.u32 %s1850, 8
                  %s1853 = scalar_lea.vmem %s1829, %s1851 [#allocation3]
                  %s1854 = scalar_lea.vmem %s1832, %s1852
                $region155: #{densenet_forward.4} parent=142 // loop_footer
                  %s1838 = sadd.s32 %s1836, 1
                $region156: #{densenet_forward.4} parent=142 // loop_footer_branch
                  %1835 = sbr.rel target = $region152
                $region157: #{densenet_forward.4} parent=142 // loop_exit
                  _
                %s1855 = sshllo.u32 0, %s1671
                loop: start=0, step=1, limit=1
                $region158: #{densenet_forward.4} parent=142 // loop_pre_header
                  _
                $region159: #{densenet_forward.4} parent=142 // loop_header
                  %s1857 = sphi 0, %s1861
                  %p1858 = scmp.ge.s32.totalorder %s1857, 1
                  %s1862 = sphi %s1673, %s1673
                  %s1863 = sphi %s1675, %s1675
                $region160: #{densenet_forward.4} parent=142 // loop_header_branch
                  %1860 = sbr.rel (%p1858) target = $region164
                $region161: #{densenet_forward.4} parent=142 // loop_body
                  %v1864 = vld [vmem:[%s1862] sm:%s1855]
                  %1865 = vst [vmem:[%s1863] sm:%s1855] %v1864
                  %v1866 = vld [vmem:[%s1862 + $0x38] sm:%s1855]
                  %1867 = vst [vmem:[%s1863 + $0x68] sm:%s1855] %v1866
                $region162: #{densenet_forward.4} parent=142 // loop_footer
                  %s1861 = sadd.s32 1, %s1857
                $region163: #{densenet_forward.4} parent=142 // loop_footer_branch
                  %1856 = sbr.rel target = $region159
                $region164: #{densenet_forward.4} parent=142 // loop_exit
                  _
              $region143: #{densenet_forward.4} parent=109 // pred_fallthru
                _
            $region110: #{densenet_forward.4} parent=105 // pred_fallthru
              _
            // Predicated region
            $region111: #{densenet_forward.4} parent=105 // pred_check
              %p1468 = pneg %p1464
            $region112: #{densenet_forward.4} parent=105 // pred_check_branch
              %1470 = sbr.rel (%p1468) target = $region114
            $region113: #{densenet_forward.4} parent=105 // pred_region
              %s1471 = sshllo.u32 0, %s1460
              loop: start=0, step=1, limit=1
              $region115: #{densenet_forward.4} parent=113 // loop_pre_header
                _
              $region116: #{densenet_forward.4} parent=113 // loop_header
                %s1473 = sphi 0, %s1477
                %p1474 = scmp.ge.s32.totalorder %s1473, 1
                %s1478 = sphi %s1448, %s1448
                %s1479 = sphi %s1459, %s1459
              $region117: #{densenet_forward.4} parent=113 // loop_header_branch
                %1476 = sbr.rel (%p1474) target = $region121
              $region118: #{densenet_forward.4} parent=113 // loop_body
                %v1480 = vld [vmem:[%s1478] sm:%s1471]
                %1481 = vst [vmem:[%s1479] sm:%s1471] %v1480
                %v1482 = vld [vmem:[%s1478 + $0x38] sm:%s1471]
                %1483 = vst [vmem:[%s1479 + $0x68] sm:%s1471] %v1482
              $region119: #{densenet_forward.4} parent=113 // loop_footer
                %s1477 = sadd.s32 1, %s1473
              $region120: #{densenet_forward.4} parent=113 // loop_footer_branch
                %1472 = sbr.rel target = $region116
              $region121: #{densenet_forward.4} parent=113 // loop_exit
                _
            $region114: #{densenet_forward.4} parent=105 // pred_fallthru
              _
          $region106: #{densenet_forward.4} parent=101 // pred_fallthru
            _
          %1868 = vnop
        $region102: #{densenet_forward.4} parent=93 // pred_fallthru
          _
      $region94: #{densenet_forward.4} parent=5 // pred_fallthru
        _
      %p1869 = scmp.le.s32.totalorder 2, %s9
      // Predicated region
      $region165: #{densenet_forward.4} parent=5 // pred_check
        %p1870 = pneg %p1869
      $region166: #{densenet_forward.4} parent=5 // pred_check_branch
        %1872 = sbr.rel (%p1870) target = $region168
      $region167: #{densenet_forward.4} parent=5 // pred_region
        %s1873 = ssub.s32 %s9, 2
        // Predicated region
        $region169: #{densenet_forward.4} parent=167 // pred_check
          %p1874 = pneg %p106
        $region170: #{densenet_forward.4} parent=167 // pred_check_branch
          %1876 = sbr.rel (%p1874) target = $region172
        $region171: #{densenet_forward.4} parent=167 // pred_region
          %s1877 = sand.u32 %s91, 1
          %s1878 = sand.u32 %s91, 1
          %s1879 = smul.addr %s1878, 112
          %s1880 = scalar_lea.vmem [#allocation3], %s1879
        $region172: #{densenet_forward.4} parent=167 // pred_fallthru
          _
      $region168: #{densenet_forward.4} parent=5 // pred_fallthru
        _
    $region6: #{densenet_forward.4} parent=1 // loop_footer
      %s13 = sadd.s32 1, %s9
    $region7: #{densenet_forward.4} parent=1 // loop_footer_branch
      %8 = sbr.rel target = $region3
    $region8: #{densenet_forward.4} parent=1 // loop_exit
      _

// kernel: densenet_forward.5
$region0: #{densenet_forward.5}
  #allocation0 [shape = 'u32[]', space=smem, size = 0x4, offset = 0x4, fixed_abs, tag = 'smem constant byte address 0x4 - core index']
  #allocation1 [shape = 'u32[144,128]{1,0:T(1,128)}', space=vmem, size = 0x12000, scoped, tag = 'internal scratch']
  #allocation2 [shape = 'f32[32,256]{1,0:T(8,128)}', space=vmem, size = 0x8000, scoped, tag = 'scratch operand']
  #allocation3 [shape = 'bf16[16,290]{1,0:T(16,128)(2,1)}', space=vmem, size = 0x3000, scoped, tag = 'scratch operand']
  %s0 = inlined_call_operand.vmem [shape: f32[1,256], index: 0, kind: input, shape index: {}]
  %s1 = inlined_call_operand.vmem [shape: f32[16,512], index: 1, kind: input, shape index: {}]
  %s2 = inlined_call_operand.vmem [shape: f32[16,1], index: 2, kind: input, shape index: {}]
  %s3 = inlined_call_operand.vmem [shape: f32[16,1], index: 3, kind: input, shape index: {}]
  %s4 = inlined_call_operand.vmem [shape: bf16[16,16], index: 4, kind: input, shape index: {}]
  %s5 = inlined_call_operand.vmem [shape: f32[16,1], index: 5, kind: input, shape index: {}]
  %s6 = inlined_call_operand.vmem [shape: f32[16,1], index: 6, kind: input, shape index: {}]
  %s7 = inlined_call_operand.vmem [shape: bf16[9,8,16], index: 7, kind: input, shape index: {}]
  %s8 = inlined_call_operand.vmem [shape: f32[24,1], index: 8, kind: input, shape index: {}]
  %s9 = inlined_call_operand.vmem [shape: f32[24,1], index: 9, kind: input, shape index: {}]
  %s10 = inlined_call_operand.vmem [shape: bf16[16,24], index: 10, kind: input, shape index: {}]
  %s11 = inlined_call_operand.vmem [shape: f32[16,1], index: 11, kind: input, shape index: {}]
  %s12 = inlined_call_operand.vmem [shape: f32[16,1], index: 12, kind: input, shape index: {}]
  %s13 = inlined_call_operand.vmem [shape: bf16[9,8,16], index: 13, kind: input, shape index: {}]
  %s14 = inlined_call_operand.vmem [shape: f32[32,1], index: 14, kind: input, shape index: {}]
  %s15 = inlined_call_operand.vmem [shape: f32[32,1], index: 15, kind: input, shape index: {}]
  %s16 = inlined_call_operand.vmem [shape: bf16[16,32], index: 16, kind: input, shape index: {}]
  %s17 = inlined_call_operand.vmem [shape: f32[16,512], index: 17, kind: output, shape index: {}]
  %s18 = sld [smem:[#allocation0]]
  $region143: #{densenet_forward.5} parent=0
    _
  %s20 = ssub.s32 1, %s18
  %s21 = scalar_select 0, %s20, %s18
  $region1: #{densenet_forward.5} parent=0
    #allocation4 [shape = 'u8[32768]{0}', space=vmem, size = 0x8000, scoped, tag = 'input window, operand 1']
    #allocation5 [shape = 'u8[32768]{0}', space=vmem, size = 0x8000, scoped, tag = 'output window, operand 0']
    loop: start=0, step=1, limit=4
    $region2: #{densenet_forward.5} parent=1 // loop_pre_header
      _
    $region3: #{densenet_forward.5} parent=1 // loop_header
      %s23 = sphi 0, %s27
      %p24 = scmp.ge.s32.totalorder %s23, 4
      %s31 = sphi 0, %s31
      %s33 = sphi 0, %s31
      %s34 = sphi 0, %s33
      %s48 = sphi 0, %s34
      %s54 = sphi 0, %s56
      %s57 = sphi 0, %s54
      %s58 = sphi 0, %s57
      %s74 = sphi 0, %s58
      %s78 = sphi 0, %s78
      %s80 = sphi 0, %s78
      %s81 = sphi 0, %s80
      %s95 = sphi 0, %s81
      %s99 = sphi 0, %s99
      %s101 = sphi 0, %s99
      %s102 = sphi 0, %s101
      %s116 = sphi 0, %s102
      %s120 = sphi 0, %s120
      %s122 = sphi 0, %s120
      %s123 = sphi 0, %s122
      %s137 = sphi 0, %s123
      %s141 = sphi 0, %s141
      %s143 = sphi 0, %s141
      %s144 = sphi 0, %s143
      %s158 = sphi 0, %s144
      %s162 = sphi 0, %s162
      %s164 = sphi 0, %s162
      %s165 = sphi 0, %s164
      %s179 = sphi 0, %s165
      %s183 = sphi 0, %s183
      %s185 = sphi 0, %s183
      %s186 = sphi 0, %s185
      %s200 = sphi 0, %s186
      %s204 = sphi 0, %s204
      %s206 = sphi 0, %s204
      %s207 = sphi 0, %s206
      %s221 = sphi 0, %s207
      %s225 = sphi 0, %s225
      %s227 = sphi 0, %s225
      %s228 = sphi 0, %s227
      %s242 = sphi 0, %s228
      %s246 = sphi 0, %s246
      %s248 = sphi 0, %s246
      %s249 = sphi 0, %s248
      %s263 = sphi 0, %s249
      %s267 = sphi 0, %s267
      %s269 = sphi 0, %s267
      %s270 = sphi 0, %s269
      %s284 = sphi 0, %s270
      %s288 = sphi 0, %s288
      %s290 = sphi 0, %s288
      %s291 = sphi 0, %s290
      %s305 = sphi 0, %s291
      %s309 = sphi 0, %s309
      %s311 = sphi 0, %s309
      %s312 = sphi 0, %s311
      %s326 = sphi 0, %s312
      %s330 = sphi 0, %s330
      %s332 = sphi 0, %s330
      %s333 = sphi 0, %s332
      %s347 = sphi 0, %s333
      %s351 = sphi 0, %s351
      %s353 = sphi 0, %s351
      %s354 = sphi 0, %s353
      %s368 = sphi 0, %s354
      %s372 = sphi 0, %s372
      %s374 = sphi 0, %s372
      %s375 = sphi 0, %s374
      %s389 = sphi 0, %s375
      %s395 = sphi 0, %s397
      %s398 = sphi 0, %s395
      %s399 = sphi 0, %s398
      %s415 = sphi 0, %s399
    $region4: #{densenet_forward.5} parent=1 // loop_header_branch
      %26 = sbr.rel (%p24) target = $region8
    $region5: #{densenet_forward.5} parent=1 // loop_body
      %s28 = ssub.s32 %s23, 1
      %s29 = ssub.s32 %s23, 2
      %s30 = sadd.s32 %s23, 1
      %s32 = sadd.s32 %s31, 1
      %p35 = scmp.eq.s32.totalorder %s23, 1
      %p36 = scmp.ne.s32.totalorder %s31, %s33
      %p37 = scmp.eq.s32.totalorder %s23, 0
      %p38 = por %p36, %p37
      %p39 = scmp.ne.s32.totalorder %s31, %s33
      %p40 = scmp.eq.s32.totalorder %s28, 1
      %p41 = por %p39, %p40
      %p42 = scmp.ne.s32.totalorder %s33, %s34
      %p43 = scmp.eq.s32.totalorder %s28, 0
      %p44 = por %p42, %p43
      %p45 = scmp.ne.s32.totalorder %s33, %s34
      %p46 = scmp.eq.s32.totalorder %s29, 1
      %p47 = por %p45, %p46
      %p49 = scmp.ne.s32.totalorder %s34, %s48
      %p50 = scmp.eq.s32.totalorder %s29, 0
      %p51 = por %p49, %p50
      %s52 = ssub.s32 %s23, %s30
      %p53 = scmp.eq.s32.totalorder %s52, 0
      %s55 = sadd.s32 %s54, 1
      %s56 = scalar_select %p53, %s54, %s55
      %p59 = pneg %p53
      %p60 = scmp.eq.s32.totalorder %s23, 1
      %p61 = por %p59, %p60
      %p62 = scmp.ne.s32.totalorder %s54, %s57
      %p63 = scmp.eq.s32.totalorder %s23, 0
      %p64 = por %p62, %p63
      %p65 = scmp.ne.s32.totalorder %s54, %s57
      %p66 = scmp.eq.s32.totalorder %s28, 1
      %p67 = por %p65, %p66
      %p68 = scmp.ne.s32.totalorder %s57, %s58
      %p69 = scmp.eq.s32.totalorder %s28, 0
      %p70 = por %p68, %p69
      %p71 = scmp.ne.s32.totalorder %s57, %s58
      %p72 = scmp.eq.s32.totalorder %s29, 1
      %p73 = por %p71, %p72
      %p75 = scmp.ne.s32.totalorder %s58, %s74
      %p76 = scmp.eq.s32.totalorder %s29, 0
      %p77 = por %p75, %p76
      %s79 = sadd.s32 %s78, 1
      %p82 = scmp.eq.s32.totalorder %s23, 1
      %p83 = scmp.ne.s32.totalorder %s78, %s80
      %p84 = scmp.eq.s32.totalorder %s23, 0
      %p85 = por %p83, %p84
      %p86 = scmp.ne.s32.totalorder %s78, %s80
      %p87 = scmp.eq.s32.totalorder %s28, 1
      %p88 = por %p86, %p87
      %p89 = scmp.ne.s32.totalorder %s80, %s81
      %p90 = scmp.eq.s32.totalorder %s28, 0
      %p91 = por %p89, %p90
      %p92 = scmp.ne.s32.totalorder %s80, %s81
      %p93 = scmp.eq.s32.totalorder %s29, 1
      %p94 = por %p92, %p93
      %p96 = scmp.ne.s32.totalorder %s81, %s95
      %p97 = scmp.eq.s32.totalorder %s29, 0
      %p98 = por %p96, %p97
      %s100 = sadd.s32 %s99, 1
      %p103 = scmp.eq.s32.totalorder %s23, 1
      %p104 = scmp.ne.s32.totalorder %s99, %s101
      %p105 = scmp.eq.s32.totalorder %s23, 0
      %p106 = por %p104, %p105
      %p107 = scmp.ne.s32.totalorder %s99, %s101
      %p108 = scmp.eq.s32.totalorder %s28, 1
      %p109 = por %p107, %p108
      %p110 = scmp.ne.s32.totalorder %s101, %s102
      %p111 = scmp.eq.s32.totalorder %s28, 0
      %p112 = por %p110, %p111
      %p113 = scmp.ne.s32.totalorder %s101, %s102
      %p114 = scmp.eq.s32.totalorder %s29, 1
      %p115 = por %p113, %p114
      %p117 = scmp.ne.s32.totalorder %s102, %s116
      %p118 = scmp.eq.s32.totalorder %s29, 0
      %p119 = por %p117, %p118
      %s121 = sadd.s32 %s120, 1
      %p124 = scmp.eq.s32.totalorder %s23, 1
      %p125 = scmp.ne.s32.totalorder %s120, %s122
      %p126 = scmp.eq.s32.totalorder %s23, 0
      %p127 = por %p125, %p126
      %p128 = scmp.ne.s32.totalorder %s120, %s122
      %p129 = scmp.eq.s32.totalorder %s28, 1
      %p130 = por %p128, %p129
      %p131 = scmp.ne.s32.totalorder %s122, %s123
      %p132 = scmp.eq.s32.totalorder %s28, 0
      %p133 = por %p131, %p132
      %p134 = scmp.ne.s32.totalorder %s122, %s123
      %p135 = scmp.eq.s32.totalorder %s29, 1
      %p136 = por %p134, %p135
      %p138 = scmp.ne.s32.totalorder %s123, %s137
      %p139 = scmp.eq.s32.totalorder %s29, 0
      %p140 = por %p138, %p139
      %s142 = sadd.s32 %s141, 1
      %p145 = scmp.eq.s32.totalorder %s23, 1
      %p146 = scmp.ne.s32.totalorder %s141, %s143
      %p147 = scmp.eq.s32.totalorder %s23, 0
      %p148 = por %p146, %p147
      %p149 = scmp.ne.s32.totalorder %s141, %s143
      %p150 = scmp.eq.s32.totalorder %s28, 1
      %p151 = por %p149, %p150
      %p152 = scmp.ne.s32.totalorder %s143, %s144
      %p153 = scmp.eq.s32.totalorder %s28, 0
      %p154 = por %p152, %p153
      %p155 = scmp.ne.s32.totalorder %s143, %s144
      %p156 = scmp.eq.s32.totalorder %s29, 1
      %p157 = por %p155, %p156
      %p159 = scmp.ne.s32.totalorder %s144, %s158
      %p160 = scmp.eq.s32.totalorder %s29, 0
      %p161 = por %p159, %p160
      %s163 = sadd.s32 %s162, 1
      %p166 = scmp.eq.s32.totalorder %s23, 1
      %p167 = scmp.ne.s32.totalorder %s162, %s164
      %p168 = scmp.eq.s32.totalorder %s23, 0
      %p169 = por %p167, %p168
      %p170 = scmp.ne.s32.totalorder %s162, %s164
      %p171 = scmp.eq.s32.totalorder %s28, 1
      %p172 = por %p170, %p171
      %p173 = scmp.ne.s32.totalorder %s164, %s165
      %p174 = scmp.eq.s32.totalorder %s28, 0
      %p175 = por %p173, %p174
      %p176 = scmp.ne.s32.totalorder %s164, %s165
      %p177 = scmp.eq.s32.totalorder %s29, 1
      %p178 = por %p176, %p177
      %p180 = scmp.ne.s32.totalorder %s165, %s179
      %p181 = scmp.eq.s32.totalorder %s29, 0
      %p182 = por %p180, %p181
      %s184 = sadd.s32 %s183, 1
      %p187 = scmp.eq.s32.totalorder %s23, 1
      %p188 = scmp.ne.s32.totalorder %s183, %s185
      %p189 = scmp.eq.s32.totalorder %s23, 0
      %p190 = por %p188, %p189
      %p191 = scmp.ne.s32.totalorder %s183, %s185
      %p192 = scmp.eq.s32.totalorder %s28, 1
      %p193 = por %p191, %p192
      %p194 = scmp.ne.s32.totalorder %s185, %s186
      %p195 = scmp.eq.s32.totalorder %s28, 0
      %p196 = por %p194, %p195
      %p197 = scmp.ne.s32.totalorder %s185, %s186
      %p198 = scmp.eq.s32.totalorder %s29, 1
      %p199 = por %p197, %p198
      %p201 = scmp.ne.s32.totalorder %s186, %s200
      %p202 = scmp.eq.s32.totalorder %s29, 0
      %p203 = por %p201, %p202
      %s205 = sadd.s32 %s204, 1
      %p208 = scmp.eq.s32.totalorder %s23, 1
      %p209 = scmp.ne.s32.totalorder %s204, %s206
      %p210 = scmp.eq.s32.totalorder %s23, 0
      %p211 = por %p209, %p210
      %p212 = scmp.ne.s32.totalorder %s204, %s206
      %p213 = scmp.eq.s32.totalorder %s28, 1
      %p214 = por %p212, %p213
      %p215 = scmp.ne.s32.totalorder %s206, %s207
      %p216 = scmp.eq.s32.totalorder %s28, 0
      %p217 = por %p215, %p216
      %p218 = scmp.ne.s32.totalorder %s206, %s207
      %p219 = scmp.eq.s32.totalorder %s29, 1
      %p220 = por %p218, %p219
      %p222 = scmp.ne.s32.totalorder %s207, %s221
      %p223 = scmp.eq.s32.totalorder %s29, 0
      %p224 = por %p222, %p223
      %s226 = sadd.s32 %s225, 1
      %p229 = scmp.eq.s32.totalorder %s23, 1
      %p230 = scmp.ne.s32.totalorder %s225, %s227
      %p231 = scmp.eq.s32.totalorder %s23, 0
      %p232 = por %p230, %p231
      %p233 = scmp.ne.s32.totalorder %s225, %s227
      %p234 = scmp.eq.s32.totalorder %s28, 1
      %p235 = por %p233, %p234
      %p236 = scmp.ne.s32.totalorder %s227, %s228
      %p237 = scmp.eq.s32.totalorder %s28, 0
      %p238 = por %p236, %p237
      %p239 = scmp.ne.s32.totalorder %s227, %s228
      %p240 = scmp.eq.s32.totalorder %s29, 1
      %p241 = por %p239, %p240
      %p243 = scmp.ne.s32.totalorder %s228, %s242
      %p244 = scmp.eq.s32.totalorder %s29, 0
      %p245 = por %p243, %p244
      %s247 = sadd.s32 %s246, 1
      %p250 = scmp.eq.s32.totalorder %s23, 1
      %p251 = scmp.ne.s32.totalorder %s246, %s248
      %p252 = scmp.eq.s32.totalorder %s23, 0
      %p253 = por %p251, %p252
      %p254 = scmp.ne.s32.totalorder %s246, %s248
      %p255 = scmp.eq.s32.totalorder %s28, 1
      %p256 = por %p254, %p255
      %p257 = scmp.ne.s32.totalorder %s248, %s249
      %p258 = scmp.eq.s32.totalorder %s28, 0
      %p259 = por %p257, %p258
      %p260 = scmp.ne.s32.totalorder %s248, %s249
      %p261 = scmp.eq.s32.totalorder %s29, 1
      %p262 = por %p260, %p261
      %p264 = scmp.ne.s32.totalorder %s249, %s263
      %p265 = scmp.eq.s32.totalorder %s29, 0
      %p266 = por %p264, %p265
      %s268 = sadd.s32 %s267, 1
      %p271 = scmp.eq.s32.totalorder %s23, 1
      %p272 = scmp.ne.s32.totalorder %s267, %s269
      %p273 = scmp.eq.s32.totalorder %s23, 0
      %p274 = por %p272, %p273
      %p275 = scmp.ne.s32.totalorder %s267, %s269
      %p276 = scmp.eq.s32.totalorder %s28, 1
      %p277 = por %p275, %p276
      %p278 = scmp.ne.s32.totalorder %s269, %s270
      %p279 = scmp.eq.s32.totalorder %s28, 0
      %p280 = por %p278, %p279
      %p281 = scmp.ne.s32.totalorder %s269, %s270
      %p282 = scmp.eq.s32.totalorder %s29, 1
      %p283 = por %p281, %p282
      %p285 = scmp.ne.s32.totalorder %s270, %s284
      %p286 = scmp.eq.s32.totalorder %s29, 0
      %p287 = por %p285, %p286
      %s289 = sadd.s32 %s288, 1
      %p292 = scmp.eq.s32.totalorder %s23, 1
      %p293 = scmp.ne.s32.totalorder %s288, %s290
      %p294 = scmp.eq.s32.totalorder %s23, 0
      %p295 = por %p293, %p294
      %p296 = scmp.ne.s32.totalorder %s288, %s290
      %p297 = scmp.eq.s32.totalorder %s28, 1
      %p298 = por %p296, %p297
      %p299 = scmp.ne.s32.totalorder %s290, %s291
      %p300 = scmp.eq.s32.totalorder %s28, 0
      %p301 = por %p299, %p300
      %p302 = scmp.ne.s32.totalorder %s290, %s291
      %p303 = scmp.eq.s32.totalorder %s29, 1
      %p304 = por %p302, %p303
      %p306 = scmp.ne.s32.totalorder %s291, %s305
      %p307 = scmp.eq.s32.totalorder %s29, 0
      %p308 = por %p306, %p307
      %s310 = sadd.s32 %s309, 1
      %p313 = scmp.eq.s32.totalorder %s23, 1
      %p314 = scmp.ne.s32.totalorder %s309, %s311
      %p315 = scmp.eq.s32.totalorder %s23, 0
      %p316 = por %p314, %p315
      %p317 = scmp.ne.s32.totalorder %s309, %s311
      %p318 = scmp.eq.s32.totalorder %s28, 1
      %p319 = por %p317, %p318
      %p320 = scmp.ne.s32.totalorder %s311, %s312
      %p321 = scmp.eq.s32.totalorder %s28, 0
      %p322 = por %p320, %p321
      %p323 = scmp.ne.s32.totalorder %s311, %s312
      %p324 = scmp.eq.s32.totalorder %s29, 1
      %p325 = por %p323, %p324
      %p327 = scmp.ne.s32.totalorder %s312, %s326
      %p328 = scmp.eq.s32.totalorder %s29, 0
      %p329 = por %p327, %p328
      %s331 = sadd.s32 %s330, 1
      %p334 = scmp.eq.s32.totalorder %s23, 1
      %p335 = scmp.ne.s32.totalorder %s330, %s332
      %p336 = scmp.eq.s32.totalorder %s23, 0
      %p337 = por %p335, %p336
      %p338 = scmp.ne.s32.totalorder %s330, %s332
      %p339 = scmp.eq.s32.totalorder %s28, 1
      %p340 = por %p338, %p339
      %p341 = scmp.ne.s32.totalorder %s332, %s333
      %p342 = scmp.eq.s32.totalorder %s28, 0
      %p343 = por %p341, %p342
      %p344 = scmp.ne.s32.totalorder %s332, %s333
      %p345 = scmp.eq.s32.totalorder %s29, 1
      %p346 = por %p344, %p345
      %p348 = scmp.ne.s32.totalorder %s333, %s347
      %p349 = scmp.eq.s32.totalorder %s29, 0
      %p350 = por %p348, %p349
      %s352 = sadd.s32 %s351, 1
      %p355 = scmp.eq.s32.totalorder %s23, 1
      %p356 = scmp.ne.s32.totalorder %s351, %s353
      %p357 = scmp.eq.s32.totalorder %s23, 0
      %p358 = por %p356, %p357
      %p359 = scmp.ne.s32.totalorder %s351, %s353
      %p360 = scmp.eq.s32.totalorder %s28, 1
      %p361 = por %p359, %p360
      %p362 = scmp.ne.s32.totalorder %s353, %s354
      %p363 = scmp.eq.s32.totalorder %s28, 0
      %p364 = por %p362, %p363
      %p365 = scmp.ne.s32.totalorder %s353, %s354
      %p366 = scmp.eq.s32.totalorder %s29, 1
      %p367 = por %p365, %p366
      %p369 = scmp.ne.s32.totalorder %s354, %s368
      %p370 = scmp.eq.s32.totalorder %s29, 0
      %p371 = por %p369, %p370
      %s373 = sadd.s32 %s372, 1
      %p376 = scmp.eq.s32.totalorder %s23, 1
      %p377 = scmp.ne.s32.totalorder %s372, %s374
      %p378 = scmp.eq.s32.totalorder %s23, 0
      %p379 = por %p377, %p378
      %p380 = scmp.ne.s32.totalorder %s372, %s374
      %p381 = scmp.eq.s32.totalorder %s28, 1
      %p382 = por %p380, %p381
      %p383 = scmp.ne.s32.totalorder %s374, %s375
      %p384 = scmp.eq.s32.totalorder %s28, 0
      %p385 = por %p383, %p384
      %p386 = scmp.ne.s32.totalorder %s374, %s375
      %p387 = scmp.eq.s32.totalorder %s29, 1
      %p388 = por %p386, %p387
      %p390 = scmp.ne.s32.totalorder %s375, %s389
      %p391 = scmp.eq.s32.totalorder %s29, 0
      %p392 = por %p390, %p391
      %s393 = ssub.s32 %s23, %s30
      %p394 = scmp.eq.s32.totalorder %s393, 0
      %s396 = sadd.s32 %s395, 1
      %s397 = scalar_select %p394, %s395, %s396
      %p400 = pneg %p394
      %p401 = scmp.eq.s32.totalorder %s23, 1
      %p402 = por %p400, %p401
      %p403 = scmp.ne.s32.totalorder %s395, %s398
      %p404 = scmp.eq.s32.totalorder %s23, 0
      %p405 = por %p403, %p404
      %p406 = scmp.ne.s32.totalorder %s395, %s398
      %p407 = scmp.eq.s32.totalorder %s28, 1
      %p408 = por %p406, %p407
      %p409 = scmp.ne.s32.totalorder %s398, %s399
      %p410 = scmp.eq.s32.totalorder %s28, 0
      %p411 = por %p409, %p410
      %p412 = scmp.ne.s32.totalorder %s398, %s399
      %p413 = scmp.eq.s32.totalorder %s29, 1
      %p414 = por %p412, %p413
      %p416 = scmp.ne.s32.totalorder %s399, %s415
      %p417 = scmp.eq.s32.totalorder %s29, 0
      %p418 = por %p416, %p417
      %p419 = scmp.le.s32.totalorder 1, %s23
      %p420 = scmp.lt.s32.totalorder %s23, 3
      %p421 = pnand %p419, %p420
      %p422 = pneg %p421
      // Predicated region
      $region9: #{densenet_forward.5} parent=5 // pred_check
        _
      $region10: #{densenet_forward.5} parent=5 // pred_check_branch
        %424 = sbr.rel (%p421) target = $region12
      $region11: #{densenet_forward.5} parent=5 // pred_region
        %s425 = ssub.s32 %s23, 1
        // Predicated region
        $region13: #{densenet_forward.5} parent=11 // pred_check
          %p426 = pneg %p44
        $region14: #{densenet_forward.5} parent=11 // pred_check_branch
          %428 = sbr.rel (%p426) target = $region16
        $region15: #{densenet_forward.5} parent=11 // pred_region
          _
        $region16: #{densenet_forward.5} parent=11 // pred_fallthru
          _
        // Predicated region
        $region17: #{densenet_forward.5} parent=11 // pred_check
          %p429 = pneg %p91
        $region18: #{densenet_forward.5} parent=11 // pred_check_branch
          %431 = sbr.rel (%p429) target = $region20
        $region19: #{densenet_forward.5} parent=11 // pred_region
          _
        $region20: #{densenet_forward.5} parent=11 // pred_fallthru
          _
        // Predicated region
        $region21: #{densenet_forward.5} parent=11 // pred_check
          %p432 = pneg %p112
        $region22: #{densenet_forward.5} parent=11 // pred_check_branch
          %434 = sbr.rel (%p432) target = $region24
        $region23: #{densenet_forward.5} parent=11 // pred_region
          _
        $region24: #{densenet_forward.5} parent=11 // pred_fallthru
          _
        // Predicated region
        $region25: #{densenet_forward.5} parent=11 // pred_check
          %p435 = pneg %p133
        $region26: #{densenet_forward.5} parent=11 // pred_check_branch
          %437 = sbr.rel (%p435) target = $region28
        $region27: #{densenet_forward.5} parent=11 // pred_region
          _
        $region28: #{densenet_forward.5} parent=11 // pred_fallthru
          _
        // Predicated region
        $region29: #{densenet_forward.5} parent=11 // pred_check
          %p438 = pneg %p154
        $region30: #{densenet_forward.5} parent=11 // pred_check_branch
          %440 = sbr.rel (%p438) target = $region32
        $region31: #{densenet_forward.5} parent=11 // pred_region
          _
        $region32: #{densenet_forward.5} parent=11 // pred_fallthru
          _
        // Predicated region
        $region33: #{densenet_forward.5} parent=11 // pred_check
          %p441 = pneg %p175
        $region34: #{densenet_forward.5} parent=11 // pred_check_branch
          %443 = sbr.rel (%p441) target = $region36
        $region35: #{densenet_forward.5} parent=11 // pred_region
          _
        $region36: #{densenet_forward.5} parent=11 // pred_fallthru
          _
        // Predicated region
        $region37: #{densenet_forward.5} parent=11 // pred_check
          %p444 = pneg %p196
        $region38: #{densenet_forward.5} parent=11 // pred_check_branch
          %446 = sbr.rel (%p444) target = $region40
        $region39: #{densenet_forward.5} parent=11 // pred_region
          _
        $region40: #{densenet_forward.5} parent=11 // pred_fallthru
          _
        // Predicated region
        $region41: #{densenet_forward.5} parent=11 // pred_check
          %p447 = pneg %p217
        $region42: #{densenet_forward.5} parent=11 // pred_check_branch
          %449 = sbr.rel (%p447) target = $region44
        $region43: #{densenet_forward.5} parent=11 // pred_region
          _
        $region44: #{densenet_forward.5} parent=11 // pred_fallthru
          _
        // Predicated region
        $region45: #{densenet_forward.5} parent=11 // pred_check
          %p450 = pneg %p238
        $region46: #{densenet_forward.5} parent=11 // pred_check_branch
          %452 = sbr.rel (%p450) target = $region48
        $region47: #{densenet_forward.5} parent=11 // pred_region
          _
        $region48: #{densenet_forward.5} parent=11 // pred_fallthru
          _
        // Predicated region
        $region49: #{densenet_forward.5} parent=11 // pred_check
          %p453 = pneg %p259
        $region50: #{densenet_forward.5} parent=11 // pred_check_branch
          %455 = sbr.rel (%p453) target = $region52
        $region51: #{densenet_forward.5} parent=11 // pred_region
          _
        $region52: #{densenet_forward.5} parent=11 // pred_fallthru
          _
        // Predicated region
        $region53: #{densenet_forward.5} parent=11 // pred_check
          %p456 = pneg %p280
        $region54: #{densenet_forward.5} parent=11 // pred_check_branch
          %458 = sbr.rel (%p456) target = $region56
        $region55: #{densenet_forward.5} parent=11 // pred_region
          _
        $region56: #{densenet_forward.5} parent=11 // pred_fallthru
          _
        // Predicated region
        $region57: #{densenet_forward.5} parent=11 // pred_check
          %p459 = pneg %p301
        $region58: #{densenet_forward.5} parent=11 // pred_check_branch
          %461 = sbr.rel (%p459) target = $region60
        $region59: #{densenet_forward.5} parent=11 // pred_region
          _
        $region60: #{densenet_forward.5} parent=11 // pred_fallthru
          _
        // Predicated region
        $region61: #{densenet_forward.5} parent=11 // pred_check
          %p462 = pneg %p322
        $region62: #{densenet_forward.5} parent=11 // pred_check_branch
          %464 = sbr.rel (%p462) target = $region64
        $region63: #{densenet_forward.5} parent=11 // pred_region
          _
        $region64: #{densenet_forward.5} parent=11 // pred_fallthru
          _
        // Predicated region
        $region65: #{densenet_forward.5} parent=11 // pred_check
          %p465 = pneg %p343
        $region66: #{densenet_forward.5} parent=11 // pred_check_branch
          %467 = sbr.rel (%p465) target = $region68
        $region67: #{densenet_forward.5} parent=11 // pred_region
          _
        $region68: #{densenet_forward.5} parent=11 // pred_fallthru
          _
        // Predicated region
        $region69: #{densenet_forward.5} parent=11 // pred_check
          %p468 = pneg %p364
        $region70: #{densenet_forward.5} parent=11 // pred_check_branch
          %470 = sbr.rel (%p468) target = $region72
        $region71: #{densenet_forward.5} parent=11 // pred_region
          _
        $region72: #{densenet_forward.5} parent=11 // pred_fallthru
          _
        // Predicated region
        $region73: #{densenet_forward.5} parent=11 // pred_check
          %p471 = pneg %p385
        $region74: #{densenet_forward.5} parent=11 // pred_check_branch
          %473 = sbr.rel (%p471) target = $region76
        $region75: #{densenet_forward.5} parent=11 // pred_region
          _
        $region76: #{densenet_forward.5} parent=11 // pred_fallthru
          _
      $region12: #{densenet_forward.5} parent=5 // pred_fallthru
        _
      %p474 = scmp.lt.s32.totalorder %s23, 2
      // Predicated region
      $region77: #{densenet_forward.5} parent=5 // pred_check
        %p475 = pneg %p474
      $region78: #{densenet_forward.5} parent=5 // pred_check_branch
        %477 = sbr.rel (%p475) target = $region80
      $region79: #{densenet_forward.5} parent=5 // pred_region
        // Predicated region
        $region81: #{densenet_forward.5} parent=79 // pred_check
          %p478 = pneg %p64
        $region82: #{densenet_forward.5} parent=79 // pred_check_branch
          %480 = sbr.rel (%p478) target = $region84
        $region83: #{densenet_forward.5} parent=79 // pred_region
          %s481 = sand.u32 %s54, 1
          %s482 = sand.u32 %s54, 1
          %s483 = smul.addr %s482, 32
          %s484 = scalar_lea.vmem [#allocation4], %s483
          %s485 = smul.u32 2, %s23
          %s486 = smul.addr %s485, 8
          %s487 = scalar_lea.vmem %s1, %s486
          // Predicated region
          $region85: #{densenet_forward.5} parent=83 // pred_check
            _
          $region86: #{densenet_forward.5} parent=83 // pred_check_branch
            %489 = sbr.rel (0) target = $region88
          $region87: #{densenet_forward.5} parent=83 // pred_region
            // Predicated region
            $region89: #{densenet_forward.5} parent=87 // pred_check
              _
            $region90: #{densenet_forward.5} parent=87 // pred_check_branch
              %491 = sbr.rel (0) target = $region92
            $region91: #{densenet_forward.5} parent=87 // pred_region
              loop: start=0, step=1, limit=1
              $region93: #{densenet_forward.5} parent=91 // loop_pre_header
                _
              $region94: #{densenet_forward.5} parent=91 // loop_header
                %s493 = sphi 0, %s497
                %p494 = scmp.ge.s32.totalorder %s493, 1
                %s498 = sphi %s487, %s487
                %s499 = sphi %s484, %s484
              $region95: #{densenet_forward.5} parent=91 // loop_header_branch
                %496 = sbr.rel (%p494) target = $region99
              $region96: #{densenet_forward.5} parent=91 // loop_body
                %v500 = vld [vmem:[%s498] sm:$0xff]
                %501 = vst [vmem:[%s499] sm:$0xff] %v500
                %v502 = vld [vmem:[%s498 + $0x8] sm:$0xff]
                %503 = vst [vmem:[%s499 + $0x8] sm:$0xff] %v502
                %v504 = vld [vmem:[%s498 + $0x20] sm:$0xff]
                %505 = vst [vmem:[%s499 + $0x10] sm:$0xff] %v504
                %v506 = vld [vmem:[%s498 + $0x28] sm:$0xff]
                %507 = vst [vmem:[%s499 + $0x18] sm:$0xff] %v506
              $region97: #{densenet_forward.5} parent=91 // loop_footer
                %s497 = sadd.s32 1, %s493
              $region98: #{densenet_forward.5} parent=91 // loop_footer_branch
                %492 = sbr.rel target = $region94
              $region99: #{densenet_forward.5} parent=91 // loop_exit
                _
            $region92: #{densenet_forward.5} parent=87 // pred_fallthru
              _
            // Predicated region
            $region100: #{densenet_forward.5} parent=87 // pred_check
              _
            $region101: #{densenet_forward.5} parent=87 // pred_check_branch
              %509 = sbr.rel target = $region103
            $region102: #{densenet_forward.5} parent=87 // pred_region
              _
            $region103: #{densenet_forward.5} parent=87 // pred_fallthru
              _
          $region88: #{densenet_forward.5} parent=83 // pred_fallthru
            _
          %510 = vnop
        $region84: #{densenet_forward.5} parent=79 // pred_fallthru
          _
      $region80: #{densenet_forward.5} parent=5 // pred_fallthru
        _
      %p511 = scmp.le.s32.totalorder 1, %s23
      %p512 = scmp.lt.s32.totalorder %s23, 3
      %p513 = pnand %p511, %p512
      %p514 = pneg %p513
      // Predicated region
      $region104: #{densenet_forward.5} parent=5 // pred_check
        _
      $region105: #{densenet_forward.5} parent=5 // pred_check_branch
        %516 = sbr.rel (%p513) target = $region107
      $region106: #{densenet_forward.5} parent=5 // pred_region
        %s517 = ssub.s32 %s23, 1
        %s518 = sand.u32 %s57, 1
        %s519 = sand.u32 %s57, 1
        %s520 = smul.addr %s519, 32
        %s521 = scalar_lea.vmem [#allocation4], %s520
        // Predicated region
        $region108: #{densenet_forward.5} parent=106 // pred_check
          %p522 = pneg %p70
        $region109: #{densenet_forward.5} parent=106 // pred_check_branch
          %524 = sbr.rel (%p522) target = $region111
        $region110: #{densenet_forward.5} parent=106 // pred_region
          _
        $region111: #{densenet_forward.5} parent=106 // pred_fallthru
          _
        %p525 = pneg %p44
        %p526 = pneg %p41
        %s527 = sand.u32 %s57, 1
        %s528 = sand.u32 %s57, 1
        %s529 = smul.addr %s528, 32
        %s530 = scalar_lea.vmem [#allocation4], %s529
        %p531 = pneg %p70
        %p532 = pneg %p67
        %p533 = pneg %p91
        %p534 = pneg %p88
        %p535 = pneg %p112
        %p536 = pneg %p109
        %p537 = pneg %p133
        %p538 = pneg %p130
        %p539 = pneg %p154
        %p540 = pneg %p151
        %p541 = pneg %p175
        %p542 = pneg %p172
        %p543 = pneg %p196
        %p544 = pneg %p193
        %p545 = pneg %p217
        %p546 = pneg %p214
        %p547 = pneg %p238
        %p548 = pneg %p235
        %p549 = pneg %p259
        %p550 = pneg %p256
        %p551 = pneg %p280
        %p552 = pneg %p277
        %p553 = pneg %p301
        %p554 = pneg %p298
        %p555 = pneg %p322
        %p556 = pneg %p319
        %p557 = pneg %p343
        %p558 = pneg %p340
        %p559 = pneg %p364
        %p560 = pneg %p361
        %p561 = pneg %p385
        %p562 = pneg %p382
        %p563 = pneg %p411
        %p564 = pneg %p408
        %s565 = sand.u32 %s398, 1
        %s566 = sand.u32 %s398, 1
        %s567 = smul.addr %s566, 32
        %s568 = scalar_lea.vmem [#allocation5], %s567
        %s569 = smul.u32 2, %s28
        %s570 = smul.u32 2, %s28
        %v572 = vld [vmem:[%s0] sm:$0x3]
        %573 = vst [vmem:[#allocation3] sm:$0xff] 0
        %574 = vst [vmem:[#allocation3 + $0x8] sm:$0xff] 0
        %vm575 = vcmask 277504
        %576 = vst.msk [vmem:[#allocation3 + $0x10] sm:$0xff] %vm575, 0
        %v577 = vld [vmem:[%s521] sm:$0xff]
        %v578 = vld [vmem:[%s521 + $0x8] sm:$0xff]
        %v579 = vld [vmem:[%s521 + $0x10] sm:$0xff]
        %v580 = vld [vmem:[%s521 + $0x18] sm:$0xff]
        %581 = vst [vmem:[#allocation2] sm:$0xff] %v577
        %582 = vst [vmem:[#allocation2 + $0x8] sm:$0xff] %v578
        %583 = vst [vmem:[#allocation2 + $0x10] sm:$0xff] %v579
        %584 = vst [vmem:[#allocation2 + $0x18] sm:$0xff] %v580
        %v585 = vld [vmem:[#allocation2] sm:$0xff]
        %v586 = vld [vmem:[#allocation2 + $0x8] sm:$0xff]
        %v587 = vld [vmem:[#allocation2 + $0x10] sm:$0xff]
        %v588 = vld [vmem:[#allocation2 + $0x18] sm:$0xff]
        %v589 = vld [vmem:[%s2] sm:$0xff]
        %v590 = vld [vmem:[%s2 + $0x8] sm:$0xff]
        %592 = vset.pattern.permute.xlu0 0
        %593 = vperm.xlu0 %592, %v589
        %v594 = vpop.permute.xlu0 %593
        %597 = vset.pattern.permute.xlu0 0
        %598 = vperm.xlu0 %597, %v590
        %v599 = vpop.permute.xlu0 %598
        %v601 = vmul.f32 %v585, %v594
        %v602 = vmul.f32 %v586, %v594
        %v603 = vmul.f32 %v587, %v599
        %v604 = vmul.f32 %v588, %v599
        %v605 = vld [vmem:[%s3] sm:$0xff]
        %v606 = vld [vmem:[%s3 + $0x8] sm:$0xff]
        %608 = vset.pattern.permute.xlu0 0
        %609 = vperm.xlu0 %608, %v605
        %v610 = vpop.permute.xlu0 %609
        %613 = vset.pattern.permute.xlu0 0
        %614 = vperm.xlu0 %613, %v606
        %v615 = vpop.permute.xlu0 %614
        %v617 = vadd.f32 %v601, %v610
        %v618 = vadd.f32 %v602, %v610
        %v619 = vadd.f32 %v603, %v615
        %v620 = vadd.f32 %v604, %v615
        %v621 = vmax.f32 %v617, 0.0
        %v622 = vmax.f32 %v618, 0.0
        %v623 = vmax.f32 %v619, 0.0
        %v624 = vmax.f32 %v620, 0.0
        %v625 = vld [vmem:[%s4] sm:$0xf]
        %v626 = vld [vmem:[%s4 + $0x4] sm:$0xf]
        %v627 = vpack.c.bf16 %v623, %v621
        %v628 = vpack.c.bf16 %v624, %v622
        %v631 = vunpack.c.l.b16 %v625
        %v632 = vunpack.c.l.b16 %v626
        %v633 = vpack.c.b16 %v632, %v631
        %vm634 = vcmask 130048
        %v636 = vsel %vm634, %v633, 0
        %638 = vmatprep.subr.bf16.mxu0 %v628
        %639 = vmatpush1.bf16.msra.mxu0 %v627
        %640 = vmatprep.subr.bf16.mxu0 0
        %641 = vmatpush1.bf16.msra.mxu0 0
        %642 = vmatprep.subr.bf16.mxu0 0
        %643 = vmatpush1.bf16.msra.mxu0 0
        %644 = vmatprep.subr.bf16.mxu0 0
        %645 = vmatpush1.bf16.msra.mxu0 0
        %646 = vmatprep.subr.bf16.mxu0 0
        %647 = vmatpush1.bf16.msra.mxu0 0
        %648 = vmatprep.subr.bf16.mxu0 0
        %649 = vmatpush1.bf16.msra.mxu0 0
        %650 = vmatprep.subr.bf16.mxu0 0
        %651 = vmatpush1.bf16.msra.mxu0 0
        %652 = vmatprep.subr.bf16.mxu0 0
        %653 = vmatpush1.bf16.msra.mxu0 0
        %654 = vmatprep.subr.bf16.mxu0 0
        %655 = vmatpush1.bf16.msra.mxu0 0
        %656 = vmatprep.subr.bf16.mxu0 0
        %657 = vmatpush1.bf16.msra.mxu0 0
        %658 = vmatprep.subr.bf16.mxu0 0
        %659 = vmatpush1.bf16.msra.mxu0 0
        %660 = vmatprep.subr.bf16.mxu0 0
        %661 = vmatpush1.bf16.msra.mxu0 0
        %662 = vmatprep.subr.bf16.mxu0 0
        %663 = vmatpush1.bf16.msra.mxu0 0
        %664 = vmatprep.subr.bf16.mxu0 0
        %665 = vmatpush1.bf16.msra.mxu0 0
        %666 = vmatprep.subr.bf16.mxu0 0
        %667 = vmatpush1.bf16.msra.mxu0 0
        %668 = vmatprep.subr.bf16.mxu0 0
        %669 = vmatpush1.bf16.msra.mxu0 0
        %670 = vmatprep.mubr.bf16.mxu0 0
        %671 = vmatmul.mubr.bf16.gmra.mrb[0].mxu0 %v636
        %v672 = vpop.f32.mrb[0].mxu0
        %v673 = vadd.f32 0.0, %v672
        %v674 = vpop.f32.mrb[0].mxu0
        %v675 = vadd.f32 0.0, %v674
        %v676 = vpop.f32.mrb[0].mxu0
        %v677 = vadd.f32 0.0, %v676
        %v678 = vpop.f32.mrb[0].mxu0
        %v679 = vadd.f32 0.0, %v678
        %680 = vdwg.mxu0
        %v681 = vld [vmem:[%s5] sm:$0xff]
        %v682 = vld [vmem:[%s5 + $0x8] sm:$0xff]
        %684 = vset.pattern.permute.xlu0 0
        %685 = vperm.xlu0 %684, %v681
        %v686 = vpop.permute.xlu0 %685
        %689 = vset.pattern.permute.xlu0 0
        %690 = vperm.xlu0 %689, %v682
        %v691 = vpop.permute.xlu0 %690
        %v693 = vmul.f32 %v673, %v686
        %v694 = vmul.f32 %v675, %v686
        %v695 = vmul.f32 %v677, %v691
        %v696 = vmul.f32 %v679, %v691
        %v697 = vld [vmem:[%s6] sm:$0xff]
        %v698 = vld [vmem:[%s6 + $0x8] sm:$0xff]
        %700 = vset.pattern.permute.xlu0 0
        %701 = vperm.xlu0 %700, %v697
        %v702 = vpop.permute.xlu0 %701
        %705 = vset.pattern.permute.xlu0 0
        %706 = vperm.xlu0 %705, %v698
        %v707 = vpop.permute.xlu0 %706
        %v709 = vadd.f32 %v693, %v702
        %v710 = vadd.f32 %v694, %v702
        %v711 = vadd.f32 %v695, %v707
        %v712 = vadd.f32 %v696, %v707
        %v713 = vmax.f32 %v709, 0.0
        %v714 = vmax.f32 %v710, 0.0
        %v715 = vmax.f32 %v711, 0.0
        %v716 = vmax.f32 %v712, 0.0
        %v718 = vlaneseq
        %v719 = vshrl.u32 %v718, 7
        %v720 = vsub.s32 0, %v719
        %v721 = vrot.slane %v572, %v720
        %v722 = vlaneseq
        %v723 = vshrl.u32 %v722, 7
        %v724 = vsub.s32 1, %v723
        %v725 = vrot.slane %v572, %v724
        %v728 = vmul.f32 %v713, %v721
        %v729 = vmul.f32 %v714, %v725
        %v730 = vmul.f32 %v715, %v721
        %v731 = vmul.f32 %v716, %v725
        %v732 = vpack.c.bf16 %v730, %v728
        %v733 = vpack.c.bf16 %v731, %v729
        %736 = vrot.lane.b32.xlu0 %v732, 17
        %v737 = vpop.permute.xlu0 %736
        %738 = vrot.lane.b32.xlu0 %v733, 17
        %v739 = vpop.permute.xlu0 %738
        %vm740 = vcmask 138240
        %v741 = vsel %vm740, %v737, %v739
        %vm745 = vcmask 1047688
        %746 = vst.msk [vmem:[#allocation3] sm:$0xff] %vm745, %v737
        %747 = vst [vmem:[#allocation3 + $0x8] sm:$0xff] %v741
        %vm748 = vcmask 138240
        %749 = vst.msk [vmem:[#allocation3 + $0x10] sm:$0xff] %vm748, %v739
        %v750 = vld [vmem:[#allocation3] sm:$0xff]
        %v751 = vld [vmem:[#allocation3 + $0x8] sm:$0xff]
        %v752 = vld [vmem:[%s7] sm:$0xf]
        %v753 = vld [vmem:[#allocation3 + $0x10] sm:$0xff]
        %s754 = scalar_lea.vmem %s7, 4
        %v755 = vld [vmem:[%s754] sm:$0xf]
        %759 = vrot.lane.b32.xlu0 %v750, 127
        %v760 = vpop.permute.xlu0 %759
        %761 = vrot.lane.b32.xlu0 %v751, 127
        %v762 = vpop.permute.xlu0 %761
        %763 = vrot.lane.b32.xlu0 %v753, 127
        %v764 = vpop.permute.xlu0 %763
        %vm765 = vcmask 1039360
        %v766 = vsel %vm765, %v760, %v762
        %v767 = vsel %vm765, %v762, %v764
        %v771 = vsel %vm634, %v755, 0
        %773 = vmatprep.subr.bf16.mxu0 %v767
        %774 = vmatpush1.bf16.msra.mxu0 %v766
        %775 = vmatprep.subr.bf16.mxu0 0
        %776 = vmatpush1.bf16.msra.mxu0 0
        %777 = vmatprep.subr.bf16.mxu0 0
        %778 = vmatpush1.bf16.msra.mxu0 0
        %779 = vmatprep.subr.bf16.mxu0 0
        %780 = vmatpush1.bf16.msra.mxu0 0
        %781 = vmatprep.subr.bf16.mxu0 0
        %782 = vmatpush1.bf16.msra.mxu0 0
        %783 = vmatprep.subr.bf16.mxu0 0
        %784 = vmatpush1.bf16.msra.mxu0 0
        %785 = vmatprep.subr.bf16.mxu0 0
        %786 = vmatpush1.bf16.msra.mxu0 0
        %787 = vmatprep.subr.bf16.mxu0 0
        %788 = vmatpush1.bf16.msra.mxu0 0
        %789 = vmatprep.subr.bf16.mxu0 0
        %790 = vmatpush1.bf16.msra.mxu0 0
        %791 = vmatprep.subr.bf16.mxu0 0
        %792 = vmatpush1.bf16.msra.mxu0 0
        %793 = vmatprep.subr.bf16.mxu0 0
        %794 = vmatpush1.bf16.msra.mxu0 0
        %795 = vmatprep.subr.bf16.mxu0 0
        %796 = vmatpush1.bf16.msra.mxu0 0
        %797 = vmatprep.subr.bf16.mxu0 0
        %798 = vmatpush1.bf16.msra.mxu0 0
        %799 = vmatprep.subr.bf16.mxu0 0
        %800 = vmatpush1.bf16.msra.mxu0 0
        %801 = vmatprep.subr.bf16.mxu0 0
        %802 = vmatpush1.bf16.msra.mxu0 0
        %803 = vmatprep.subr.bf16.mxu0 0
        %804 = vmatpush1.bf16.msra.mxu0 0
        %805 = vmatprep.mubr.bf16.mxu0 0
        %806 = vmatmul.mubr.bf16.gmra.mrb[0].mxu0 %v771
        %v807 = vpop.f32.mrb[0].mxu0
        %v808 = vadd.f32 0.0, %v807
        %v809 = vpop.f32.mrb[0].mxu0
        %v810 = vadd.f32 0.0, %v809
        %v811 = vpop.f32.mrb[0].mxu0
        %v812 = vpop.f32.mrb[0].mxu0
        %813 = vdwg.mxu0
        %v815 = vsel %vm634, %v752, 0
        %817 = vmatprep.subr.bf16.mxu0 %v751
        %818 = vmatpush1.bf16.msra.mxu0 %v750
        %819 = vmatprep.subr.bf16.mxu0 0
        %820 = vmatpush1.bf16.msra.mxu0 0
        %821 = vmatprep.subr.bf16.mxu0 0
        %822 = vmatpush1.bf16.msra.mxu0 0
        %823 = vmatprep.subr.bf16.mxu0 0
        %824 = vmatpush1.bf16.msra.mxu0 0
        %825 = vmatprep.subr.bf16.mxu0 0
        %826 = vmatpush1.bf16.msra.mxu0 0
        %827 = vmatprep.subr.bf16.mxu0 0
        %828 = vmatpush1.bf16.msra.mxu0 0
        %829 = vmatprep.subr.bf16.mxu0 0
        %830 = vmatpush1.bf16.msra.mxu0 0
        %831 = vmatprep.subr.bf16.mxu0 0
        %832 = vmatpush1.bf16.msra.mxu0 0
        %833 = vmatprep.subr.bf16.mxu0 0
        %834 = vmatpush1.bf16.msra.mxu0 0
        %835 = vmatprep.subr.bf16.mxu0 0
        %836 = vmatpush1.bf16.msra.mxu0 0
        %837 = vmatprep.subr.bf16.mxu0 0
        %838 = vmatpush1.bf16.msra.mxu0 0
        %839 = vmatprep.subr.bf16.mxu0 0
        %840 = vmatpush1.bf16.msra.mxu0 0
        %841 = vmatprep.subr.bf16.mxu0 0
        %842 = vmatpush1.bf16.msra.mxu0 0
        %843 = vmatprep.subr.bf16.mxu0 0
        %844 = vmatpush1.bf16.msra.mxu0 0
        %845 = vmatprep.subr.bf16.mxu0 0
        %846 = vmatpush1.bf16.msra.mxu0 0
        %847 = vmatprep.subr.bf16.mxu0 0
        %848 = vmatpush1.bf16.msra.mxu0 0
        %849 = vmatprep.mubr.bf16.mxu0 0
        %850 = vmatmul.mubr.bf16.gmra.mrb[0].mxu0 %v815
        %v851 = vpop.f32.mrb[0].mxu0
        %v852 = vadd.f32 %v808, %v851
        %v853 = vpop.f32.mrb[0].mxu0
        %v854 = vadd.f32 %v810, %v853
        %v855 = vpop.f32.mrb[0].mxu0
        %v856 = vpop.f32.mrb[0].mxu0
        %857 = vdwg.mxu0
        %s858 = scalar_lea.vmem %s7, 8
        %v859 = vld [vmem:[%s858] sm:$0xf]
        %860 = vrot.lane.b32.xlu0 %v750, 126
        %v861 = vpop.permute.xlu0 %860
        %862 = vrot.lane.b32.xlu0 %v751, 126
        %v863 = vpop.permute.xlu0 %862
        %864 = vrot.lane.b32.xlu0 %v753, 126
        %v865 = vpop.permute.xlu0 %864
        %vm866 = vcmask 1031168
        %v867 = vsel %vm866, %v861, %v863
        %v868 = vsel %vm866, %v863, %v865
        %v872 = vsel %vm634, %v859, 0
        %874 = vmatprep.subr.bf16.mxu0 %v868
        %875 = vmatpush1.bf16.msra.mxu0 %v867
        %876 = vmatprep.subr.bf16.mxu0 0
        %877 = vmatpush1.bf16.msra.mxu0 0
        %878 = vmatprep.subr.bf16.mxu0 0
        %879 = vmatpush1.bf16.msra.mxu0 0
        %880 = vmatprep.subr.bf16.mxu0 0
        %881 = vmatpush1.bf16.msra.mxu0 0
        %882 = vmatprep.subr.bf16.mxu0 0
        %883 = vmatpush1.bf16.msra.mxu0 0
        %884 = vmatprep.subr.bf16.mxu0 0
        %885 = vmatpush1.bf16.msra.mxu0 0
        %886 = vmatprep.subr.bf16.mxu0 0
        %887 = vmatpush1.bf16.msra.mxu0 0
        %888 = vmatprep.subr.bf16.mxu0 0
        %889 = vmatpush1.bf16.msra.mxu0 0
        %890 = vmatprep.subr.bf16.mxu0 0
        %891 = vmatpush1.bf16.msra.mxu0 0
        %892 = vmatprep.subr.bf16.mxu0 0
        %893 = vmatpush1.bf16.msra.mxu0 0
        %894 = vmatprep.subr.bf16.mxu0 0
        %895 = vmatpush1.bf16.msra.mxu0 0
        %896 = vmatprep.subr.bf16.mxu0 0
        %897 = vmatpush1.bf16.msra.mxu0 0
        %898 = vmatprep.subr.bf16.mxu0 0
        %899 = vmatpush1.bf16.msra.mxu0 0
        %900 = vmatprep.subr.bf16.mxu0 0
        %901 = vmatpush1.bf16.msra.mxu0 0
        %902 = vmatprep.subr.bf16.mxu0 0
        %903 = vmatpush1.bf16.msra.mxu0 0
        %904 = vmatprep.subr.bf16.mxu0 0
        %905 = vmatpush1.bf16.msra.mxu0 0
        %906 = vmatprep.mubr.bf16.mxu0 0
        %907 = vmatmul.mubr.bf16.gmra.mrb[0].mxu0 %v872
        %v908 = vpop.f32.mrb[0].mxu0
        %v909 = vadd.f32 0.0, %v908
        %v910 = vpop.f32.mrb[0].mxu0
        %v911 = vadd.f32 0.0, %v910
        %v912 = vpop.f32.mrb[0].mxu0
        %v913 = vpop.f32.mrb[0].mxu0
        %914 = vdwg.mxu0
        %v915 = vadd.f32 %v852, %v909
        %v916 = vadd.f32 %v854, %v911
        %s917 = scalar_lea.vmem %s7, 12
        %v918 = vld [vmem:[%s917] sm:$0xf]
        %919 = vrot.lane.b32.xlu0 %v750, 112
        %v920 = vpop.permute.xlu0 %919
        %921 = vrot.lane.b32.xlu0 %v751, 112
        %v922 = vpop.permute.xlu0 %921
        %923 = vrot.lane.b32.xlu0 %v753, 112
        %v924 = vpop.permute.xlu0 %923
        %vm925 = vcmask 916480
        %v926 = vsel %vm925, %v920, %v922
        %v927 = vsel %vm925, %v922, %v924
        %v931 = vsel %vm634, %v918, 0
        %933 = vmatprep.subr.bf16.mxu0 %v927
        %934 = vmatpush1.bf16.msra.mxu0 %v926
        %935 = vmatprep.subr.bf16.mxu0 0
        %936 = vmatpush1.bf16.msra.mxu0 0
        %937 = vmatprep.subr.bf16.mxu0 0
        %938 = vmatpush1.bf16.msra.mxu0 0
        %939 = vmatprep.subr.bf16.mxu0 0
        %940 = vmatpush1.bf16.msra.mxu0 0
        %941 = vmatprep.subr.bf16.mxu0 0
        %942 = vmatpush1.bf16.msra.mxu0 0
        %943 = vmatprep.subr.bf16.mxu0 0
        %944 = vmatpush1.bf16.msra.mxu0 0
        %945 = vmatprep.subr.bf16.mxu0 0
        %946 = vmatpush1.bf16.msra.mxu0 0
        %947 = vmatprep.subr.bf16.mxu0 0
        %948 = vmatpush1.bf16.msra.mxu0 0
        %949 = vmatprep.subr.bf16.mxu0 0
        %950 = vmatpush1.bf16.msra.mxu0 0
        %951 = vmatprep.subr.bf16.mxu0 0
        %952 = vmatpush1.bf16.msra.mxu0 0
        %953 = vmatprep.subr.bf16.mxu0 0
        %954 = vmatpush1.bf16.msra.mxu0 0
        %955 = vmatprep.subr.bf16.mxu0 0
        %956 = vmatpush1.bf16.msra.mxu0 0
        %957 = vmatprep.subr.bf16.mxu0 0
        %958 = vmatpush1.bf16.msra.mxu0 0
        %959 = vmatprep.subr.bf16.mxu0 0
        %960 = vmatpush1.bf16.msra.mxu0 0
        %961 = vmatprep.subr.bf16.mxu0 0
        %962 = vmatpush1.bf16.msra.mxu0 0
        %963 = vmatprep.subr.bf16.mxu0 0
        %964 = vmatpush1.bf16.msra.mxu0 0
        %965 = vmatprep.mubr.bf16.mxu0 0
        %966 = vmatmul.mubr.bf16.gmra.mrb[0].mxu0 %v931
        %v967 = vpop.f32.mrb[0].mxu0
        %v968 = vadd.f32 0.0, %v967
        %v969 = vpop.f32.mrb[0].mxu0
        %v970 = vadd.f32 0.0, %v969
        %v971 = vpop.f32.mrb[0].mxu0
        %v972 = vpop.f32.mrb[0].mxu0
        %973 = vdwg.mxu0
        %v974 = vadd.f32 %v915, %v968
        %v975 = vadd.f32 %v916, %v970
        %s976 = scalar_lea.vmem %s7, 16
        %v977 = vld [vmem:[%s976] sm:$0xf]
        %978 = vrot.lane.b32.xlu0 %v750, 111
        %v979 = vpop.permute.xlu0 %978
        %980 = vrot.lane.b32.xlu0 %v751, 111
        %v981 = vpop.permute.xlu0 %980
        %982 = vrot.lane.b32.xlu0 %v753, 111
        %v983 = vpop.permute.xlu0 %982
        %vm984 = vcmask 908288
        %v985 = vsel %vm984, %v979, %v981
        %v986 = vsel %vm984, %v981, %v983
        %v990 = vsel %vm634, %v977, 0
        %992 = vmatprep.subr.bf16.mxu0 %v986
        %993 = vmatpush1.bf16.msra.mxu0 %v985
        %994 = vmatprep.subr.bf16.mxu0 0
        %995 = vmatpush1.bf16.msra.mxu0 0
        %996 = vmatprep.subr.bf16.mxu0 0
        %997 = vmatpush1.bf16.msra.mxu0 0
        %998 = vmatprep.subr.bf16.mxu0 0
        %999 = vmatpush1.bf16.msra.mxu0 0
        %1000 = vmatprep.subr.bf16.mxu0 0
        %1001 = vmatpush1.bf16.msra.mxu0 0
        %1002 = vmatprep.subr.bf16.mxu0 0
        %1003 = vmatpush1.bf16.msra.mxu0 0
        %1004 = vmatprep.subr.bf16.mxu0 0
        %1005 = vmatpush1.bf16.msra.mxu0 0
        %1006 = vmatprep.subr.bf16.mxu0 0
        %1007 = vmatpush1.bf16.msra.mxu0 0
        %1008 = vmatprep.subr.bf16.mxu0 0
        %1009 = vmatpush1.bf16.msra.mxu0 0
        %1010 = vmatprep.subr.bf16.mxu0 0
        %1011 = vmatpush1.bf16.msra.mxu0 0
        %1012 = vmatprep.subr.bf16.mxu0 0
        %1013 = vmatpush1.bf16.msra.mxu0 0
        %1014 = vmatprep.subr.bf16.mxu0 0
        %1015 = vmatpush1.bf16.msra.mxu0 0
        %1016 = vmatprep.subr.bf16.mxu0 0
        %1017 = vmatpush1.bf16.msra.mxu0 0
        %1018 = vmatprep.subr.bf16.mxu0 0
        %1019 = vmatpush1.bf16.msra.mxu0 0
        %1020 = vmatprep.subr.bf16.mxu0 0
        %1021 = vmatpush1.bf16.msra.mxu0 0
        %1022 = vmatprep.subr.bf16.mxu0 0
        %1023 = vmatpush1.bf16.msra.mxu0 0
        %1024 = vmatprep.mubr.bf16.mxu0 0
        %1025 = vmatmul.mubr.bf16.gmra.mrb[0].mxu0 %v990
        %v1026 = vpop.f32.mrb[0].mxu0
        %v1027 = vadd.f32 0.0, %v1026
        %v1028 = vpop.f32.mrb[0].mxu0
        %v1029 = vadd.f32 0.0, %v1028
        %v1030 = vpop.f32.mrb[0].mxu0
        %v1031 = vpop.f32.mrb[0].mxu0
        %1032 = vdwg.mxu0
        %v1033 = vadd.f32 %v974, %v1027
        %v1034 = vadd.f32 %v975, %v1029
        %s1035 = scalar_lea.vmem %s7, 20
        %v1036 = vld [vmem:[%s1035] sm:$0xf]
        %1037 = vrot.lane.b32.xlu0 %v750, 110
        %v1038 = vpop.permute.xlu0 %1037
        %1039 = vrot.lane.b32.xlu0 %v751, 110
        %v1040 = vpop.permute.xlu0 %1039
        %1041 = vrot.lane.b32.xlu0 %v753, 110
        %v1042 = vpop.permute.xlu0 %1041
        %vm1043 = vcmask 900096
        %v1044 = vsel %vm1043, %v1038, %v1040
        %v1045 = vsel %vm1043, %v1040, %v1042
        %v1049 = vsel %vm634, %v1036, 0
        %1051 = vmatprep.subr.bf16.mxu0 %v1045
        %1052 = vmatpush1.bf16.msra.mxu0 %v1044
        %1053 = vmatprep.subr.bf16.mxu0 0
        %1054 = vmatpush1.bf16.msra.mxu0 0
        %1055 = vmatprep.subr.bf16.mxu0 0
        %1056 = vmatpush1.bf16.msra.mxu0 0
        %1057 = vmatprep.subr.bf16.mxu0 0
        %1058 = vmatpush1.bf16.msra.mxu0 0
        %1059 = vmatprep.subr.bf16.mxu0 0
        %1060 = vmatpush1.bf16.msra.mxu0 0
        %1061 = vmatprep.subr.bf16.mxu0 0
        %1062 = vmatpush1.bf16.msra.mxu0 0
        %1063 = vmatprep.subr.bf16.mxu0 0
        %1064 = vmatpush1.bf16.msra.mxu0 0
        %1065 = vmatprep.subr.bf16.mxu0 0
        %1066 = vmatpush1.bf16.msra.mxu0 0
        %1067 = vmatprep.subr.bf16.mxu0 0
        %1068 = vmatpush1.bf16.msra.mxu0 0
        %1069 = vmatprep.subr.bf16.mxu0 0
        %1070 = vmatpush1.bf16.msra.mxu0 0
        %1071 = vmatprep.subr.bf16.mxu0 0
        %1072 = vmatpush1.bf16.msra.mxu0 0
        %1073 = vmatprep.subr.bf16.mxu0 0
        %1074 = vmatpush1.bf16.msra.mxu0 0
        %1075 = vmatprep.subr.bf16.mxu0 0
        %1076 = vmatpush1.bf16.msra.mxu0 0
        %1077 = vmatprep.subr.bf16.mxu0 0
        %1078 = vmatpush1.bf16.msra.mxu0 0
        %1079 = vmatprep.subr.bf16.mxu0 0
        %1080 = vmatpush1.bf16.msra.mxu0 0
        %1081 = vmatprep.subr.bf16.mxu0 0
        %1082 = vmatpush1.bf16.msra.mxu0 0
        %1083 = vmatprep.mubr.bf16.mxu0 0
        %1084 = vmatmul.mubr.bf16.gmra.mrb[0].mxu0 %v1049
        %v1085 = vpop.f32.mrb[0].mxu0
        %v1086 = vadd.f32 0.0, %v1085
        %v1087 = vpop.f32.mrb[0].mxu0
        %v1088 = vadd.f32 0.0, %v1087
        %v1089 = vpop.f32.mrb[0].mxu0
        %v1090 = vpop.f32.mrb[0].mxu0
        %1091 = vdwg.mxu0
        %v1092 = vadd.f32 %v1033, %v1086
        %v1093 = vadd.f32 %v1034, %v1088
        %s1094 = scalar_lea.vmem %s7, 24
        %v1095 = vld [vmem:[%s1094] sm:$0xf]
        %1096 = vrot.lane.b32.xlu0 %v750, 96
        %v1097 = vpop.permute.xlu0 %1096
        %1098 = vrot.lane.b32.xlu0 %v751, 96
        %v1099 = vpop.permute.xlu0 %1098
        %1100 = vrot.lane.b32.xlu0 %v753, 96
        %v1101 = vpop.permute.xlu0 %1100
        %vm1102 = vcmask 785408
        %v1103 = vsel %vm1102, %v1097, %v1099
        %v1104 = vsel %vm1102, %v1099, %v1101
        %v1108 = vsel %vm634, %v1095, 0
        %1110 = vmatprep.subr.bf16.mxu0 %v1104
        %1111 = vmatpush1.bf16.msra.mxu0 %v1103
        %1112 = vmatprep.subr.bf16.mxu0 0
        %1113 = vmatpush1.bf16.msra.mxu0 0
        %1114 = vmatprep.subr.bf16.mxu0 0
        %1115 = vmatpush1.bf16.msra.mxu0 0
        %1116 = vmatprep.subr.bf16.mxu0 0
        %1117 = vmatpush1.bf16.msra.mxu0 0
        %1118 = vmatprep.subr.bf16.mxu0 0
        %1119 = vmatpush1.bf16.msra.mxu0 0
        %1120 = vmatprep.subr.bf16.mxu0 0
        %1121 = vmatpush1.bf16.msra.mxu0 0
        %1122 = vmatprep.subr.bf16.mxu0 0
        %1123 = vmatpush1.bf16.msra.mxu0 0
        %1124 = vmatprep.subr.bf16.mxu0 0
        %1125 = vmatpush1.bf16.msra.mxu0 0
        %1126 = vmatprep.subr.bf16.mxu0 0
        %1127 = vmatpush1.bf16.msra.mxu0 0
        %1128 = vmatprep.subr.bf16.mxu0 0
        %1129 = vmatpush1.bf16.msra.mxu0 0
        %1130 = vmatprep.subr.bf16.mxu0 0
        %1131 = vmatpush1.bf16.msra.mxu0 0
        %1132 = vmatprep.subr.bf16.mxu0 0
        %1133 = vmatpush1.bf16.msra.mxu0 0
        %1134 = vmatprep.subr.bf16.mxu0 0
        %1135 = vmatpush1.bf16.msra.mxu0 0
        %1136 = vmatprep.subr.bf16.mxu0 0
        %1137 = vmatpush1.bf16.msra.mxu0 0
        %1138 = vmatprep.subr.bf16.mxu0 0
        %1139 = vmatpush1.bf16.msra.mxu0 0
        %1140 = vmatprep.subr.bf16.mxu0 0
        %1141 = vmatpush1.bf16.msra.mxu0 0
        %1142 = vmatprep.mubr.bf16.mxu0 0
        %1143 = vmatmul.mubr.bf16.gmra.mrb[0].mxu0 %v1108
        %v1144 = vpop.f32.mrb[0].mxu0
        %v1145 = vadd.f32 0.0, %v1144
        %v1146 = vpop.f32.mrb[0].mxu0
        %v1147 = vadd.f32 0.0, %v1146
        %v1148 = vpop.f32.mrb[0].mxu0
        %v1149 = vpop.f32.mrb[0].mxu0
        %1150 = vdwg.mxu0
        %v1151 = vadd.f32 %v1092, %v1145
        %v1152 = vadd.f32 %v1093, %v1147
        %s1153 = scalar_lea.vmem %s7, 28
        %v1154 = vld [vmem:[%s1153] sm:$0xf]
        %1155 = vrot.lane.b32.xlu0 %v750, 95
        %v1156 = vpop.permute.xlu0 %1155
        %1157 = vrot.lane.b32.xlu0 %v751, 95
        %v1158 = vpop.permute.xlu0 %1157
        %1159 = vrot.lane.b32.xlu0 %v753, 95
        %v1160 = vpop.permute.xlu0 %1159
        %vm1161 = vcmask 777216
        %v1162 = vsel %vm1161, %v1156, %v1158
        %v1163 = vsel %vm1161, %v1158, %v1160
        %v1167 = vsel %vm634, %v1154, 0
        %1169 = vmatprep.subr.bf16.mxu0 %v1163
        %1170 = vmatpush1.bf16.msra.mxu0 %v1162
        %1171 = vmatprep.subr.bf16.mxu0 0
        %1172 = vmatpush1.bf16.msra.mxu0 0
        %1173 = vmatprep.subr.bf16.mxu0 0
        %1174 = vmatpush1.bf16.msra.mxu0 0
        %1175 = vmatprep.subr.bf16.mxu0 0
        %1176 = vmatpush1.bf16.msra.mxu0 0
        %1177 = vmatprep.subr.bf16.mxu0 0
        %1178 = vmatpush1.bf16.msra.mxu0 0
        %1179 = vmatprep.subr.bf16.mxu0 0
        %1180 = vmatpush1.bf16.msra.mxu0 0
        %1181 = vmatprep.subr.bf16.mxu0 0
        %1182 = vmatpush1.bf16.msra.mxu0 0
        %1183 = vmatprep.subr.bf16.mxu0 0
        %1184 = vmatpush1.bf16.msra.mxu0 0
        %1185 = vmatprep.subr.bf16.mxu0 0
        %1186 = vmatpush1.bf16.msra.mxu0 0
        %1187 = vmatprep.subr.bf16.mxu0 0
        %1188 = vmatpush1.bf16.msra.mxu0 0
        %1189 = vmatprep.subr.bf16.mxu0 0
        %1190 = vmatpush1.bf16.msra.mxu0 0
        %1191 = vmatprep.subr.bf16.mxu0 0
        %1192 = vmatpush1.bf16.msra.mxu0 0
        %1193 = vmatprep.subr.bf16.mxu0 0
        %1194 = vmatpush1.bf16.msra.mxu0 0
        %1195 = vmatprep.subr.bf16.mxu0 0
        %1196 = vmatpush1.bf16.msra.mxu0 0
        %1197 = vmatprep.subr.bf16.mxu0 0
        %1198 = vmatpush1.bf16.msra.mxu0 0
        %1199 = vmatprep.subr.bf16.mxu0 0
        %1200 = vmatpush1.bf16.msra.mxu0 0
        %1201 = vmatprep.mubr.bf16.mxu0 0
        %1202 = vmatmul.mubr.bf16.gmra.mrb[0].mxu0 %v1167
        %v1203 = vpop.f32.mrb[0].mxu0
        %v1204 = vadd.f32 0.0, %v1203
        %v1205 = vpop.f32.mrb[0].mxu0
        %v1206 = vadd.f32 0.0, %v1205
        %v1207 = vpop.f32.mrb[0].mxu0
        %v1208 = vpop.f32.mrb[0].mxu0
        %1209 = vdwg.mxu0
        %v1210 = vadd.f32 %v1151, %v1204
        %v1211 = vadd.f32 %v1152, %v1206
        %s1212 = scalar_lea.vmem %s7, 32
        %v1213 = vld [vmem:[%s1212] sm:$0xf]
        %1214 = vrot.lane.b32.xlu0 %v750, 94
        %v1215 = vpop.permute.xlu0 %1214
        %1216 = vrot.lane.b32.xlu0 %v751, 94
        %v1217 = vpop.permute.xlu0 %1216
        %1218 = vrot.lane.b32.xlu0 %v753, 94
        %v1219 = vpop.permute.xlu0 %1218
        %vm1220 = vcmask 769024
        %v1221 = vsel %vm1220, %v1215, %v1217
        %v1222 = vsel %vm1220, %v1217, %v1219
        %v1226 = vsel %vm634, %v1213, 0
        %1228 = vmatprep.subr.bf16.mxu0 %v1222
        %1229 = vmatpush1.bf16.msra.mxu0 %v1221
        %1230 = vmatprep.subr.bf16.mxu0 0
        %1231 = vmatpush1.bf16.msra.mxu0 0
        %1232 = vmatprep.subr.bf16.mxu0 0
        %1233 = vmatpush1.bf16.msra.mxu0 0
        %1234 = vmatprep.subr.bf16.mxu0 0
        %1235 = vmatpush1.bf16.msra.mxu0 0
        %1236 = vmatprep.subr.bf16.mxu0 0
        %1237 = vmatpush1.bf16.msra.mxu0 0
        %1238 = vmatprep.subr.bf16.mxu0 0
        %1239 = vmatpush1.bf16.msra.mxu0 0
        %1240 = vmatprep.subr.bf16.mxu0 0
        %1241 = vmatpush1.bf16.msra.mxu0 0
        %1242 = vmatprep.subr.bf16.mxu0 0
        %1243 = vmatpush1.bf16.msra.mxu0 0
        %1244 = vmatprep.subr.bf16.mxu0 0
        %1245 = vmatpush1.bf16.msra.mxu0 0
        %1246 = vmatprep.subr.bf16.mxu0 0
        %1247 = vmatpush1.bf16.msra.mxu0 0
        %1248 = vmatprep.subr.bf16.mxu0 0
        %1249 = vmatpush1.bf16.msra.mxu0 0
        %1250 = vmatprep.subr.bf16.mxu0 0
        %1251 = vmatpush1.bf16.msra.mxu0 0
        %1252 = vmatprep.subr.bf16.mxu0 0
        %1253 = vmatpush1.bf16.msra.mxu0 0
        %1254 = vmatprep.subr.bf16.mxu0 0
        %1255 = vmatpush1.bf16.msra.mxu0 0
        %1256 = vmatprep.subr.bf16.mxu0 0
        %1257 = vmatpush1.bf16.msra.mxu0 0
        %1258 = vmatprep.subr.bf16.mxu0 0
        %1259 = vmatpush1.bf16.msra.mxu0 0
        %1260 = vmatprep.mubr.bf16.mxu0 0
        %1261 = vmatmul.mubr.bf16.gmra.mrb[0].mxu0 %v1226
        %v1262 = vpop.f32.mrb[0].mxu0
        %v1263 = vadd.f32 0.0, %v1262
        %v1264 = vpop.f32.mrb[0].mxu0
        %v1265 = vadd.f32 0.0, %v1264
        %v1266 = vpop.f32.mrb[0].mxu0
        %v1267 = vpop.f32.mrb[0].mxu0
        %1268 = vdwg.mxu0
        %v1269 = vadd.f32 %v1210, %v1263
        %v1270 = vadd.f32 %v1211, %v1265
        %v1271 = vmul.f32 %v1269, %v721
        %v1272 = vmul.f32 %v1270, %v725
        %1273 = vst [vmem:[#allocation2 + $0x20] sm:$0xff] %v1271
        %1274 = vst [vmem:[#allocation2 + $0x28] sm:$0xff] %v1272
        %v1275 = vld [vmem:[#allocation2] sm:$0xff]
        %v1276 = vld [vmem:[#allocation2 + $0x8] sm:$0xff]
        %v1277 = vld [vmem:[#allocation2 + $0x10] sm:$0xff]
        %v1278 = vld [vmem:[#allocation2 + $0x18] sm:$0xff]
        %v1279 = vld [vmem:[#allocation2 + $0x20] sm:$0xff]
        %v1280 = vld [vmem:[#allocation2 + $0x28] sm:$0xff]
        %v1281 = vld [vmem:[%s8] sm:$0xff]
        %v1282 = vld [vmem:[%s8 + $0x8] sm:$0xff]
        %v1283 = vld [vmem:[%s8 + $0x10] sm:$0xff]
        %1285 = vset.pattern.permute.xlu0 0
        %1286 = vperm.xlu0 %1285, %v1281
        %v1287 = vpop.permute.xlu0 %1286
        %1290 = vset.pattern.permute.xlu0 0
        %1291 = vperm.xlu0 %1290, %v1282
        %v1292 = vpop.permute.xlu0 %1291
        %1295 = vset.pattern.permute.xlu0 0
        %1296 = vperm.xlu0 %1295, %v1283
        %v1297 = vpop.permute.xlu0 %1296
        %v1299 = vmul.f32 %v1275, %v1287
        %v1300 = vmul.f32 %v1276, %v1287
        %v1301 = vmul.f32 %v1277, %v1292
        %v1302 = vmul.f32 %v1278, %v1292
        %v1303 = vmul.f32 %v1279, %v1297
        %v1304 = vmul.f32 %v1280, %v1297
        %v1305 = vld [vmem:[%s9] sm:$0xff]
        %v1306 = vld [vmem:[%s9 + $0x8] sm:$0xff]
        %v1307 = vld [vmem:[%s9 + $0x10] sm:$0xff]
        %1309 = vset.pattern.permute.xlu0 0
        %1310 = vperm.xlu0 %1309, %v1305
        %v1311 = vpop.permute.xlu0 %1310
        %1314 = vset.pattern.permute.xlu0 0
        %1315 = vperm.xlu0 %1314, %v1306
        %v1316 = vpop.permute.xlu0 %1315
        %1319 = vset.pattern.permute.xlu0 0
        %1320 = vperm.xlu0 %1319, %v1307
        %v1321 = vpop.permute.xlu0 %1320
        %v1323 = vadd.f32 %v1299, %v1311
        %v1324 = vadd.f32 %v1300, %v1311
        %v1325 = vadd.f32 %v1301, %v1316
        %v1326 = vadd.f32 %v1302, %v1316
        %v1327 = vadd.f32 %v1303, %v1321
        %v1328 = vadd.f32 %v1304, %v1321
        %v1329 = vmax.f32 %v1323, 0.0
        %v1330 = vmax.f32 %v1324, 0.0
        %v1331 = vmax.f32 %v1325, 0.0
        %v1332 = vmax.f32 %v1326, 0.0
        %v1333 = vmax.f32 %v1327, 0.0
        %v1334 = vmax.f32 %v1328, 0.0
        %v1335 = vld [vmem:[%s10] sm:$0xf]
        %v1336 = vld [vmem:[%s10 + $0x4] sm:$0xf]
        %v1337 = vpack.c.bf16 %v1331, %v1329
        %v1338 = vpack.c.bf16 %v1332, %v1330
        %v1339 = vpack.c.bf16 %v1333, %v1333
        %v1340 = vpack.c.bf16 %v1334, %v1334
        %v1343 = vunpack.c.l.b16 %v1335
        %v1344 = vunpack.c.l.b16 %v1336
        %v1345 = vpack.c.b16 %v1344, %v1343
        %vm1346 = vcmask 195584
        %v1348 = vsel %vm1346, %v1345, 0
        %vm1350 = vcmask 1043456
        %v1352 = vsel %vm1350, %v1339, 0
        %v1355 = vsel %vm1350, %v1340, 0
        %1357 = vmatprep.subr.bf16.mxu0 %v1338
        %1358 = vmatpush1.bf16.msra.mxu0 %v1337
        %1359 = vmatprep.subr.bf16.mxu0 %v1355
        %1360 = vmatpush1.bf16.msra.mxu0 %v1352
        %1361 = vmatprep.subr.bf16.mxu0 0
        %1362 = vmatpush1.bf16.msra.mxu0 0
        %1363 = vmatprep.subr.bf16.mxu0 0
        %1364 = vmatpush1.bf16.msra.mxu0 0
        %1365 = vmatprep.subr.bf16.mxu0 0
        %1366 = vmatpush1.bf16.msra.mxu0 0
        %1367 = vmatprep.subr.bf16.mxu0 0
        %1368 = vmatpush1.bf16.msra.mxu0 0
        %1369 = vmatprep.subr.bf16.mxu0 0
        %1370 = vmatpush1.bf16.msra.mxu0 0
        %1371 = vmatprep.subr.bf16.mxu0 0
        %1372 = vmatpush1.bf16.msra.mxu0 0
        %1373 = vmatprep.subr.bf16.mxu0 0
        %1374 = vmatpush1.bf16.msra.mxu0 0
        %1375 = vmatprep.subr.bf16.mxu0 0
        %1376 = vmatpush1.bf16.msra.mxu0 0
        %1377 = vmatprep.subr.bf16.mxu0 0
        %1378 = vmatpush1.bf16.msra.mxu0 0
        %1379 = vmatprep.subr.bf16.mxu0 0
        %1380 = vmatpush1.bf16.msra.mxu0 0
        %1381 = vmatprep.subr.bf16.mxu0 0
        %1382 = vmatpush1.bf16.msra.mxu0 0
        %1383 = vmatprep.subr.bf16.mxu0 0
        %1384 = vmatpush1.bf16.msra.mxu0 0
        %1385 = vmatprep.subr.bf16.mxu0 0
        %1386 = vmatpush1.bf16.msra.mxu0 0
        %1387 = vmatprep.subr.bf16.mxu0 0
        %1388 = vmatpush1.bf16.msra.mxu0 0
        %1389 = vmatprep.mubr.bf16.mxu0 0
        %1390 = vmatmul.mubr.bf16.gmra.mrb[0].mxu0 %v1348
        %v1391 = vpop.f32.mrb[0].mxu0
        %v1392 = vadd.f32 0.0, %v1391
        %v1393 = vpop.f32.mrb[0].mxu0
        %v1394 = vadd.f32 0.0, %v1393
        %v1395 = vpop.f32.mrb[0].mxu0
        %v1396 = vadd.f32 0.0, %v1395
        %v1397 = vpop.f32.mrb[0].mxu0
        %v1398 = vadd.f32 0.0, %v1397
        %1399 = vdwg.mxu0
        %v1400 = vld [vmem:[%s11] sm:$0xff]
        %v1401 = vld [vmem:[%s11 + $0x8] sm:$0xff]
        %1403 = vset.pattern.permute.xlu0 0
        %1404 = vperm.xlu0 %1403, %v1400
        %v1405 = vpop.permute.xlu0 %1404
        %1408 = vset.pattern.permute.xlu0 0
        %1409 = vperm.xlu0 %1408, %v1401
        %v1410 = vpop.permute.xlu0 %1409
        %v1412 = vmul.f32 %v1392, %v1405
        %v1413 = vmul.f32 %v1394, %v1405
        %v1414 = vmul.f32 %v1396, %v1410
        %v1415 = vmul.f32 %v1398, %v1410
        %v1416 = vld [vmem:[%s12] sm:$0xff]
        %v1417 = vld [vmem:[%s12 + $0x8] sm:$0xff]
        %1419 = vset.pattern.permute.xlu0 0
        %1420 = vperm.xlu0 %1419, %v1416
        %v1421 = vpop.permute.xlu0 %1420
        %1424 = vset.pattern.permute.xlu0 0
        %1425 = vperm.xlu0 %1424, %v1417
        %v1426 = vpop.permute.xlu0 %1425
        %v1428 = vadd.f32 %v1412, %v1421
        %v1429 = vadd.f32 %v1413, %v1421
        %v1430 = vadd.f32 %v1414, %v1426
        %v1431 = vadd.f32 %v1415, %v1426
        %v1432 = vmax.f32 %v1428, 0.0
        %v1433 = vmax.f32 %v1429, 0.0
        %v1434 = vmax.f32 %v1430, 0.0
        %v1435 = vmax.f32 %v1431, 0.0
        %v1436 = vmul.f32 %v1432, %v721
        %v1437 = vmul.f32 %v1433, %v725
        %v1438 = vmul.f32 %v1434, %v721
        %v1439 = vmul.f32 %v1435, %v725
        %v1440 = vpack.c.bf16 %v1438, %v1436
        %v1441 = vpack.c.bf16 %v1439, %v1437
        %1444 = vrot.lane.b32.xlu0 %v1440, 17
        %v1445 = vpop.permute.xlu0 %1444
        %1446 = vrot.lane.b32.xlu0 %v1441, 17
        %v1447 = vpop.permute.xlu0 %1446
        %v1448 = vsel %vm740, %v1445, %v1447
        %1452 = vst.msk [vmem:[#allocation3] sm:$0xff] %vm745, %v1445
        %1453 = vst [vmem:[#allocation3 + $0x8] sm:$0xff] %v1448
        %1454 = vst.msk [vmem:[#allocation3 + $0x10] sm:$0xff] %vm748, %v1447
        %v1455 = vld [vmem:[#allocation3] sm:$0xff]
        %v1456 = vld [vmem:[#allocation3 + $0x8] sm:$0xff]
        %v1457 = vld [vmem:[%s13] sm:$0xf]
        %v1458 = vld [vmem:[#allocation3 + $0x10] sm:$0xff]
        %s1459 = scalar_lea.vmem %s13, 4
        %v1460 = vld [vmem:[%s1459] sm:$0xf]
        %1464 = vrot.lane.b32.xlu0 %v1455, 127
        %v1465 = vpop.permute.xlu0 %1464
        %1466 = vrot.lane.b32.xlu0 %v1456, 127
        %v1467 = vpop.permute.xlu0 %1466
        %1468 = vrot.lane.b32.xlu0 %v1458, 127
        %v1469 = vpop.permute.xlu0 %1468
        %v1470 = vsel %vm765, %v1465, %v1467
        %v1471 = vsel %vm765, %v1467, %v1469
        %v1475 = vsel %vm634, %v1460, 0
        %1477 = vmatprep.subr.bf16.mxu0 %v1471
        %1478 = vmatpush1.bf16.msra.mxu0 %v1470
        %1479 = vmatprep.subr.bf16.mxu0 0
        %1480 = vmatpush1.bf16.msra.mxu0 0
        %1481 = vmatprep.subr.bf16.mxu0 0
        %1482 = vmatpush1.bf16.msra.mxu0 0
        %1483 = vmatprep.subr.bf16.mxu0 0
        %1484 = vmatpush1.bf16.msra.mxu0 0
        %1485 = vmatprep.subr.bf16.mxu0 0
        %1486 = vmatpush1.bf16.msra.mxu0 0
        %1487 = vmatprep.subr.bf16.mxu0 0
        %1488 = vmatpush1.bf16.msra.mxu0 0
        %1489 = vmatprep.subr.bf16.mxu0 0
        %1490 = vmatpush1.bf16.msra.mxu0 0
        %1491 = vmatprep.subr.bf16.mxu0 0
        %1492 = vmatpush1.bf16.msra.mxu0 0
        %1493 = vmatprep.subr.bf16.mxu0 0
        %1494 = vmatpush1.bf16.msra.mxu0 0
        %1495 = vmatprep.subr.bf16.mxu0 0
        %1496 = vmatpush1.bf16.msra.mxu0 0
        %1497 = vmatprep.subr.bf16.mxu0 0
        %1498 = vmatpush1.bf16.msra.mxu0 0
        %1499 = vmatprep.subr.bf16.mxu0 0
        %1500 = vmatpush1.bf16.msra.mxu0 0
        %1501 = vmatprep.subr.bf16.mxu0 0
        %1502 = vmatpush1.bf16.msra.mxu0 0
        %1503 = vmatprep.subr.bf16.mxu0 0
        %1504 = vmatpush1.bf16.msra.mxu0 0
        %1505 = vmatprep.subr.bf16.mxu0 0
        %1506 = vmatpush1.bf16.msra.mxu0 0
        %1507 = vmatprep.subr.bf16.mxu0 0
        %1508 = vmatpush1.bf16.msra.mxu0 0
        %1509 = vmatprep.mubr.bf16.mxu0 0
        %1510 = vmatmul.mubr.bf16.gmra.mrb[0].mxu0 %v1475
        %v1511 = vpop.f32.mrb[0].mxu0
        %v1512 = vadd.f32 0.0, %v1511
        %v1513 = vpop.f32.mrb[0].mxu0
        %v1514 = vadd.f32 0.0, %v1513
        %v1515 = vpop.f32.mrb[0].mxu0
        %v1516 = vpop.f32.mrb[0].mxu0
        %1517 = vdwg.mxu0
        %v1519 = vsel %vm634, %v1457, 0
        %1521 = vmatprep.subr.bf16.mxu0 %v1456
        %1522 = vmatpush1.bf16.msra.mxu0 %v1455
        %1523 = vmatprep.subr.bf16.mxu0 0
        %1524 = vmatpush1.bf16.msra.mxu0 0
        %1525 = vmatprep.subr.bf16.mxu0 0
        %1526 = vmatpush1.bf16.msra.mxu0 0
        %1527 = vmatprep.subr.bf16.mxu0 0
        %1528 = vmatpush1.bf16.msra.mxu0 0
        %1529 = vmatprep.subr.bf16.mxu0 0
        %1530 = vmatpush1.bf16.msra.mxu0 0
        %1531 = vmatprep.subr.bf16.mxu0 0
        %1532 = vmatpush1.bf16.msra.mxu0 0
        %1533 = vmatprep.subr.bf16.mxu0 0
        %1534 = vmatpush1.bf16.msra.mxu0 0
        %1535 = vmatprep.subr.bf16.mxu0 0
        %1536 = vmatpush1.bf16.msra.mxu0 0
        %1537 = vmatprep.subr.bf16.mxu0 0
        %1538 = vmatpush1.bf16.msra.mxu0 0
        %1539 = vmatprep.subr.bf16.mxu0 0
        %1540 = vmatpush1.bf16.msra.mxu0 0
        %1541 = vmatprep.subr.bf16.mxu0 0
        %1542 = vmatpush1.bf16.msra.mxu0 0
        %1543 = vmatprep.subr.bf16.mxu0 0
        %1544 = vmatpush1.bf16.msra.mxu0 0
        %1545 = vmatprep.subr.bf16.mxu0 0
        %1546 = vmatpush1.bf16.msra.mxu0 0
        %1547 = vmatprep.subr.bf16.mxu0 0
        %1548 = vmatpush1.bf16.msra.mxu0 0
        %1549 = vmatprep.subr.bf16.mxu0 0
        %1550 = vmatpush1.bf16.msra.mxu0 0
        %1551 = vmatprep.subr.bf16.mxu0 0
        %1552 = vmatpush1.bf16.msra.mxu0 0
        %1553 = vmatprep.mubr.bf16.mxu0 0
        %1554 = vmatmul.mubr.bf16.gmra.mrb[0].mxu0 %v1519
        %v1555 = vpop.f32.mrb[0].mxu0
        %v1556 = vadd.f32 %v1512, %v1555
        %v1557 = vpop.f32.mrb[0].mxu0
        %v1558 = vadd.f32 %v1514, %v1557
        %v1559 = vpop.f32.mrb[0].mxu0
        %v1560 = vpop.f32.mrb[0].mxu0
        %1561 = vdwg.mxu0
        %s1562 = scalar_lea.vmem %s13, 8
        %v1563 = vld [vmem:[%s1562] sm:$0xf]
        %1564 = vrot.lane.b32.xlu0 %v1455, 126
        %v1565 = vpop.permute.xlu0 %1564
        %1566 = vrot.lane.b32.xlu0 %v1456, 126
        %v1567 = vpop.permute.xlu0 %1566
        %1568 = vrot.lane.b32.xlu0 %v1458, 126
        %v1569 = vpop.permute.xlu0 %1568
        %v1570 = vsel %vm866, %v1565, %v1567
        %v1571 = vsel %vm866, %v1567, %v1569
        %v1575 = vsel %vm634, %v1563, 0
        %1577 = vmatprep.subr.bf16.mxu0 %v1571
        %1578 = vmatpush1.bf16.msra.mxu0 %v1570
        %1579 = vmatprep.subr.bf16.mxu0 0
        %1580 = vmatpush1.bf16.msra.mxu0 0
        %1581 = vmatprep.subr.bf16.mxu0 0
        %1582 = vmatpush1.bf16.msra.mxu0 0
        %1583 = vmatprep.subr.bf16.mxu0 0
        %1584 = vmatpush1.bf16.msra.mxu0 0
        %1585 = vmatprep.subr.bf16.mxu0 0
        %1586 = vmatpush1.bf16.msra.mxu0 0
        %1587 = vmatprep.subr.bf16.mxu0 0
        %1588 = vmatpush1.bf16.msra.mxu0 0
        %1589 = vmatprep.subr.bf16.mxu0 0
        %1590 = vmatpush1.bf16.msra.mxu0 0
        %1591 = vmatprep.subr.bf16.mxu0 0
        %1592 = vmatpush1.bf16.msra.mxu0 0
        %1593 = vmatprep.subr.bf16.mxu0 0
        %1594 = vmatpush1.bf16.msra.mxu0 0
        %1595 = vmatprep.subr.bf16.mxu0 0
        %1596 = vmatpush1.bf16.msra.mxu0 0
        %1597 = vmatprep.subr.bf16.mxu0 0
        %1598 = vmatpush1.bf16.msra.mxu0 0
        %1599 = vmatprep.subr.bf16.mxu0 0
        %1600 = vmatpush1.bf16.msra.mxu0 0
        %1601 = vmatprep.subr.bf16.mxu0 0
        %1602 = vmatpush1.bf16.msra.mxu0 0
        %1603 = vmatprep.subr.bf16.mxu0 0
        %1604 = vmatpush1.bf16.msra.mxu0 0
        %1605 = vmatprep.subr.bf16.mxu0 0
        %1606 = vmatpush1.bf16.msra.mxu0 0
        %1607 = vmatprep.subr.bf16.mxu0 0
        %1608 = vmatpush1.bf16.msra.mxu0 0
        %1609 = vmatprep.mubr.bf16.mxu0 0
        %1610 = vmatmul.mubr.bf16.gmra.mrb[0].mxu0 %v1575
        %v1611 = vpop.f32.mrb[0].mxu0
        %v1612 = vadd.f32 0.0, %v1611
        %v1613 = vpop.f32.mrb[0].mxu0
        %v1614 = vadd.f32 0.0, %v1613
        %v1615 = vpop.f32.mrb[0].mxu0
        %v1616 = vpop.f32.mrb[0].mxu0
        %1617 = vdwg.mxu0
        %v1618 = vadd.f32 %v1556, %v1612
        %v1619 = vadd.f32 %v1558, %v1614
        %s1620 = scalar_lea.vmem %s13, 12
        %v1621 = vld [vmem:[%s1620] sm:$0xf]
        %1622 = vrot.lane.b32.xlu0 %v1455, 112
        %v1623 = vpop.permute.xlu0 %1622
        %1624 = vrot.lane.b32.xlu0 %v1456, 112
        %v1625 = vpop.permute.xlu0 %1624
        %1626 = vrot.lane.b32.xlu0 %v1458, 112
        %v1627 = vpop.permute.xlu0 %1626
        %v1628 = vsel %vm925, %v1623, %v1625
        %v1629 = vsel %vm925, %v1625, %v1627
        %v1633 = vsel %vm634, %v1621, 0
        %1635 = vmatprep.subr.bf16.mxu0 %v1629
        %1636 = vmatpush1.bf16.msra.mxu0 %v1628
        %1637 = vmatprep.subr.bf16.mxu0 0
        %1638 = vmatpush1.bf16.msra.mxu0 0
        %1639 = vmatprep.subr.bf16.mxu0 0
        %1640 = vmatpush1.bf16.msra.mxu0 0
        %1641 = vmatprep.subr.bf16.mxu0 0
        %1642 = vmatpush1.bf16.msra.mxu0 0
        %1643 = vmatprep.subr.bf16.mxu0 0
        %1644 = vmatpush1.bf16.msra.mxu0 0
        %1645 = vmatprep.subr.bf16.mxu0 0
        %1646 = vmatpush1.bf16.msra.mxu0 0
        %1647 = vmatprep.subr.bf16.mxu0 0
        %1648 = vmatpush1.bf16.msra.mxu0 0
        %1649 = vmatprep.subr.bf16.mxu0 0
        %1650 = vmatpush1.bf16.msra.mxu0 0
        %1651 = vmatprep.subr.bf16.mxu0 0
        %1652 = vmatpush1.bf16.msra.mxu0 0
        %1653 = vmatprep.subr.bf16.mxu0 0
        %1654 = vmatpush1.bf16.msra.mxu0 0
        %1655 = vmatprep.subr.bf16.mxu0 0
        %1656 = vmatpush1.bf16.msra.mxu0 0
        %1657 = vmatprep.subr.bf16.mxu0 0
        %1658 = vmatpush1.bf16.msra.mxu0 0
        %1659 = vmatprep.subr.bf16.mxu0 0
        %1660 = vmatpush1.bf16.msra.mxu0 0
        %1661 = vmatprep.subr.bf16.mxu0 0
        %1662 = vmatpush1.bf16.msra.mxu0 0
        %1663 = vmatprep.subr.bf16.mxu0 0
        %1664 = vmatpush1.bf16.msra.mxu0 0
        %1665 = vmatprep.subr.bf16.mxu0 0
        %1666 = vmatpush1.bf16.msra.mxu0 0
        %1667 = vmatprep.mubr.bf16.mxu0 0
        %1668 = vmatmul.mubr.bf16.gmra.mrb[0].mxu0 %v1633
        %v1669 = vpop.f32.mrb[0].mxu0
        %v1670 = vadd.f32 0.0, %v1669
        %v1671 = vpop.f32.mrb[0].mxu0
        %v1672 = vadd.f32 0.0, %v1671
        %v1673 = vpop.f32.mrb[0].mxu0
        %v1674 = vpop.f32.mrb[0].mxu0
        %1675 = vdwg.mxu0
        %v1676 = vadd.f32 %v1618, %v1670
        %v1677 = vadd.f32 %v1619, %v1672
        %s1678 = scalar_lea.vmem %s13, 16
        %v1679 = vld [vmem:[%s1678] sm:$0xf]
        %1680 = vrot.lane.b32.xlu0 %v1455, 111
        %v1681 = vpop.permute.xlu0 %1680
        %1682 = vrot.lane.b32.xlu0 %v1456, 111
        %v1683 = vpop.permute.xlu0 %1682
        %1684 = vrot.lane.b32.xlu0 %v1458, 111
        %v1685 = vpop.permute.xlu0 %1684
        %v1686 = vsel %vm984, %v1681, %v1683
        %v1687 = vsel %vm984, %v1683, %v1685
        %v1691 = vsel %vm634, %v1679, 0
        %1693 = vmatprep.subr.bf16.mxu0 %v1687
        %1694 = vmatpush1.bf16.msra.mxu0 %v1686
        %1695 = vmatprep.subr.bf16.mxu0 0
        %1696 = vmatpush1.bf16.msra.mxu0 0
        %1697 = vmatprep.subr.bf16.mxu0 0
        %1698 = vmatpush1.bf16.msra.mxu0 0
        %1699 = vmatprep.subr.bf16.mxu0 0
        %1700 = vmatpush1.bf16.msra.mxu0 0
        %1701 = vmatprep.subr.bf16.mxu0 0
        %1702 = vmatpush1.bf16.msra.mxu0 0
        %1703 = vmatprep.subr.bf16.mxu0 0
        %1704 = vmatpush1.bf16.msra.mxu0 0
        %1705 = vmatprep.subr.bf16.mxu0 0
        %1706 = vmatpush1.bf16.msra.mxu0 0
        %1707 = vmatprep.subr.bf16.mxu0 0
        %1708 = vmatpush1.bf16.msra.mxu0 0
        %1709 = vmatprep.subr.bf16.mxu0 0
        %1710 = vmatpush1.bf16.msra.mxu0 0
        %1711 = vmatprep.subr.bf16.mxu0 0
        %1712 = vmatpush1.bf16.msra.mxu0 0
        %1713 = vmatprep.subr.bf16.mxu0 0
        %1714 = vmatpush1.bf16.msra.mxu0 0
        %1715 = vmatprep.subr.bf16.mxu0 0
        %1716 = vmatpush1.bf16.msra.mxu0 0
        %1717 = vmatprep.subr.bf16.mxu0 0
        %1718 = vmatpush1.bf16.msra.mxu0 0
        %1719 = vmatprep.subr.bf16.mxu0 0
        %1720 = vmatpush1.bf16.msra.mxu0 0
        %1721 = vmatprep.subr.bf16.mxu0 0
        %1722 = vmatpush1.bf16.msra.mxu0 0
        %1723 = vmatprep.subr.bf16.mxu0 0
        %1724 = vmatpush1.bf16.msra.mxu0 0
        %1725 = vmatprep.mubr.bf16.mxu0 0
        %1726 = vmatmul.mubr.bf16.gmra.mrb[0].mxu0 %v1691
        %v1727 = vpop.f32.mrb[0].mxu0
        %v1728 = vadd.f32 0.0, %v1727
        %v1729 = vpop.f32.mrb[0].mxu0
        %v1730 = vadd.f32 0.0, %v1729
        %v1731 = vpop.f32.mrb[0].mxu0
        %v1732 = vpop.f32.mrb[0].mxu0
        %1733 = vdwg.mxu0
        %v1734 = vadd.f32 %v1676, %v1728
        %v1735 = vadd.f32 %v1677, %v1730
        %s1736 = scalar_lea.vmem %s13, 20
        %v1737 = vld [vmem:[%s1736] sm:$0xf]
        %1738 = vrot.lane.b32.xlu0 %v1455, 110
        %v1739 = vpop.permute.xlu0 %1738
        %1740 = vrot.lane.b32.xlu0 %v1456, 110
        %v1741 = vpop.permute.xlu0 %1740
        %1742 = vrot.lane.b32.xlu0 %v1458, 110
        %v1743 = vpop.permute.xlu0 %1742
        %v1744 = vsel %vm1043, %v1739, %v1741
        %v1745 = vsel %vm1043, %v1741, %v1743
        %v1749 = vsel %vm634, %v1737, 0
        %1751 = vmatprep.subr.bf16.mxu0 %v1745
        %1752 = vmatpush1.bf16.msra.mxu0 %v1744
        %1753 = vmatprep.subr.bf16.mxu0 0
        %1754 = vmatpush1.bf16.msra.mxu0 0
        %1755 = vmatprep.subr.bf16.mxu0 0
        %1756 = vmatpush1.bf16.msra.mxu0 0
        %1757 = vmatprep.subr.bf16.mxu0 0
        %1758 = vmatpush1.bf16.msra.mxu0 0
        %1759 = vmatprep.subr.bf16.mxu0 0
        %1760 = vmatpush1.bf16.msra.mxu0 0
        %1761 = vmatprep.subr.bf16.mxu0 0
        %1762 = vmatpush1.bf16.msra.mxu0 0
        %1763 = vmatprep.subr.bf16.mxu0 0
        %1764 = vmatpush1.bf16.msra.mxu0 0
        %1765 = vmatprep.subr.bf16.mxu0 0
        %1766 = vmatpush1.bf16.msra.mxu0 0
        %1767 = vmatprep.subr.bf16.mxu0 0
        %1768 = vmatpush1.bf16.msra.mxu0 0
        %1769 = vmatprep.subr.bf16.mxu0 0
        %1770 = vmatpush1.bf16.msra.mxu0 0
        %1771 = vmatprep.subr.bf16.mxu0 0
        %1772 = vmatpush1.bf16.msra.mxu0 0
        %1773 = vmatprep.subr.bf16.mxu0 0
        %1774 = vmatpush1.bf16.msra.mxu0 0
        %1775 = vmatprep.subr.bf16.mxu0 0
        %1776 = vmatpush1.bf16.msra.mxu0 0
        %1777 = vmatprep.subr.bf16.mxu0 0
        %1778 = vmatpush1.bf16.msra.mxu0 0
        %1779 = vmatprep.subr.bf16.mxu0 0
        %1780 = vmatpush1.bf16.msra.mxu0 0
        %1781 = vmatprep.subr.bf16.mxu0 0
        %1782 = vmatpush1.bf16.msra.mxu0 0
        %1783 = vmatprep.mubr.bf16.mxu0 0
        %1784 = vmatmul.mubr.bf16.gmra.mrb[0].mxu0 %v1749
        %v1785 = vpop.f32.mrb[0].mxu0
        %v1786 = vadd.f32 0.0, %v1785
        %v1787 = vpop.f32.mrb[0].mxu0
        %v1788 = vadd.f32 0.0, %v1787
        %v1789 = vpop.f32.mrb[0].mxu0
        %v1790 = vpop.f32.mrb[0].mxu0
        %1791 = vdwg.mxu0
        %v1792 = vadd.f32 %v1734, %v1786
        %v1793 = vadd.f32 %v1735, %v1788
        %s1794 = scalar_lea.vmem %s13, 24
        %v1795 = vld [vmem:[%s1794] sm:$0xf]
        %1796 = vrot.lane.b32.xlu0 %v1455, 96
        %v1797 = vpop.permute.xlu0 %1796
        %1798 = vrot.lane.b32.xlu0 %v1456, 96
        %v1799 = vpop.permute.xlu0 %1798
        %1800 = vrot.lane.b32.xlu0 %v1458, 96
        %v1801 = vpop.permute.xlu0 %1800
        %v1802 = vsel %vm1102, %v1797, %v1799
        %v1803 = vsel %vm1102, %v1799, %v1801
        %v1807 = vsel %vm634, %v1795, 0
        %1809 = vmatprep.subr.bf16.mxu0 %v1803
        %1810 = vmatpush1.bf16.msra.mxu0 %v1802
        %1811 = vmatprep.subr.bf16.mxu0 0
        %1812 = vmatpush1.bf16.msra.mxu0 0
        %1813 = vmatprep.subr.bf16.mxu0 0
        %1814 = vmatpush1.bf16.msra.mxu0 0
        %1815 = vmatprep.subr.bf16.mxu0 0
        %1816 = vmatpush1.bf16.msra.mxu0 0
        %1817 = vmatprep.subr.bf16.mxu0 0
        %1818 = vmatpush1.bf16.msra.mxu0 0
        %1819 = vmatprep.subr.bf16.mxu0 0
        %1820 = vmatpush1.bf16.msra.mxu0 0
        %1821 = vmatprep.subr.bf16.mxu0 0
        %1822 = vmatpush1.bf16.msra.mxu0 0
        %1823 = vmatprep.subr.bf16.mxu0 0
        %1824 = vmatpush1.bf16.msra.mxu0 0
        %1825 = vmatprep.subr.bf16.mxu0 0
        %1826 = vmatpush1.bf16.msra.mxu0 0
        %1827 = vmatprep.subr.bf16.mxu0 0
        %1828 = vmatpush1.bf16.msra.mxu0 0
        %1829 = vmatprep.subr.bf16.mxu0 0
        %1830 = vmatpush1.bf16.msra.mxu0 0
        %1831 = vmatprep.subr.bf16.mxu0 0
        %1832 = vmatpush1.bf16.msra.mxu0 0
        %1833 = vmatprep.subr.bf16.mxu0 0
        %1834 = vmatpush1.bf16.msra.mxu0 0
        %1835 = vmatprep.subr.bf16.mxu0 0
        %1836 = vmatpush1.bf16.msra.mxu0 0
        %1837 = vmatprep.subr.bf16.mxu0 0
        %1838 = vmatpush1.bf16.msra.mxu0 0
        %1839 = vmatprep.subr.bf16.mxu0 0
        %1840 = vmatpush1.bf16.msra.mxu0 0
        %1841 = vmatprep.mubr.bf16.mxu0 0
        %1842 = vmatmul.mubr.bf16.gmra.mrb[0].mxu0 %v1807
        %v1843 = vpop.f32.mrb[0].mxu0
        %v1844 = vadd.f32 0.0, %v1843
        %v1845 = vpop.f32.mrb[0].mxu0
        %v1846 = vadd.f32 0.0, %v1845
        %v1847 = vpop.f32.mrb[0].mxu0
        %v1848 = vpop.f32.mrb[0].mxu0
        %1849 = vdwg.mxu0
        %v1850 = vadd.f32 %v1792, %v1844
        %v1851 = vadd.f32 %v1793, %v1846
        %s1852 = scalar_lea.vmem %s13, 28
        %v1853 = vld [vmem:[%s1852] sm:$0xf]
        %1854 = vrot.lane.b32.xlu0 %v1455, 95
        %v1855 = vpop.permute.xlu0 %1854
        %1856 = vrot.lane.b32.xlu0 %v1456, 95
        %v1857 = vpop.permute.xlu0 %1856
        %1858 = vrot.lane.b32.xlu0 %v1458, 95
        %v1859 = vpop.permute.xlu0 %1858
        %v1860 = vsel %vm1161, %v1855, %v1857
        %v1861 = vsel %vm1161, %v1857, %v1859
        %v1865 = vsel %vm634, %v1853, 0
        %1867 = vmatprep.subr.bf16.mxu0 %v1861
        %1868 = vmatpush1.bf16.msra.mxu0 %v1860
        %1869 = vmatprep.subr.bf16.mxu0 0
        %1870 = vmatpush1.bf16.msra.mxu0 0
        %1871 = vmatprep.subr.bf16.mxu0 0
        %1872 = vmatpush1.bf16.msra.mxu0 0
        %1873 = vmatprep.subr.bf16.mxu0 0
        %1874 = vmatpush1.bf16.msra.mxu0 0
        %1875 = vmatprep.subr.bf16.mxu0 0
        %1876 = vmatpush1.bf16.msra.mxu0 0
        %1877 = vmatprep.subr.bf16.mxu0 0
        %1878 = vmatpush1.bf16.msra.mxu0 0
        %1879 = vmatprep.subr.bf16.mxu0 0
        %1880 = vmatpush1.bf16.msra.mxu0 0
        %1881 = vmatprep.subr.bf16.mxu0 0
        %1882 = vmatpush1.bf16.msra.mxu0 0
        %1883 = vmatprep.subr.bf16.mxu0 0
        %1884 = vmatpush1.bf16.msra.mxu0 0
        %1885 = vmatprep.subr.bf16.mxu0 0
        %1886 = vmatpush1.bf16.msra.mxu0 0
        %1887 = vmatprep.subr.bf16.mxu0 0
        %1888 = vmatpush1.bf16.msra.mxu0 0
        %1889 = vmatprep.subr.bf16.mxu0 0
        %1890 = vmatpush1.bf16.msra.mxu0 0
        %1891 = vmatprep.subr.bf16.mxu0 0
        %1892 = vmatpush1.bf16.msra.mxu0 0
        %1893 = vmatprep.subr.bf16.mxu0 0
        %1894 = vmatpush1.bf16.msra.mxu0 0
        %1895 = vmatprep.subr.bf16.mxu0 0
        %1896 = vmatpush1.bf16.msra.mxu0 0
        %1897 = vmatprep.subr.bf16.mxu0 0
        %1898 = vmatpush1.bf16.msra.mxu0 0
        %1899 = vmatprep.mubr.bf16.mxu0 0
        %1900 = vmatmul.mubr.bf16.gmra.mrb[0].mxu0 %v1865
        %v1901 = vpop.f32.mrb[0].mxu0
        %v1902 = vadd.f32 0.0, %v1901
        %v1903 = vpop.f32.mrb[0].mxu0
        %v1904 = vadd.f32 0.0, %v1903
        %v1905 = vpop.f32.mrb[0].mxu0
        %v1906 = vpop.f32.mrb[0].mxu0
        %1907 = vdwg.mxu0
        %v1908 = vadd.f32 %v1850, %v1902
        %v1909 = vadd.f32 %v1851, %v1904
        %s1910 = scalar_lea.vmem %s13, 32
        %v1911 = vld [vmem:[%s1910] sm:$0xf]
        %1912 = vrot.lane.b32.xlu0 %v1455, 94
        %v1913 = vpop.permute.xlu0 %1912
        %1914 = vrot.lane.b32.xlu0 %v1456, 94
        %v1915 = vpop.permute.xlu0 %1914
        %1916 = vrot.lane.b32.xlu0 %v1458, 94
        %v1917 = vpop.permute.xlu0 %1916
        %v1918 = vsel %vm1220, %v1913, %v1915
        %v1919 = vsel %vm1220, %v1915, %v1917
        %v1923 = vsel %vm634, %v1911, 0
        %1925 = vmatprep.subr.bf16.mxu0 %v1919
        %1926 = vmatpush1.bf16.msra.mxu0 %v1918
        %1927 = vmatprep.subr.bf16.mxu0 0
        %1928 = vmatpush1.bf16.msra.mxu0 0
        %1929 = vmatprep.subr.bf16.mxu0 0
        %1930 = vmatpush1.bf16.msra.mxu0 0
        %1931 = vmatprep.subr.bf16.mxu0 0
        %1932 = vmatpush1.bf16.msra.mxu0 0
        %1933 = vmatprep.subr.bf16.mxu0 0
        %1934 = vmatpush1.bf16.msra.mxu0 0
        %1935 = vmatprep.subr.bf16.mxu0 0
        %1936 = vmatpush1.bf16.msra.mxu0 0
        %1937 = vmatprep.subr.bf16.mxu0 0
        %1938 = vmatpush1.bf16.msra.mxu0 0
        %1939 = vmatprep.subr.bf16.mxu0 0
        %1940 = vmatpush1.bf16.msra.mxu0 0
        %1941 = vmatprep.subr.bf16.mxu0 0
        %1942 = vmatpush1.bf16.msra.mxu0 0
        %1943 = vmatprep.subr.bf16.mxu0 0
        %1944 = vmatpush1.bf16.msra.mxu0 0
        %1945 = vmatprep.subr.bf16.mxu0 0
        %1946 = vmatpush1.bf16.msra.mxu0 0
        %1947 = vmatprep.subr.bf16.mxu0 0
        %1948 = vmatpush1.bf16.msra.mxu0 0
        %1949 = vmatprep.subr.bf16.mxu0 0
        %1950 = vmatpush1.bf16.msra.mxu0 0
        %1951 = vmatprep.subr.bf16.mxu0 0
        %1952 = vmatpush1.bf16.msra.mxu0 0
        %1953 = vmatprep.subr.bf16.mxu0 0
        %1954 = vmatpush1.bf16.msra.mxu0 0
        %1955 = vmatprep.subr.bf16.mxu0 0
        %1956 = vmatpush1.bf16.msra.mxu0 0
        %1957 = vmatprep.mubr.bf16.mxu0 0
        %1958 = vmatmul.mubr.bf16.gmra.mrb[0].mxu0 %v1923
        %v1959 = vpop.f32.mrb[0].mxu0
        %v1960 = vadd.f32 0.0, %v1959
        %v1961 = vpop.f32.mrb[0].mxu0
        %v1962 = vadd.f32 0.0, %v1961
        %v1963 = vpop.f32.mrb[0].mxu0
        %v1964 = vpop.f32.mrb[0].mxu0
        %1965 = vdwg.mxu0
        %v1966 = vadd.f32 %v1908, %v1960
        %v1967 = vadd.f32 %v1909, %v1962
        %v1968 = vmul.f32 %v1966, %v721
        %v1969 = vmul.f32 %v1967, %v725
        %1970 = vst [vmem:[#allocation2 + $0x30] sm:$0xff] %v1968
        %1971 = vst [vmem:[#allocation2 + $0x38] sm:$0xff] %v1969
        %v1972 = vld [vmem:[#allocation2] sm:$0xff]
        %v1973 = vld [vmem:[#allocation2 + $0x8] sm:$0xff]
        %v1974 = vld [vmem:[#allocation2 + $0x10] sm:$0xff]
        %v1975 = vld [vmem:[#allocation2 + $0x18] sm:$0xff]
        %v1976 = vld [vmem:[#allocation2 + $0x20] sm:$0xff]
        %v1977 = vld [vmem:[#allocation2 + $0x28] sm:$0xff]
        %v1978 = vld [vmem:[#allocation2 + $0x30] sm:$0xff]
        %v1979 = vld [vmem:[#allocation2 + $0x38] sm:$0xff]
        %v1980 = vld [vmem:[%s14] sm:$0xff]
        %v1981 = vld [vmem:[%s14 + $0x8] sm:$0xff]
        %v1982 = vld [vmem:[%s14 + $0x10] sm:$0xff]
        %v1983 = vld [vmem:[%s14 + $0x18] sm:$0xff]
        %1985 = vset.pattern.permute.xlu0 0
        %1986 = vperm.xlu0 %1985, %v1980
        %v1987 = vpop.permute.xlu0 %1986
        %1990 = vset.pattern.permute.xlu0 0
        %1991 = vperm.xlu0 %1990, %v1981
        %v1992 = vpop.permute.xlu0 %1991
        %1995 = vset.pattern.permute.xlu0 0
        %1996 = vperm.xlu0 %1995, %v1982
        %v1997 = vpop.permute.xlu0 %1996
        %2000 = vset.pattern.permute.xlu0 0
        %2001 = vperm.xlu0 %2000, %v1983
        %v2002 = vpop.permute.xlu0 %2001
        %v2004 = vmul.f32 %v1972, %v1987
        %v2005 = vmul.f32 %v1973, %v1987
        %v2006 = vmul.f32 %v1974, %v1992
        %v2007 = vmul.f32 %v1975, %v1992
        %v2008 = vmul.f32 %v1976, %v1997
        %v2009 = vmul.f32 %v1977, %v1997
        %v2010 = vmul.f32 %v1978, %v2002
        %v2011 = vmul.f32 %v1979, %v2002
        %v2012 = vld [vmem:[%s15] sm:$0xff]
        %v2013 = vld [vmem:[%s15 + $0x8] sm:$0xff]
        %v2014 = vld [vmem:[%s15 + $0x10] sm:$0xff]
        %v2015 = vld [vmem:[%s15 + $0x18] sm:$0xff]
        %2017 = vset.pattern.permute.xlu0 0
        %2018 = vperm.xlu0 %2017, %v2012
        %v2019 = vpop.permute.xlu0 %2018
        %2022 = vset.pattern.permute.xlu0 0
        %2023 = vperm.xlu0 %2022, %v2013
        %v2024 = vpop.permute.xlu0 %2023
        %2027 = vset.pattern.permute.xlu0 0
        %2028 = vperm.xlu0 %2027, %v2014
        %v2029 = vpop.permute.xlu0 %2028
        %2032 = vset.pattern.permute.xlu0 0
        %2033 = vperm.xlu0 %2032, %v2015
        %v2034 = vpop.permute.xlu0 %2033
        %v2036 = vadd.f32 %v2004, %v2019
        %v2037 = vadd.f32 %v2005, %v2019
        %v2038 = vadd.f32 %v2006, %v2024
        %v2039 = vadd.f32 %v2007, %v2024
        %v2040 = vadd.f32 %v2008, %v2029
        %v2041 = vadd.f32 %v2009, %v2029
        %v2042 = vadd.f32 %v2010, %v2034
        %v2043 = vadd.f32 %v2011, %v2034
        %v2044 = vmax.f32 %v2036, 0.0
        %v2045 = vmax.f32 %v2037, 0.0
        %v2046 = vmax.f32 %v2038, 0.0
        %v2047 = vmax.f32 %v2039, 0.0
        %v2048 = vmax.f32 %v2040, 0.0
        %v2049 = vmax.f32 %v2041, 0.0
        %v2050 = vmax.f32 %v2042, 0.0
        %v2051 = vmax.f32 %v2043, 0.0
        %v2052 = vld [vmem:[%s16] sm:$0xf]
        %v2053 = vld [vmem:[%s16 + $0x4] sm:$0xf]
        %v2054 = vpack.c.bf16 %v2046, %v2044
        %v2055 = vpack.c.bf16 %v2047, %v2045
        %v2056 = vpack.c.bf16 %v2050, %v2048
        %v2057 = vpack.c.bf16 %v2051, %v2049
        %v2060 = vunpack.c.l.b16 %v2052
        %v2061 = vunpack.c.l.b16 %v2053
        %v2062 = vpack.c.b16 %v2061, %v2060
        %vm2063 = vcmask 261120
        %v2065 = vsel %vm2063, %v2062, 0
        %2067 = vmatprep.subr.bf16.mxu0 %v2055
        %2068 = vmatpush1.bf16.msra.mxu0 %v2054
        %2069 = vmatprep.subr.bf16.mxu0 %v2057
        %2070 = vmatpush1.bf16.msra.mxu0 %v2056
        %2071 = vmatprep.subr.bf16.mxu0 0
        %2072 = vmatpush1.bf16.msra.mxu0 0
        %2073 = vmatprep.subr.bf16.mxu0 0
        %2074 = vmatpush1.bf16.msra.mxu0 0
        %2075 = vmatprep.subr.bf16.mxu0 0
        %2076 = vmatpush1.bf16.msra.mxu0 0
        %2077 = vmatprep.subr.bf16.mxu0 0
        %2078 = vmatpush1.bf16.msra.mxu0 0
        %2079 = vmatprep.subr.bf16.mxu0 0
        %2080 = vmatpush1.bf16.msra.mxu0 0
        %2081 = vmatprep.subr.bf16.mxu0 0
        %2082 = vmatpush1.bf16.msra.mxu0 0
        %2083 = vmatprep.subr.bf16.mxu0 0
        %2084 = vmatpush1.bf16.msra.mxu0 0
        %2085 = vmatprep.subr.bf16.mxu0 0
        %2086 = vmatpush1.bf16.msra.mxu0 0
        %2087 = vmatprep.subr.bf16.mxu0 0
        %2088 = vmatpush1.bf16.msra.mxu0 0
        %2089 = vmatprep.subr.bf16.mxu0 0
        %2090 = vmatpush1.bf16.msra.mxu0 0
        %2091 = vmatprep.subr.bf16.mxu0 0
        %2092 = vmatpush1.bf16.msra.mxu0 0
        %2093 = vmatprep.subr.bf16.mxu0 0
        %2094 = vmatpush1.bf16.msra.mxu0 0
        %2095 = vmatprep.subr.bf16.mxu0 0
        %2096 = vmatpush1.bf16.msra.mxu0 0
        %2097 = vmatprep.subr.bf16.mxu0 0
        %2098 = vmatpush1.bf16.msra.mxu0 0
        %2099 = vmatprep.mubr.bf16.mxu0 0
        %2100 = vmatmul.mubr.bf16.gmra.mrb[0].mxu0 %v2065
        %v2101 = vpop.f32.mrb[0].mxu0
        %v2102 = vadd.f32 0.0, %v2101
        %v2103 = vpop.f32.mrb[0].mxu0
        %v2104 = vadd.f32 0.0, %v2103
        %v2105 = vpop.f32.mrb[0].mxu0
        %v2106 = vadd.f32 0.0, %v2105
        %v2107 = vpop.f32.mrb[0].mxu0
        %v2108 = vadd.f32 0.0, %v2107
        %2109 = vdwg.mxu0
        %2110 = vst [vmem:[%s568] sm:$0xff] %v2102
        %2111 = vst [vmem:[%s568 + $0x8] sm:$0xff] %v2104
        %2112 = vst [vmem:[%s568 + $0x10] sm:$0xff] %v2106
        %2113 = vst [vmem:[%s568 + $0x18] sm:$0xff] %v2108
        %s2114 = sand.u32 %s398, 1
        %s2115 = sand.u32 %s398, 1
        %s2116 = smul.addr %s2115, 32
        %s2117 = scalar_lea.vmem [#allocation5], %s2116
        // Predicated region
        $region112: #{densenet_forward.5} parent=106 // pred_check
          %p2118 = pneg %p408
        $region113: #{densenet_forward.5} parent=106 // pred_check_branch
          %2120 = sbr.rel (%p2118) target = $region115
        $region114: #{densenet_forward.5} parent=106 // pred_region
          %s2121 = smul.u32 2, %s28
          %s2122 = smul.addr %s2121, 8
          %s2123 = scalar_lea.vmem %s17, %s2122
          // Predicated region
          $region116: #{densenet_forward.5} parent=114 // pred_check
            _
          $region117: #{densenet_forward.5} parent=114 // pred_check_branch
            %2125 = sbr.rel (0) target = $region119
          $region118: #{densenet_forward.5} parent=114 // pred_region
            // Predicated region
            $region120: #{densenet_forward.5} parent=118 // pred_check
              _
            $region121: #{densenet_forward.5} parent=118 // pred_check_branch
              %2127 = sbr.rel (0) target = $region123
            $region122: #{densenet_forward.5} parent=118 // pred_region
              loop: start=0, step=1, limit=1
              $region124: #{densenet_forward.5} parent=122 // loop_pre_header
                _
              $region125: #{densenet_forward.5} parent=122 // loop_header
                %s2129 = sphi 0, %s2133
                %p2130 = scmp.ge.s32.totalorder %s2129, 1
                %s2134 = sphi %s2117, %s2117
                %s2135 = sphi %s2123, %s2123
              $region126: #{densenet_forward.5} parent=122 // loop_header_branch
                %2132 = sbr.rel (%p2130) target = $region130
              $region127: #{densenet_forward.5} parent=122 // loop_body
                %v2136 = vld [vmem:[%s2134] sm:$0xff]
                %2137 = vst [vmem:[%s2135] sm:$0xff] %v2136
                %v2138 = vld [vmem:[%s2134 + $0x8] sm:$0xff]
                %2139 = vst [vmem:[%s2135 + $0x8] sm:$0xff] %v2138
                %v2140 = vld [vmem:[%s2134 + $0x10] sm:$0xff]
                %2141 = vst [vmem:[%s2135 + $0x20] sm:$0xff] %v2140
                %v2142 = vld [vmem:[%s2134 + $0x18] sm:$0xff]
                %2143 = vst [vmem:[%s2135 + $0x28] sm:$0xff] %v2142
              $region128: #{densenet_forward.5} parent=122 // loop_footer
                %s2133 = sadd.s32 1, %s2129
              $region129: #{densenet_forward.5} parent=122 // loop_footer_branch
                %2128 = sbr.rel target = $region125
              $region130: #{densenet_forward.5} parent=122 // loop_exit
                _
            $region123: #{densenet_forward.5} parent=118 // pred_fallthru
              _
            // Predicated region
            $region131: #{densenet_forward.5} parent=118 // pred_check
              _
            $region132: #{densenet_forward.5} parent=118 // pred_check_branch
              %2145 = sbr.rel target = $region134
            $region133: #{densenet_forward.5} parent=118 // pred_region
              _
            $region134: #{densenet_forward.5} parent=118 // pred_fallthru
              _
          $region119: #{densenet_forward.5} parent=114 // pred_fallthru
            _
          %2146 = vnop
        $region115: #{densenet_forward.5} parent=106 // pred_fallthru
          _
      $region107: #{densenet_forward.5} parent=5 // pred_fallthru
        _
      %p2147 = scmp.le.s32.totalorder 2, %s23
      // Predicated region
      $region135: #{densenet_forward.5} parent=5 // pred_check
        %p2148 = pneg %p2147
      $region136: #{densenet_forward.5} parent=5 // pred_check_branch
        %2150 = sbr.rel (%p2148) target = $region138
      $region137: #{densenet_forward.5} parent=5 // pred_region
        %s2151 = ssub.s32 %s23, 2
        // Predicated region
        $region139: #{densenet_forward.5} parent=137 // pred_check
          %p2152 = pneg %p414
        $region140: #{densenet_forward.5} parent=137 // pred_check_branch
          %2154 = sbr.rel (%p2152) target = $region142
        $region141: #{densenet_forward.5} parent=137 // pred_region
          %s2155 = sand.u32 %s399, 1
          %s2156 = sand.u32 %s399, 1
          %s2157 = smul.addr %s2156, 32
          %s2158 = scalar_lea.vmem [#allocation5], %s2157
        $region142: #{densenet_forward.5} parent=137 // pred_fallthru
          _
      $region138: #{densenet_forward.5} parent=5 // pred_fallthru
        _
    $region6: #{densenet_forward.5} parent=1 // loop_footer
      %s27 = sadd.s32 1, %s23
    $region7: #{densenet_forward.5} parent=1 // loop_footer_branch
      %22 = sbr.rel target = $region3
    $region8: #{densenet_forward.5} parent=1 // loop_exit
      _

// kernel: densenet_forward.7
$region0: #{densenet_forward.7}
  #allocation0 [shape = 'u32[]', space=smem, size = 0x4, offset = 0x4, fixed_abs, tag = 'smem constant byte address 0x4 - core index']
  #allocation1 [shape = 'u32[144,128]{1,0:T(1,128)}', space=vmem, size = 0x12000, scoped, tag = 'internal scratch']
  %s0 = inlined_call_operand.vmem [shape: f32[32,256], index: 0, kind: input, shape index: {}]
  %s1 = inlined_call_operand.vmem [shape: f32[32,1], index: 1, kind: input, shape index: {}]
  %s2 = inlined_call_operand.vmem [shape: f32[32,1], index: 2, kind: input, shape index: {}]
  %s3 = inlined_call_operand.vmem [shape: f32[256,2], index: 3, kind: input, shape index: {}]
  %s4 = inlined_call_operand.vmem [shape: f32[10,32], index: 4, kind: input, shape index: {}]
  %s5 = inlined_call_operand.vmem [shape: f32[10,1], index: 5, kind: input, shape index: {}]
  %s6 = inlined_call_operand.vmem [shape: f32[10,2], index: 6, kind: output, shape index: {}]
  %s7 = sld [smem:[#allocation0]]
  $region34: #{densenet_forward.7} parent=0
    _
  %s9 = ssub.s32 1, %s7
  %s10 = scalar_select 0, %s9, %s7
  // Predicated region
  $region2: #{densenet_forward.7} parent=0 // pred_check
    _
  $region3: #{densenet_forward.7} parent=0 // pred_check_branch
    %12 = sbr.rel (0) target = $region5
  $region4: #{densenet_forward.7} parent=0 // pred_region
    _
  $region5: #{densenet_forward.7} parent=0 // pred_fallthru
    _
  // Predicated region
  $region6: #{densenet_forward.7} parent=0 // pred_check
    _
  $region7: #{densenet_forward.7} parent=0 // pred_check_branch
    %14 = sbr.rel (0) target = $region9
  $region8: #{densenet_forward.7} parent=0 // pred_region
    _
  $region9: #{densenet_forward.7} parent=0 // pred_fallthru
    _
  // Predicated region
  $region10: #{densenet_forward.7} parent=0 // pred_check
    _
  $region11: #{densenet_forward.7} parent=0 // pred_check_branch
    %16 = sbr.rel (0) target = $region13
  $region12: #{densenet_forward.7} parent=0 // pred_region
    _
  $region13: #{densenet_forward.7} parent=0 // pred_fallthru
    _
  // Predicated region
  $region14: #{densenet_forward.7} parent=0 // pred_check
    _
  $region15: #{densenet_forward.7} parent=0 // pred_check_branch
    %18 = sbr.rel (0) target = $region17
  $region16: #{densenet_forward.7} parent=0 // pred_region
    _
  $region17: #{densenet_forward.7} parent=0 // pred_fallthru
    _
  // Predicated region
  $region18: #{densenet_forward.7} parent=0 // pred_check
    _
  $region19: #{densenet_forward.7} parent=0 // pred_check_branch
    %20 = sbr.rel (0) target = $region21
  $region20: #{densenet_forward.7} parent=0 // pred_region
    _
  $region21: #{densenet_forward.7} parent=0 // pred_fallthru
    _
  // Predicated region
  $region22: #{densenet_forward.7} parent=0 // pred_check
    _
  $region23: #{densenet_forward.7} parent=0 // pred_check_branch
    %22 = sbr.rel (0) target = $region25
  $region24: #{densenet_forward.7} parent=0 // pred_region
    _
  $region25: #{densenet_forward.7} parent=0 // pred_fallthru
    _
  %v23 = vld [vmem:[%s0] sm:$0xff]
  %v24 = vld [vmem:[%s0 + $0x8] sm:$0xff]
  %v25 = vld [vmem:[%s0 + $0x10] sm:$0xff]
  %v26 = vld [vmem:[%s0 + $0x18] sm:$0xff]
  %v27 = vld [vmem:[%s0 + $0x20] sm:$0xff]
  %v28 = vld [vmem:[%s0 + $0x28] sm:$0xff]
  %v29 = vld [vmem:[%s0 + $0x30] sm:$0xff]
  %v30 = vld [vmem:[%s0 + $0x38] sm:$0xff]
  %v31 = vld [vmem:[%s1] sm:$0xff]
  %v32 = vld [vmem:[%s1 + $0x8] sm:$0xff]
  %v33 = vld [vmem:[%s1 + $0x10] sm:$0xff]
  %v34 = vld [vmem:[%s1 + $0x18] sm:$0xff]
  %36 = vset.pattern.permute.xlu0 0
  %37 = vperm.xlu0 %36, %v31
  %v38 = vpop.permute.xlu0 %37
  %41 = vset.pattern.permute.xlu0 0
  %42 = vperm.xlu0 %41, %v32
  %v43 = vpop.permute.xlu0 %42
  %46 = vset.pattern.permute.xlu0 0
  %47 = vperm.xlu0 %46, %v33
  %v48 = vpop.permute.xlu0 %47
  %51 = vset.pattern.permute.xlu0 0
  %52 = vperm.xlu0 %51, %v34
  %v53 = vpop.permute.xlu0 %52
  %v55 = vmul.f32 %v23, %v38
  %v56 = vmul.f32 %v24, %v38
  %v57 = vmul.f32 %v25, %v43
  %v58 = vmul.f32 %v26, %v43
  %v59 = vmul.f32 %v27, %v48
  %v60 = vmul.f32 %v28, %v48
  %v61 = vmul.f32 %v29, %v53
  %v62 = vmul.f32 %v30, %v53
  %v63 = vld [vmem:[%s2] sm:$0xff]
  %v64 = vld [vmem:[%s2 + $0x8] sm:$0xff]
  %v65 = vld [vmem:[%s2 + $0x10] sm:$0xff]
  %v66 = vld [vmem:[%s2 + $0x18] sm:$0xff]
  %68 = vset.pattern.permute.xlu0 0
  %69 = vperm.xlu0 %68, %v63
  %v70 = vpop.permute.xlu0 %69
  %73 = vset.pattern.permute.xlu0 0
  %74 = vperm.xlu0 %73, %v64
  %v75 = vpop.permute.xlu0 %74
  %78 = vset.pattern.permute.xlu0 0
  %79 = vperm.xlu0 %78, %v65
  %v80 = vpop.permute.xlu0 %79
  %83 = vset.pattern.permute.xlu0 0
  %84 = vperm.xlu0 %83, %v66
  %v85 = vpop.permute.xlu0 %84
  %v87 = vadd.f32 %v55, %v70
  %v88 = vadd.f32 %v56, %v70
  %v89 = vadd.f32 %v57, %v75
  %v90 = vadd.f32 %v58, %v75
  %v91 = vadd.f32 %v59, %v80
  %v92 = vadd.f32 %v60, %v80
  %v93 = vadd.f32 %v61, %v85
  %v94 = vadd.f32 %v62, %v85
  %v95 = vmax.f32 %v87, 0.0
  %v96 = vmax.f32 %v88, 0.0
  %v97 = vmax.f32 %v89, 0.0
  %v98 = vmax.f32 %v90, 0.0
  %v99 = vmax.f32 %v91, 0.0
  %v100 = vmax.f32 %v92, 0.0
  %v101 = vmax.f32 %v93, 0.0
  %v102 = vmax.f32 %v94, 0.0
  %v103 = vld [vmem:[%s3] sm:$0xff]
  %v104 = vld [vmem:[%s3 + $0x8] sm:$0xff]
  %v105 = vld [vmem:[%s3 + $0x10] sm:$0xff]
  %v106 = vld [vmem:[%s3 + $0x18] sm:$0xff]
  %v107 = vld [vmem:[%s3 + $0x20] sm:$0xff]
  %v108 = vld [vmem:[%s3 + $0x28] sm:$0xff]
  %v109 = vld [vmem:[%s3 + $0x30] sm:$0xff]
  %v110 = vld [vmem:[%s3 + $0x38] sm:$0xff]
  %v111 = vld [vmem:[%s3 + $0x40] sm:$0xff]
  %v112 = vld [vmem:[%s3 + $0x48] sm:$0xff]
  %v113 = vld [vmem:[%s3 + $0x50] sm:$0xff]
  %v114 = vld [vmem:[%s3 + $0x58] sm:$0xff]
  %v115 = vld [vmem:[%s3 + $0x60] sm:$0xff]
  %v116 = vld [vmem:[%s3 + $0x68] sm:$0xff]
  %v117 = vld [vmem:[%s3 + $0x70] sm:$0xff]
  %v118 = vld [vmem:[%s3 + $0x78] sm:$0xff]
  %v119 = vld [vmem:[%s3 + $0x80] sm:$0xff]
  %v120 = vld [vmem:[%s3 + $0x88] sm:$0xff]
  %v121 = vld [vmem:[%s3 + $0x90] sm:$0xff]
  %v122 = vld [vmem:[%s3 + $0x98] sm:$0xff]
  %v123 = vld [vmem:[%s3 + $0xa0] sm:$0xff]
  %v124 = vld [vmem:[%s3 + $0xa8] sm:$0xff]
  %v125 = vld [vmem:[%s3 + $0xb0] sm:$0xff]
  %v126 = vld [vmem:[%s3 + $0xb8] sm:$0xff]
  %v127 = vld [vmem:[%s3 + $0xc0] sm:$0xff]
  %v128 = vld [vmem:[%s3 + $0xc8] sm:$0xff]
  %v129 = vld [vmem:[%s3 + $0xd0] sm:$0xff]
  %v130 = vld [vmem:[%s3 + $0xd8] sm:$0xff]
  %v131 = vld [vmem:[%s3 + $0xe0] sm:$0xff]
  %v132 = vld [vmem:[%s3 + $0xe8] sm:$0xff]
  %v133 = vld [vmem:[%s3 + $0xf0] sm:$0xff]
  %v134 = vld [vmem:[%s3 + $0xf8] sm:$0xff]
  %135 = vmatprep.subr.mxu0 0.0
  %136 = vmatpush1.msra.mxu0 %v103
  %137 = vmatprep.subr.mxu0 0.0
  %138 = vmatpush1.msra.mxu0 %v104
  %139 = vmatprep.subr.mxu0 0.0
  %140 = vmatpush1.msra.mxu0 %v105
  %141 = vmatprep.subr.mxu0 0.0
  %142 = vmatpush1.msra.mxu0 %v106
  %143 = vmatprep.subr.mxu0 0.0
  %144 = vmatpush1.msra.mxu0 %v107
  %145 = vmatprep.subr.mxu0 0.0
  %146 = vmatpush1.msra.mxu0 %v108
  %147 = vmatprep.subr.mxu0 0.0
  %148 = vmatpush1.msra.mxu0 %v109
  %149 = vmatprep.subr.mxu0 0.0
  %150 = vmatpush1.msra.mxu0 %v110
  %151 = vmatprep.subr.mxu0 0.0
  %152 = vmatpush1.msra.mxu0 %v111
  %153 = vmatprep.subr.mxu0 0.0
  %154 = vmatpush1.msra.mxu0 %v112
  %155 = vmatprep.subr.mxu0 0.0
  %156 = vmatpush1.msra.mxu0 %v113
  %157 = vmatprep.subr.mxu0 0.0
  %158 = vmatpush1.msra.mxu0 %v114
  %159 = vmatprep.subr.mxu0 0.0
  %160 = vmatpush1.msra.mxu0 %v115
  %161 = vmatprep.subr.mxu0 0.0
  %162 = vmatpush1.msra.mxu0 %v116
  %163 = vmatprep.subr.mxu0 0.0
  %164 = vmatpush1.msra.mxu0 %v117
  %165 = vmatprep.subr.mxu0 0.0
  %166 = vmatpush1.msra.mxu0 %v118
  %167 = vmatprep.subr.mxu0 0.0
  %168 = vmatpush1.msra.mxu0 %v119
  %169 = vmatprep.subr.mxu0 0.0
  %170 = vmatpush1.msra.mxu0 %v120
  %171 = vmatprep.subr.mxu0 0.0
  %172 = vmatpush1.msra.mxu0 %v121
  %173 = vmatprep.subr.mxu0 0.0
  %174 = vmatpush1.msra.mxu0 %v122
  %175 = vmatprep.subr.mxu0 0.0
  %176 = vmatpush1.msra.mxu0 %v123
  %177 = vmatprep.subr.mxu0 0.0
  %178 = vmatpush1.msra.mxu0 %v124
  %179 = vmatprep.subr.mxu0 0.0
  %180 = vmatpush1.msra.mxu0 %v125
  %181 = vmatprep.subr.mxu0 0.0
  %182 = vmatpush1.msra.mxu0 %v126
  %183 = vmatprep.subr.mxu0 0.0
  %184 = vmatpush1.msra.mxu0 %v127
  %185 = vmatprep.subr.mxu0 0.0
  %186 = vmatpush1.msra.mxu0 %v128
  %187 = vmatprep.subr.mxu0 0.0
  %188 = vmatpush1.msra.mxu0 %v129
  %189 = vmatprep.subr.mxu0 0.0
  %190 = vmatpush1.msra.mxu0 %v130
  %191 = vmatprep.subr.mxu0 0.0
  %192 = vmatpush1.msra.mxu0 %v131
  %193 = vmatprep.subr.mxu0 0.0
  %194 = vmatpush1.msra.mxu0 %v132
  %195 = vmatprep.subr.mxu0 0.0
  %196 = vmatpush1.msra.mxu0 %v133
  %197 = vmatprep.subr.mxu0 0.0
  %198 = vmatpush1.msra.mxu0 %v134
  %199 = vmatprep.mubr.f32.mxu0 %v96
  %200 = vmatmul.mubr.f32.gmra.mrb[0].mxu0 %v95
  %v201 = vpop.f32.mrb[0].mxu0
  %v202 = vadd.f32 0.0, %v201
  %v203 = vpop.f32.mrb[0].mxu0
  %204 = vmatprep.mubr.f32.mxu0 %v98
  %205 = vmatmul.mubr.f32.gmra.mrb[0].mxu0 %v97
  %v206 = vpop.f32.mrb[0].mxu0
  %v207 = vadd.f32 0.0, %v206
  %v208 = vpop.f32.mrb[0].mxu0
  %209 = vmatprep.mubr.f32.mxu0 %v100
  %210 = vmatmul.mubr.f32.gmra.mrb[0].mxu0 %v99
  %v211 = vpop.f32.mrb[0].mxu0
  %v212 = vadd.f32 0.0, %v211
  %v213 = vpop.f32.mrb[0].mxu0
  %214 = vmatprep.mubr.f32.mxu0 %v102
  %215 = vmatmul.mubr.f32.gmra.mrb[0].mxu0 %v101
  %v216 = vpop.f32.mrb[0].mxu0
  %v217 = vadd.f32 0.0, %v216
  %v218 = vpop.f32.mrb[0].mxu0
  %219 = vdwg.mxu0
  %v220 = vld [vmem:[%s4] sm:$0xff]
  %v221 = vld [vmem:[%s4 + $0x8] sm:$0x3]
  %v222 = vld [vmem:[%s5] sm:$0xff]
  %v223 = vld [vmem:[%s5 + $0x8] sm:$0x3]
  %225 = vset.pattern.permute.xlu0 0
  %226 = vperm.xlu0 %225, %v222
  %v227 = vpop.permute.xlu0 %226
  %230 = vset.pattern.permute.xlu0 0
  %231 = vperm.xlu0 %230, %v223
  %v232 = vpop.permute.xlu0 %231
  %vm234 = vcmask 261120
  %v236 = vsel %vm234, %v220, 0
  %v239 = vsel %vm234, %v221, 0
  %241 = vmatprep.subr.mxu0 0.0
  %242 = vmatpush1.msra.mxu0 %v202
  %243 = vmatprep.subr.mxu0 0.0
  %244 = vmatpush1.msra.mxu0 %v207
  %245 = vmatprep.subr.mxu0 0.0
  %246 = vmatpush1.msra.mxu0 %v212
  %247 = vmatprep.subr.mxu0 0.0
  %248 = vmatpush1.msra.mxu0 %v217
  %249 = vmatprep.subr.mxu0 0.0
  %250 = vmatpush1.msra.mxu0 0.0
  %251 = vmatprep.subr.mxu0 0.0
  %252 = vmatpush1.msra.mxu0 0.0
  %253 = vmatprep.subr.mxu0 0.0
  %254 = vmatpush1.msra.mxu0 0.0
  %255 = vmatprep.subr.mxu0 0.0
  %256 = vmatpush1.msra.mxu0 0.0
  %257 = vmatprep.subr.mxu0 0.0
  %258 = vmatpush1.msra.mxu0 0.0
  %259 = vmatprep.subr.mxu0 0.0
  %260 = vmatpush1.msra.mxu0 0.0
  %261 = vmatprep.subr.mxu0 0.0
  %262 = vmatpush1.msra.mxu0 0.0
  %263 = vmatprep.subr.mxu0 0.0
  %264 = vmatpush1.msra.mxu0 0.0
  %265 = vmatprep.subr.mxu0 0.0
  %266 = vmatpush1.msra.mxu0 0.0
  %267 = vmatprep.subr.mxu0 0.0
  %268 = vmatpush1.msra.mxu0 0.0
  %269 = vmatprep.subr.mxu0 0.0
  %270 = vmatpush1.msra.mxu0 0.0
  %271 = vmatprep.subr.mxu0 0.0
  %272 = vmatpush1.msra.mxu0 0.0
  %273 = vmatprep.subr.mxu0 0.0
  %274 = vmatpush1.msra.mxu0 0.0
  %275 = vmatprep.subr.mxu0 0.0
  %276 = vmatpush1.msra.mxu0 0.0
  %277 = vmatprep.subr.mxu0 0.0
  %278 = vmatpush1.msra.mxu0 0.0
  %279 = vmatprep.subr.mxu0 0.0
  %280 = vmatpush1.msra.mxu0 0.0
  %281 = vmatprep.subr.mxu0 0.0
  %282 = vmatpush1.msra.mxu0 0.0
  %283 = vmatprep.subr.mxu0 0.0
  %284 = vmatpush1.msra.mxu0 0.0
  %285 = vmatprep.subr.mxu0 0.0
  %286 = vmatpush1.msra.mxu0 0.0
  %287 = vmatprep.subr.mxu0 0.0
  %288 = vmatpush1.msra.mxu0 0.0
  %289 = vmatprep.subr.mxu0 0.0
  %290 = vmatpush1.msra.mxu0 0.0
  %291 = vmatprep.subr.mxu0 0.0
  %292 = vmatpush1.msra.mxu0 0.0
  %293 = vmatprep.subr.mxu0 0.0
  %294 = vmatpush1.msra.mxu0 0.0
  %295 = vmatprep.subr.mxu0 0.0
  %296 = vmatpush1.msra.mxu0 0.0
  %297 = vmatprep.subr.mxu0 0.0
  %298 = vmatpush1.msra.mxu0 0.0
  %299 = vmatprep.subr.mxu0 0.0
  %300 = vmatpush1.msra.mxu0 0.0
  %301 = vmatprep.subr.mxu0 0.0
  %302 = vmatpush1.msra.mxu0 0.0
  %303 = vmatprep.subr.mxu0 0.0
  %304 = vmatpush1.msra.mxu0 0.0
  %305 = vmatprep.mubr.f32.mxu0 0.0
  %306 = vmatmul.mubr.f32.gmra.mrb[0].mxu0 %v236
  %v307 = vpop.f32.mrb[0].mxu0
  %v308 = vadd.f32 %v227, %v307
  %v309 = vpop.f32.mrb[0].mxu0
  %310 = vmatprep.mubr.f32.mxu0 0.0
  %311 = vmatmul.mubr.f32.gmra.mrb[0].mxu0 %v239
  %v312 = vpop.f32.mrb[0].mxu0
  %v313 = vadd.f32 %v232, %v312
  %v314 = vpop.f32.mrb[0].mxu0
  %315 = vdwg.mxu0
  %vm316 = vcmask 15360
  %317 = vst.msk [vmem:[%s6] sm:$0xff] %vm316, %v308
  %vm318 = vcmask 9216
  %319 = vst.msk [vmem:[%s6 + $0x8] sm:$0x3] %vm318, %v313
  // Predicated region
  $region26: #{densenet_forward.7} parent=0 // pred_check
    _
  $region27: #{densenet_forward.7} parent=0 // pred_check_branch
    %321 = sbr.rel (0) target = $region29
  $region28: #{densenet_forward.7} parent=0 // pred_region
    _
  $region29: #{densenet_forward.7} parent=0 // pred_fallthru
    _
  // Predicated region
  $region30: #{densenet_forward.7} parent=0 // pred_check
    _
  $region31: #{densenet_forward.7} parent=0 // pred_check_branch
    %323 = sbr.rel (0) target = $region33
  $region32: #{densenet_forward.7} parent=0 // pred_region
    _
  $region33: #{densenet_forward.7} parent=0 // pred_fallthru
    _

// kernel: densenet_forward.6
$region0: #{densenet_forward.6}
  #allocation0 [shape = 'u32[]', space=smem, size = 0x4, offset = 0x4, fixed_abs, tag = 'smem constant byte address 0x4 - core index']
  #allocation1 [shape = 'u32[144,128]{1,0:T(1,128)}', space=vmem, size = 0x12000, scoped, tag = 'internal scratch']
  #allocation2 [shape = 'bf16[16,148]{1,0:T(16,128)(2,1)}', space=vmem, size = 0x2000, scoped, tag = 'scratch operand']
  %s0 = inlined_call_operand.vmem [shape: f32[1,128], index: 0, kind: input, shape index: {}]
  %s1 = inlined_call_operand.vmem [shape: f32[16,256], index: 1, kind: input, shape index: {}]
  %s2 = inlined_call_operand.vmem [shape: f32[16,1], index: 2, kind: input, shape index: {}]
  %s3 = inlined_call_operand.vmem [shape: f32[16,1], index: 3, kind: input, shape index: {}]
  %s4 = inlined_call_operand.vmem [shape: bf16[16,16], index: 4, kind: input, shape index: {}]
  %s5 = inlined_call_operand.vmem [shape: f32[16,1], index: 5, kind: input, shape index: {}]
  %s6 = inlined_call_operand.vmem [shape: f32[16,1], index: 6, kind: input, shape index: {}]
  %s7 = inlined_call_operand.vmem [shape: bf16[9,8,16], index: 7, kind: input, shape index: {}]
  %s8 = inlined_call_operand.vmem [shape: f32[24,1], index: 8, kind: input, shape index: {}]
  %s9 = inlined_call_operand.vmem [shape: f32[24,1], index: 9, kind: input, shape index: {}]
  %s10 = inlined_call_operand.vmem [shape: bf16[16,24], index: 10, kind: input, shape index: {}]
  %s11 = inlined_call_operand.vmem [shape: f32[16,1], index: 11, kind: input, shape index: {}]
  %s12 = inlined_call_operand.vmem [shape: f32[16,1], index: 12, kind: input, shape index: {}]
  %s13 = inlined_call_operand.vmem [shape: bf16[9,8,16], index: 13, kind: input, shape index: {}]
  %s14 = inlined_call_operand.vmem [shape: f32[32,256], index: 14, kind: output, shape index: {}]
  %s15 = sld [smem:[#allocation0]]
  $region161: #{densenet_forward.6} parent=0
    _
  %s17 = ssub.s32 1, %s15
  %s18 = scalar_select 0, %s17, %s15
  $region1: #{densenet_forward.6} parent=0
    #allocation3 [shape = 'u8[16384]{0}', space=vmem, size = 0x4000, scoped, tag = 'input window, operand 1']
    #allocation4 [shape = 'u8[32768]{0}', space=vmem, size = 0x8000, scoped, tag = 'output window, operand 0']
    loop: start=0, step=1, limit=4
    $region2: #{densenet_forward.6} parent=1 // loop_pre_header
      _
    $region3: #{densenet_forward.6} parent=1 // loop_header
      %s20 = sphi 0, %s24
      %p21 = scmp.ge.s32.totalorder %s20, 4
      %s28 = sphi 0, %s28
      %s30 = sphi 0, %s28
      %s31 = sphi 0, %s30
      %s45 = sphi 0, %s31
      %s51 = sphi 0, %s53
      %s54 = sphi 0, %s51
      %s55 = sphi 0, %s54
      %s71 = sphi 0, %s55
      %s75 = sphi 0, %s75
      %s77 = sphi 0, %s75
      %s78 = sphi 0, %s77
      %s92 = sphi 0, %s78
      %s96 = sphi 0, %s96
      %s98 = sphi 0, %s96
      %s99 = sphi 0, %s98
      %s113 = sphi 0, %s99
      %s117 = sphi 0, %s117
      %s119 = sphi 0, %s117
      %s120 = sphi 0, %s119
      %s134 = sphi 0, %s120
      %s138 = sphi 0, %s138
      %s140 = sphi 0, %s138
      %s141 = sphi 0, %s140
      %s155 = sphi 0, %s141
      %s159 = sphi 0, %s159
      %s161 = sphi 0, %s159
      %s162 = sphi 0, %s161
      %s176 = sphi 0, %s162
      %s180 = sphi 0, %s180
      %s182 = sphi 0, %s180
      %s183 = sphi 0, %s182
      %s197 = sphi 0, %s183
      %s201 = sphi 0, %s201
      %s203 = sphi 0, %s201
      %s204 = sphi 0, %s203
      %s218 = sphi 0, %s204
      %s222 = sphi 0, %s222
      %s224 = sphi 0, %s222
      %s225 = sphi 0, %s224
      %s239 = sphi 0, %s225
      %s243 = sphi 0, %s243
      %s245 = sphi 0, %s243
      %s246 = sphi 0, %s245
      %s260 = sphi 0, %s246
      %s264 = sphi 0, %s264
      %s266 = sphi 0, %s264
      %s267 = sphi 0, %s266
      %s281 = sphi 0, %s267
      %s285 = sphi 0, %s285
      %s287 = sphi 0, %s285
      %s288 = sphi 0, %s287
      %s302 = sphi 0, %s288
      %s306 = sphi 0, %s306
      %s308 = sphi 0, %s306
      %s309 = sphi 0, %s308
      %s323 = sphi 0, %s309
      %s329 = sphi 0, %s331
      %s332 = sphi 0, %s329
      %s333 = sphi 0, %s332
      %s349 = sphi 0, %s333
    $region4: #{densenet_forward.6} parent=1 // loop_header_branch
      %23 = sbr.rel (%p21) target = $region8
    $region5: #{densenet_forward.6} parent=1 // loop_body
      %s25 = ssub.s32 %s20, 1
      %s26 = ssub.s32 %s20, 2
      %s27 = sadd.s32 %s20, 1
      %s29 = sadd.s32 %s28, 1
      %p32 = scmp.eq.s32.totalorder %s20, 1
      %p33 = scmp.ne.s32.totalorder %s28, %s30
      %p34 = scmp.eq.s32.totalorder %s20, 0
      %p35 = por %p33, %p34
      %p36 = scmp.ne.s32.totalorder %s28, %s30
      %p37 = scmp.eq.s32.totalorder %s25, 1
      %p38 = por %p36, %p37
      %p39 = scmp.ne.s32.totalorder %s30, %s31
      %p40 = scmp.eq.s32.totalorder %s25, 0
      %p41 = por %p39, %p40
      %p42 = scmp.ne.s32.totalorder %s30, %s31
      %p43 = scmp.eq.s32.totalorder %s26, 1
      %p44 = por %p42, %p43
      %p46 = scmp.ne.s32.totalorder %s31, %s45
      %p47 = scmp.eq.s32.totalorder %s26, 0
      %p48 = por %p46, %p47
      %s49 = ssub.s32 %s20, %s27
      %p50 = scmp.eq.s32.totalorder %s49, 0
      %s52 = sadd.s32 %s51, 1
      %s53 = scalar_select %p50, %s51, %s52
      %p56 = pneg %p50
      %p57 = scmp.eq.s32.totalorder %s20, 1
      %p58 = por %p56, %p57
      %p59 = scmp.ne.s32.totalorder %s51, %s54
      %p60 = scmp.eq.s32.totalorder %s20, 0
      %p61 = por %p59, %p60
      %p62 = scmp.ne.s32.totalorder %s51, %s54
      %p63 = scmp.eq.s32.totalorder %s25, 1
      %p64 = por %p62, %p63
      %p65 = scmp.ne.s32.totalorder %s54, %s55
      %p66 = scmp.eq.s32.totalorder %s25, 0
      %p67 = por %p65, %p66
      %p68 = scmp.ne.s32.totalorder %s54, %s55
      %p69 = scmp.eq.s32.totalorder %s26, 1
      %p70 = por %p68, %p69
      %p72 = scmp.ne.s32.totalorder %s55, %s71
      %p73 = scmp.eq.s32.totalorder %s26, 0
      %p74 = por %p72, %p73
      %s76 = sadd.s32 %s75, 1
      %p79 = scmp.eq.s32.totalorder %s20, 1
      %p80 = scmp.ne.s32.totalorder %s75, %s77
      %p81 = scmp.eq.s32.totalorder %s20, 0
      %p82 = por %p80, %p81
      %p83 = scmp.ne.s32.totalorder %s75, %s77
      %p84 = scmp.eq.s32.totalorder %s25, 1
      %p85 = por %p83, %p84
      %p86 = scmp.ne.s32.totalorder %s77, %s78
      %p87 = scmp.eq.s32.totalorder %s25, 0
      %p88 = por %p86, %p87
      %p89 = scmp.ne.s32.totalorder %s77, %s78
      %p90 = scmp.eq.s32.totalorder %s26, 1
      %p91 = por %p89, %p90
      %p93 = scmp.ne.s32.totalorder %s78, %s92
      %p94 = scmp.eq.s32.totalorder %s26, 0
      %p95 = por %p93, %p94
      %s97 = sadd.s32 %s96, 1
      %p100 = scmp.eq.s32.totalorder %s20, 1
      %p101 = scmp.ne.s32.totalorder %s96, %s98
      %p102 = scmp.eq.s32.totalorder %s20, 0
      %p103 = por %p101, %p102
      %p104 = scmp.ne.s32.totalorder %s96, %s98
      %p105 = scmp.eq.s32.totalorder %s25, 1
      %p106 = por %p104, %p105
      %p107 = scmp.ne.s32.totalorder %s98, %s99
      %p108 = scmp.eq.s32.totalorder %s25, 0
      %p109 = por %p107, %p108
      %p110 = scmp.ne.s32.totalorder %s98, %s99
      %p111 = scmp.eq.s32.totalorder %s26, 1
      %p112 = por %p110, %p111
      %p114 = scmp.ne.s32.totalorder %s99, %s113
      %p115 = scmp.eq.s32.totalorder %s26, 0
      %p116 = por %p114, %p115
      %s118 = sadd.s32 %s117, 1
      %p121 = scmp.eq.s32.totalorder %s20, 1
      %p122 = scmp.ne.s32.totalorder %s117, %s119
      %p123 = scmp.eq.s32.totalorder %s20, 0
      %p124 = por %p122, %p123
      %p125 = scmp.ne.s32.totalorder %s117, %s119
      %p126 = scmp.eq.s32.totalorder %s25, 1
      %p127 = por %p125, %p126
      %p128 = scmp.ne.s32.totalorder %s119, %s120
      %p129 = scmp.eq.s32.totalorder %s25, 0
      %p130 = por %p128, %p129
      %p131 = scmp.ne.s32.totalorder %s119, %s120
      %p132 = scmp.eq.s32.totalorder %s26, 1
      %p133 = por %p131, %p132
      %p135 = scmp.ne.s32.totalorder %s120, %s134
      %p136 = scmp.eq.s32.totalorder %s26, 0
      %p137 = por %p135, %p136
      %s139 = sadd.s32 %s138, 1
      %p142 = scmp.eq.s32.totalorder %s20, 1
      %p143 = scmp.ne.s32.totalorder %s138, %s140
      %p144 = scmp.eq.s32.totalorder %s20, 0
      %p145 = por %p143, %p144
      %p146 = scmp.ne.s32.totalorder %s138, %s140
      %p147 = scmp.eq.s32.totalorder %s25, 1
      %p148 = por %p146, %p147
      %p149 = scmp.ne.s32.totalorder %s140, %s141
      %p150 = scmp.eq.s32.totalorder %s25, 0
      %p151 = por %p149, %p150
      %p152 = scmp.ne.s32.totalorder %s140, %s141
      %p153 = scmp.eq.s32.totalorder %s26, 1
      %p154 = por %p152, %p153
      %p156 = scmp.ne.s32.totalorder %s141, %s155
      %p157 = scmp.eq.s32.totalorder %s26, 0
      %p158 = por %p156, %p157
      %s160 = sadd.s32 %s159, 1
      %p163 = scmp.eq.s32.totalorder %s20, 1
      %p164 = scmp.ne.s32.totalorder %s159, %s161
      %p165 = scmp.eq.s32.totalorder %s20, 0
      %p166 = por %p164, %p165
      %p167 = scmp.ne.s32.totalorder %s159, %s161
      %p168 = scmp.eq.s32.totalorder %s25, 1
      %p169 = por %p167, %p168
      %p170 = scmp.ne.s32.totalorder %s161, %s162
      %p171 = scmp.eq.s32.totalorder %s25, 0
      %p172 = por %p170, %p171
      %p173 = scmp.ne.s32.totalorder %s161, %s162
      %p174 = scmp.eq.s32.totalorder %s26, 1
      %p175 = por %p173, %p174
      %p177 = scmp.ne.s32.totalorder %s162, %s176
      %p178 = scmp.eq.s32.totalorder %s26, 0
      %p179 = por %p177, %p178
      %s181 = sadd.s32 %s180, 1
      %p184 = scmp.eq.s32.totalorder %s20, 1
      %p185 = scmp.ne.s32.totalorder %s180, %s182
      %p186 = scmp.eq.s32.totalorder %s20, 0
      %p187 = por %p185, %p186
      %p188 = scmp.ne.s32.totalorder %s180, %s182
      %p189 = scmp.eq.s32.totalorder %s25, 1
      %p190 = por %p188, %p189
      %p191 = scmp.ne.s32.totalorder %s182, %s183
      %p192 = scmp.eq.s32.totalorder %s25, 0
      %p193 = por %p191, %p192
      %p194 = scmp.ne.s32.totalorder %s182, %s183
      %p195 = scmp.eq.s32.totalorder %s26, 1
      %p196 = por %p194, %p195
      %p198 = scmp.ne.s32.totalorder %s183, %s197
      %p199 = scmp.eq.s32.totalorder %s26, 0
      %p200 = por %p198, %p199
      %s202 = sadd.s32 %s201, 1
      %p205 = scmp.eq.s32.totalorder %s20, 1
      %p206 = scmp.ne.s32.totalorder %s201, %s203
      %p207 = scmp.eq.s32.totalorder %s20, 0
      %p208 = por %p206, %p207
      %p209 = scmp.ne.s32.totalorder %s201, %s203
      %p210 = scmp.eq.s32.totalorder %s25, 1
      %p211 = por %p209, %p210
      %p212 = scmp.ne.s32.totalorder %s203, %s204
      %p213 = scmp.eq.s32.totalorder %s25, 0
      %p214 = por %p212, %p213
      %p215 = scmp.ne.s32.totalorder %s203, %s204
      %p216 = scmp.eq.s32.totalorder %s26, 1
      %p217 = por %p215, %p216
      %p219 = scmp.ne.s32.totalorder %s204, %s218
      %p220 = scmp.eq.s32.totalorder %s26, 0
      %p221 = por %p219, %p220
      %s223 = sadd.s32 %s222, 1
      %p226 = scmp.eq.s32.totalorder %s20, 1
      %p227 = scmp.ne.s32.totalorder %s222, %s224
      %p228 = scmp.eq.s32.totalorder %s20, 0
      %p229 = por %p227, %p228
      %p230 = scmp.ne.s32.totalorder %s222, %s224
      %p231 = scmp.eq.s32.totalorder %s25, 1
      %p232 = por %p230, %p231
      %p233 = scmp.ne.s32.totalorder %s224, %s225
      %p234 = scmp.eq.s32.totalorder %s25, 0
      %p235 = por %p233, %p234
      %p236 = scmp.ne.s32.totalorder %s224, %s225
      %p237 = scmp.eq.s32.totalorder %s26, 1
      %p238 = por %p236, %p237
      %p240 = scmp.ne.s32.totalorder %s225, %s239
      %p241 = scmp.eq.s32.totalorder %s26, 0
      %p242 = por %p240, %p241
      %s244 = sadd.s32 %s243, 1
      %p247 = scmp.eq.s32.totalorder %s20, 1
      %p248 = scmp.ne.s32.totalorder %s243, %s245
      %p249 = scmp.eq.s32.totalorder %s20, 0
      %p250 = por %p248, %p249
      %p251 = scmp.ne.s32.totalorder %s243, %s245
      %p252 = scmp.eq.s32.totalorder %s25, 1
      %p253 = por %p251, %p252
      %p254 = scmp.ne.s32.totalorder %s245, %s246
      %p255 = scmp.eq.s32.totalorder %s25, 0
      %p256 = por %p254, %p255
      %p257 = scmp.ne.s32.totalorder %s245, %s246
      %p258 = scmp.eq.s32.totalorder %s26, 1
      %p259 = por %p257, %p258
      %p261 = scmp.ne.s32.totalorder %s246, %s260
      %p262 = scmp.eq.s32.totalorder %s26, 0
      %p263 = por %p261, %p262
      %s265 = sadd.s32 %s264, 1
      %p268 = scmp.eq.s32.totalorder %s20, 1
      %p269 = scmp.ne.s32.totalorder %s264, %s266
      %p270 = scmp.eq.s32.totalorder %s20, 0
      %p271 = por %p269, %p270
      %p272 = scmp.ne.s32.totalorder %s264, %s266
      %p273 = scmp.eq.s32.totalorder %s25, 1
      %p274 = por %p272, %p273
      %p275 = scmp.ne.s32.totalorder %s266, %s267
      %p276 = scmp.eq.s32.totalorder %s25, 0
      %p277 = por %p275, %p276
      %p278 = scmp.ne.s32.totalorder %s266, %s267
      %p279 = scmp.eq.s32.totalorder %s26, 1
      %p280 = por %p278, %p279
      %p282 = scmp.ne.s32.totalorder %s267, %s281
      %p283 = scmp.eq.s32.totalorder %s26, 0
      %p284 = por %p282, %p283
      %s286 = sadd.s32 %s285, 1
      %p289 = scmp.eq.s32.totalorder %s20, 1
      %p290 = scmp.ne.s32.totalorder %s285, %s287
      %p291 = scmp.eq.s32.totalorder %s20, 0
      %p292 = por %p290, %p291
      %p293 = scmp.ne.s32.totalorder %s285, %s287
      %p294 = scmp.eq.s32.totalorder %s25, 1
      %p295 = por %p293, %p294
      %p296 = scmp.ne.s32.totalorder %s287, %s288
      %p297 = scmp.eq.s32.totalorder %s25, 0
      %p298 = por %p296, %p297
      %p299 = scmp.ne.s32.totalorder %s287, %s288
      %p300 = scmp.eq.s32.totalorder %s26, 1
      %p301 = por %p299, %p300
      %p303 = scmp.ne.s32.totalorder %s288, %s302
      %p304 = scmp.eq.s32.totalorder %s26, 0
      %p305 = por %p303, %p304
      %s307 = sadd.s32 %s306, 1
      %p310 = scmp.eq.s32.totalorder %s20, 1
      %p311 = scmp.ne.s32.totalorder %s306, %s308
      %p312 = scmp.eq.s32.totalorder %s20, 0
      %p313 = por %p311, %p312
      %p314 = scmp.ne.s32.totalorder %s306, %s308
      %p315 = scmp.eq.s32.totalorder %s25, 1
      %p316 = por %p314, %p315
      %p317 = scmp.ne.s32.totalorder %s308, %s309
      %p318 = scmp.eq.s32.totalorder %s25, 0
      %p319 = por %p317, %p318
      %p320 = scmp.ne.s32.totalorder %s308, %s309
      %p321 = scmp.eq.s32.totalorder %s26, 1
      %p322 = por %p320, %p321
      %p324 = scmp.ne.s32.totalorder %s309, %s323
      %p325 = scmp.eq.s32.totalorder %s26, 0
      %p326 = por %p324, %p325
      %s327 = ssub.s32 %s20, %s27
      %p328 = scmp.eq.s32.totalorder %s327, 0
      %s330 = sadd.s32 %s329, 1
      %s331 = scalar_select %p328, %s329, %s330
      %p334 = pneg %p328
      %p335 = scmp.eq.s32.totalorder %s20, 1
      %p336 = por %p334, %p335
      %p337 = scmp.ne.s32.totalorder %s329, %s332
      %p338 = scmp.eq.s32.totalorder %s20, 0
      %p339 = por %p337, %p338
      %p340 = scmp.ne.s32.totalorder %s329, %s332
      %p341 = scmp.eq.s32.totalorder %s25, 1
      %p342 = por %p340, %p341
      %p343 = scmp.ne.s32.totalorder %s332, %s333
      %p344 = scmp.eq.s32.totalorder %s25, 0
      %p345 = por %p343, %p344
      %p346 = scmp.ne.s32.totalorder %s332, %s333
      %p347 = scmp.eq.s32.totalorder %s26, 1
      %p348 = por %p346, %p347
      %p350 = scmp.ne.s32.totalorder %s333, %s349
      %p351 = scmp.eq.s32.totalorder %s26, 0
      %p352 = por %p350, %p351
      %p353 = scmp.le.s32.totalorder 1, %s20
      %p354 = scmp.lt.s32.totalorder %s20, 3
      %p355 = pnand %p353, %p354
      %p356 = pneg %p355
      // Predicated region
      $region9: #{densenet_forward.6} parent=5 // pred_check
        _
      $region10: #{densenet_forward.6} parent=5 // pred_check_branch
        %358 = sbr.rel (%p355) target = $region12
      $region11: #{densenet_forward.6} parent=5 // pred_region
        %s359 = ssub.s32 %s20, 1
        // Predicated region
        $region13: #{densenet_forward.6} parent=11 // pred_check
          %p360 = pneg %p41
        $region14: #{densenet_forward.6} parent=11 // pred_check_branch
          %362 = sbr.rel (%p360) target = $region16
        $region15: #{densenet_forward.6} parent=11 // pred_region
          _
        $region16: #{densenet_forward.6} parent=11 // pred_fallthru
          _
        // Predicated region
        $region17: #{densenet_forward.6} parent=11 // pred_check
          %p363 = pneg %p88
        $region18: #{densenet_forward.6} parent=11 // pred_check_branch
          %365 = sbr.rel (%p363) target = $region20
        $region19: #{densenet_forward.6} parent=11 // pred_region
          _
        $region20: #{densenet_forward.6} parent=11 // pred_fallthru
          _
        // Predicated region
        $region21: #{densenet_forward.6} parent=11 // pred_check
          %p366 = pneg %p109
        $region22: #{densenet_forward.6} parent=11 // pred_check_branch
          %368 = sbr.rel (%p366) target = $region24
        $region23: #{densenet_forward.6} parent=11 // pred_region
          _
        $region24: #{densenet_forward.6} parent=11 // pred_fallthru
          _
        // Predicated region
        $region25: #{densenet_forward.6} parent=11 // pred_check
          %p369 = pneg %p130
        $region26: #{densenet_forward.6} parent=11 // pred_check_branch
          %371 = sbr.rel (%p369) target = $region28
        $region27: #{densenet_forward.6} parent=11 // pred_region
          _
        $region28: #{densenet_forward.6} parent=11 // pred_fallthru
          _
        // Predicated region
        $region29: #{densenet_forward.6} parent=11 // pred_check
          %p372 = pneg %p151
        $region30: #{densenet_forward.6} parent=11 // pred_check_branch
          %374 = sbr.rel (%p372) target = $region32
        $region31: #{densenet_forward.6} parent=11 // pred_region
          _
        $region32: #{densenet_forward.6} parent=11 // pred_fallthru
          _
        // Predicated region
        $region33: #{densenet_forward.6} parent=11 // pred_check
          %p375 = pneg %p172
        $region34: #{densenet_forward.6} parent=11 // pred_check_branch
          %377 = sbr.rel (%p375) target = $region36
        $region35: #{densenet_forward.6} parent=11 // pred_region
          _
        $region36: #{densenet_forward.6} parent=11 // pred_fallthru
          _
        // Predicated region
        $region37: #{densenet_forward.6} parent=11 // pred_check
          %p378 = pneg %p193
        $region38: #{densenet_forward.6} parent=11 // pred_check_branch
          %380 = sbr.rel (%p378) target = $region40
        $region39: #{densenet_forward.6} parent=11 // pred_region
          _
        $region40: #{densenet_forward.6} parent=11 // pred_fallthru
          _
        // Predicated region
        $region41: #{densenet_forward.6} parent=11 // pred_check
          %p381 = pneg %p214
        $region42: #{densenet_forward.6} parent=11 // pred_check_branch
          %383 = sbr.rel (%p381) target = $region44
        $region43: #{densenet_forward.6} parent=11 // pred_region
          _
        $region44: #{densenet_forward.6} parent=11 // pred_fallthru
          _
        // Predicated region
        $region45: #{densenet_forward.6} parent=11 // pred_check
          %p384 = pneg %p235
        $region46: #{densenet_forward.6} parent=11 // pred_check_branch
          %386 = sbr.rel (%p384) target = $region48
        $region47: #{densenet_forward.6} parent=11 // pred_region
          _
        $region48: #{densenet_forward.6} parent=11 // pred_fallthru
          _
        // Predicated region
        $region49: #{densenet_forward.6} parent=11 // pred_check
          %p387 = pneg %p256
        $region50: #{densenet_forward.6} parent=11 // pred_check_branch
          %389 = sbr.rel (%p387) target = $region52
        $region51: #{densenet_forward.6} parent=11 // pred_region
          _
        $region52: #{densenet_forward.6} parent=11 // pred_fallthru
          _
        // Predicated region
        $region53: #{densenet_forward.6} parent=11 // pred_check
          %p390 = pneg %p277
        $region54: #{densenet_forward.6} parent=11 // pred_check_branch
          %392 = sbr.rel (%p390) target = $region56
        $region55: #{densenet_forward.6} parent=11 // pred_region
          _
        $region56: #{densenet_forward.6} parent=11 // pred_fallthru
          _
        // Predicated region
        $region57: #{densenet_forward.6} parent=11 // pred_check
          %p393 = pneg %p298
        $region58: #{densenet_forward.6} parent=11 // pred_check_branch
          %395 = sbr.rel (%p393) target = $region60
        $region59: #{densenet_forward.6} parent=11 // pred_region
          _
        $region60: #{densenet_forward.6} parent=11 // pred_fallthru
          _
        // Predicated region
        $region61: #{densenet_forward.6} parent=11 // pred_check
          %p396 = pneg %p319
        $region62: #{densenet_forward.6} parent=11 // pred_check_branch
          %398 = sbr.rel (%p396) target = $region64
        $region63: #{densenet_forward.6} parent=11 // pred_region
          _
        $region64: #{densenet_forward.6} parent=11 // pred_fallthru
          _
      $region12: #{densenet_forward.6} parent=5 // pred_fallthru
        _
      %p399 = scmp.lt.s32.totalorder %s20, 2
      // Predicated region
      $region65: #{densenet_forward.6} parent=5 // pred_check
        %p400 = pneg %p399
      $region66: #{densenet_forward.6} parent=5 // pred_check_branch
        %402 = sbr.rel (%p400) target = $region68
      $region67: #{densenet_forward.6} parent=5 // pred_region
        // Predicated region
        $region69: #{densenet_forward.6} parent=67 // pred_check
          %p403 = pneg %p61
        $region70: #{densenet_forward.6} parent=67 // pred_check_branch
          %405 = sbr.rel (%p403) target = $region72
        $region71: #{densenet_forward.6} parent=67 // pred_region
          %s406 = sand.u32 %s51, 1
          %s407 = sand.u32 %s51, 1
          %s408 = smul.addr %s407, 16
          %s409 = scalar_lea.vmem [#allocation3], %s408
          %s410 = smul.addr %s20, 8
          %s411 = scalar_lea.vmem %s1, %s410
          // Predicated region
          $region73: #{densenet_forward.6} parent=71 // pred_check
            _
          $region74: #{densenet_forward.6} parent=71 // pred_check_branch
            %413 = sbr.rel (0) target = $region76
          $region75: #{densenet_forward.6} parent=71 // pred_region
            // Predicated region
            $region77: #{densenet_forward.6} parent=75 // pred_check
              _
            $region78: #{densenet_forward.6} parent=75 // pred_check_branch
              %415 = sbr.rel (0) target = $region80
            $region79: #{densenet_forward.6} parent=75 // pred_region
              // Predicated region
              $region92: #{densenet_forward.6} parent=79 // pred_check
                _
              $region93: #{densenet_forward.6} parent=79 // pred_check_branch
                %432 = sbr.rel (0) target = $region95
              $region94: #{densenet_forward.6} parent=79 // pred_region
                loop: start=0, step=1, limit=1
                $region96: #{densenet_forward.6} parent=94 // loop_pre_header
                  _
                $region97: #{densenet_forward.6} parent=94 // loop_header
                  %s434 = sphi 0, %s438
                  %p435 = scmp.ge.s32.totalorder %s434, 1
                  %s439 = sphi %s411, %s411
                  %s440 = sphi %s409, %s409
                $region98: #{densenet_forward.6} parent=94 // loop_header_branch
                  %437 = sbr.rel (%p435) target = $region102
                $region99: #{densenet_forward.6} parent=94 // loop_body
                  %v441 = vld [vmem:[%s439] sm:$0xff]
                  %442 = vst [vmem:[%s440] sm:$0xff] %v441
                  %v443 = vld [vmem:[%s439 + $0x10] sm:$0xff]
                  %444 = vst [vmem:[%s440 + $0x8] sm:$0xff] %v443
                $region100: #{densenet_forward.6} parent=94 // loop_footer
                  %s438 = sadd.s32 1, %s434
                $region101: #{densenet_forward.6} parent=94 // loop_footer_branch
                  %433 = sbr.rel target = $region97
                $region102: #{densenet_forward.6} parent=94 // loop_exit
                  _
              $region95: #{densenet_forward.6} parent=79 // pred_fallthru
                _
              // Predicated region
              $region103: #{densenet_forward.6} parent=79 // pred_check
                _
              $region104: #{densenet_forward.6} parent=79 // pred_check_branch
                %446 = sbr.rel target = $region106
              $region105: #{densenet_forward.6} parent=79 // pred_region
                _
              $region106: #{densenet_forward.6} parent=79 // pred_fallthru
                _
            $region80: #{densenet_forward.6} parent=75 // pred_fallthru
              _
            // Predicated region
            $region81: #{densenet_forward.6} parent=75 // pred_check
              _
            $region82: #{densenet_forward.6} parent=75 // pred_check_branch
              %417 = sbr.rel target = $region84
            $region83: #{densenet_forward.6} parent=75 // pred_region
              loop: start=0, step=1, limit=1
              $region85: #{densenet_forward.6} parent=83 // loop_pre_header
                _
              $region86: #{densenet_forward.6} parent=83 // loop_header
                %s420 = sphi 0, %s424
                %p421 = scmp.ge.s32.totalorder %s420, 1
                %s425 = sphi %s411, %s411
                %s426 = sphi %s409, %s409
              $region87: #{densenet_forward.6} parent=83 // loop_header_branch
                %423 = sbr.rel (%p421) target = $region91
              $region88: #{densenet_forward.6} parent=83 // loop_body
                %v427 = vld [vmem:[%s425] sm:$0xff]
                %428 = vst [vmem:[%s426] sm:$0xff] %v427
                %v429 = vld [vmem:[%s425 + $0x10] sm:$0xff]
                %430 = vst [vmem:[%s426 + $0x8] sm:$0xff] %v429
              $region89: #{densenet_forward.6} parent=83 // loop_footer
                %s424 = sadd.s32 1, %s420
              $region90: #{densenet_forward.6} parent=83 // loop_footer_branch
                %419 = sbr.rel target = $region86
              $region91: #{densenet_forward.6} parent=83 // loop_exit
                _
            $region84: #{densenet_forward.6} parent=75 // pred_fallthru
              _
          $region76: #{densenet_forward.6} parent=71 // pred_fallthru
            _
          %447 = vnop
        $region72: #{densenet_forward.6} parent=67 // pred_fallthru
          _
      $region68: #{densenet_forward.6} parent=5 // pred_fallthru
        _
      %p448 = scmp.le.s32.totalorder 1, %s20
      %p449 = scmp.lt.s32.totalorder %s20, 3
      %p450 = pnand %p448, %p449
      %p451 = pneg %p450
      // Predicated region
      $region107: #{densenet_forward.6} parent=5 // pred_check
        _
      $region108: #{densenet_forward.6} parent=5 // pred_check_branch
        %453 = sbr.rel (%p450) target = $region110
      $region109: #{densenet_forward.6} parent=5 // pred_region
        %s454 = ssub.s32 %s20, 1
        %s455 = sand.u32 %s54, 1
        %s456 = sand.u32 %s54, 1
        %s457 = smul.addr %s456, 16
        %s458 = scalar_lea.vmem [#allocation3], %s457
        // Predicated region
        $region111: #{densenet_forward.6} parent=109 // pred_check
          %p459 = pneg %p67
        $region112: #{densenet_forward.6} parent=109 // pred_check_branch
          %461 = sbr.rel (%p459) target = $region114
        $region113: #{densenet_forward.6} parent=109 // pred_region
          _
        $region114: #{densenet_forward.6} parent=109 // pred_fallthru
          _
        %p462 = pneg %p41
        %p463 = pneg %p38
        %s464 = sand.u32 %s54, 1
        %s465 = sand.u32 %s54, 1
        %s466 = smul.addr %s465, 16
        %s467 = scalar_lea.vmem [#allocation3], %s466
        %p468 = pneg %p67
        %p469 = pneg %p64
        %p470 = pneg %p88
        %p471 = pneg %p85
        %p472 = pneg %p109
        %p473 = pneg %p106
        %p474 = pneg %p130
        %p475 = pneg %p127
        %p476 = pneg %p151
        %p477 = pneg %p148
        %p478 = pneg %p172
        %p479 = pneg %p169
        %p480 = pneg %p193
        %p481 = pneg %p190
        %p482 = pneg %p214
        %p483 = pneg %p211
        %p484 = pneg %p235
        %p485 = pneg %p232
        %p486 = pneg %p256
        %p487 = pneg %p253
        %p488 = pneg %p277
        %p489 = pneg %p274
        %p490 = pneg %p298
        %p491 = pneg %p295
        %p492 = pneg %p319
        %p493 = pneg %p316
        %p494 = pneg %p345
        %p495 = pneg %p342
        %s496 = sand.u32 %s332, 1
        %s497 = sand.u32 %s332, 1
        %s498 = smul.addr %s497, 32
        %s499 = scalar_lea.vmem [#allocation4], %s498
        %v501 = vld [vmem:[%s0] sm:$0x1]
        %502 = vst [vmem:[#allocation2] sm:$0xff] 0
        %vm503 = vcmask 162816
        %504 = vst.msk [vmem:[#allocation2 + $0x8] sm:$0xff] %vm503, 0
        %v505 = vld [vmem:[%s458] sm:$0xff]
        %v506 = vld [vmem:[%s458 + $0x8] sm:$0xff]
        %507 = vst [vmem:[%s499] sm:$0xff] %v505
        %508 = vst [vmem:[%s499 + $0x8] sm:$0xff] %v506
        %v509 = vld [vmem:[%s499] sm:$0xff]
        %v510 = vld [vmem:[%s499 + $0x8] sm:$0xff]
        %v511 = vld [vmem:[%s2] sm:$0xff]
        %v512 = vld [vmem:[%s2 + $0x8] sm:$0xff]
        %514 = vset.pattern.permute.xlu0 0
        %515 = vperm.xlu0 %514, %v511
        %v516 = vpop.permute.xlu0 %515
        %519 = vset.pattern.permute.xlu0 0
        %520 = vperm.xlu0 %519, %v512
        %v521 = vpop.permute.xlu0 %520
        %v523 = vmul.f32 %v509, %v516
        %v524 = vmul.f32 %v510, %v521
        %v525 = vld [vmem:[%s3] sm:$0xff]
        %v526 = vld [vmem:[%s3 + $0x8] sm:$0xff]
        %528 = vset.pattern.permute.xlu0 0
        %529 = vperm.xlu0 %528, %v525
        %v530 = vpop.permute.xlu0 %529
        %533 = vset.pattern.permute.xlu0 0
        %534 = vperm.xlu0 %533, %v526
        %v535 = vpop.permute.xlu0 %534
        %v537 = vadd.f32 %v523, %v530
        %v538 = vadd.f32 %v524, %v535
        %v539 = vmax.f32 %v537, 0.0
        %v540 = vmax.f32 %v538, 0.0
        %v541 = vld [vmem:[%s4] sm:$0xf]
        %v542 = vld [vmem:[%s4 + $0x4] sm:$0xf]
        %v543 = vpack.c.bf16 %v540, %v539
        %v546 = vunpack.c.l.b16 %v541
        %v547 = vunpack.c.l.b16 %v542
        %v548 = vpack.c.b16 %v547, %v546
        %vm549 = vcmask 130048
        %v551 = vsel %vm549, %v548, 0
        %553 = vmatprep.subr.bf16.mxu0 0
        %554 = vmatpush1.bf16.msra.mxu0 %v543
        %555 = vmatprep.subr.bf16.mxu0 0
        %556 = vmatpush1.bf16.msra.mxu0 0
        %557 = vmatprep.subr.bf16.mxu0 0
        %558 = vmatpush1.bf16.msra.mxu0 0
        %559 = vmatprep.subr.bf16.mxu0 0
        %560 = vmatpush1.bf16.msra.mxu0 0
        %561 = vmatprep.subr.bf16.mxu0 0
        %562 = vmatpush1.bf16.msra.mxu0 0
        %563 = vmatprep.subr.bf16.mxu0 0
        %564 = vmatpush1.bf16.msra.mxu0 0
        %565 = vmatprep.subr.bf16.mxu0 0
        %566 = vmatpush1.bf16.msra.mxu0 0
        %567 = vmatprep.subr.bf16.mxu0 0
        %568 = vmatpush1.bf16.msra.mxu0 0
        %569 = vmatprep.subr.bf16.mxu0 0
        %570 = vmatpush1.bf16.msra.mxu0 0
        %571 = vmatprep.subr.bf16.mxu0 0
        %572 = vmatpush1.bf16.msra.mxu0 0
        %573 = vmatprep.subr.bf16.mxu0 0
        %574 = vmatpush1.bf16.msra.mxu0 0
        %575 = vmatprep.subr.bf16.mxu0 0
        %576 = vmatpush1.bf16.msra.mxu0 0
        %577 = vmatprep.subr.bf16.mxu0 0
        %578 = vmatpush1.bf16.msra.mxu0 0
        %579 = vmatprep.subr.bf16.mxu0 0
        %580 = vmatpush1.bf16.msra.mxu0 0
        %581 = vmatprep.subr.bf16.mxu0 0
        %582 = vmatpush1.bf16.msra.mxu0 0
        %583 = vmatprep.subr.bf16.mxu0 0
        %584 = vmatpush1.bf16.msra.mxu0 0
        %585 = vmatprep.mubr.bf16.mxu0 0
        %586 = vmatmul.mubr.bf16.gmra.mrb[0].mxu0 %v551
        %v587 = vpop.f32.mrb[0].mxu0
        %v588 = vadd.f32 0.0, %v587
        %v589 = vpop.f32.mrb[0].mxu0
        %v590 = vpop.f32.mrb[0].mxu0
        %v591 = vadd.f32 0.0, %v590
        %v592 = vpop.f32.mrb[0].mxu0
        %593 = vdwg.mxu0
        %v594 = vld [vmem:[%s5] sm:$0xff]
        %v595 = vld [vmem:[%s5 + $0x8] sm:$0xff]
        %597 = vset.pattern.permute.xlu0 0
        %598 = vperm.xlu0 %597, %v594
        %v599 = vpop.permute.xlu0 %598
        %602 = vset.pattern.permute.xlu0 0
        %603 = vperm.xlu0 %602, %v595
        %v604 = vpop.permute.xlu0 %603
        %v606 = vmul.f32 %v588, %v599
        %v607 = vmul.f32 %v591, %v604
        %v608 = vld [vmem:[%s6] sm:$0xff]
        %v609 = vld [vmem:[%s6 + $0x8] sm:$0xff]
        %611 = vset.pattern.permute.xlu0 0
        %612 = vperm.xlu0 %611, %v608
        %v613 = vpop.permute.xlu0 %612
        %616 = vset.pattern.permute.xlu0 0
        %617 = vperm.xlu0 %616, %v609
        %v618 = vpop.permute.xlu0 %617
        %v620 = vadd.f32 %v606, %v613
        %v621 = vadd.f32 %v607, %v618
        %v622 = vmax.f32 %v620, 0.0
        %v623 = vmax.f32 %v621, 0.0
        %v625 = vlaneseq
        %v626 = vshrl.u32 %v625, 7
        %v627 = vsub.s32 0, %v626
        %v628 = vrot.slane %v501, %v627
        %v630 = vmul.f32 %v622, %v628
        %v631 = vmul.f32 %v623, %v628
        %v632 = vpack.c.bf16 %v631, %v630
        %634 = vrot.lane.b32.xlu0 %v632, 10
        %v635 = vpop.permute.xlu0 %634
        %vm637 = vcmask 1047632
        %638 = vst.msk [vmem:[#allocation2] sm:$0xff] %vm637, %v635
        %vm639 = vcmask 80896
        %640 = vst.msk [vmem:[#allocation2 + $0x8] sm:$0xff] %vm639, %v635
        %v641 = vld [vmem:[#allocation2] sm:$0xff]
        %v642 = vld [vmem:[%s7] sm:$0xf]
        %v643 = vld [vmem:[#allocation2 + $0x8] sm:$0xff]
        %s644 = scalar_lea.vmem %s7, 4
        %v645 = vld [vmem:[%s644] sm:$0xf]
        %648 = vrot.lane.b32.xlu0 %v641, 127
        %v649 = vpop.permute.xlu0 %648
        %650 = vrot.lane.b32.xlu0 %v643, 127
        %v651 = vpop.permute.xlu0 %650
        %vm652 = vcmask 1039360
        %v653 = vsel %vm652, %v649, %v651
        %v656 = vsel %vm549, %v645, 0
        %658 = vmatprep.subr.bf16.mxu0 0
        %659 = vmatpush1.bf16.msra.mxu0 %v653
        %660 = vmatprep.subr.bf16.mxu0 0
        %661 = vmatpush1.bf16.msra.mxu0 0
        %662 = vmatprep.subr.bf16.mxu0 0
        %663 = vmatpush1.bf16.msra.mxu0 0
        %664 = vmatprep.subr.bf16.mxu0 0
        %665 = vmatpush1.bf16.msra.mxu0 0
        %666 = vmatprep.subr.bf16.mxu0 0
        %667 = vmatpush1.bf16.msra.mxu0 0
        %668 = vmatprep.subr.bf16.mxu0 0
        %669 = vmatpush1.bf16.msra.mxu0 0
        %670 = vmatprep.subr.bf16.mxu0 0
        %671 = vmatpush1.bf16.msra.mxu0 0
        %672 = vmatprep.subr.bf16.mxu0 0
        %673 = vmatpush1.bf16.msra.mxu0 0
        %674 = vmatprep.subr.bf16.mxu0 0
        %675 = vmatpush1.bf16.msra.mxu0 0
        %676 = vmatprep.subr.bf16.mxu0 0
        %677 = vmatpush1.bf16.msra.mxu0 0
        %678 = vmatprep.subr.bf16.mxu0 0
        %679 = vmatpush1.bf16.msra.mxu0 0
        %680 = vmatprep.subr.bf16.mxu0 0
        %681 = vmatpush1.bf16.msra.mxu0 0
        %682 = vmatprep.subr.bf16.mxu0 0
        %683 = vmatpush1.bf16.msra.mxu0 0
        %684 = vmatprep.subr.bf16.mxu0 0
        %685 = vmatpush1.bf16.msra.mxu0 0
        %686 = vmatprep.subr.bf16.mxu0 0
        %687 = vmatpush1.bf16.msra.mxu0 0
        %688 = vmatprep.subr.bf16.mxu0 0
        %689 = vmatpush1.bf16.msra.mxu0 0
        %690 = vmatprep.mubr.bf16.mxu0 0
        %691 = vmatmul.mubr.bf16.gmra.mrb[0].mxu0 %v656
        %v692 = vpop.f32.mrb[0].mxu0
        %v693 = vadd.f32 0.0, %v692
        %v694 = vpop.f32.mrb[0].mxu0
        %v695 = vpop.f32.mrb[0].mxu0
        %v696 = vpop.f32.mrb[0].mxu0
        %697 = vdwg.mxu0
        %v699 = vsel %vm549, %v642, 0
        %701 = vmatprep.subr.bf16.mxu0 0
        %702 = vmatpush1.bf16.msra.mxu0 %v641
        %703 = vmatprep.subr.bf16.mxu0 0
        %704 = vmatpush1.bf16.msra.mxu0 0
        %705 = vmatprep.subr.bf16.mxu0 0
        %706 = vmatpush1.bf16.msra.mxu0 0
        %707 = vmatprep.subr.bf16.mxu0 0
        %708 = vmatpush1.bf16.msra.mxu0 0
        %709 = vmatprep.subr.bf16.mxu0 0
        %710 = vmatpush1.bf16.msra.mxu0 0
        %711 = vmatprep.subr.bf16.mxu0 0
        %712 = vmatpush1.bf16.msra.mxu0 0
        %713 = vmatprep.subr.bf16.mxu0 0
        %714 = vmatpush1.bf16.msra.mxu0 0
        %715 = vmatprep.subr.bf16.mxu0 0
        %716 = vmatpush1.bf16.msra.mxu0 0
        %717 = vmatprep.subr.bf16.mxu0 0
        %718 = vmatpush1.bf16.msra.mxu0 0
        %719 = vmatprep.subr.bf16.mxu0 0
        %720 = vmatpush1.bf16.msra.mxu0 0
        %721 = vmatprep.subr.bf16.mxu0 0
        %722 = vmatpush1.bf16.msra.mxu0 0
        %723 = vmatprep.subr.bf16.mxu0 0
        %724 = vmatpush1.bf16.msra.mxu0 0
        %725 = vmatprep.subr.bf16.mxu0 0
        %726 = vmatpush1.bf16.msra.mxu0 0
        %727 = vmatprep.subr.bf16.mxu0 0
        %728 = vmatpush1.bf16.msra.mxu0 0
        %729 = vmatprep.subr.bf16.mxu0 0
        %730 = vmatpush1.bf16.msra.mxu0 0
        %731 = vmatprep.subr.bf16.mxu0 0
        %732 = vmatpush1.bf16.msra.mxu0 0
        %733 = vmatprep.mubr.bf16.mxu0 0
        %734 = vmatmul.mubr.bf16.gmra.mrb[0].mxu0 %v699
        %v735 = vpop.f32.mrb[0].mxu0
        %v736 = vadd.f32 %v693, %v735
        %v737 = vpop.f32.mrb[0].mxu0
        %v738 = vpop.f32.mrb[0].mxu0
        %v739 = vpop.f32.mrb[0].mxu0
        %740 = vdwg.mxu0
        %s741 = scalar_lea.vmem %s7, 8
        %v742 = vld [vmem:[%s741] sm:$0xf]
        %743 = vrot.lane.b32.xlu0 %v641, 126
        %v744 = vpop.permute.xlu0 %743
        %745 = vrot.lane.b32.xlu0 %v643, 126
        %v746 = vpop.permute.xlu0 %745
        %vm747 = vcmask 1031168
        %v748 = vsel %vm747, %v744, %v746
        %v751 = vsel %vm549, %v742, 0
        %753 = vmatprep.subr.bf16.mxu0 0
        %754 = vmatpush1.bf16.msra.mxu0 %v748
        %755 = vmatprep.subr.bf16.mxu0 0
        %756 = vmatpush1.bf16.msra.mxu0 0
        %757 = vmatprep.subr.bf16.mxu0 0
        %758 = vmatpush1.bf16.msra.mxu0 0
        %759 = vmatprep.subr.bf16.mxu0 0
        %760 = vmatpush1.bf16.msra.mxu0 0
        %761 = vmatprep.subr.bf16.mxu0 0
        %762 = vmatpush1.bf16.msra.mxu0 0
        %763 = vmatprep.subr.bf16.mxu0 0
        %764 = vmatpush1.bf16.msra.mxu0 0
        %765 = vmatprep.subr.bf16.mxu0 0
        %766 = vmatpush1.bf16.msra.mxu0 0
        %767 = vmatprep.subr.bf16.mxu0 0
        %768 = vmatpush1.bf16.msra.mxu0 0
        %769 = vmatprep.subr.bf16.mxu0 0
        %770 = vmatpush1.bf16.msra.mxu0 0
        %771 = vmatprep.subr.bf16.mxu0 0
        %772 = vmatpush1.bf16.msra.mxu0 0
        %773 = vmatprep.subr.bf16.mxu0 0
        %774 = vmatpush1.bf16.msra.mxu0 0
        %775 = vmatprep.subr.bf16.mxu0 0
        %776 = vmatpush1.bf16.msra.mxu0 0
        %777 = vmatprep.subr.bf16.mxu0 0
        %778 = vmatpush1.bf16.msra.mxu0 0
        %779 = vmatprep.subr.bf16.mxu0 0
        %780 = vmatpush1.bf16.msra.mxu0 0
        %781 = vmatprep.subr.bf16.mxu0 0
        %782 = vmatpush1.bf16.msra.mxu0 0
        %783 = vmatprep.subr.bf16.mxu0 0
        %784 = vmatpush1.bf16.msra.mxu0 0
        %785 = vmatprep.mubr.bf16.mxu0 0
        %786 = vmatmul.mubr.bf16.gmra.mrb[0].mxu0 %v751
        %v787 = vpop.f32.mrb[0].mxu0
        %v788 = vadd.f32 0.0, %v787
        %v789 = vpop.f32.mrb[0].mxu0
        %v790 = vpop.f32.mrb[0].mxu0
        %v791 = vpop.f32.mrb[0].mxu0
        %792 = vdwg.mxu0
        %v793 = vadd.f32 %v736, %v788
        %s794 = scalar_lea.vmem %s7, 12
        %v795 = vld [vmem:[%s794] sm:$0xf]
        %796 = vrot.lane.b32.xlu0 %v641, 119
        %v797 = vpop.permute.xlu0 %796
        %798 = vrot.lane.b32.xlu0 %v643, 119
        %v799 = vpop.permute.xlu0 %798
        %vm800 = vcmask 973824
        %v801 = vsel %vm800, %v797, %v799
        %v804 = vsel %vm549, %v795, 0
        %806 = vmatprep.subr.bf16.mxu0 0
        %807 = vmatpush1.bf16.msra.mxu0 %v801
        %808 = vmatprep.subr.bf16.mxu0 0
        %809 = vmatpush1.bf16.msra.mxu0 0
        %810 = vmatprep.subr.bf16.mxu0 0
        %811 = vmatpush1.bf16.msra.mxu0 0
        %812 = vmatprep.subr.bf16.mxu0 0
        %813 = vmatpush1.bf16.msra.mxu0 0
        %814 = vmatprep.subr.bf16.mxu0 0
        %815 = vmatpush1.bf16.msra.mxu0 0
        %816 = vmatprep.subr.bf16.mxu0 0
        %817 = vmatpush1.bf16.msra.mxu0 0
        %818 = vmatprep.subr.bf16.mxu0 0
        %819 = vmatpush1.bf16.msra.mxu0 0
        %820 = vmatprep.subr.bf16.mxu0 0
        %821 = vmatpush1.bf16.msra.mxu0 0
        %822 = vmatprep.subr.bf16.mxu0 0
        %823 = vmatpush1.bf16.msra.mxu0 0
        %824 = vmatprep.subr.bf16.mxu0 0
        %825 = vmatpush1.bf16.msra.mxu0 0
        %826 = vmatprep.subr.bf16.mxu0 0
        %827 = vmatpush1.bf16.msra.mxu0 0
        %828 = vmatprep.subr.bf16.mxu0 0
        %829 = vmatpush1.bf16.msra.mxu0 0
        %830 = vmatprep.subr.bf16.mxu0 0
        %831 = vmatpush1.bf16.msra.mxu0 0
        %832 = vmatprep.subr.bf16.mxu0 0
        %833 = vmatpush1.bf16.msra.mxu0 0
        %834 = vmatprep.subr.bf16.mxu0 0
        %835 = vmatpush1.bf16.msra.mxu0 0
        %836 = vmatprep.subr.bf16.mxu0 0
        %837 = vmatpush1.bf16.msra.mxu0 0
        %838 = vmatprep.mubr.bf16.mxu0 0
        %839 = vmatmul.mubr.bf16.gmra.mrb[0].mxu0 %v804
        %v840 = vpop.f32.mrb[0].mxu0
        %v841 = vadd.f32 0.0, %v840
        %v842 = vpop.f32.mrb[0].mxu0
        %v843 = vpop.f32.mrb[0].mxu0
        %v844 = vpop.f32.mrb[0].mxu0
        %845 = vdwg.mxu0
        %v846 = vadd.f32 %v793, %v841
        %s847 = scalar_lea.vmem %s7, 16
        %v848 = vld [vmem:[%s847] sm:$0xf]
        %849 = vrot.lane.b32.xlu0 %v641, 118
        %v850 = vpop.permute.xlu0 %849
        %851 = vrot.lane.b32.xlu0 %v643, 118
        %v852 = vpop.permute.xlu0 %851
        %vm853 = vcmask 965632
        %v854 = vsel %vm853, %v850, %v852
        %v857 = vsel %vm549, %v848, 0
        %859 = vmatprep.subr.bf16.mxu0 0
        %860 = vmatpush1.bf16.msra.mxu0 %v854
        %861 = vmatprep.subr.bf16.mxu0 0
        %862 = vmatpush1.bf16.msra.mxu0 0
        %863 = vmatprep.subr.bf16.mxu0 0
        %864 = vmatpush1.bf16.msra.mxu0 0
        %865 = vmatprep.subr.bf16.mxu0 0
        %866 = vmatpush1.bf16.msra.mxu0 0
        %867 = vmatprep.subr.bf16.mxu0 0
        %868 = vmatpush1.bf16.msra.mxu0 0
        %869 = vmatprep.subr.bf16.mxu0 0
        %870 = vmatpush1.bf16.msra.mxu0 0
        %871 = vmatprep.subr.bf16.mxu0 0
        %872 = vmatpush1.bf16.msra.mxu0 0
        %873 = vmatprep.subr.bf16.mxu0 0
        %874 = vmatpush1.bf16.msra.mxu0 0
        %875 = vmatprep.subr.bf16.mxu0 0
        %876 = vmatpush1.bf16.msra.mxu0 0
        %877 = vmatprep.subr.bf16.mxu0 0
        %878 = vmatpush1.bf16.msra.mxu0 0
        %879 = vmatprep.subr.bf16.mxu0 0
        %880 = vmatpush1.bf16.msra.mxu0 0
        %881 = vmatprep.subr.bf16.mxu0 0
        %882 = vmatpush1.bf16.msra.mxu0 0
        %883 = vmatprep.subr.bf16.mxu0 0
        %884 = vmatpush1.bf16.msra.mxu0 0
        %885 = vmatprep.subr.bf16.mxu0 0
        %886 = vmatpush1.bf16.msra.mxu0 0
        %887 = vmatprep.subr.bf16.mxu0 0
        %888 = vmatpush1.bf16.msra.mxu0 0
        %889 = vmatprep.subr.bf16.mxu0 0
        %890 = vmatpush1.bf16.msra.mxu0 0
        %891 = vmatprep.mubr.bf16.mxu0 0
        %892 = vmatmul.mubr.bf16.gmra.mrb[0].mxu0 %v857
        %v893 = vpop.f32.mrb[0].mxu0
        %v894 = vadd.f32 0.0, %v893
        %v895 = vpop.f32.mrb[0].mxu0
        %v896 = vpop.f32.mrb[0].mxu0
        %v897 = vpop.f32.mrb[0].mxu0
        %898 = vdwg.mxu0
        %v899 = vadd.f32 %v846, %v894
        %s900 = scalar_lea.vmem %s7, 20
        %v901 = vld [vmem:[%s900] sm:$0xf]
        %902 = vrot.lane.b32.xlu0 %v641, 117
        %v903 = vpop.permute.xlu0 %902
        %904 = vrot.lane.b32.xlu0 %v643, 117
        %v905 = vpop.permute.xlu0 %904
        %vm906 = vcmask 957440
        %v907 = vsel %vm906, %v903, %v905
        %v910 = vsel %vm549, %v901, 0
        %912 = vmatprep.subr.bf16.mxu0 0
        %913 = vmatpush1.bf16.msra.mxu0 %v907
        %914 = vmatprep.subr.bf16.mxu0 0
        %915 = vmatpush1.bf16.msra.mxu0 0
        %916 = vmatprep.subr.bf16.mxu0 0
        %917 = vmatpush1.bf16.msra.mxu0 0
        %918 = vmatprep.subr.bf16.mxu0 0
        %919 = vmatpush1.bf16.msra.mxu0 0
        %920 = vmatprep.subr.bf16.mxu0 0
        %921 = vmatpush1.bf16.msra.mxu0 0
        %922 = vmatprep.subr.bf16.mxu0 0
        %923 = vmatpush1.bf16.msra.mxu0 0
        %924 = vmatprep.subr.bf16.mxu0 0
        %925 = vmatpush1.bf16.msra.mxu0 0
        %926 = vmatprep.subr.bf16.mxu0 0
        %927 = vmatpush1.bf16.msra.mxu0 0
        %928 = vmatprep.subr.bf16.mxu0 0
        %929 = vmatpush1.bf16.msra.mxu0 0
        %930 = vmatprep.subr.bf16.mxu0 0
        %931 = vmatpush1.bf16.msra.mxu0 0
        %932 = vmatprep.subr.bf16.mxu0 0
        %933 = vmatpush1.bf16.msra.mxu0 0
        %934 = vmatprep.subr.bf16.mxu0 0
        %935 = vmatpush1.bf16.msra.mxu0 0
        %936 = vmatprep.subr.bf16.mxu0 0
        %937 = vmatpush1.bf16.msra.mxu0 0
        %938 = vmatprep.subr.bf16.mxu0 0
        %939 = vmatpush1.bf16.msra.mxu0 0
        %940 = vmatprep.subr.bf16.mxu0 0
        %941 = vmatpush1.bf16.msra.mxu0 0
        %942 = vmatprep.subr.bf16.mxu0 0
        %943 = vmatpush1.bf16.msra.mxu0 0
        %944 = vmatprep.mubr.bf16.mxu0 0
        %945 = vmatmul.mubr.bf16.gmra.mrb[0].mxu0 %v910
        %v946 = vpop.f32.mrb[0].mxu0
        %v947 = vadd.f32 0.0, %v946
        %v948 = vpop.f32.mrb[0].mxu0
        %v949 = vpop.f32.mrb[0].mxu0
        %v950 = vpop.f32.mrb[0].mxu0
        %951 = vdwg.mxu0
        %v952 = vadd.f32 %v899, %v947
        %s953 = scalar_lea.vmem %s7, 24
        %v954 = vld [vmem:[%s953] sm:$0xf]
        %955 = vrot.lane.b32.xlu0 %v641, 110
        %v956 = vpop.permute.xlu0 %955
        %957 = vrot.lane.b32.xlu0 %v643, 110
        %v958 = vpop.permute.xlu0 %957
        %vm959 = vcmask 900096
        %v960 = vsel %vm959, %v956, %v958
        %v963 = vsel %vm549, %v954, 0
        %965 = vmatprep.subr.bf16.mxu0 0
        %966 = vmatpush1.bf16.msra.mxu0 %v960
        %967 = vmatprep.subr.bf16.mxu0 0
        %968 = vmatpush1.bf16.msra.mxu0 0
        %969 = vmatprep.subr.bf16.mxu0 0
        %970 = vmatpush1.bf16.msra.mxu0 0
        %971 = vmatprep.subr.bf16.mxu0 0
        %972 = vmatpush1.bf16.msra.mxu0 0
        %973 = vmatprep.subr.bf16.mxu0 0
        %974 = vmatpush1.bf16.msra.mxu0 0
        %975 = vmatprep.subr.bf16.mxu0 0
        %976 = vmatpush1.bf16.msra.mxu0 0
        %977 = vmatprep.subr.bf16.mxu0 0
        %978 = vmatpush1.bf16.msra.mxu0 0
        %979 = vmatprep.subr.bf16.mxu0 0
        %980 = vmatpush1.bf16.msra.mxu0 0
        %981 = vmatprep.subr.bf16.mxu0 0
        %982 = vmatpush1.bf16.msra.mxu0 0
        %983 = vmatprep.subr.bf16.mxu0 0
        %984 = vmatpush1.bf16.msra.mxu0 0
        %985 = vmatprep.subr.bf16.mxu0 0
        %986 = vmatpush1.bf16.msra.mxu0 0
        %987 = vmatprep.subr.bf16.mxu0 0
        %988 = vmatpush1.bf16.msra.mxu0 0
        %989 = vmatprep.subr.bf16.mxu0 0
        %990 = vmatpush1.bf16.msra.mxu0 0
        %991 = vmatprep.subr.bf16.mxu0 0
        %992 = vmatpush1.bf16.msra.mxu0 0
        %993 = vmatprep.subr.bf16.mxu0 0
        %994 = vmatpush1.bf16.msra.mxu0 0
        %995 = vmatprep.subr.bf16.mxu0 0
        %996 = vmatpush1.bf16.msra.mxu0 0
        %997 = vmatprep.mubr.bf16.mxu0 0
        %998 = vmatmul.mubr.bf16.gmra.mrb[0].mxu0 %v963
        %v999 = vpop.f32.mrb[0].mxu0
        %v1000 = vadd.f32 0.0, %v999
        %v1001 = vpop.f32.mrb[0].mxu0
        %v1002 = vpop.f32.mrb[0].mxu0
        %v1003 = vpop.f32.mrb[0].mxu0
        %1004 = vdwg.mxu0
        %v1005 = vadd.f32 %v952, %v1000
        %s1006 = scalar_lea.vmem %s7, 28
        %v1007 = vld [vmem:[%s1006] sm:$0xf]
        %1008 = vrot.lane.b32.xlu0 %v641, 109
        %v1009 = vpop.permute.xlu0 %1008
        %1010 = vrot.lane.b32.xlu0 %v643, 109
        %v1011 = vpop.permute.xlu0 %1010
        %vm1012 = vcmask 891904
        %v1013 = vsel %vm1012, %v1009, %v1011
        %v1016 = vsel %vm549, %v1007, 0
        %1018 = vmatprep.subr.bf16.mxu0 0
        %1019 = vmatpush1.bf16.msra.mxu0 %v1013
        %1020 = vmatprep.subr.bf16.mxu0 0
        %1021 = vmatpush1.bf16.msra.mxu0 0
        %1022 = vmatprep.subr.bf16.mxu0 0
        %1023 = vmatpush1.bf16.msra.mxu0 0
        %1024 = vmatprep.subr.bf16.mxu0 0
        %1025 = vmatpush1.bf16.msra.mxu0 0
        %1026 = vmatprep.subr.bf16.mxu0 0
        %1027 = vmatpush1.bf16.msra.mxu0 0
        %1028 = vmatprep.subr.bf16.mxu0 0
        %1029 = vmatpush1.bf16.msra.mxu0 0
        %1030 = vmatprep.subr.bf16.mxu0 0
        %1031 = vmatpush1.bf16.msra.mxu0 0
        %1032 = vmatprep.subr.bf16.mxu0 0
        %1033 = vmatpush1.bf16.msra.mxu0 0
        %1034 = vmatprep.subr.bf16.mxu0 0
        %1035 = vmatpush1.bf16.msra.mxu0 0
        %1036 = vmatprep.subr.bf16.mxu0 0
        %1037 = vmatpush1.bf16.msra.mxu0 0
        %1038 = vmatprep.subr.bf16.mxu0 0
        %1039 = vmatpush1.bf16.msra.mxu0 0
        %1040 = vmatprep.subr.bf16.mxu0 0
        %1041 = vmatpush1.bf16.msra.mxu0 0
        %1042 = vmatprep.subr.bf16.mxu0 0
        %1043 = vmatpush1.bf16.msra.mxu0 0
        %1044 = vmatprep.subr.bf16.mxu0 0
        %1045 = vmatpush1.bf16.msra.mxu0 0
        %1046 = vmatprep.subr.bf16.mxu0 0
        %1047 = vmatpush1.bf16.msra.mxu0 0
        %1048 = vmatprep.subr.bf16.mxu0 0
        %1049 = vmatpush1.bf16.msra.mxu0 0
        %1050 = vmatprep.mubr.bf16.mxu0 0
        %1051 = vmatmul.mubr.bf16.gmra.mrb[0].mxu0 %v1016
        %v1052 = vpop.f32.mrb[0].mxu0
        %v1053 = vadd.f32 0.0, %v1052
        %v1054 = vpop.f32.mrb[0].mxu0
        %v1055 = vpop.f32.mrb[0].mxu0
        %v1056 = vpop.f32.mrb[0].mxu0
        %1057 = vdwg.mxu0
        %v1058 = vadd.f32 %v1005, %v1053
        %s1059 = scalar_lea.vmem %s7, 32
        %v1060 = vld [vmem:[%s1059] sm:$0xf]
        %1061 = vrot.lane.b32.xlu0 %v641, 108
        %v1062 = vpop.permute.xlu0 %1061
        %1063 = vrot.lane.b32.xlu0 %v643, 108
        %v1064 = vpop.permute.xlu0 %1063
        %vm1065 = vcmask 883712
        %v1066 = vsel %vm1065, %v1062, %v1064
        %v1069 = vsel %vm549, %v1060, 0
        %1071 = vmatprep.subr.bf16.mxu0 0
        %1072 = vmatpush1.bf16.msra.mxu0 %v1066
        %1073 = vmatprep.subr.bf16.mxu0 0
        %1074 = vmatpush1.bf16.msra.mxu0 0
        %1075 = vmatprep.subr.bf16.mxu0 0
        %1076 = vmatpush1.bf16.msra.mxu0 0
        %1077 = vmatprep.subr.bf16.mxu0 0
        %1078 = vmatpush1.bf16.msra.mxu0 0
        %1079 = vmatprep.subr.bf16.mxu0 0
        %1080 = vmatpush1.bf16.msra.mxu0 0
        %1081 = vmatprep.subr.bf16.mxu0 0
        %1082 = vmatpush1.bf16.msra.mxu0 0
        %1083 = vmatprep.subr.bf16.mxu0 0
        %1084 = vmatpush1.bf16.msra.mxu0 0
        %1085 = vmatprep.subr.bf16.mxu0 0
        %1086 = vmatpush1.bf16.msra.mxu0 0
        %1087 = vmatprep.subr.bf16.mxu0 0
        %1088 = vmatpush1.bf16.msra.mxu0 0
        %1089 = vmatprep.subr.bf16.mxu0 0
        %1090 = vmatpush1.bf16.msra.mxu0 0
        %1091 = vmatprep.subr.bf16.mxu0 0
        %1092 = vmatpush1.bf16.msra.mxu0 0
        %1093 = vmatprep.subr.bf16.mxu0 0
        %1094 = vmatpush1.bf16.msra.mxu0 0
        %1095 = vmatprep.subr.bf16.mxu0 0
        %1096 = vmatpush1.bf16.msra.mxu0 0
        %1097 = vmatprep.subr.bf16.mxu0 0
        %1098 = vmatpush1.bf16.msra.mxu0 0
        %1099 = vmatprep.subr.bf16.mxu0 0
        %1100 = vmatpush1.bf16.msra.mxu0 0
        %1101 = vmatprep.subr.bf16.mxu0 0
        %1102 = vmatpush1.bf16.msra.mxu0 0
        %1103 = vmatprep.mubr.bf16.mxu0 0
        %1104 = vmatmul.mubr.bf16.gmra.mrb[0].mxu0 %v1069
        %v1105 = vpop.f32.mrb[0].mxu0
        %v1106 = vadd.f32 0.0, %v1105
        %v1107 = vpop.f32.mrb[0].mxu0
        %v1108 = vpop.f32.mrb[0].mxu0
        %v1109 = vpop.f32.mrb[0].mxu0
        %1110 = vdwg.mxu0
        %v1111 = vadd.f32 %v1058, %v1106
        %v1112 = vmul.f32 %v1111, %v628
        %1113 = vst [vmem:[%s499 + $0x10] sm:$0xff] %v1112
        %v1114 = vld [vmem:[%s499] sm:$0xff]
        %v1115 = vld [vmem:[%s499 + $0x8] sm:$0xff]
        %v1116 = vld [vmem:[%s499 + $0x10] sm:$0xff]
        %v1117 = vld [vmem:[%s8] sm:$0xff]
        %v1118 = vld [vmem:[%s8 + $0x8] sm:$0xff]
        %v1119 = vld [vmem:[%s8 + $0x10] sm:$0xff]
        %1121 = vset.pattern.permute.xlu0 0
        %1122 = vperm.xlu0 %1121, %v1117
        %v1123 = vpop.permute.xlu0 %1122
        %1126 = vset.pattern.permute.xlu0 0
        %1127 = vperm.xlu0 %1126, %v1118
        %v1128 = vpop.permute.xlu0 %1127
        %1131 = vset.pattern.permute.xlu0 0
        %1132 = vperm.xlu0 %1131, %v1119
        %v1133 = vpop.permute.xlu0 %1132
        %v1135 = vmul.f32 %v1114, %v1123
        %v1136 = vmul.f32 %v1115, %v1128
        %v1137 = vmul.f32 %v1116, %v1133
        %v1138 = vld [vmem:[%s9] sm:$0xff]
        %v1139 = vld [vmem:[%s9 + $0x8] sm:$0xff]
        %v1140 = vld [vmem:[%s9 + $0x10] sm:$0xff]
        %1142 = vset.pattern.permute.xlu0 0
        %1143 = vperm.xlu0 %1142, %v1138
        %v1144 = vpop.permute.xlu0 %1143
        %1147 = vset.pattern.permute.xlu0 0
        %1148 = vperm.xlu0 %1147, %v1139
        %v1149 = vpop.permute.xlu0 %1148
        %1152 = vset.pattern.permute.xlu0 0
        %1153 = vperm.xlu0 %1152, %v1140
        %v1154 = vpop.permute.xlu0 %1153
        %v1156 = vadd.f32 %v1135, %v1144
        %v1157 = vadd.f32 %v1136, %v1149
        %v1158 = vadd.f32 %v1137, %v1154
        %v1159 = vmax.f32 %v1156, 0.0
        %v1160 = vmax.f32 %v1157, 0.0
        %v1161 = vmax.f32 %v1158, 0.0
        %v1162 = vld [vmem:[%s10] sm:$0xf]
        %v1163 = vld [vmem:[%s10 + $0x4] sm:$0xf]
        %v1164 = vpack.c.bf16 %v1160, %v1159
        %v1165 = vpack.c.bf16 %v1161, %v1161
        %v1168 = vunpack.c.l.b16 %v1162
        %v1169 = vunpack.c.l.b16 %v1163
        %v1170 = vpack.c.b16 %v1169, %v1168
        %vm1171 = vcmask 195584
        %v1173 = vsel %vm1171, %v1170, 0
        %vm1175 = vcmask 1043456
        %v1177 = vsel %vm1175, %v1165, 0
        %1179 = vmatprep.subr.bf16.mxu0 0
        %1180 = vmatpush1.bf16.msra.mxu0 %v1164
        %1181 = vmatprep.subr.bf16.mxu0 0
        %1182 = vmatpush1.bf16.msra.mxu0 %v1177
        %1183 = vmatprep.subr.bf16.mxu0 0
        %1184 = vmatpush1.bf16.msra.mxu0 0
        %1185 = vmatprep.subr.bf16.mxu0 0
        %1186 = vmatpush1.bf16.msra.mxu0 0
        %1187 = vmatprep.subr.bf16.mxu0 0
        %1188 = vmatpush1.bf16.msra.mxu0 0
        %1189 = vmatprep.subr.bf16.mxu0 0
        %1190 = vmatpush1.bf16.msra.mxu0 0
        %1191 = vmatprep.subr.bf16.mxu0 0
        %1192 = vmatpush1.bf16.msra.mxu0 0
        %1193 = vmatprep.subr.bf16.mxu0 0
        %1194 = vmatpush1.bf16.msra.mxu0 0
        %1195 = vmatprep.subr.bf16.mxu0 0
        %1196 = vmatpush1.bf16.msra.mxu0 0
        %1197 = vmatprep.subr.bf16.mxu0 0
        %1198 = vmatpush1.bf16.msra.mxu0 0
        %1199 = vmatprep.subr.bf16.mxu0 0
        %1200 = vmatpush1.bf16.msra.mxu0 0
        %1201 = vmatprep.subr.bf16.mxu0 0
        %1202 = vmatpush1.bf16.msra.mxu0 0
        %1203 = vmatprep.subr.bf16.mxu0 0
        %1204 = vmatpush1.bf16.msra.mxu0 0
        %1205 = vmatprep.subr.bf16.mxu0 0
        %1206 = vmatpush1.bf16.msra.mxu0 0
        %1207 = vmatprep.subr.bf16.mxu0 0
        %1208 = vmatpush1.bf16.msra.mxu0 0
        %1209 = vmatprep.subr.bf16.mxu0 0
        %1210 = vmatpush1.bf16.msra.mxu0 0
        %1211 = vmatprep.mubr.bf16.mxu0 0
        %1212 = vmatmul.mubr.bf16.gmra.mrb[0].mxu0 %v1173
        %v1213 = vpop.f32.mrb[0].mxu0
        %v1214 = vadd.f32 0.0, %v1213
        %v1215 = vpop.f32.mrb[0].mxu0
        %v1216 = vpop.f32.mrb[0].mxu0
        %v1217 = vadd.f32 0.0, %v1216
        %v1218 = vpop.f32.mrb[0].mxu0
        %1219 = vdwg.mxu0
        %v1220 = vld [vmem:[%s11] sm:$0xff]
        %v1221 = vld [vmem:[%s11 + $0x8] sm:$0xff]
        %1223 = vset.pattern.permute.xlu0 0
        %1224 = vperm.xlu0 %1223, %v1220
        %v1225 = vpop.permute.xlu0 %1224
        %1228 = vset.pattern.permute.xlu0 0
        %1229 = vperm.xlu0 %1228, %v1221
        %v1230 = vpop.permute.xlu0 %1229
        %v1232 = vmul.f32 %v1214, %v1225
        %v1233 = vmul.f32 %v1217, %v1230
        %v1234 = vld [vmem:[%s12] sm:$0xff]
        %v1235 = vld [vmem:[%s12 + $0x8] sm:$0xff]
        %1237 = vset.pattern.permute.xlu0 0
        %1238 = vperm.xlu0 %1237, %v1234
        %v1239 = vpop.permute.xlu0 %1238
        %1242 = vset.pattern.permute.xlu0 0
        %1243 = vperm.xlu0 %1242, %v1235
        %v1244 = vpop.permute.xlu0 %1243
        %v1246 = vadd.f32 %v1232, %v1239
        %v1247 = vadd.f32 %v1233, %v1244
        %v1248 = vmax.f32 %v1246, 0.0
        %v1249 = vmax.f32 %v1247, 0.0
        %v1250 = vmul.f32 %v1248, %v628
        %v1251 = vmul.f32 %v1249, %v628
        %v1252 = vpack.c.bf16 %v1251, %v1250
        %1254 = vrot.lane.b32.xlu0 %v1252, 10
        %v1255 = vpop.permute.xlu0 %1254
        %1257 = vst.msk [vmem:[#allocation2] sm:$0xff] %vm637, %v1255
        %1258 = vst.msk [vmem:[#allocation2 + $0x8] sm:$0xff] %vm639, %v1255
        %v1259 = vld [vmem:[#allocation2] sm:$0xff]
        %v1260 = vld [vmem:[%s13] sm:$0xf]
        %v1261 = vld [vmem:[#allocation2 + $0x8] sm:$0xff]
        %s1262 = scalar_lea.vmem %s13, 4
        %v1263 = vld [vmem:[%s1262] sm:$0xf]
        %1266 = vrot.lane.b32.xlu0 %v1259, 127
        %v1267 = vpop.permute.xlu0 %1266
        %1268 = vrot.lane.b32.xlu0 %v1261, 127
        %v1269 = vpop.permute.xlu0 %1268
        %v1270 = vsel %vm652, %v1267, %v1269
        %v1273 = vsel %vm549, %v1263, 0
        %1275 = vmatprep.subr.bf16.mxu0 0
        %1276 = vmatpush1.bf16.msra.mxu0 %v1270
        %1277 = vmatprep.subr.bf16.mxu0 0
        %1278 = vmatpush1.bf16.msra.mxu0 0
        %1279 = vmatprep.subr.bf16.mxu0 0
        %1280 = vmatpush1.bf16.msra.mxu0 0
        %1281 = vmatprep.subr.bf16.mxu0 0
        %1282 = vmatpush1.bf16.msra.mxu0 0
        %1283 = vmatprep.subr.bf16.mxu0 0
        %1284 = vmatpush1.bf16.msra.mxu0 0
        %1285 = vmatprep.subr.bf16.mxu0 0
        %1286 = vmatpush1.bf16.msra.mxu0 0
        %1287 = vmatprep.subr.bf16.mxu0 0
        %1288 = vmatpush1.bf16.msra.mxu0 0
        %1289 = vmatprep.subr.bf16.mxu0 0
        %1290 = vmatpush1.bf16.msra.mxu0 0
        %1291 = vmatprep.subr.bf16.mxu0 0
        %1292 = vmatpush1.bf16.msra.mxu0 0
        %1293 = vmatprep.subr.bf16.mxu0 0
        %1294 = vmatpush1.bf16.msra.mxu0 0
        %1295 = vmatprep.subr.bf16.mxu0 0
        %1296 = vmatpush1.bf16.msra.mxu0 0
        %1297 = vmatprep.subr.bf16.mxu0 0
        %1298 = vmatpush1.bf16.msra.mxu0 0
        %1299 = vmatprep.subr.bf16.mxu0 0
        %1300 = vmatpush1.bf16.msra.mxu0 0
        %1301 = vmatprep.subr.bf16.mxu0 0
        %1302 = vmatpush1.bf16.msra.mxu0 0
        %1303 = vmatprep.subr.bf16.mxu0 0
        %1304 = vmatpush1.bf16.msra.mxu0 0
        %1305 = vmatprep.subr.bf16.mxu0 0
        %1306 = vmatpush1.bf16.msra.mxu0 0
        %1307 = vmatprep.mubr.bf16.mxu0 0
        %1308 = vmatmul.mubr.bf16.gmra.mrb[0].mxu0 %v1273
        %v1309 = vpop.f32.mrb[0].mxu0
        %v1310 = vadd.f32 0.0, %v1309
        %v1311 = vpop.f32.mrb[0].mxu0
        %v1312 = vpop.f32.mrb[0].mxu0
        %v1313 = vpop.f32.mrb[0].mxu0
        %1314 = vdwg.mxu0
        %v1316 = vsel %vm549, %v1260, 0
        %1318 = vmatprep.subr.bf16.mxu0 0
        %1319 = vmatpush1.bf16.msra.mxu0 %v1259
        %1320 = vmatprep.subr.bf16.mxu0 0
        %1321 = vmatpush1.bf16.msra.mxu0 0
        %1322 = vmatprep.subr.bf16.mxu0 0
        %1323 = vmatpush1.bf16.msra.mxu0 0
        %1324 = vmatprep.subr.bf16.mxu0 0
        %1325 = vmatpush1.bf16.msra.mxu0 0
        %1326 = vmatprep.subr.bf16.mxu0 0
        %1327 = vmatpush1.bf16.msra.mxu0 0
        %1328 = vmatprep.subr.bf16.mxu0 0
        %1329 = vmatpush1.bf16.msra.mxu0 0
        %1330 = vmatprep.subr.bf16.mxu0 0
        %1331 = vmatpush1.bf16.msra.mxu0 0
        %1332 = vmatprep.subr.bf16.mxu0 0
        %1333 = vmatpush1.bf16.msra.mxu0 0
        %1334 = vmatprep.subr.bf16.mxu0 0
        %1335 = vmatpush1.bf16.msra.mxu0 0
        %1336 = vmatprep.subr.bf16.mxu0 0
        %1337 = vmatpush1.bf16.msra.mxu0 0
        %1338 = vmatprep.subr.bf16.mxu0 0
        %1339 = vmatpush1.bf16.msra.mxu0 0
        %1340 = vmatprep.subr.bf16.mxu0 0
        %1341 = vmatpush1.bf16.msra.mxu0 0
        %1342 = vmatprep.subr.bf16.mxu0 0
        %1343 = vmatpush1.bf16.msra.mxu0 0
        %1344 = vmatprep.subr.bf16.mxu0 0
        %1345 = vmatpush1.bf16.msra.mxu0 0
        %1346 = vmatprep.subr.bf16.mxu0 0
        %1347 = vmatpush1.bf16.msra.mxu0 0
        %1348 = vmatprep.subr.bf16.mxu0 0
        %1349 = vmatpush1.bf16.msra.mxu0 0
        %1350 = vmatprep.mubr.bf16.mxu0 0
        %1351 = vmatmul.mubr.bf16.gmra.mrb[0].mxu0 %v1316
        %v1352 = vpop.f32.mrb[0].mxu0
        %v1353 = vadd.f32 %v1310, %v1352
        %v1354 = vpop.f32.mrb[0].mxu0
        %v1355 = vpop.f32.mrb[0].mxu0
        %v1356 = vpop.f32.mrb[0].mxu0
        %1357 = vdwg.mxu0
        %s1358 = scalar_lea.vmem %s13, 8
        %v1359 = vld [vmem:[%s1358] sm:$0xf]
        %1360 = vrot.lane.b32.xlu0 %v1259, 126
        %v1361 = vpop.permute.xlu0 %1360
        %1362 = vrot.lane.b32.xlu0 %v1261, 126
        %v1363 = vpop.permute.xlu0 %1362
        %v1364 = vsel %vm747, %v1361, %v1363
        %v1367 = vsel %vm549, %v1359, 0
        %1369 = vmatprep.subr.bf16.mxu0 0
        %1370 = vmatpush1.bf16.msra.mxu0 %v1364
        %1371 = vmatprep.subr.bf16.mxu0 0
        %1372 = vmatpush1.bf16.msra.mxu0 0
        %1373 = vmatprep.subr.bf16.mxu0 0
        %1374 = vmatpush1.bf16.msra.mxu0 0
        %1375 = vmatprep.subr.bf16.mxu0 0
        %1376 = vmatpush1.bf16.msra.mxu0 0
        %1377 = vmatprep.subr.bf16.mxu0 0
        %1378 = vmatpush1.bf16.msra.mxu0 0
        %1379 = vmatprep.subr.bf16.mxu0 0
        %1380 = vmatpush1.bf16.msra.mxu0 0
        %1381 = vmatprep.subr.bf16.mxu0 0
        %1382 = vmatpush1.bf16.msra.mxu0 0
        %1383 = vmatprep.subr.bf16.mxu0 0
        %1384 = vmatpush1.bf16.msra.mxu0 0
        %1385 = vmatprep.subr.bf16.mxu0 0
        %1386 = vmatpush1.bf16.msra.mxu0 0
        %1387 = vmatprep.subr.bf16.mxu0 0
        %1388 = vmatpush1.bf16.msra.mxu0 0
        %1389 = vmatprep.subr.bf16.mxu0 0
        %1390 = vmatpush1.bf16.msra.mxu0 0
        %1391 = vmatprep.subr.bf16.mxu0 0
        %1392 = vmatpush1.bf16.msra.mxu0 0
        %1393 = vmatprep.subr.bf16.mxu0 0
        %1394 = vmatpush1.bf16.msra.mxu0 0
        %1395 = vmatprep.subr.bf16.mxu0 0
        %1396 = vmatpush1.bf16.msra.mxu0 0
        %1397 = vmatprep.subr.bf16.mxu0 0
        %1398 = vmatpush1.bf16.msra.mxu0 0
        %1399 = vmatprep.subr.bf16.mxu0 0
        %1400 = vmatpush1.bf16.msra.mxu0 0
        %1401 = vmatprep.mubr.bf16.mxu0 0
        %1402 = vmatmul.mubr.bf16.gmra.mrb[0].mxu0 %v1367
        %v1403 = vpop.f32.mrb[0].mxu0
        %v1404 = vadd.f32 0.0, %v1403
        %v1405 = vpop.f32.mrb[0].mxu0
        %v1406 = vpop.f32.mrb[0].mxu0
        %v1407 = vpop.f32.mrb[0].mxu0
        %1408 = vdwg.mxu0
        %v1409 = vadd.f32 %v1353, %v1404
        %s1410 = scalar_lea.vmem %s13, 12
        %v1411 = vld [vmem:[%s1410] sm:$0xf]
        %1412 = vrot.lane.b32.xlu0 %v1259, 119
        %v1413 = vpop.permute.xlu0 %1412
        %1414 = vrot.lane.b32.xlu0 %v1261, 119
        %v1415 = vpop.permute.xlu0 %1414
        %v1416 = vsel %vm800, %v1413, %v1415
        %v1419 = vsel %vm549, %v1411, 0
        %1421 = vmatprep.subr.bf16.mxu0 0
        %1422 = vmatpush1.bf16.msra.mxu0 %v1416
        %1423 = vmatprep.subr.bf16.mxu0 0
        %1424 = vmatpush1.bf16.msra.mxu0 0
        %1425 = vmatprep.subr.bf16.mxu0 0
        %1426 = vmatpush1.bf16.msra.mxu0 0
        %1427 = vmatprep.subr.bf16.mxu0 0
        %1428 = vmatpush1.bf16.msra.mxu0 0
        %1429 = vmatprep.subr.bf16.mxu0 0
        %1430 = vmatpush1.bf16.msra.mxu0 0
        %1431 = vmatprep.subr.bf16.mxu0 0
        %1432 = vmatpush1.bf16.msra.mxu0 0
        %1433 = vmatprep.subr.bf16.mxu0 0
        %1434 = vmatpush1.bf16.msra.mxu0 0
        %1435 = vmatprep.subr.bf16.mxu0 0
        %1436 = vmatpush1.bf16.msra.mxu0 0
        %1437 = vmatprep.subr.bf16.mxu0 0
        %1438 = vmatpush1.bf16.msra.mxu0 0
        %1439 = vmatprep.subr.bf16.mxu0 0
        %1440 = vmatpush1.bf16.msra.mxu0 0
        %1441 = vmatprep.subr.bf16.mxu0 0
        %1442 = vmatpush1.bf16.msra.mxu0 0
        %1443 = vmatprep.subr.bf16.mxu0 0
        %1444 = vmatpush1.bf16.msra.mxu0 0
        %1445 = vmatprep.subr.bf16.mxu0 0
        %1446 = vmatpush1.bf16.msra.mxu0 0
        %1447 = vmatprep.subr.bf16.mxu0 0
        %1448 = vmatpush1.bf16.msra.mxu0 0
        %1449 = vmatprep.subr.bf16.mxu0 0
        %1450 = vmatpush1.bf16.msra.mxu0 0
        %1451 = vmatprep.subr.bf16.mxu0 0
        %1452 = vmatpush1.bf16.msra.mxu0 0
        %1453 = vmatprep.mubr.bf16.mxu0 0
        %1454 = vmatmul.mubr.bf16.gmra.mrb[0].mxu0 %v1419
        %v1455 = vpop.f32.mrb[0].mxu0
        %v1456 = vadd.f32 0.0, %v1455
        %v1457 = vpop.f32.mrb[0].mxu0
        %v1458 = vpop.f32.mrb[0].mxu0
        %v1459 = vpop.f32.mrb[0].mxu0
        %1460 = vdwg.mxu0
        %v1461 = vadd.f32 %v1409, %v1456
        %s1462 = scalar_lea.vmem %s13, 16
        %v1463 = vld [vmem:[%s1462] sm:$0xf]
        %1464 = vrot.lane.b32.xlu0 %v1259, 118
        %v1465 = vpop.permute.xlu0 %1464
        %1466 = vrot.lane.b32.xlu0 %v1261, 118
        %v1467 = vpop.permute.xlu0 %1466
        %v1468 = vsel %vm853, %v1465, %v1467
        %v1471 = vsel %vm549, %v1463, 0
        %1473 = vmatprep.subr.bf16.mxu0 0
        %1474 = vmatpush1.bf16.msra.mxu0 %v1468
        %1475 = vmatprep.subr.bf16.mxu0 0
        %1476 = vmatpush1.bf16.msra.mxu0 0
        %1477 = vmatprep.subr.bf16.mxu0 0
        %1478 = vmatpush1.bf16.msra.mxu0 0
        %1479 = vmatprep.subr.bf16.mxu0 0
        %1480 = vmatpush1.bf16.msra.mxu0 0
        %1481 = vmatprep.subr.bf16.mxu0 0
        %1482 = vmatpush1.bf16.msra.mxu0 0
        %1483 = vmatprep.subr.bf16.mxu0 0
        %1484 = vmatpush1.bf16.msra.mxu0 0
        %1485 = vmatprep.subr.bf16.mxu0 0
        %1486 = vmatpush1.bf16.msra.mxu0 0
        %1487 = vmatprep.subr.bf16.mxu0 0
        %1488 = vmatpush1.bf16.msra.mxu0 0
        %1489 = vmatprep.subr.bf16.mxu0 0
        %1490 = vmatpush1.bf16.msra.mxu0 0
        %1491 = vmatprep.subr.bf16.mxu0 0
        %1492 = vmatpush1.bf16.msra.mxu0 0
        %1493 = vmatprep.subr.bf16.mxu0 0
        %1494 = vmatpush1.bf16.msra.mxu0 0
        %1495 = vmatprep.subr.bf16.mxu0 0
        %1496 = vmatpush1.bf16.msra.mxu0 0
        %1497 = vmatprep.subr.bf16.mxu0 0
        %1498 = vmatpush1.bf16.msra.mxu0 0
        %1499 = vmatprep.subr.bf16.mxu0 0
        %1500 = vmatpush1.bf16.msra.mxu0 0
        %1501 = vmatprep.subr.bf16.mxu0 0
        %1502 = vmatpush1.bf16.msra.mxu0 0
        %1503 = vmatprep.subr.bf16.mxu0 0
        %1504 = vmatpush1.bf16.msra.mxu0 0
        %1505 = vmatprep.mubr.bf16.mxu0 0
        %1506 = vmatmul.mubr.bf16.gmra.mrb[0].mxu0 %v1471
        %v1507 = vpop.f32.mrb[0].mxu0
        %v1508 = vadd.f32 0.0, %v1507
        %v1509 = vpop.f32.mrb[0].mxu0
        %v1510 = vpop.f32.mrb[0].mxu0
        %v1511 = vpop.f32.mrb[0].mxu0
        %1512 = vdwg.mxu0
        %v1513 = vadd.f32 %v1461, %v1508
        %s1514 = scalar_lea.vmem %s13, 20
        %v1515 = vld [vmem:[%s1514] sm:$0xf]
        %1516 = vrot.lane.b32.xlu0 %v1259, 117
        %v1517 = vpop.permute.xlu0 %1516
        %1518 = vrot.lane.b32.xlu0 %v1261, 117
        %v1519 = vpop.permute.xlu0 %1518
        %v1520 = vsel %vm906, %v1517, %v1519
        %v1523 = vsel %vm549, %v1515, 0
        %1525 = vmatprep.subr.bf16.mxu0 0
        %1526 = vmatpush1.bf16.msra.mxu0 %v1520
        %1527 = vmatprep.subr.bf16.mxu0 0
        %1528 = vmatpush1.bf16.msra.mxu0 0
        %1529 = vmatprep.subr.bf16.mxu0 0
        %1530 = vmatpush1.bf16.msra.mxu0 0
        %1531 = vmatprep.subr.bf16.mxu0 0
        %1532 = vmatpush1.bf16.msra.mxu0 0
        %1533 = vmatprep.subr.bf16.mxu0 0
        %1534 = vmatpush1.bf16.msra.mxu0 0
        %1535 = vmatprep.subr.bf16.mxu0 0
        %1536 = vmatpush1.bf16.msra.mxu0 0
        %1537 = vmatprep.subr.bf16.mxu0 0
        %1538 = vmatpush1.bf16.msra.mxu0 0
        %1539 = vmatprep.subr.bf16.mxu0 0
        %1540 = vmatpush1.bf16.msra.mxu0 0
        %1541 = vmatprep.subr.bf16.mxu0 0
        %1542 = vmatpush1.bf16.msra.mxu0 0
        %1543 = vmatprep.subr.bf16.mxu0 0
        %1544 = vmatpush1.bf16.msra.mxu0 0
        %1545 = vmatprep.subr.bf16.mxu0 0
        %1546 = vmatpush1.bf16.msra.mxu0 0
        %1547 = vmatprep.subr.bf16.mxu0 0
        %1548 = vmatpush1.bf16.msra.mxu0 0
        %1549 = vmatprep.subr.bf16.mxu0 0
        %1550 = vmatpush1.bf16.msra.mxu0 0
        %1551 = vmatprep.subr.bf16.mxu0 0
        %1552 = vmatpush1.bf16.msra.mxu0 0
        %1553 = vmatprep.subr.bf16.mxu0 0
        %1554 = vmatpush1.bf16.msra.mxu0 0
        %1555 = vmatprep.subr.bf16.mxu0 0
        %1556 = vmatpush1.bf16.msra.mxu0 0
        %1557 = vmatprep.mubr.bf16.mxu0 0
        %1558 = vmatmul.mubr.bf16.gmra.mrb[0].mxu0 %v1523
        %v1559 = vpop.f32.mrb[0].mxu0
        %v1560 = vadd.f32 0.0, %v1559
        %v1561 = vpop.f32.mrb[0].mxu0
        %v1562 = vpop.f32.mrb[0].mxu0
        %v1563 = vpop.f32.mrb[0].mxu0
        %1564 = vdwg.mxu0
        %v1565 = vadd.f32 %v1513, %v1560
        %s1566 = scalar_lea.vmem %s13, 24
        %v1567 = vld [vmem:[%s1566] sm:$0xf]
        %1568 = vrot.lane.b32.xlu0 %v1259, 110
        %v1569 = vpop.permute.xlu0 %1568
        %1570 = vrot.lane.b32.xlu0 %v1261, 110
        %v1571 = vpop.permute.xlu0 %1570
        %v1572 = vsel %vm959, %v1569, %v1571
        %v1575 = vsel %vm549, %v1567, 0
        %1577 = vmatprep.subr.bf16.mxu0 0
        %1578 = vmatpush1.bf16.msra.mxu0 %v1572
        %1579 = vmatprep.subr.bf16.mxu0 0
        %1580 = vmatpush1.bf16.msra.mxu0 0
        %1581 = vmatprep.subr.bf16.mxu0 0
        %1582 = vmatpush1.bf16.msra.mxu0 0
        %1583 = vmatprep.subr.bf16.mxu0 0
        %1584 = vmatpush1.bf16.msra.mxu0 0
        %1585 = vmatprep.subr.bf16.mxu0 0
        %1586 = vmatpush1.bf16.msra.mxu0 0
        %1587 = vmatprep.subr.bf16.mxu0 0
        %1588 = vmatpush1.bf16.msra.mxu0 0
        %1589 = vmatprep.subr.bf16.mxu0 0
        %1590 = vmatpush1.bf16.msra.mxu0 0
        %1591 = vmatprep.subr.bf16.mxu0 0
        %1592 = vmatpush1.bf16.msra.mxu0 0
        %1593 = vmatprep.subr.bf16.mxu0 0
        %1594 = vmatpush1.bf16.msra.mxu0 0
        %1595 = vmatprep.subr.bf16.mxu0 0
        %1596 = vmatpush1.bf16.msra.mxu0 0
        %1597 = vmatprep.subr.bf16.mxu0 0
        %1598 = vmatpush1.bf16.msra.mxu0 0
        %1599 = vmatprep.subr.bf16.mxu0 0
        %1600 = vmatpush1.bf16.msra.mxu0 0
        %1601 = vmatprep.subr.bf16.mxu0 0
        %1602 = vmatpush1.bf16.msra.mxu0 0
        %1603 = vmatprep.subr.bf16.mxu0 0
        %1604 = vmatpush1.bf16.msra.mxu0 0
        %1605 = vmatprep.subr.bf16.mxu0 0
        %1606 = vmatpush1.bf16.msra.mxu0 0
        %1607 = vmatprep.subr.bf16.mxu0 0
        %1608 = vmatpush1.bf16.msra.mxu0 0
        %1609 = vmatprep.mubr.bf16.mxu0 0
        %1610 = vmatmul.mubr.bf16.gmra.mrb[0].mxu0 %v1575
        %v1611 = vpop.f32.mrb[0].mxu0
        %v1612 = vadd.f32 0.0, %v1611
        %v1613 = vpop.f32.mrb[0].mxu0
        %v1614 = vpop.f32.mrb[0].mxu0
        %v1615 = vpop.f32.mrb[0].mxu0
        %1616 = vdwg.mxu0
        %v1617 = vadd.f32 %v1565, %v1612
        %s1618 = scalar_lea.vmem %s13, 28
        %v1619 = vld [vmem:[%s1618] sm:$0xf]
        %1620 = vrot.lane.b32.xlu0 %v1259, 109
        %v1621 = vpop.permute.xlu0 %1620
        %1622 = vrot.lane.b32.xlu0 %v1261, 109
        %v1623 = vpop.permute.xlu0 %1622
        %v1624 = vsel %vm1012, %v1621, %v1623
        %v1627 = vsel %vm549, %v1619, 0
        %1629 = vmatprep.subr.bf16.mxu0 0
        %1630 = vmatpush1.bf16.msra.mxu0 %v1624
        %1631 = vmatprep.subr.bf16.mxu0 0
        %1632 = vmatpush1.bf16.msra.mxu0 0
        %1633 = vmatprep.subr.bf16.mxu0 0
        %1634 = vmatpush1.bf16.msra.mxu0 0
        %1635 = vmatprep.subr.bf16.mxu0 0
        %1636 = vmatpush1.bf16.msra.mxu0 0
        %1637 = vmatprep.subr.bf16.mxu0 0
        %1638 = vmatpush1.bf16.msra.mxu0 0
        %1639 = vmatprep.subr.bf16.mxu0 0
        %1640 = vmatpush1.bf16.msra.mxu0 0
        %1641 = vmatprep.subr.bf16.mxu0 0
        %1642 = vmatpush1.bf16.msra.mxu0 0
        %1643 = vmatprep.subr.bf16.mxu0 0
        %1644 = vmatpush1.bf16.msra.mxu0 0
        %1645 = vmatprep.subr.bf16.mxu0 0
        %1646 = vmatpush1.bf16.msra.mxu0 0
        %1647 = vmatprep.subr.bf16.mxu0 0
        %1648 = vmatpush1.bf16.msra.mxu0 0
        %1649 = vmatprep.subr.bf16.mxu0 0
        %1650 = vmatpush1.bf16.msra.mxu0 0
        %1651 = vmatprep.subr.bf16.mxu0 0
        %1652 = vmatpush1.bf16.msra.mxu0 0
        %1653 = vmatprep.subr.bf16.mxu0 0
        %1654 = vmatpush1.bf16.msra.mxu0 0
        %1655 = vmatprep.subr.bf16.mxu0 0
        %1656 = vmatpush1.bf16.msra.mxu0 0
        %1657 = vmatprep.subr.bf16.mxu0 0
        %1658 = vmatpush1.bf16.msra.mxu0 0
        %1659 = vmatprep.subr.bf16.mxu0 0
        %1660 = vmatpush1.bf16.msra.mxu0 0
        %1661 = vmatprep.mubr.bf16.mxu0 0
        %1662 = vmatmul.mubr.bf16.gmra.mrb[0].mxu0 %v1627
        %v1663 = vpop.f32.mrb[0].mxu0
        %v1664 = vadd.f32 0.0, %v1663
        %v1665 = vpop.f32.mrb[0].mxu0
        %v1666 = vpop.f32.mrb[0].mxu0
        %v1667 = vpop.f32.mrb[0].mxu0
        %1668 = vdwg.mxu0
        %v1669 = vadd.f32 %v1617, %v1664
        %s1670 = scalar_lea.vmem %s13, 32
        %v1671 = vld [vmem:[%s1670] sm:$0xf]
        %1672 = vrot.lane.b32.xlu0 %v1259, 108
        %v1673 = vpop.permute.xlu0 %1672
        %1674 = vrot.lane.b32.xlu0 %v1261, 108
        %v1675 = vpop.permute.xlu0 %1674
        %v1676 = vsel %vm1065, %v1673, %v1675
        %v1679 = vsel %vm549, %v1671, 0
        %1681 = vmatprep.subr.bf16.mxu0 0
        %1682 = vmatpush1.bf16.msra.mxu0 %v1676
        %1683 = vmatprep.subr.bf16.mxu0 0
        %1684 = vmatpush1.bf16.msra.mxu0 0
        %1685 = vmatprep.subr.bf16.mxu0 0
        %1686 = vmatpush1.bf16.msra.mxu0 0
        %1687 = vmatprep.subr.bf16.mxu0 0
        %1688 = vmatpush1.bf16.msra.mxu0 0
        %1689 = vmatprep.subr.bf16.mxu0 0
        %1690 = vmatpush1.bf16.msra.mxu0 0
        %1691 = vmatprep.subr.bf16.mxu0 0
        %1692 = vmatpush1.bf16.msra.mxu0 0
        %1693 = vmatprep.subr.bf16.mxu0 0
        %1694 = vmatpush1.bf16.msra.mxu0 0
        %1695 = vmatprep.subr.bf16.mxu0 0
        %1696 = vmatpush1.bf16.msra.mxu0 0
        %1697 = vmatprep.subr.bf16.mxu0 0
        %1698 = vmatpush1.bf16.msra.mxu0 0
        %1699 = vmatprep.subr.bf16.mxu0 0
        %1700 = vmatpush1.bf16.msra.mxu0 0
        %1701 = vmatprep.subr.bf16.mxu0 0
        %1702 = vmatpush1.bf16.msra.mxu0 0
        %1703 = vmatprep.subr.bf16.mxu0 0
        %1704 = vmatpush1.bf16.msra.mxu0 0
        %1705 = vmatprep.subr.bf16.mxu0 0
        %1706 = vmatpush1.bf16.msra.mxu0 0
        %1707 = vmatprep.subr.bf16.mxu0 0
        %1708 = vmatpush1.bf16.msra.mxu0 0
        %1709 = vmatprep.subr.bf16.mxu0 0
        %1710 = vmatpush1.bf16.msra.mxu0 0
        %1711 = vmatprep.subr.bf16.mxu0 0
        %1712 = vmatpush1.bf16.msra.mxu0 0
        %1713 = vmatprep.mubr.bf16.mxu0 0
        %1714 = vmatmul.mubr.bf16.gmra.mrb[0].mxu0 %v1679
        %v1715 = vpop.f32.mrb[0].mxu0
        %v1716 = vadd.f32 0.0, %v1715
        %v1717 = vpop.f32.mrb[0].mxu0
        %v1718 = vpop.f32.mrb[0].mxu0
        %v1719 = vpop.f32.mrb[0].mxu0
        %1720 = vdwg.mxu0
        %v1721 = vadd.f32 %v1669, %v1716
        %v1722 = vmul.f32 %v1721, %v628
        %1723 = vst [vmem:[%s499 + $0x18] sm:$0xff] %v1722
        %s1724 = sand.u32 %s332, 1
        %s1725 = sand.u32 %s332, 1
        %s1726 = smul.addr %s1725, 32
        %s1727 = scalar_lea.vmem [#allocation4], %s1726
        // Predicated region
        $region115: #{densenet_forward.6} parent=109 // pred_check
          %p1728 = pneg %p342
        $region116: #{densenet_forward.6} parent=109 // pred_check_branch
          %1730 = sbr.rel (%p1728) target = $region118
        $region117: #{densenet_forward.6} parent=109 // pred_region
          %s1731 = smul.addr %s25, 8
          %s1732 = scalar_lea.vmem %s14, %s1731
          // Predicated region
          $region119: #{densenet_forward.6} parent=117 // pred_check
            _
          $region120: #{densenet_forward.6} parent=117 // pred_check_branch
            %1734 = sbr.rel (0) target = $region122
          $region121: #{densenet_forward.6} parent=117 // pred_region
            // Predicated region
            $region123: #{densenet_forward.6} parent=121 // pred_check
              _
            $region124: #{densenet_forward.6} parent=121 // pred_check_branch
              %1736 = sbr.rel (0) target = $region126
            $region125: #{densenet_forward.6} parent=121 // pred_region
              // Predicated region
              $region138: #{densenet_forward.6} parent=125 // pred_check
                _
              $region139: #{densenet_forward.6} parent=125 // pred_check_branch
                %1757 = sbr.rel (0) target = $region141
              $region140: #{densenet_forward.6} parent=125 // pred_region
                loop: start=0, step=1, limit=1
                $region142: #{densenet_forward.6} parent=140 // loop_pre_header
                  _
                $region143: #{densenet_forward.6} parent=140 // loop_header
                  %s1759 = sphi 0, %s1763
                  %p1760 = scmp.ge.s32.totalorder %s1759, 1
                  %s1764 = sphi %s1727, %s1727
                  %s1765 = sphi %s1732, %s1732
                $region144: #{densenet_forward.6} parent=140 // loop_header_branch
                  %1762 = sbr.rel (%p1760) target = $region148
                $region145: #{densenet_forward.6} parent=140 // loop_body
                  %v1766 = vld [vmem:[%s1764] sm:$0xff]
                  %1767 = vst [vmem:[%s1765] sm:$0xff] %v1766
                  %v1768 = vld [vmem:[%s1764 + $0x8] sm:$0xff]
                  %1769 = vst [vmem:[%s1765 + $0x10] sm:$0xff] %v1768
                  %v1770 = vld [vmem:[%s1764 + $0x10] sm:$0xff]
                  %1771 = vst [vmem:[%s1765 + $0x20] sm:$0xff] %v1770
                  %v1772 = vld [vmem:[%s1764 + $0x18] sm:$0xff]
                  %1773 = vst [vmem:[%s1765 + $0x30] sm:$0xff] %v1772
                $region146: #{densenet_forward.6} parent=140 // loop_footer
                  %s1763 = sadd.s32 1, %s1759
                $region147: #{densenet_forward.6} parent=140 // loop_footer_branch
                  %1758 = sbr.rel target = $region143
                $region148: #{densenet_forward.6} parent=140 // loop_exit
                  _
              $region141: #{densenet_forward.6} parent=125 // pred_fallthru
                _
              // Predicated region
              $region149: #{densenet_forward.6} parent=125 // pred_check
                _
              $region150: #{densenet_forward.6} parent=125 // pred_check_branch
                %1775 = sbr.rel target = $region152
              $region151: #{densenet_forward.6} parent=125 // pred_region
                _
              $region152: #{densenet_forward.6} parent=125 // pred_fallthru
                _
            $region126: #{densenet_forward.6} parent=121 // pred_fallthru
              _
            // Predicated region
            $region127: #{densenet_forward.6} parent=121 // pred_check
              _
            $region128: #{densenet_forward.6} parent=121 // pred_check_branch
              %1738 = sbr.rel target = $region130
            $region129: #{densenet_forward.6} parent=121 // pred_region
              loop: start=0, step=1, limit=1
              $region131: #{densenet_forward.6} parent=129 // loop_pre_header
                _
              $region132: #{densenet_forward.6} parent=129 // loop_header
                %s1741 = sphi 0, %s1745
                %p1742 = scmp.ge.s32.totalorder %s1741, 1
                %s1746 = sphi %s1727, %s1727
                %s1747 = sphi %s1732, %s1732
              $region133: #{densenet_forward.6} parent=129 // loop_header_branch
                %1744 = sbr.rel (%p1742) target = $region137
              $region134: #{densenet_forward.6} parent=129 // loop_body
                %v1748 = vld [vmem:[%s1746] sm:$0xff]
                %1749 = vst [vmem:[%s1747] sm:$0xff] %v1748
                %v1750 = vld [vmem:[%s1746 + $0x8] sm:$0xff]
                %1751 = vst [vmem:[%s1747 + $0x10] sm:$0xff] %v1750
                %v1752 = vld [vmem:[%s1746 + $0x10] sm:$0xff]
                %1753 = vst [vmem:[%s1747 + $0x20] sm:$0xff] %v1752
                %v1754 = vld [vmem:[%s1746 + $0x18] sm:$0xff]
                %1755 = vst [vmem:[%s1747 + $0x30] sm:$0xff] %v1754
              $region135: #{densenet_forward.6} parent=129 // loop_footer
                %s1745 = sadd.s32 1, %s1741
              $region136: #{densenet_forward.6} parent=129 // loop_footer_branch
                %1740 = sbr.rel target = $region132
              $region137: #{densenet_forward.6} parent=129 // loop_exit
                _
            $region130: #{densenet_forward.6} parent=121 // pred_fallthru
              _
          $region122: #{densenet_forward.6} parent=117 // pred_fallthru
            _
          %1776 = vnop
        $region118: #{densenet_forward.6} parent=109 // pred_fallthru
          _
      $region110: #{densenet_forward.6} parent=5 // pred_fallthru
        _
      %p1777 = scmp.le.s32.totalorder 2, %s20
      // Predicated region
      $region153: #{densenet_forward.6} parent=5 // pred_check
        %p1778 = pneg %p1777
      $region154: #{densenet_forward.6} parent=5 // pred_check_branch
        %1780 = sbr.rel (%p1778) target = $region156
      $region155: #{densenet_forward.6} parent=5 // pred_region
        %s1781 = ssub.s32 %s20, 2
        // Predicated region
        $region157: #{densenet_forward.6} parent=155 // pred_check
          %p1782 = pneg %p348
        $region158: #{densenet_forward.6} parent=155 // pred_check_branch
          %1784 = sbr.rel (%p1782) target = $region160
        $region159: #{densenet_forward.6} parent=155 // pred_region
          %s1785 = sand.u32 %s333, 1
          %s1786 = sand.u32 %s333, 1
          %s1787 = smul.addr %s1786, 32
          %s1788 = scalar_lea.vmem [#allocation4], %s1787
        $region160: #{densenet_forward.6} parent=155 // pred_fallthru
          _
      $region156: #{densenet_forward.6} parent=5 // pred_fallthru
        _
    $region6: #{densenet_forward.6} parent=1 // loop_footer
      %s24 = sadd.s32 1, %s20
    $region7: #{densenet_forward.6} parent=1 // loop_footer_branch
      %19 = sbr.rel target = $region3
    $region8: #{densenet_forward.6} parent=1 // loop_exit
      _

</llo_original>
